<compile_context>
chip_gen: v7x
topology: tpu7x:2x2x1
jax: 0.10.0
libtpu: 0.0.40
codegen_flags: <defaults>
</compile_context>

<pallas_src>
import jax
import jax.numpy as jnp
from jax.experimental import pallas as pl
from jax.experimental.pallas import tpu as pltpu

KH = KW = 5
PAD = 2
VMEM_LIMIT = 32 * 1024 * 1024  # <= every generation's scoped VMEM (incl. v7x 64 MiB phys)


# ---------------------------------------------------------------------------
# Fused conv-as-GEMM + bias + ReLU + 2x2 max-pool kernel.
# One grid step = one batch element x one block of pooled output rows.
# ---------------------------------------------------------------------------
def conv_gemm_pool_kernel(p_ref, w_ref, b_ref, o_ref):
    # p_ref: (1, 4, RM, K)   bf16 im2col patches, one slab per 2x2-pool phase
    # w_ref: (K, Cout)       bf16 (K = KH*KW*Cin)
    # b_ref: (1, Cout)       f32
    # o_ref: (1, RM, Cout)   f32 pooled+activated output rows
    w = w_ref[...]
    m = jnp.dot(p_ref[0, 0], w, preferred_element_type=jnp.float32)
    for ph in range(1, 4):
        m = jnp.maximum(
            m, jnp.dot(p_ref[0, ph], w, preferred_element_type=jnp.float32))
    # bias is identical for all pool phases, so max-then-bias == bias-then-max,
    # and relu(max(.)) == max(relu(.)):  this IS pool(relu(conv + b)).
    o_ref[0] = jnp.maximum(m + b_ref[...], 0.0).astype(o_ref.dtype)


def conv_relu_pool(x_nhwc, w_kc, bias, *, rows_per_block):
    """x_nhwc: (B,H,W,Cin) f32.  w_kc: (KH*KW*Cin, Cout) bf16.  bias: (Cout,) f32."""
    B, H, W, Cin = x_nhwc.shape
    K, Cout = w_kc.shape
    Ho, Wo = H // 2, W // 2

    # --- im2col in the wrapper (XLA), as recommended by the perf review ---------
    xp = jnp.pad(x_nhwc, ((0, 0), (PAD, PAD), (PAD, PAD), (0, 0)))
    taps = [xp[:, ky:ky + H, kx:kx + W, :] for ky in range(KH) for kx in range(KW)]
    pf = jnp.concatenate(taps, axis=-1).astype(jnp.bfloat16)        # (B, H, W, K)
    # split into the four 2x2 max-pool phases: phase (a,b) -> conv output (2i+a, 2j+b)
    phases = [pf[:, a::2, b::2, :] for a in range(2) for b in range(2)]
    p = jnp.stack(phases, axis=1).reshape(B, 4, Ho * Wo, K)          # (B, 4, Ho*Wo, K)

    RM = rows_per_block                      # GEMM rows (pooled positions) per grid step
    assert (Ho * Wo) % RM == 0 and RM % 8 == 0
    grid = (B, (Ho * Wo) // RM)

    out = pl.pallas_call(
        conv_gemm_pool_kernel,
        out_shape=jax.ShapeDtypeStruct((B, Ho * Wo, Cout), jnp.float32),
        grid=grid,
        in_specs=[
            pl.BlockSpec((1, 4, RM, K), lambda i, r: (i, 0, r, 0)),
            pl.BlockSpec((K, Cout), lambda i, r: (0, 0)),      # weight stays resident
            pl.BlockSpec((1, Cout), lambda i, r: (0, 0)),      # bias stays resident
        ],
        out_specs=pl.BlockSpec((1, RM, Cout), lambda i, r: (i, r, 0)),
        compiler_params=pltpu.CompilerParams(
            dimension_semantics=("parallel", "parallel"),      # batch & row blocks independent
            vmem_limit_bytes=VMEM_LIMIT),
    )(p, w_kc, bias.reshape(1, Cout).astype(jnp.float32))
    return out.reshape(B, Ho, Wo, Cout)


# ---------------------------------------------------------------------------
# Fused 4-layer FC stack in a single pallas_call.
# fc1's (8192,128) weight is streamed in K-chunks (grid axis, auto-pipelined DMA);
# fc2/fc3/fc4 weights + all biases stay VMEM-resident; intermediates never hit HBM.
# ---------------------------------------------------------------------------
def fc_stack_kernel(x_ref, w1_ref, b1_ref, w2_ref, b2_ref, w3_ref, b3_ref,
                    w4_ref, b4_ref, o_ref, acc_ref):
    k = pl.program_id(0)

    @pl.when(k == 0)
    def _():
        acc_ref[...] = jnp.zeros_like(acc_ref)

    acc_ref[...] += jnp.dot(x_ref[...], w1_ref[...],
                            preferred_element_type=jnp.float32)

    @pl.when(k == pl.num_programs(0) - 1)
    def _():
        h = jnp.maximum(acc_ref[...] + b1_ref[...], 0.0)                      # fc1+relu
        h = jnp.dot(h.astype(jnp.bfloat16), w2_ref[...],
                    preferred_element_type=jnp.float32) + b2_ref[...]
        h = jnp.maximum(h, 0.0)                                               # fc2+relu
        h = jnp.dot(h.astype(jnp.bfloat16), w3_ref[...],
                    preferred_element_type=jnp.float32) + b3_ref[...]
        h = jnp.maximum(h, 0.0)                                               # fc3+relu
        y = jnp.dot(h.astype(jnp.bfloat16), w4_ref[...],
                    preferred_element_type=jnp.float32) + b4_ref[...]         # fc4
        o_ref[...] = y.astype(o_ref.dtype)


def fc_stack(x, w1, b1, w2, b2, w3, b3, w4, b4, *, tk=2048):
    B, K1 = x.shape
    N1, N2, N3, N4 = w1.shape[1], w2.shape[1], w3.shape[1], w4.shape[1]
    assert K1 % tk == 0
    nk = K1 // tk
    return pl.pallas_call(
        fc_stack_kernel,
        out_shape=jax.ShapeDtypeStruct((B, N4), jnp.float32),
        grid=(nk,),
        in_specs=[
            pl.BlockSpec((B, tk), lambda k: (0, k)),       # activation K-chunk
            pl.BlockSpec((tk, N1), lambda k: (k, 0)),      # fc1 weight K-chunk (streamed)
            pl.BlockSpec((1, N1), lambda k: (0, 0)),
            pl.BlockSpec((N1, N2), lambda k: (0, 0)),
            pl.BlockSpec((1, N2), lambda k: (0, 0)),
            pl.BlockSpec((N2, N3), lambda k: (0, 0)),
            pl.BlockSpec((1, N3), lambda k: (0, 0)),
            pl.BlockSpec((N3, N4), lambda k: (0, 0)),
            pl.BlockSpec((1, N4), lambda k: (0, 0)),
        ],
        out_specs=pl.BlockSpec((B, N4), lambda k: (0, 0)),
        scratch_shapes=[pltpu.VMEM((B, N1), jnp.float32)],
        compiler_params=pltpu.CompilerParams(
            dimension_semantics=("arbitrary",),            # K reduction
            vmem_limit_bytes=VMEM_LIMIT),
    )(x, w1, b1.reshape(1, N1).astype(jnp.float32),
      w2, b2.reshape(1, N2).astype(jnp.float32),
      w3, b3.reshape(1, N3).astype(jnp.float32),
      w4, b4.reshape(1, N4).astype(jnp.float32))


# ---------------------------------------------------------------------------
# Deterministic parameter init (shapes from Modified.__init__; fan-in scaled
# normals, NOT torch's kaiming_uniform_ default — fine for shape/finiteness).
# Conv weights stored pre-reshaped as (KH*KW*Cin, Cout) bf16 (row order ky,kx,cin
# matching the im2col tap order); fc weights as (in, out) bf16; biases f32.
# ---------------------------------------------------------------------------
def init_params(key):
    ks = jax.random.split(key, 14)

    def conv_p(kw, kb, cin, cout):
        s = 1.0 / jnp.sqrt(jnp.float32(cin * KH * KW))
        w = jax.random.normal(kw, (KH, KW, cin, cout), jnp.float32) * s   # HWIO
        b = jax.random.normal(kb, (cout,), jnp.float32) * s
        return w.reshape(KH * KW * cin, cout).astype(jnp.bfloat16), b

    def fc_p(kw, kb, kin, kout):
        s = 1.0 / jnp.sqrt(jnp.float32(kin))
        w = jax.random.normal(kw, (kin, kout), jnp.float32) * s
        b = jax.random.normal(kb, (kout,), jnp.float32) * s
        return w.astype(jnp.bfloat16), b

    p = {}
    p["c1w"], p["c1b"] = conv_p(ks[0], ks[1], 3, 16)
    p["c2w"], p["c2b"] = conv_p(ks[2], ks[3], 16, 64)
    p["c3w"], p["c3b"] = conv_p(ks[4], ks[5], 64, 128)
    p["f1w"], p["f1b"] = fc_p(ks[6], ks[7], 128 * 8 * 8, 32 * 2 * 2)
    p["f2w"], p["f2b"] = fc_p(ks[8], ks[9], 32 * 2 * 2, 120)
    p["f3w"], p["f3b"] = fc_p(ks[10], ks[11], 120, 84)
    p["f4w"], p["f4b"] = fc_p(ks[12], ks[13], 84, 10)
    return p


@jax.jit
def modified_forward(params, x_nchw):
    # NCHW -> NHWC for the conv path (channels on the 128-lane axis)
    x = jnp.transpose(x_nchw, (0, 2, 3, 1))                                   # (B,64,64,3)
    x = conv_relu_pool(x, params["c1w"], params["c1b"], rows_per_block=256)   # (B,32,32,16)
    x = conv_relu_pool(x, params["c2w"], params["c2b"], rows_per_block=128)   # (B,16,16,64)
    x = conv_relu_pool(x, params["c3w"], params["c3b"], rows_per_block=64)    # (B,8,8,128)
    # back to NCHW then flatten, matching torch's x.view(-1, 128*8*8) ordering
    B = x.shape[0]
    x = jnp.transpose(x, (0, 3, 1, 2)).reshape(B, 128 * 8 * 8).astype(jnp.bfloat16)
    return fc_stack(x,
                    params["f1w"], params["f1b"], params["f2w"], params["f2b"],
                    params["f3w"], params["f3b"], params["f4w"], params["f4b"],
                    tk=2048)                                                  # (B,10)


if __name__ == "__main__":
    keys = jax.random.split(jax.random.PRNGKey(0), 2)
    params = init_params(keys[0])
    # 64x64 input: three 2x2 pools -> 8x8 spatial, as required by fc1 (128*8*8)
    x = jax.random.normal(keys[1], (2, 3, 64, 64), jnp.float32)

    out = jax.block_until_ready(modified_forward(params, x))

    assert out.shape == (2, 10), out.shape
    assert bool(jnp.all(jnp.isfinite(out)))
    print("KERNEL_OK")
</pallas_src>

<mosaic_0001>
module attributes {stable_mosaic.version = 11 : i64} {
  func.func @conv_gemm_pool_kernel(%arg0: i32, %arg1: i32, %arg2: memref<1x4x256x75xbf16, #tpu.memory_space<vmem>>, %arg3: memref<75x16xbf16, #tpu.memory_space<vmem>>, %arg4: memref<1x16xf32, #tpu.memory_space<vmem>>, %arg5: memref<1x256x16xf32, #tpu.memory_space<vmem>>) attributes {dimension_semantics = [#tpu.dimension_semantics<parallel>, #tpu.dimension_semantics<parallel>], iteration_bounds = array<i64: 2, 4>, scalar_prefetch = 0 : i64, scratch_operands = 0 : i64, tpu.core_type = #tpu.core_type<tc>, window_params = [{transform_indices = @transform_0, window_bounds = array<i64: 1, 4, 256, 75>}, {pipeline_mode = #tpu.pipeline_mode<synchronous>, transform_indices = @transform_1, window_bounds = array<i64: 75, 16>}, {pipeline_mode = #tpu.pipeline_mode<synchronous>, transform_indices = @transform_2, window_bounds = array<i64: 1, 16>}, {transform_indices = @transform_3, window_bounds = array<i64: 1, 256, 16>}]} {
    %c0 = arith.constant 0 : index
    %c0_0 = arith.constant 0 : index
    %0 = vector.load %arg3[%c0, %c0_0] : memref<75x16xbf16, #tpu.memory_space<vmem>>, vector<75x16xbf16>
    %c0_1 = arith.constant 0 : index
    %c0_2 = arith.constant 0 : index
    %c0_3 = arith.constant 0 : index
    %c0_4 = arith.constant 0 : index
    %1 = vector.load %arg2[%c0_1, %c0_2, %c0_3, %c0_4] : memref<1x4x256x75xbf16, #tpu.memory_space<vmem>>, vector<1x1x256x75xbf16>
    %2 = vector.shape_cast %1 : vector<1x1x256x75xbf16> to vector<256x75xbf16>
    %cst = arith.constant dense<0.000000e+00> : vector<256x16xf32>
    %3 = tpu.matmul %2, %0, %cst {dimension_numbers = #tpu.dot_dimension_numbers<[1], [0], [0], [1], [0, 0, 1, 1], [], []>} : vector<256x75xbf16>, vector<75x16xbf16>, vector<256x16xf32> -> vector<256x16xf32>
    %c0_5 = arith.constant 0 : index
    %c1 = arith.constant 1 : index
    %c0_6 = arith.constant 0 : index
    %c0_7 = arith.constant 0 : index
    %4 = vector.load %arg2[%c0_5, %c1, %c0_6, %c0_7] : memref<1x4x256x75xbf16, #tpu.memory_space<vmem>>, vector<1x1x256x75xbf16>
    %5 = vector.shape_cast %4 : vector<1x1x256x75xbf16> to vector<256x75xbf16>
    %cst_8 = arith.constant dense<0.000000e+00> : vector<256x16xf32>
    %6 = tpu.matmul %5, %0, %cst_8 {dimension_numbers = #tpu.dot_dimension_numbers<[1], [0], [0], [1], [0, 0, 1, 1], [], []>} : vector<256x75xbf16>, vector<75x16xbf16>, vector<256x16xf32> -> vector<256x16xf32>
    %7 = arith.maximumf %3, %6 : vector<256x16xf32>
    %c0_9 = arith.constant 0 : index
    %c2 = arith.constant 2 : index
    %c0_10 = arith.constant 0 : index
    %c0_11 = arith.constant 0 : index
    %8 = vector.load %arg2[%c0_9, %c2, %c0_10, %c0_11] : memref<1x4x256x75xbf16, #tpu.memory_space<vmem>>, vector<1x1x256x75xbf16>
    %9 = vector.shape_cast %8 : vector<1x1x256x75xbf16> to vector<256x75xbf16>
    %cst_12 = arith.constant dense<0.000000e+00> : vector<256x16xf32>
    %10 = tpu.matmul %9, %0, %cst_12 {dimension_numbers = #tpu.dot_dimension_numbers<[1], [0], [0], [1], [0, 0, 1, 1], [], []>} : vector<256x75xbf16>, vector<75x16xbf16>, vector<256x16xf32> -> vector<256x16xf32>
    %11 = arith.maximumf %7, %10 : vector<256x16xf32>
    %c0_13 = arith.constant 0 : index
    %c3 = arith.constant 3 : index
    %c0_14 = arith.constant 0 : index
    %c0_15 = arith.constant 0 : index
    %12 = vector.load %arg2[%c0_13, %c3, %c0_14, %c0_15] : memref<1x4x256x75xbf16, #tpu.memory_space<vmem>>, vector<1x1x256x75xbf16>
    %13 = vector.shape_cast %12 : vector<1x1x256x75xbf16> to vector<256x75xbf16>
    %cst_16 = arith.constant dense<0.000000e+00> : vector<256x16xf32>
    %14 = tpu.matmul %13, %0, %cst_16 {dimension_numbers = #tpu.dot_dimension_numbers<[1], [0], [0], [1], [0, 0, 1, 1], [], []>} : vector<256x75xbf16>, vector<75x16xbf16>, vector<256x16xf32> -> vector<256x16xf32>
    %15 = arith.maximumf %11, %14 : vector<256x16xf32>
    %c0_17 = arith.constant 0 : index
    %c0_18 = arith.constant 0 : index
    %16 = vector.load %arg4[%c0_17, %c0_18] : memref<1x16xf32, #tpu.memory_space<vmem>>, vector<1x16xf32>
    %17 = vector.broadcast %16 : vector<1x16xf32> to vector<256x16xf32>
    %18 = arith.addf %15, %17 : vector<256x16xf32>
    %cst_19 = arith.constant 0.000000e+00 : f32
    %19 = vector.broadcast %cst_19 : f32 to vector<256x16xf32>
    %20 = arith.maximumf %18, %19 : vector<256x16xf32>
    %c0_20 = arith.constant 0 : index
    %c0_21 = arith.constant 0 : index
    %c0_22 = arith.constant 0 : index
    %21 = vector.load %arg5[%c0_20, %c0_21, %c0_22] : memref<1x256x16xf32, #tpu.memory_space<vmem>>, vector<1x256x16xf32>
    %22 = vector.shape_cast %21 : vector<1x256x16xf32> to vector<256x16xf32>
    %23 = vector.shape_cast %20 : vector<256x16xf32> to vector<1x256x16xf32>
    tpu.vector_store %arg5[%c0_20, %c0_21, %c0_22], %23 {strides = array<i32>} : memref<1x256x16xf32, #tpu.memory_space<vmem>>, vector<1x256x16xf32>,
    return
  }
  func.func @transform_0(%arg0: i32, %arg1: i32) -> (i32, i32, i32, i32) {
    %c0_i32 = arith.constant 0 : i32
    %c0_i32_0 = arith.constant 0 : i32
    %c0_i32_1 = arith.constant 0 : i32
    return %arg0, %c0_i32, %arg1, %c0_i32_0 : i32, i32, i32, i32
  }
  func.func @transform_1(%arg0: i32, %arg1: i32) -> (i32, i32) {
    %c0_i32 = arith.constant 0 : i32
    %c0_i32_0 = arith.constant 0 : i32
    %c0_i32_1 = arith.constant 0 : i32
    return %c0_i32, %c0_i32_0 : i32, i32
  }
  func.func @transform_2(%arg0: i32, %arg1: i32) -> (i32, i32) {
    %c0_i32 = arith.constant 0 : i32
    %c0_i32_0 = arith.constant 0 : i32
    %c0_i32_1 = arith.constant 0 : i32
    return %c0_i32, %c0_i32_0 : i32, i32
  }
  func.func @transform_3(%arg0: i32, %arg1: i32) -> (i32, i32, i32) {
    %c0_i32 = arith.constant 0 : i32
    %c0_i32_0 = arith.constant 0 : i32
    return %arg0, %arg1, %c0_i32 : i32, i32, i32
  }
}

module attributes {stable_mosaic.version = 11 : i64} {
  func.func @conv_gemm_pool_kernel(%arg0: i32, %arg1: i32, %arg2: memref<1x4x128x400xbf16, #tpu.memory_space<vmem>>, %arg3: memref<400x64xbf16, #tpu.memory_space<vmem>>, %arg4: memref<1x64xf32, #tpu.memory_space<vmem>>, %arg5: memref<1x128x64xf32, #tpu.memory_space<vmem>>) attributes {dimension_semantics = [#tpu.dimension_semantics<parallel>, #tpu.dimension_semantics<parallel>], iteration_bounds = array<i64: 2, 2>, scalar_prefetch = 0 : i64, scratch_operands = 0 : i64, tpu.core_type = #tpu.core_type<tc>, window_params = [{transform_indices = @transform_0, window_bounds = array<i64: 1, 4, 128, 400>}, {pipeline_mode = #tpu.pipeline_mode<synchronous>, transform_indices = @transform_1, window_bounds = array<i64: 400, 64>}, {pipeline_mode = #tpu.pipeline_mode<synchronous>, transform_indices = @transform_2, window_bounds = array<i64: 1, 64>}, {transform_indices = @transform_3, window_bounds = array<i64: 1, 128, 64>}]} {
    %c0 = arith.constant 0 : index
    %c0_0 = arith.constant 0 : index
    %0 = vector.load %arg3[%c0, %c0_0] : memref<400x64xbf16, #tpu.memory_space<vmem>>, vector<400x64xbf16>
    %c0_1 = arith.constant 0 : index
    %c0_2 = arith.constant 0 : index
    %c0_3 = arith.constant 0 : index
    %c0_4 = arith.constant 0 : index
    %1 = vector.load %arg2[%c0_1, %c0_2, %c0_3, %c0_4] : memref<1x4x128x400xbf16, #tpu.memory_space<vmem>>, vector<1x1x128x400xbf16>
    %2 = vector.shape_cast %1 : vector<1x1x128x400xbf16> to vector<128x400xbf16>
    %cst = arith.constant dense<0.000000e+00> : vector<128x64xf32>
    %3 = tpu.matmul %2, %0, %cst {dimension_numbers = #tpu.dot_dimension_numbers<[1], [0], [0], [1], [0, 0, 1, 1], [], []>} : vector<128x400xbf16>, vector<400x64xbf16>, vector<128x64xf32> -> vector<128x64xf32>
    %c0_5 = arith.constant 0 : index
    %c1 = arith.constant 1 : index
    %c0_6 = arith.constant 0 : index
    %c0_7 = arith.constant 0 : index
    %4 = vector.load %arg2[%c0_5, %c1, %c0_6, %c0_7] : memref<1x4x128x400xbf16, #tpu.memory_space<vmem>>, vector<1x1x128x400xbf16>
    %5 = vector.shape_cast %4 : vector<1x1x128x400xbf16> to vector<128x400xbf16>
    %cst_8 = arith.constant dense<0.000000e+00> : vector<128x64xf32>
    %6 = tpu.matmul %5, %0, %cst_8 {dimension_numbers = #tpu.dot_dimension_numbers<[1], [0], [0], [1], [0, 0, 1, 1], [], []>} : vector<128x400xbf16>, vector<400x64xbf16>, vector<128x64xf32> -> vector<128x64xf32>
    %7 = arith.maximumf %3, %6 : vector<128x64xf32>
    %c0_9 = arith.constant 0 : index
    %c2 = arith.constant 2 : index
    %c0_10 = arith.constant 0 : index
    %c0_11 = arith.constant 0 : index
    %8 = vector.load %arg2[%c0_9, %c2, %c0_10, %c0_11] : memref<1x4x128x400xbf16, #tpu.memory_space<vmem>>, vector<1x1x128x400xbf16>
    %9 = vector.shape_cast %8 : vector<1x1x128x400xbf16> to vector<128x400xbf16>
    %cst_12 = arith.constant dense<0.000000e+00> : vector<128x64xf32>
    %10 = tpu.matmul %9, %0, %cst_12 {dimension_numbers = #tpu.dot_dimension_numbers<[1], [0], [0], [1], [0, 0, 1, 1], [], []>} : vector<128x400xbf16>, vector<400x64xbf16>, vector<128x64xf32> -> vector<128x64xf32>
    %11 = arith.maximumf %7, %10 : vector<128x64xf32>
    %c0_13 = arith.constant 0 : index
    %c3 = arith.constant 3 : index
    %c0_14 = arith.constant 0 : index
    %c0_15 = arith.constant 0 : index
    %12 = vector.load %arg2[%c0_13, %c3, %c0_14, %c0_15] : memref<1x4x128x400xbf16, #tpu.memory_space<vmem>>, vector<1x1x128x400xbf16>
    %13 = vector.shape_cast %12 : vector<1x1x128x400xbf16> to vector<128x400xbf16>
    %cst_16 = arith.constant dense<0.000000e+00> : vector<128x64xf32>
    %14 = tpu.matmul %13, %0, %cst_16 {dimension_numbers = #tpu.dot_dimension_numbers<[1], [0], [0], [1], [0, 0, 1, 1], [], []>} : vector<128x400xbf16>, vector<400x64xbf16>, vector<128x64xf32> -> vector<128x64xf32>
    %15 = arith.maximumf %11, %14 : vector<128x64xf32>
    %c0_17 = arith.constant 0 : index
    %c0_18 = arith.constant 0 : index
    %16 = vector.load %arg4[%c0_17, %c0_18] : memref<1x64xf32, #tpu.memory_space<vmem>>, vector<1x64xf32>
    %17 = vector.broadcast %16 : vector<1x64xf32> to vector<128x64xf32>
    %18 = arith.addf %15, %17 : vector<128x64xf32>
    %cst_19 = arith.constant 0.000000e+00 : f32
    %19 = vector.broadcast %cst_19 : f32 to vector<128x64xf32>
    %20 = arith.maximumf %18, %19 : vector<128x64xf32>
    %c0_20 = arith.constant 0 : index
    %c0_21 = arith.constant 0 : index
    %c0_22 = arith.constant 0 : index
    %21 = vector.load %arg5[%c0_20, %c0_21, %c0_22] : memref<1x128x64xf32, #tpu.memory_space<vmem>>, vector<1x128x64xf32>
    %22 = vector.shape_cast %21 : vector<1x128x64xf32> to vector<128x64xf32>
    %23 = vector.shape_cast %20 : vector<128x64xf32> to vector<1x128x64xf32>
    tpu.vector_store %arg5[%c0_20, %c0_21, %c0_22], %23 {strides = array<i32>} : memref<1x128x64xf32, #tpu.memory_space<vmem>>, vector<1x128x64xf32>,
    return
  }
  func.func @transform_0(%arg0: i32, %arg1: i32) -> (i32, i32, i32, i32) {
    %c0_i32 = arith.constant 0 : i32
    %c0_i32_0 = arith.constant 0 : i32
    %c0_i32_1 = arith.constant 0 : i32
    return %arg0, %c0_i32, %arg1, %c0_i32_0 : i32, i32, i32, i32
  }
  func.func @transform_1(%arg0: i32, %arg1: i32) -> (i32, i32) {
    %c0_i32 = arith.constant 0 : i32
    %c0_i32_0 = arith.constant 0 : i32
    %c0_i32_1 = arith.constant 0 : i32
    return %c0_i32, %c0_i32_0 : i32, i32
  }
  func.func @transform_2(%arg0: i32, %arg1: i32) -> (i32, i32) {
    %c0_i32 = arith.constant 0 : i32
    %c0_i32_0 = arith.constant 0 : i32
    %c0_i32_1 = arith.constant 0 : i32
    return %c0_i32, %c0_i32_0 : i32, i32
  }
  func.func @transform_3(%arg0: i32, %arg1: i32) -> (i32, i32, i32) {
    %c0_i32 = arith.constant 0 : i32
    %c0_i32_0 = arith.constant 0 : i32
    return %arg0, %arg1, %c0_i32 : i32, i32, i32
  }
}

module attributes {stable_mosaic.version = 11 : i64} {
  func.func @conv_gemm_pool_kernel(%arg0: i32, %arg1: i32, %arg2: memref<1x4x64x1600xbf16, #tpu.memory_space<vmem>>, %arg3: memref<1600x128xbf16, #tpu.memory_space<vmem>>, %arg4: memref<1x128xf32, #tpu.memory_space<vmem>>, %arg5: memref<1x64x128xf32, #tpu.memory_space<vmem>>) attributes {dimension_semantics = [#tpu.dimension_semantics<parallel>, #tpu.dimension_semantics<parallel>], iteration_bounds = array<i64: 2, 1>, scalar_prefetch = 0 : i64, scratch_operands = 0 : i64, tpu.core_type = #tpu.core_type<tc>, window_params = [{transform_indices = @transform_0, window_bounds = array<i64: 1, 4, 64, 1600>}, {pipeline_mode = #tpu.pipeline_mode<synchronous>, transform_indices = @transform_1, window_bounds = array<i64: 1600, 128>}, {pipeline_mode = #tpu.pipeline_mode<synchronous>, transform_indices = @transform_2, window_bounds = array<i64: 1, 128>}, {transform_indices = @transform_3, window_bounds = array<i64: 1, 64, 128>}]} {
    %c0 = arith.constant 0 : index
    %c0_0 = arith.constant 0 : index
    %0 = vector.load %arg3[%c0, %c0_0] : memref<1600x128xbf16, #tpu.memory_space<vmem>>, vector<1600x128xbf16>
    %c0_1 = arith.constant 0 : index
    %c0_2 = arith.constant 0 : index
    %c0_3 = arith.constant 0 : index
    %c0_4 = arith.constant 0 : index
    %1 = vector.load %arg2[%c0_1, %c0_2, %c0_3, %c0_4] : memref<1x4x64x1600xbf16, #tpu.memory_space<vmem>>, vector<1x1x64x1600xbf16>
    %2 = vector.shape_cast %1 : vector<1x1x64x1600xbf16> to vector<64x1600xbf16>
    %cst = arith.constant dense<0.000000e+00> : vector<64x128xf32>
    %3 = tpu.matmul %2, %0, %cst {dimension_numbers = #tpu.dot_dimension_numbers<[1], [0], [0], [1], [0, 0, 1, 1], [], []>} : vector<64x1600xbf16>, vector<1600x128xbf16>, vector<64x128xf32> -> vector<64x128xf32>
    %c0_5 = arith.constant 0 : index
    %c1 = arith.constant 1 : index
    %c0_6 = arith.constant 0 : index
    %c0_7 = arith.constant 0 : index
    %4 = vector.load %arg2[%c0_5, %c1, %c0_6, %c0_7] : memref<1x4x64x1600xbf16, #tpu.memory_space<vmem>>, vector<1x1x64x1600xbf16>
    %5 = vector.shape_cast %4 : vector<1x1x64x1600xbf16> to vector<64x1600xbf16>
    %cst_8 = arith.constant dense<0.000000e+00> : vector<64x128xf32>
    %6 = tpu.matmul %5, %0, %cst_8 {dimension_numbers = #tpu.dot_dimension_numbers<[1], [0], [0], [1], [0, 0, 1, 1], [], []>} : vector<64x1600xbf16>, vector<1600x128xbf16>, vector<64x128xf32> -> vector<64x128xf32>
    %7 = arith.maximumf %3, %6 : vector<64x128xf32>
    %c0_9 = arith.constant 0 : index
    %c2 = arith.constant 2 : index
    %c0_10 = arith.constant 0 : index
    %c0_11 = arith.constant 0 : index
    %8 = vector.load %arg2[%c0_9, %c2, %c0_10, %c0_11] : memref<1x4x64x1600xbf16, #tpu.memory_space<vmem>>, vector<1x1x64x1600xbf16>
    %9 = vector.shape_cast %8 : vector<1x1x64x1600xbf16> to vector<64x1600xbf16>
    %cst_12 = arith.constant dense<0.000000e+00> : vector<64x128xf32>
    %10 = tpu.matmul %9, %0, %cst_12 {dimension_numbers = #tpu.dot_dimension_numbers<[1], [0], [0], [1], [0, 0, 1, 1], [], []>} : vector<64x1600xbf16>, vector<1600x128xbf16>, vector<64x128xf32> -> vector<64x128xf32>
    %11 = arith.maximumf %7, %10 : vector<64x128xf32>
    %c0_13 = arith.constant 0 : index
    %c3 = arith.constant 3 : index
    %c0_14 = arith.constant 0 : index
    %c0_15 = arith.constant 0 : index
    %12 = vector.load %arg2[%c0_13, %c3, %c0_14, %c0_15] : memref<1x4x64x1600xbf16, #tpu.memory_space<vmem>>, vector<1x1x64x1600xbf16>
    %13 = vector.shape_cast %12 : vector<1x1x64x1600xbf16> to vector<64x1600xbf16>
    %cst_16 = arith.constant dense<0.000000e+00> : vector<64x128xf32>
    %14 = tpu.matmul %13, %0, %cst_16 {dimension_numbers = #tpu.dot_dimension_numbers<[1], [0], [0], [1], [0, 0, 1, 1], [], []>} : vector<64x1600xbf16>, vector<1600x128xbf16>, vector<64x128xf32> -> vector<64x128xf32>
    %15 = arith.maximumf %11, %14 : vector<64x128xf32>
    %c0_17 = arith.constant 0 : index
    %c0_18 = arith.constant 0 : index
    %16 = vector.load %arg4[%c0_17, %c0_18] : memref<1x128xf32, #tpu.memory_space<vmem>>, vector<1x128xf32>
    %17 = vector.broadcast %16 : vector<1x128xf32> to vector<64x128xf32>
    %18 = arith.addf %15, %17 : vector<64x128xf32>
    %cst_19 = arith.constant 0.000000e+00 : f32
    %19 = vector.broadcast %cst_19 : f32 to vector<64x128xf32>
    %20 = arith.maximumf %18, %19 : vector<64x128xf32>
    %c0_20 = arith.constant 0 : index
    %c0_21 = arith.constant 0 : index
    %c0_22 = arith.constant 0 : index
    %21 = vector.load %arg5[%c0_20, %c0_21, %c0_22] : memref<1x64x128xf32, #tpu.memory_space<vmem>>, vector<1x64x128xf32>
    %22 = vector.shape_cast %21 : vector<1x64x128xf32> to vector<64x128xf32>
    %23 = vector.shape_cast %20 : vector<64x128xf32> to vector<1x64x128xf32>
    tpu.vector_store %arg5[%c0_20, %c0_21, %c0_22], %23 {strides = array<i32>} : memref<1x64x128xf32, #tpu.memory_space<vmem>>, vector<1x64x128xf32>,
    return
  }
  func.func @transform_0(%arg0: i32, %arg1: i32) -> (i32, i32, i32, i32) {
    %c0_i32 = arith.constant 0 : i32
    %c0_i32_0 = arith.constant 0 : i32
    %c0_i32_1 = arith.constant 0 : i32
    return %arg0, %c0_i32, %arg1, %c0_i32_0 : i32, i32, i32, i32
  }
  func.func @transform_1(%arg0: i32, %arg1: i32) -> (i32, i32) {
    %c0_i32 = arith.constant 0 : i32
    %c0_i32_0 = arith.constant 0 : i32
    %c0_i32_1 = arith.constant 0 : i32
    return %c0_i32, %c0_i32_0 : i32, i32
  }
  func.func @transform_2(%arg0: i32, %arg1: i32) -> (i32, i32) {
    %c0_i32 = arith.constant 0 : i32
    %c0_i32_0 = arith.constant 0 : i32
    %c0_i32_1 = arith.constant 0 : i32
    return %c0_i32, %c0_i32_0 : i32, i32
  }
  func.func @transform_3(%arg0: i32, %arg1: i32) -> (i32, i32, i32) {
    %c0_i32 = arith.constant 0 : i32
    %c0_i32_0 = arith.constant 0 : i32
    return %arg0, %arg1, %c0_i32 : i32, i32, i32
  }
}

module attributes {stable_mosaic.version = 11 : i64} {
  func.func @fc_stack_kernel(%arg0: i32, %arg1: memref<2x2048xbf16, #tpu.memory_space<vmem>>, %arg2: memref<2048x128xbf16, #tpu.memory_space<vmem>>, %arg3: memref<1x128xf32, #tpu.memory_space<vmem>>, %arg4: memref<128x120xbf16, #tpu.memory_space<vmem>>, %arg5: memref<1x120xf32, #tpu.memory_space<vmem>>, %arg6: memref<120x84xbf16, #tpu.memory_space<vmem>>, %arg7: memref<1x84xf32, #tpu.memory_space<vmem>>, %arg8: memref<84x10xbf16, #tpu.memory_space<vmem>>, %arg9: memref<1x10xf32, #tpu.memory_space<vmem>>, %arg10: memref<2x10xf32, #tpu.memory_space<vmem>>, %arg11: memref<2x128xf32, #tpu.memory_space<vmem>>) attributes {dimension_semantics = [#tpu.dimension_semantics<arbitrary>], iteration_bounds = array<i64: 4>, scalar_prefetch = 0 : i64, scratch_operands = 1 : i64, tpu.core_type = #tpu.core_type<tc>, window_params = [{transform_indices = @transform_0, window_bounds = array<i64: 2, 2048>}, {transform_indices = @transform_1, window_bounds = array<i64: 2048, 128>}, {pipeline_mode = #tpu.pipeline_mode<synchronous>, transform_indices = @transform_2, window_bounds = array<i64: 1, 128>}, {pipeline_mode = #tpu.pipeline_mode<synchronous>, transform_indices = @transform_3, window_bounds = array<i64: 128, 120>}, {pipeline_mode = #tpu.pipeline_mode<synchronous>, transform_indices = @transform_4, window_bounds = array<i64: 1, 120>}, {pipeline_mode = #tpu.pipeline_mode<synchronous>, transform_indices = @transform_5, window_bounds = array<i64: 120, 84>}, {pipeline_mode = #tpu.pipeline_mode<synchronous>, transform_indices = @transform_6, window_bounds = array<i64: 1, 84>}, {pipeline_mode = #tpu.pipeline_mode<synchronous>, transform_indices = @transform_7, window_bounds = array<i64: 84, 10>}, {pipeline_mode = #tpu.pipeline_mode<synchronous>, transform_indices = @transform_8, window_bounds = array<i64: 1, 10>}, {pipeline_mode = #tpu.pipeline_mode<synchronous>, transform_indices = @transform_9, window_bounds = array<i64: 2, 10>}]} {
    %c0_i32 = arith.constant 0 : i32
    %0 = arith.cmpi eq, %arg0, %c0_i32 : i32
    %1 = arith.extui %0 : i1 to i32
    %c0_i32_0 = arith.constant 0 : i32
    %2 = arith.cmpi ne, %1, %c0_i32_0 : i32
    scf.if %2 {
      %cst_9 = arith.constant 0.000000e+00 : f32
      %12 = vector.broadcast %cst_9 : f32 to vector<2x128xf32>
      %c0_10 = arith.constant 0 : index
      %c0_11 = arith.constant 0 : index
      %13 = vector.load %arg11[%c0_10, %c0_11] : memref<2x128xf32, #tpu.memory_space<vmem>>, vector<2x128xf32>
      tpu.vector_store %arg11[%c0_10, %c0_11], %12 {strides = array<i32>} : memref<2x128xf32, #tpu.memory_space<vmem>>, vector<2x128xf32>,
    } else {
    }
    %c0 = arith.constant 0 : index
    %c0_1 = arith.constant 0 : index
    %3 = vector.load %arg11[%c0, %c0_1] : memref<2x128xf32, #tpu.memory_space<vmem>>, vector<2x128xf32>
    %c0_2 = arith.constant 0 : index
    %c0_3 = arith.constant 0 : index
    %4 = vector.load %arg1[%c0_2, %c0_3] : memref<2x2048xbf16, #tpu.memory_space<vmem>>, vector<2x2048xbf16>
    %c0_4 = arith.constant 0 : index
    %c0_5 = arith.constant 0 : index
    %5 = vector.load %arg2[%c0_4, %c0_5] : memref<2048x128xbf16, #tpu.memory_space<vmem>>, vector<2048x128xbf16>
    %cst = arith.constant dense<0.000000e+00> : vector<2x128xf32>
    %6 = tpu.matmul %4, %5, %cst {dimension_numbers = #tpu.dot_dimension_numbers<[1], [0], [0], [1], [0, 0, 1, 1], [], []>} : vector<2x2048xbf16>, vector<2048x128xbf16>, vector<2x128xf32> -> vector<2x128xf32>
    %7 = arith.addf %3, %6 : vector<2x128xf32>
    %c0_6 = arith.constant 0 : index
    %c0_7 = arith.constant 0 : index
    %8 = vector.load %arg11[%c0_6, %c0_7] : memref<2x128xf32, #tpu.memory_space<vmem>>, vector<2x128xf32>
    tpu.vector_store %arg11[%c0_6, %c0_7], %7 {strides = array<i32>} : memref<2x128xf32, #tpu.memory_space<vmem>>, vector<2x128xf32>,
    %c3_i32 = arith.constant 3 : i32
    %9 = arith.cmpi eq, %arg0, %c3_i32 : i32
    %10 = arith.extui %9 : i1 to i32
    %c0_i32_8 = arith.constant 0 : i32
    %11 = arith.cmpi ne, %10, %c0_i32_8 : i32
    scf.if %11 {
      %c0_9 = arith.constant 0 : index
      %c0_10 = arith.constant 0 : index
      %12 = vector.load %arg11[%c0_9, %c0_10] : memref<2x128xf32, #tpu.memory_space<vmem>>, vector<2x128xf32>
      %c0_11 = arith.constant 0 : index
      %c0_12 = arith.constant 0 : index
      %13 = vector.load %arg3[%c0_11, %c0_12] : memref<1x128xf32, #tpu.memory_space<vmem>>, vector<1x128xf32>
      %14 = vector.broadcast %13 : vector<1x128xf32> to vector<2x128xf32>
      %15 = arith.addf %12, %14 : vector<2x128xf32>
      %cst_13 = arith.constant 0.000000e+00 : f32
      %16 = vector.broadcast %cst_13 : f32 to vector<2x128xf32>
      %17 = arith.maximumf %15, %16 : vector<2x128xf32>
      %18 = arith.truncf %17 : vector<2x128xf32> to vector<2x128xbf16>
      %c0_14 = arith.constant 0 : index
      %c0_15 = arith.constant 0 : index
      %19 = vector.load %arg4[%c0_14, %c0_15] : memref<128x120xbf16, #tpu.memory_space<vmem>>, vector<128x120xbf16>
      %cst_16 = arith.constant dense<0.000000e+00> : vector<2x120xf32>
      %20 = tpu.matmul %18, %19, %cst_16 {dimension_numbers = #tpu.dot_dimension_numbers<[1], [0], [0], [1], [0, 0, 1, 1], [], []>} : vector<2x128xbf16>, vector<128x120xbf16>, vector<2x120xf32> -> vector<2x120xf32>
      %c0_17 = arith.constant 0 : index
      %c0_18 = arith.constant 0 : index
      %21 = vector.load %arg5[%c0_17, %c0_18] : memref<1x120xf32, #tpu.memory_space<vmem>>, vector<1x120xf32>
      %22 = vector.broadcast %21 : vector<1x120xf32> to vector<2x120xf32>
      %23 = arith.addf %20, %22 : vector<2x120xf32>
      %cst_19 = arith.constant 0.000000e+00 : f32
      %24 = vector.broadcast %cst_19 : f32 to vector<2x120xf32>
      %25 = arith.maximumf %23, %24 : vector<2x120xf32>
      %26 = arith.truncf %25 : vector<2x120xf32> to vector<2x120xbf16>
      %c0_20 = arith.constant 0 : index
      %c0_21 = arith.constant 0 : index
      %27 = vector.load %arg6[%c0_20, %c0_21] : memref<120x84xbf16, #tpu.memory_space<vmem>>, vector<120x84xbf16>
      %cst_22 = arith.constant dense<0.000000e+00> : vector<2x84xf32>
      %28 = tpu.matmul %26, %27, %cst_22 {dimension_numbers = #tpu.dot_dimension_numbers<[1], [0], [0], [1], [0, 0, 1, 1], [], []>} : vector<2x120xbf16>, vector<120x84xbf16>, vector<2x84xf32> -> vector<2x84xf32>
      %c0_23 = arith.constant 0 : index
      %c0_24 = arith.constant 0 : index
      %29 = vector.load %arg7[%c0_23, %c0_24] : memref<1x84xf32, #tpu.memory_space<vmem>>, vector<1x84xf32>
      %30 = vector.broadcast %29 : vector<1x84xf32> to vector<2x84xf32>
      %31 = arith.addf %28, %30 : vector<2x84xf32>
      %cst_25 = arith.constant 0.000000e+00 : f32
      %32 = vector.broadcast %cst_25 : f32 to vector<2x84xf32>
      %33 = arith.maximumf %31, %32 : vector<2x84xf32>
      %34 = arith.truncf %33 : vector<2x84xf32> to vector<2x84xbf16>
      %c0_26 = arith.constant 0 : index
      %c0_27 = arith.constant 0 : index
      %35 = vector.load %arg8[%c0_26, %c0_27] : memref<84x10xbf16, #tpu.memory_space<vmem>>, vector<84x10xbf16>
      %cst_28 = arith.constant dense<0.000000e+00> : vector<2x10xf32>
      %36 = tpu.matmul %34, %35, %cst_28 {dimension_numbers = #tpu.dot_dimension_numbers<[1], [0], [0], [1], [0, 0, 1, 1], [], []>} : vector<2x84xbf16>, vector<84x10xbf16>, vector<2x10xf32> -> vector<2x10xf32>
      %c0_29 = arith.constant 0 : index
      %c0_30 = arith.constant 0 : index
      %37 = vector.load %arg9[%c0_29, %c0_30] : memref<1x10xf32, #tpu.memory_space<vmem>>, vector<1x10xf32>
      %38 = vector.broadcast %37 : vector<1x10xf32> to vector<2x10xf32>
      %39 = arith.addf %36, %38 : vector<2x10xf32>
      %c0_31 = arith.constant 0 : index
      %c0_32 = arith.constant 0 : index
      %40 = vector.load %arg10[%c0_31, %c0_32] : memref<2x10xf32, #tpu.memory_space<vmem>>, vector<2x10xf32>
      tpu.vector_store %arg10[%c0_31, %c0_32], %39 {strides = array<i32>} : memref<2x10xf32, #tpu.memory_space<vmem>>, vector<2x10xf32>,
    } else {
    }
    return
  }
  func.func @transform_0(%arg0: i32) -> (i32, i32) {
    %c0_i32 = arith.constant 0 : i32
    %c0_i32_0 = arith.constant 0 : i32
    return %c0_i32, %arg0 : i32, i32
  }
  func.func @transform_1(%arg0: i32) -> (i32, i32) {
    %c0_i32 = arith.constant 0 : i32
    %c0_i32_0 = arith.constant 0 : i32
    return %arg0, %c0_i32 : i32, i32
  }
  func.func @transform_2(%arg0: i32) -> (i32, i32) {
    %c0_i32 = arith.constant 0 : i32
    %c0_i32_0 = arith.constant 0 : i32
    %c0_i32_1 = arith.constant 0 : i32
    return %c0_i32, %c0_i32_0 : i32, i32
  }
  func.func @transform_3(%arg0: i32) -> (i32, i32) {
    %c0_i32 = arith.constant 0 : i32
    %c0_i32_0 = arith.constant 0 : i32
    %c0_i32_1 = arith.constant 0 : i32
    return %c0_i32, %c0_i32_0 : i32, i32
  }
  func.func @transform_4(%arg0: i32) -> (i32, i32) {
    %c0_i32 = arith.constant 0 : i32
    %c0_i32_0 = arith.constant 0 : i32
    %c0_i32_1 = arith.constant 0 : i32
    return %c0_i32, %c0_i32_0 : i32, i32
  }
  func.func @transform_5(%arg0: i32) -> (i32, i32) {
    %c0_i32 = arith.constant 0 : i32
    %c0_i32_0 = arith.constant 0 : i32
    %c0_i32_1 = arith.constant 0 : i32
    return %c0_i32, %c0_i32_0 : i32, i32
  }
  func.func @transform_6(%arg0: i32) -> (i32, i32) {
    %c0_i32 = arith.constant 0 : i32
    %c0_i32_0 = arith.constant 0 : i32
    %c0_i32_1 = arith.constant 0 : i32
    return %c0_i32, %c0_i32_0 : i32, i32
  }
  func.func @transform_7(%arg0: i32) -> (i32, i32) {
    %c0_i32 = arith.constant 0 : i32
    %c0_i32_0 = arith.constant 0 : i32
    %c0_i32_1 = arith.constant 0 : i32
    return %c0_i32, %c0_i32_0 : i32, i32
  }
  func.func @transform_8(%arg0: i32) -> (i32, i32) {
    %c0_i32 = arith.constant 0 : i32
    %c0_i32_0 = arith.constant 0 : i32
    %c0_i32_1 = arith.constant 0 : i32
    return %c0_i32, %c0_i32_0 : i32, i32
  }
  func.func @transform_9(%arg0: i32) -> (i32, i32) {
    %c0_i32 = arith.constant 0 : i32
    %c0_i32_0 = arith.constant 0 : i32
    %c0_i32_1 = arith.constant 0 : i32
    return %c0_i32, %c0_i32_0 : i32, i32
  }
}

</mosaic_0001>

<llo_original>
// kernel: modified_forward.4
$region0: #{modified_forward.4}
  #allocation0 [shape = 'u32[]', space=smem, size = 0x4, offset = 0x4, fixed_abs, tag = 'smem constant byte address 0x4 - core index']
  #allocation1 [shape = 'u32[144,128]{1,0:T(1,128)}', space=vmem, size = 0x12000, scoped, tag = 'internal scratch']
  %s0 = inlined_call_operand.vmem [shape: bf16[2,4,1024,75], index: 0, kind: input, shape index: {}]
  %s1 = inlined_call_operand.vmem [shape: bf16[75,16], index: 1, kind: input, shape index: {}]
  %s2 = inlined_call_operand.vmem [shape: f32[1,16], index: 2, kind: input, shape index: {}]
  %s3 = inlined_call_operand.vmem [shape: f32[2,1024,16], index: 3, kind: output, shape index: {}]
  %s4 = sld [smem:[#allocation0]]
  $region86: #{modified_forward.4} parent=0
    _
  %s6 = ssub.s32 1, %s4
  %s7 = scalar_select 0, %s6, %s4
  $region1: #{modified_forward.4} parent=0
    #allocation2 [shape = 'u8[524288]{0}', space=vmem, size = 0x80000, scoped, tag = 'input window, operand 0']
    loop: start=0, step=1, limit=10
    $region2: #{modified_forward.4} parent=1 // loop_pre_header
      _
    $region3: #{modified_forward.4} parent=1 // loop_header
      %s9 = sphi 0, %s13
      %p10 = scmp.ge.s32.totalorder %s9, 10
      %s16 = sphi 0, %s28
      %s17 = sphi 0, %s24
      %s18 = sphi 0, %s16
      %s19 = sphi 0, %s17
      %s20 = sphi 0, %s18
      %s21 = sphi 0, %s19
      %s33 = sphi 0, %s35
      %s36 = sphi 0, %s33
      %s37 = sphi 0, %s36
      %s53 = sphi 0, %s37
      %s57 = sphi 0, %s57
      %s59 = sphi 0, %s57
      %s60 = sphi 0, %s59
      %s74 = sphi 0, %s60
      %s78 = sphi 0, %s78
      %s80 = sphi 0, %s78
      %s81 = sphi 0, %s80
      %s95 = sphi 0, %s81
      %s103 = sphi 0, %s105
      %s106 = sphi 0, %s103
      %s107 = sphi 0, %s106
      %s123 = sphi 0, %s107
    $region4: #{modified_forward.4} parent=1 // loop_header_branch
      %12 = sbr.rel (%p10) target = $region8
    $region5: #{modified_forward.4} parent=1 // loop_body
      %s14 = ssub.s32 %s9, 1
      %s15 = ssub.s32 %s9, 2
      %s22 = sadd.s32 1, %s17
      %p23 = scmp.ge.s32.totalorder %s22, 4
      %s24 = scalar_select %p23, 0, %s22
      %s25 = sadd.s32 1, %s16
      %s26 = scalar_select %p23, %s25, %s16
      %p27 = scmp.ge.s32.totalorder %s26, 2
      %s28 = scalar_select %p27, 0, %s26
      %s29 = ssub.s32 %s16, %s28
      %s30 = ssub.s32 %s17, %s24
      %s31 = sor.u32 %s29, %s30
      %p32 = scmp.eq.s32.totalorder %s31, 0
      %s34 = sadd.s32 %s33, 1
      %s35 = scalar_select %p32, %s33, %s34
      %p38 = pneg %p32
      %p39 = scmp.eq.s32.totalorder %s9, 7
      %p40 = por %p38, %p39
      %p41 = scmp.ne.s32.totalorder %s33, %s36
      %p42 = scmp.eq.s32.totalorder %s9, 0
      %p43 = por %p41, %p42
      %p44 = scmp.ne.s32.totalorder %s33, %s36
      %p45 = scmp.eq.s32.totalorder %s14, 7
      %p46 = por %p44, %p45
      %p47 = scmp.ne.s32.totalorder %s36, %s37
      %p48 = scmp.eq.s32.totalorder %s14, 0
      %p49 = por %p47, %p48
      %p50 = scmp.ne.s32.totalorder %s36, %s37
      %p51 = scmp.eq.s32.totalorder %s15, 7
      %p52 = por %p50, %p51
      %p54 = scmp.ne.s32.totalorder %s37, %s53
      %p55 = scmp.eq.s32.totalorder %s15, 0
      %p56 = por %p54, %p55
      %s58 = sadd.s32 %s57, 1
      %p61 = scmp.eq.s32.totalorder %s9, 7
      %p62 = scmp.ne.s32.totalorder %s57, %s59
      %p63 = scmp.eq.s32.totalorder %s9, 0
      %p64 = por %p62, %p63
      %p65 = scmp.ne.s32.totalorder %s57, %s59
      %p66 = scmp.eq.s32.totalorder %s14, 7
      %p67 = por %p65, %p66
      %p68 = scmp.ne.s32.totalorder %s59, %s60
      %p69 = scmp.eq.s32.totalorder %s14, 0
      %p70 = por %p68, %p69
      %p71 = scmp.ne.s32.totalorder %s59, %s60
      %p72 = scmp.eq.s32.totalorder %s15, 7
      %p73 = por %p71, %p72
      %p75 = scmp.ne.s32.totalorder %s60, %s74
      %p76 = scmp.eq.s32.totalorder %s15, 0
      %p77 = por %p75, %p76
      %s79 = sadd.s32 %s78, 1
      %p82 = scmp.eq.s32.totalorder %s9, 7
      %p83 = scmp.ne.s32.totalorder %s78, %s80
      %p84 = scmp.eq.s32.totalorder %s9, 0
      %p85 = por %p83, %p84
      %p86 = scmp.ne.s32.totalorder %s78, %s80
      %p87 = scmp.eq.s32.totalorder %s14, 7
      %p88 = por %p86, %p87
      %p89 = scmp.ne.s32.totalorder %s80, %s81
      %p90 = scmp.eq.s32.totalorder %s14, 0
      %p91 = por %p89, %p90
      %p92 = scmp.ne.s32.totalorder %s80, %s81
      %p93 = scmp.eq.s32.totalorder %s15, 7
      %p94 = por %p92, %p93
      %p96 = scmp.ne.s32.totalorder %s81, %s95
      %p97 = scmp.eq.s32.totalorder %s15, 0
      %p98 = por %p96, %p97
      %s99 = ssub.s32 %s16, %s28
      %s100 = ssub.s32 %s17, %s24
      %s101 = sor.u32 %s99, %s100
      %p102 = scmp.eq.s32.totalorder %s101, 0
      %s104 = sadd.s32 %s103, 1
      %s105 = scalar_select %p102, %s103, %s104
      %p108 = pneg %p102
      %p109 = scmp.eq.s32.totalorder %s9, 7
      %p110 = por %p108, %p109
      %p111 = scmp.ne.s32.totalorder %s103, %s106
      %p112 = scmp.eq.s32.totalorder %s9, 0
      %p113 = por %p111, %p112
      %p114 = scmp.ne.s32.totalorder %s103, %s106
      %p115 = scmp.eq.s32.totalorder %s14, 7
      %p116 = por %p114, %p115
      %p117 = scmp.ne.s32.totalorder %s106, %s107
      %p118 = scmp.eq.s32.totalorder %s14, 0
      %p119 = por %p117, %p118
      %p120 = scmp.ne.s32.totalorder %s106, %s107
      %p121 = scmp.eq.s32.totalorder %s15, 7
      %p122 = por %p120, %p121
      %p124 = scmp.ne.s32.totalorder %s107, %s123
      %p125 = scmp.eq.s32.totalorder %s15, 0
      %p126 = por %p124, %p125
      %p127 = scmp.le.s32.totalorder 1, %s9
      %p128 = scmp.lt.s32.totalorder %s9, 9
      %p129 = pnand %p127, %p128
      %p130 = pneg %p129
      // Predicated region
      $region9: #{modified_forward.4} parent=5 // pred_check
        _
      $region10: #{modified_forward.4} parent=5 // pred_check_branch
        %132 = sbr.rel (%p129) target = $region12
      $region11: #{modified_forward.4} parent=5 // pred_region
        %s133 = ssub.s32 %s9, 1
        // Predicated region
        $region13: #{modified_forward.4} parent=11 // pred_check
          %p134 = pneg %p70
        $region14: #{modified_forward.4} parent=11 // pred_check_branch
          %136 = sbr.rel (%p134) target = $region16
        $region15: #{modified_forward.4} parent=11 // pred_region
          _
        $region16: #{modified_forward.4} parent=11 // pred_fallthru
          _
        // Predicated region
        $region17: #{modified_forward.4} parent=11 // pred_check
          %p137 = pneg %p91
        $region18: #{modified_forward.4} parent=11 // pred_check_branch
          %139 = sbr.rel (%p137) target = $region20
        $region19: #{modified_forward.4} parent=11 // pred_region
          _
        $region20: #{modified_forward.4} parent=11 // pred_fallthru
          _
      $region12: #{modified_forward.4} parent=5 // pred_fallthru
        _
      %p140 = scmp.lt.s32.totalorder %s9, 8
      // Predicated region
      $region21: #{modified_forward.4} parent=5 // pred_check
        %p141 = pneg %p140
      $region22: #{modified_forward.4} parent=5 // pred_check_branch
        %143 = sbr.rel (%p141) target = $region24
      $region23: #{modified_forward.4} parent=5 // pred_region
        // Predicated region
        $region25: #{modified_forward.4} parent=23 // pred_check
          %p144 = pneg %p43
        $region26: #{modified_forward.4} parent=23 // pred_check_branch
          %146 = sbr.rel (%p144) target = $region28
        $region27: #{modified_forward.4} parent=23 // pred_region
          %s147 = sand.u32 %s33, 1
          %s148 = sand.u32 %s33, 1
          %s149 = smul.addr %s148, 512
          %s150 = scalar_lea.vmem [#allocation2], %s149
          %s151 = smul.u32 32, %s17
          %s152 = smul.addr %s16, 512
          %s153 = sadd.s32 %s151, %s152
          %s154 = smul.addr %s153, 4
          %s155 = scalar_lea.vmem %s0, %s154
          // Predicated region
          $region29: #{modified_forward.4} parent=27 // pred_check
            _
          $region30: #{modified_forward.4} parent=27 // pred_check_branch
            %157 = sbr.rel (0) target = $region32
          $region31: #{modified_forward.4} parent=27 // pred_region
            // Predicated region
            $region33: #{modified_forward.4} parent=31 // pred_check
              _
            $region34: #{modified_forward.4} parent=31 // pred_check_branch
              %159 = sbr.rel target = $region36
            $region35: #{modified_forward.4} parent=31 // pred_region
              // Predicated region
              $region48: #{modified_forward.4} parent=35 // pred_check
                _
              $region49: #{modified_forward.4} parent=35 // pred_check_branch
                %428 = sbr.rel (0) target = $region51
              $region50: #{modified_forward.4} parent=35 // pred_region
                loop: start=0, step=1, limit=1
                $region52: #{modified_forward.4} parent=50 // loop_pre_header
                  _
                $region53: #{modified_forward.4} parent=50 // loop_header
                  %s430 = sphi 0, %s434
                  %p431 = scmp.ge.s32.totalorder %s430, 1
                  %s435 = sphi %s155, %s155
                  %s436 = sphi %s150, %s150
                $region54: #{modified_forward.4} parent=50 // loop_header_branch
                  %433 = sbr.rel (%p431) target = $region58
                $region55: #{modified_forward.4} parent=50 // loop_body
                  _
                $region56: #{modified_forward.4} parent=50 // loop_footer
                  %s434 = sadd.s32 1, %s430
                $region57: #{modified_forward.4} parent=50 // loop_footer_branch
                  %429 = sbr.rel target = $region53
                $region58: #{modified_forward.4} parent=50 // loop_exit
                  _
                loop: start=0, step=1, limit=1
                $region59: #{modified_forward.4} parent=50 // loop_pre_header
                  _
                $region60: #{modified_forward.4} parent=50 // loop_header
                  %s439 = sphi 0, %s443
                  %p440 = scmp.ge.s32.totalorder %s439, 1
                  %s444 = sphi %s155, %s155
                  %s445 = sphi %s150, %s150
                $region61: #{modified_forward.4} parent=50 // loop_header_branch
                  %442 = sbr.rel (%p440) target = $region65
                $region62: #{modified_forward.4} parent=50 // loop_body
                  %v446 = vld [vmem:[%s444] sm:$0xf]
                  %447 = vst [vmem:[%s445] sm:$0xf] %v446
                  %v448 = vld [vmem:[%s444 + $0x4] sm:$0xf]
                  %449 = vst [vmem:[%s445 + $0x4] sm:$0xf] %v448
                  %v450 = vld [vmem:[%s444 + $0x8] sm:$0xf]
                  %451 = vst [vmem:[%s445 + $0x8] sm:$0xf] %v450
                  %v452 = vld [vmem:[%s444 + $0xc] sm:$0xf]
                  %453 = vst [vmem:[%s445 + $0xc] sm:$0xf] %v452
                  %v454 = vld [vmem:[%s444 + $0x10] sm:$0xf]
                  %455 = vst [vmem:[%s445 + $0x10] sm:$0xf] %v454
                  %v456 = vld [vmem:[%s444 + $0x14] sm:$0xf]
                  %457 = vst [vmem:[%s445 + $0x14] sm:$0xf] %v456
                  %v458 = vld [vmem:[%s444 + $0x18] sm:$0xf]
                  %459 = vst [vmem:[%s445 + $0x18] sm:$0xf] %v458
                  %v460 = vld [vmem:[%s444 + $0x1c] sm:$0xf]
                  %461 = vst [vmem:[%s445 + $0x1c] sm:$0xf] %v460
                  %v462 = vld [vmem:[%s444 + $0x20] sm:$0xf]
                  %463 = vst [vmem:[%s445 + $0x20] sm:$0xf] %v462
                  %v464 = vld [vmem:[%s444 + $0x24] sm:$0xf]
                  %465 = vst [vmem:[%s445 + $0x24] sm:$0xf] %v464
                  %v466 = vld [vmem:[%s444 + $0x28] sm:$0xf]
                  %467 = vst [vmem:[%s445 + $0x28] sm:$0xf] %v466
                  %v468 = vld [vmem:[%s444 + $0x2c] sm:$0xf]
                  %469 = vst [vmem:[%s445 + $0x2c] sm:$0xf] %v468
                  %v470 = vld [vmem:[%s444 + $0x30] sm:$0xf]
                  %471 = vst [vmem:[%s445 + $0x30] sm:$0xf] %v470
                  %v472 = vld [vmem:[%s444 + $0x34] sm:$0xf]
                  %473 = vst [vmem:[%s445 + $0x34] sm:$0xf] %v472
                  %v474 = vld [vmem:[%s444 + $0x38] sm:$0xf]
                  %475 = vst [vmem:[%s445 + $0x38] sm:$0xf] %v474
                  %v476 = vld [vmem:[%s444 + $0x3c] sm:$0xf]
                  %477 = vst [vmem:[%s445 + $0x3c] sm:$0xf] %v476
                  %v478 = vld [vmem:[%s444 + $0x40] sm:$0xf]
                  %479 = vst [vmem:[%s445 + $0x40] sm:$0xf] %v478
                  %v480 = vld [vmem:[%s444 + $0x44] sm:$0xf]
                  %481 = vst [vmem:[%s445 + $0x44] sm:$0xf] %v480
                  %v482 = vld [vmem:[%s444 + $0x48] sm:$0xf]
                  %483 = vst [vmem:[%s445 + $0x48] sm:$0xf] %v482
                  %v484 = vld [vmem:[%s444 + $0x4c] sm:$0xf]
                  %485 = vst [vmem:[%s445 + $0x4c] sm:$0xf] %v484
                  %v486 = vld [vmem:[%s444 + $0x50] sm:$0xf]
                  %487 = vst [vmem:[%s445 + $0x50] sm:$0xf] %v486
                  %v488 = vld [vmem:[%s444 + $0x54] sm:$0xf]
                  %489 = vst [vmem:[%s445 + $0x54] sm:$0xf] %v488
                  %v490 = vld [vmem:[%s444 + $0x58] sm:$0xf]
                  %491 = vst [vmem:[%s445 + $0x58] sm:$0xf] %v490
                  %v492 = vld [vmem:[%s444 + $0x5c] sm:$0xf]
                  %493 = vst [vmem:[%s445 + $0x5c] sm:$0xf] %v492
                  %v494 = vld [vmem:[%s444 + $0x60] sm:$0xf]
                  %495 = vst [vmem:[%s445 + $0x60] sm:$0xf] %v494
                  %v496 = vld [vmem:[%s444 + $0x64] sm:$0xf]
                  %497 = vst [vmem:[%s445 + $0x64] sm:$0xf] %v496
                  %v498 = vld [vmem:[%s444 + $0x68] sm:$0xf]
                  %499 = vst [vmem:[%s445 + $0x68] sm:$0xf] %v498
                  %v500 = vld [vmem:[%s444 + $0x6c] sm:$0xf]
                  %501 = vst [vmem:[%s445 + $0x6c] sm:$0xf] %v500
                  %v502 = vld [vmem:[%s444 + $0x70] sm:$0xf]
                  %503 = vst [vmem:[%s445 + $0x70] sm:$0xf] %v502
                  %v504 = vld [vmem:[%s444 + $0x74] sm:$0xf]
                  %505 = vst [vmem:[%s445 + $0x74] sm:$0xf] %v504
                  %v506 = vld [vmem:[%s444 + $0x78] sm:$0xf]
                  %507 = vst [vmem:[%s445 + $0x78] sm:$0xf] %v506
                  %v508 = vld [vmem:[%s444 + $0x7c] sm:$0xf]
                  %509 = vst [vmem:[%s445 + $0x7c] sm:$0xf] %v508
                  %v510 = vld [vmem:[%s444 + $0x200] sm:$0xf]
                  %511 = vst [vmem:[%s445 + $0x80] sm:$0xf] %v510
                  %v512 = vld [vmem:[%s444 + $0x204] sm:$0xf]
                  %513 = vst [vmem:[%s445 + $0x84] sm:$0xf] %v512
                  %v514 = vld [vmem:[%s444 + $0x208] sm:$0xf]
                  %515 = vst [vmem:[%s445 + $0x88] sm:$0xf] %v514
                  %v516 = vld [vmem:[%s444 + $0x20c] sm:$0xf]
                  %517 = vst [vmem:[%s445 + $0x8c] sm:$0xf] %v516
                  %v518 = vld [vmem:[%s444 + $0x210] sm:$0xf]
                  %519 = vst [vmem:[%s445 + $0x90] sm:$0xf] %v518
                  %v520 = vld [vmem:[%s444 + $0x214] sm:$0xf]
                  %521 = vst [vmem:[%s445 + $0x94] sm:$0xf] %v520
                  %v522 = vld [vmem:[%s444 + $0x218] sm:$0xf]
                  %523 = vst [vmem:[%s445 + $0x98] sm:$0xf] %v522
                  %v524 = vld [vmem:[%s444 + $0x21c] sm:$0xf]
                  %525 = vst [vmem:[%s445 + $0x9c] sm:$0xf] %v524
                  %v526 = vld [vmem:[%s444 + $0x220] sm:$0xf]
                  %527 = vst [vmem:[%s445 + $0xa0] sm:$0xf] %v526
                  %v528 = vld [vmem:[%s444 + $0x224] sm:$0xf]
                  %529 = vst [vmem:[%s445 + $0xa4] sm:$0xf] %v528
                  %v530 = vld [vmem:[%s444 + $0x228] sm:$0xf]
                  %531 = vst [vmem:[%s445 + $0xa8] sm:$0xf] %v530
                  %v532 = vld [vmem:[%s444 + $0x22c] sm:$0xf]
                  %533 = vst [vmem:[%s445 + $0xac] sm:$0xf] %v532
                  %v534 = vld [vmem:[%s444 + $0x230] sm:$0xf]
                  %535 = vst [vmem:[%s445 + $0xb0] sm:$0xf] %v534
                  %v536 = vld [vmem:[%s444 + $0x234] sm:$0xf]
                  %537 = vst [vmem:[%s445 + $0xb4] sm:$0xf] %v536
                  %v538 = vld [vmem:[%s444 + $0x238] sm:$0xf]
                  %539 = vst [vmem:[%s445 + $0xb8] sm:$0xf] %v538
                  %v540 = vld [vmem:[%s444 + $0x23c] sm:$0xf]
                  %541 = vst [vmem:[%s445 + $0xbc] sm:$0xf] %v540
                  %v542 = vld [vmem:[%s444 + $0x240] sm:$0xf]
                  %543 = vst [vmem:[%s445 + $0xc0] sm:$0xf] %v542
                  %v544 = vld [vmem:[%s444 + $0x244] sm:$0xf]
                  %545 = vst [vmem:[%s445 + $0xc4] sm:$0xf] %v544
                  %v546 = vld [vmem:[%s444 + $0x248] sm:$0xf]
                  %547 = vst [vmem:[%s445 + $0xc8] sm:$0xf] %v546
                  %v548 = vld [vmem:[%s444 + $0x24c] sm:$0xf]
                  %549 = vst [vmem:[%s445 + $0xcc] sm:$0xf] %v548
                  %v550 = vld [vmem:[%s444 + $0x250] sm:$0xf]
                  %551 = vst [vmem:[%s445 + $0xd0] sm:$0xf] %v550
                  %v552 = vld [vmem:[%s444 + $0x254] sm:$0xf]
                  %553 = vst [vmem:[%s445 + $0xd4] sm:$0xf] %v552
                  %v554 = vld [vmem:[%s444 + $0x258] sm:$0xf]
                  %555 = vst [vmem:[%s445 + $0xd8] sm:$0xf] %v554
                  %v556 = vld [vmem:[%s444 + $0x25c] sm:$0xf]
                  %557 = vst [vmem:[%s445 + $0xdc] sm:$0xf] %v556
                  %v558 = vld [vmem:[%s444 + $0x260] sm:$0xf]
                  %559 = vst [vmem:[%s445 + $0xe0] sm:$0xf] %v558
                  %v560 = vld [vmem:[%s444 + $0x264] sm:$0xf]
                  %561 = vst [vmem:[%s445 + $0xe4] sm:$0xf] %v560
                  %v562 = vld [vmem:[%s444 + $0x268] sm:$0xf]
                  %563 = vst [vmem:[%s445 + $0xe8] sm:$0xf] %v562
                  %v564 = vld [vmem:[%s444 + $0x26c] sm:$0xf]
                  %565 = vst [vmem:[%s445 + $0xec] sm:$0xf] %v564
                  %v566 = vld [vmem:[%s444 + $0x270] sm:$0xf]
                  %567 = vst [vmem:[%s445 + $0xf0] sm:$0xf] %v566
                  %v568 = vld [vmem:[%s444 + $0x274] sm:$0xf]
                  %569 = vst [vmem:[%s445 + $0xf4] sm:$0xf] %v568
                  %v570 = vld [vmem:[%s444 + $0x278] sm:$0xf]
                  %571 = vst [vmem:[%s445 + $0xf8] sm:$0xf] %v570
                  %v572 = vld [vmem:[%s444 + $0x27c] sm:$0xf]
                  %573 = vst [vmem:[%s445 + $0xfc] sm:$0xf] %v572
                  %v574 = vld [vmem:[%s444 + $0x400] sm:$0xf]
                  %575 = vst [vmem:[%s445 + $0x100] sm:$0xf] %v574
                  %v576 = vld [vmem:[%s444 + $0x404] sm:$0xf]
                  %577 = vst [vmem:[%s445 + $0x104] sm:$0xf] %v576
                  %v578 = vld [vmem:[%s444 + $0x408] sm:$0xf]
                  %579 = vst [vmem:[%s445 + $0x108] sm:$0xf] %v578
                  %v580 = vld [vmem:[%s444 + $0x40c] sm:$0xf]
                  %581 = vst [vmem:[%s445 + $0x10c] sm:$0xf] %v580
                  %v582 = vld [vmem:[%s444 + $0x410] sm:$0xf]
                  %583 = vst [vmem:[%s445 + $0x110] sm:$0xf] %v582
                  %v584 = vld [vmem:[%s444 + $0x414] sm:$0xf]
                  %585 = vst [vmem:[%s445 + $0x114] sm:$0xf] %v584
                  %v586 = vld [vmem:[%s444 + $0x418] sm:$0xf]
                  %587 = vst [vmem:[%s445 + $0x118] sm:$0xf] %v586
                  %v588 = vld [vmem:[%s444 + $0x41c] sm:$0xf]
                  %589 = vst [vmem:[%s445 + $0x11c] sm:$0xf] %v588
                  %v590 = vld [vmem:[%s444 + $0x420] sm:$0xf]
                  %591 = vst [vmem:[%s445 + $0x120] sm:$0xf] %v590
                  %v592 = vld [vmem:[%s444 + $0x424] sm:$0xf]
                  %593 = vst [vmem:[%s445 + $0x124] sm:$0xf] %v592
                  %v594 = vld [vmem:[%s444 + $0x428] sm:$0xf]
                  %595 = vst [vmem:[%s445 + $0x128] sm:$0xf] %v594
                  %v596 = vld [vmem:[%s444 + $0x42c] sm:$0xf]
                  %597 = vst [vmem:[%s445 + $0x12c] sm:$0xf] %v596
                  %v598 = vld [vmem:[%s444 + $0x430] sm:$0xf]
                  %599 = vst [vmem:[%s445 + $0x130] sm:$0xf] %v598
                  %v600 = vld [vmem:[%s444 + $0x434] sm:$0xf]
                  %601 = vst [vmem:[%s445 + $0x134] sm:$0xf] %v600
                  %v602 = vld [vmem:[%s444 + $0x438] sm:$0xf]
                  %603 = vst [vmem:[%s445 + $0x138] sm:$0xf] %v602
                  %v604 = vld [vmem:[%s444 + $0x43c] sm:$0xf]
                  %605 = vst [vmem:[%s445 + $0x13c] sm:$0xf] %v604
                  %v606 = vld [vmem:[%s444 + $0x440] sm:$0xf]
                  %607 = vst [vmem:[%s445 + $0x140] sm:$0xf] %v606
                  %v608 = vld [vmem:[%s444 + $0x444] sm:$0xf]
                  %609 = vst [vmem:[%s445 + $0x144] sm:$0xf] %v608
                  %v610 = vld [vmem:[%s444 + $0x448] sm:$0xf]
                  %611 = vst [vmem:[%s445 + $0x148] sm:$0xf] %v610
                  %v612 = vld [vmem:[%s444 + $0x44c] sm:$0xf]
                  %613 = vst [vmem:[%s445 + $0x14c] sm:$0xf] %v612
                  %v614 = vld [vmem:[%s444 + $0x450] sm:$0xf]
                  %615 = vst [vmem:[%s445 + $0x150] sm:$0xf] %v614
                  %v616 = vld [vmem:[%s444 + $0x454] sm:$0xf]
                  %617 = vst [vmem:[%s445 + $0x154] sm:$0xf] %v616
                  %v618 = vld [vmem:[%s444 + $0x458] sm:$0xf]
                  %619 = vst [vmem:[%s445 + $0x158] sm:$0xf] %v618
                  %v620 = vld [vmem:[%s444 + $0x45c] sm:$0xf]
                  %621 = vst [vmem:[%s445 + $0x15c] sm:$0xf] %v620
                  %v622 = vld [vmem:[%s444 + $0x460] sm:$0xf]
                  %623 = vst [vmem:[%s445 + $0x160] sm:$0xf] %v622
                  %v624 = vld [vmem:[%s444 + $0x464] sm:$0xf]
                  %625 = vst [vmem:[%s445 + $0x164] sm:$0xf] %v624
                  %v626 = vld [vmem:[%s444 + $0x468] sm:$0xf]
                  %627 = vst [vmem:[%s445 + $0x168] sm:$0xf] %v626
                  %v628 = vld [vmem:[%s444 + $0x46c] sm:$0xf]
                  %629 = vst [vmem:[%s445 + $0x16c] sm:$0xf] %v628
                  %v630 = vld [vmem:[%s444 + $0x470] sm:$0xf]
                  %631 = vst [vmem:[%s445 + $0x170] sm:$0xf] %v630
                  %v632 = vld [vmem:[%s444 + $0x474] sm:$0xf]
                  %633 = vst [vmem:[%s445 + $0x174] sm:$0xf] %v632
                  %v634 = vld [vmem:[%s444 + $0x478] sm:$0xf]
                  %635 = vst [vmem:[%s445 + $0x178] sm:$0xf] %v634
                  %v636 = vld [vmem:[%s444 + $0x47c] sm:$0xf]
                  %637 = vst [vmem:[%s445 + $0x17c] sm:$0xf] %v636
                  %v638 = vld [vmem:[%s444 + $0x600] sm:$0xf]
                  %639 = vst [vmem:[%s445 + $0x180] sm:$0xf] %v638
                  %v640 = vld [vmem:[%s444 + $0x604] sm:$0xf]
                  %641 = vst [vmem:[%s445 + $0x184] sm:$0xf] %v640
                  %v642 = vld [vmem:[%s444 + $0x608] sm:$0xf]
                  %643 = vst [vmem:[%s445 + $0x188] sm:$0xf] %v642
                  %v644 = vld [vmem:[%s444 + $0x60c] sm:$0xf]
                  %645 = vst [vmem:[%s445 + $0x18c] sm:$0xf] %v644
                  %v646 = vld [vmem:[%s444 + $0x610] sm:$0xf]
                  %647 = vst [vmem:[%s445 + $0x190] sm:$0xf] %v646
                  %v648 = vld [vmem:[%s444 + $0x614] sm:$0xf]
                  %649 = vst [vmem:[%s445 + $0x194] sm:$0xf] %v648
                  %v650 = vld [vmem:[%s444 + $0x618] sm:$0xf]
                  %651 = vst [vmem:[%s445 + $0x198] sm:$0xf] %v650
                  %v652 = vld [vmem:[%s444 + $0x61c] sm:$0xf]
                  %653 = vst [vmem:[%s445 + $0x19c] sm:$0xf] %v652
                  %v654 = vld [vmem:[%s444 + $0x620] sm:$0xf]
                  %655 = vst [vmem:[%s445 + $0x1a0] sm:$0xf] %v654
                  %v656 = vld [vmem:[%s444 + $0x624] sm:$0xf]
                  %657 = vst [vmem:[%s445 + $0x1a4] sm:$0xf] %v656
                  %v658 = vld [vmem:[%s444 + $0x628] sm:$0xf]
                  %659 = vst [vmem:[%s445 + $0x1a8] sm:$0xf] %v658
                  %v660 = vld [vmem:[%s444 + $0x62c] sm:$0xf]
                  %661 = vst [vmem:[%s445 + $0x1ac] sm:$0xf] %v660
                  %v662 = vld [vmem:[%s444 + $0x630] sm:$0xf]
                  %663 = vst [vmem:[%s445 + $0x1b0] sm:$0xf] %v662
                  %v664 = vld [vmem:[%s444 + $0x634] sm:$0xf]
                  %665 = vst [vmem:[%s445 + $0x1b4] sm:$0xf] %v664
                  %v666 = vld [vmem:[%s444 + $0x638] sm:$0xf]
                  %667 = vst [vmem:[%s445 + $0x1b8] sm:$0xf] %v666
                  %v668 = vld [vmem:[%s444 + $0x63c] sm:$0xf]
                  %669 = vst [vmem:[%s445 + $0x1bc] sm:$0xf] %v668
                  %v670 = vld [vmem:[%s444 + $0x640] sm:$0xf]
                  %671 = vst [vmem:[%s445 + $0x1c0] sm:$0xf] %v670
                  %v672 = vld [vmem:[%s444 + $0x644] sm:$0xf]
                  %673 = vst [vmem:[%s445 + $0x1c4] sm:$0xf] %v672
                  %v674 = vld [vmem:[%s444 + $0x648] sm:$0xf]
                  %675 = vst [vmem:[%s445 + $0x1c8] sm:$0xf] %v674
                  %v676 = vld [vmem:[%s444 + $0x64c] sm:$0xf]
                  %677 = vst [vmem:[%s445 + $0x1cc] sm:$0xf] %v676
                  %v678 = vld [vmem:[%s444 + $0x650] sm:$0xf]
                  %679 = vst [vmem:[%s445 + $0x1d0] sm:$0xf] %v678
                  %v680 = vld [vmem:[%s444 + $0x654] sm:$0xf]
                  %681 = vst [vmem:[%s445 + $0x1d4] sm:$0xf] %v680
                  %v682 = vld [vmem:[%s444 + $0x658] sm:$0xf]
                  %683 = vst [vmem:[%s445 + $0x1d8] sm:$0xf] %v682
                  %v684 = vld [vmem:[%s444 + $0x65c] sm:$0xf]
                  %685 = vst [vmem:[%s445 + $0x1dc] sm:$0xf] %v684
                  %v686 = vld [vmem:[%s444 + $0x660] sm:$0xf]
                  %687 = vst [vmem:[%s445 + $0x1e0] sm:$0xf] %v686
                  %v688 = vld [vmem:[%s444 + $0x664] sm:$0xf]
                  %689 = vst [vmem:[%s445 + $0x1e4] sm:$0xf] %v688
                  %v690 = vld [vmem:[%s444 + $0x668] sm:$0xf]
                  %691 = vst [vmem:[%s445 + $0x1e8] sm:$0xf] %v690
                  %v692 = vld [vmem:[%s444 + $0x66c] sm:$0xf]
                  %693 = vst [vmem:[%s445 + $0x1ec] sm:$0xf] %v692
                  %v694 = vld [vmem:[%s444 + $0x670] sm:$0xf]
                  %695 = vst [vmem:[%s445 + $0x1f0] sm:$0xf] %v694
                  %v696 = vld [vmem:[%s444 + $0x674] sm:$0xf]
                  %697 = vst [vmem:[%s445 + $0x1f4] sm:$0xf] %v696
                  %v698 = vld [vmem:[%s444 + $0x678] sm:$0xf]
                  %699 = vst [vmem:[%s445 + $0x1f8] sm:$0xf] %v698
                  %v700 = vld [vmem:[%s444 + $0x67c] sm:$0xf]
                  %701 = vst [vmem:[%s445 + $0x1fc] sm:$0xf] %v700
                $region63: #{modified_forward.4} parent=50 // loop_footer
                  %s443 = sadd.s32 1, %s439
                $region64: #{modified_forward.4} parent=50 // loop_footer_branch
                  %438 = sbr.rel target = $region60
                $region65: #{modified_forward.4} parent=50 // loop_exit
                  _
              $region51: #{modified_forward.4} parent=35 // pred_fallthru
                _
            $region36: #{modified_forward.4} parent=31 // pred_fallthru
              _
            // Predicated region
            $region37: #{modified_forward.4} parent=31 // pred_check
              _
            $region38: #{modified_forward.4} parent=31 // pred_check_branch
              %161 = sbr.rel (0) target = $region40
            $region39: #{modified_forward.4} parent=31 // pred_region
              loop: start=0, step=1, limit=1
              $region41: #{modified_forward.4} parent=39 // loop_pre_header
                _
              $region42: #{modified_forward.4} parent=39 // loop_header
                %s164 = sphi 0, %s168
                %p165 = scmp.ge.s32.totalorder %s164, 1
                %s169 = sphi %s155, %s155
                %s170 = sphi %s150, %s150
              $region43: #{modified_forward.4} parent=39 // loop_header_branch
                %167 = sbr.rel (%p165) target = $region47
              $region44: #{modified_forward.4} parent=39 // loop_body
                %v171 = vld [vmem:[%s169] sm:$0xf]
                %172 = vst [vmem:[%s170] sm:$0xf] %v171
                %v173 = vld [vmem:[%s169 + $0x4] sm:$0xf]
                %174 = vst [vmem:[%s170 + $0x4] sm:$0xf] %v173
                %v175 = vld [vmem:[%s169 + $0x8] sm:$0xf]
                %176 = vst [vmem:[%s170 + $0x8] sm:$0xf] %v175
                %v177 = vld [vmem:[%s169 + $0xc] sm:$0xf]
                %178 = vst [vmem:[%s170 + $0xc] sm:$0xf] %v177
                %v179 = vld [vmem:[%s169 + $0x10] sm:$0xf]
                %180 = vst [vmem:[%s170 + $0x10] sm:$0xf] %v179
                %v181 = vld [vmem:[%s169 + $0x14] sm:$0xf]
                %182 = vst [vmem:[%s170 + $0x14] sm:$0xf] %v181
                %v183 = vld [vmem:[%s169 + $0x18] sm:$0xf]
                %184 = vst [vmem:[%s170 + $0x18] sm:$0xf] %v183
                %v185 = vld [vmem:[%s169 + $0x1c] sm:$0xf]
                %186 = vst [vmem:[%s170 + $0x1c] sm:$0xf] %v185
                %v187 = vld [vmem:[%s169 + $0x20] sm:$0xf]
                %188 = vst [vmem:[%s170 + $0x20] sm:$0xf] %v187
                %v189 = vld [vmem:[%s169 + $0x24] sm:$0xf]
                %190 = vst [vmem:[%s170 + $0x24] sm:$0xf] %v189
                %v191 = vld [vmem:[%s169 + $0x28] sm:$0xf]
                %192 = vst [vmem:[%s170 + $0x28] sm:$0xf] %v191
                %v193 = vld [vmem:[%s169 + $0x2c] sm:$0xf]
                %194 = vst [vmem:[%s170 + $0x2c] sm:$0xf] %v193
                %v195 = vld [vmem:[%s169 + $0x30] sm:$0xf]
                %196 = vst [vmem:[%s170 + $0x30] sm:$0xf] %v195
                %v197 = vld [vmem:[%s169 + $0x34] sm:$0xf]
                %198 = vst [vmem:[%s170 + $0x34] sm:$0xf] %v197
                %v199 = vld [vmem:[%s169 + $0x38] sm:$0xf]
                %200 = vst [vmem:[%s170 + $0x38] sm:$0xf] %v199
                %v201 = vld [vmem:[%s169 + $0x3c] sm:$0xf]
                %202 = vst [vmem:[%s170 + $0x3c] sm:$0xf] %v201
                %v203 = vld [vmem:[%s169 + $0x40] sm:$0xf]
                %204 = vst [vmem:[%s170 + $0x40] sm:$0xf] %v203
                %v205 = vld [vmem:[%s169 + $0x44] sm:$0xf]
                %206 = vst [vmem:[%s170 + $0x44] sm:$0xf] %v205
                %v207 = vld [vmem:[%s169 + $0x48] sm:$0xf]
                %208 = vst [vmem:[%s170 + $0x48] sm:$0xf] %v207
                %v209 = vld [vmem:[%s169 + $0x4c] sm:$0xf]
                %210 = vst [vmem:[%s170 + $0x4c] sm:$0xf] %v209
                %v211 = vld [vmem:[%s169 + $0x50] sm:$0xf]
                %212 = vst [vmem:[%s170 + $0x50] sm:$0xf] %v211
                %v213 = vld [vmem:[%s169 + $0x54] sm:$0xf]
                %214 = vst [vmem:[%s170 + $0x54] sm:$0xf] %v213
                %v215 = vld [vmem:[%s169 + $0x58] sm:$0xf]
                %216 = vst [vmem:[%s170 + $0x58] sm:$0xf] %v215
                %v217 = vld [vmem:[%s169 + $0x5c] sm:$0xf]
                %218 = vst [vmem:[%s170 + $0x5c] sm:$0xf] %v217
                %v219 = vld [vmem:[%s169 + $0x60] sm:$0xf]
                %220 = vst [vmem:[%s170 + $0x60] sm:$0xf] %v219
                %v221 = vld [vmem:[%s169 + $0x64] sm:$0xf]
                %222 = vst [vmem:[%s170 + $0x64] sm:$0xf] %v221
                %v223 = vld [vmem:[%s169 + $0x68] sm:$0xf]
                %224 = vst [vmem:[%s170 + $0x68] sm:$0xf] %v223
                %v225 = vld [vmem:[%s169 + $0x6c] sm:$0xf]
                %226 = vst [vmem:[%s170 + $0x6c] sm:$0xf] %v225
                %v227 = vld [vmem:[%s169 + $0x70] sm:$0xf]
                %228 = vst [vmem:[%s170 + $0x70] sm:$0xf] %v227
                %v229 = vld [vmem:[%s169 + $0x74] sm:$0xf]
                %230 = vst [vmem:[%s170 + $0x74] sm:$0xf] %v229
                %v231 = vld [vmem:[%s169 + $0x78] sm:$0xf]
                %232 = vst [vmem:[%s170 + $0x78] sm:$0xf] %v231
                %v233 = vld [vmem:[%s169 + $0x7c] sm:$0xf]
                %234 = vst [vmem:[%s170 + $0x7c] sm:$0xf] %v233
                %v235 = vld [vmem:[%s169 + $0x200] sm:$0xf]
                %236 = vst [vmem:[%s170 + $0x80] sm:$0xf] %v235
                %v237 = vld [vmem:[%s169 + $0x204] sm:$0xf]
                %238 = vst [vmem:[%s170 + $0x84] sm:$0xf] %v237
                %v239 = vld [vmem:[%s169 + $0x208] sm:$0xf]
                %240 = vst [vmem:[%s170 + $0x88] sm:$0xf] %v239
                %v241 = vld [vmem:[%s169 + $0x20c] sm:$0xf]
                %242 = vst [vmem:[%s170 + $0x8c] sm:$0xf] %v241
                %v243 = vld [vmem:[%s169 + $0x210] sm:$0xf]
                %244 = vst [vmem:[%s170 + $0x90] sm:$0xf] %v243
                %v245 = vld [vmem:[%s169 + $0x214] sm:$0xf]
                %246 = vst [vmem:[%s170 + $0x94] sm:$0xf] %v245
                %v247 = vld [vmem:[%s169 + $0x218] sm:$0xf]
                %248 = vst [vmem:[%s170 + $0x98] sm:$0xf] %v247
                %v249 = vld [vmem:[%s169 + $0x21c] sm:$0xf]
                %250 = vst [vmem:[%s170 + $0x9c] sm:$0xf] %v249
                %v251 = vld [vmem:[%s169 + $0x220] sm:$0xf]
                %252 = vst [vmem:[%s170 + $0xa0] sm:$0xf] %v251
                %v253 = vld [vmem:[%s169 + $0x224] sm:$0xf]
                %254 = vst [vmem:[%s170 + $0xa4] sm:$0xf] %v253
                %v255 = vld [vmem:[%s169 + $0x228] sm:$0xf]
                %256 = vst [vmem:[%s170 + $0xa8] sm:$0xf] %v255
                %v257 = vld [vmem:[%s169 + $0x22c] sm:$0xf]
                %258 = vst [vmem:[%s170 + $0xac] sm:$0xf] %v257
                %v259 = vld [vmem:[%s169 + $0x230] sm:$0xf]
                %260 = vst [vmem:[%s170 + $0xb0] sm:$0xf] %v259
                %v261 = vld [vmem:[%s169 + $0x234] sm:$0xf]
                %262 = vst [vmem:[%s170 + $0xb4] sm:$0xf] %v261
                %v263 = vld [vmem:[%s169 + $0x238] sm:$0xf]
                %264 = vst [vmem:[%s170 + $0xb8] sm:$0xf] %v263
                %v265 = vld [vmem:[%s169 + $0x23c] sm:$0xf]
                %266 = vst [vmem:[%s170 + $0xbc] sm:$0xf] %v265
                %v267 = vld [vmem:[%s169 + $0x240] sm:$0xf]
                %268 = vst [vmem:[%s170 + $0xc0] sm:$0xf] %v267
                %v269 = vld [vmem:[%s169 + $0x244] sm:$0xf]
                %270 = vst [vmem:[%s170 + $0xc4] sm:$0xf] %v269
                %v271 = vld [vmem:[%s169 + $0x248] sm:$0xf]
                %272 = vst [vmem:[%s170 + $0xc8] sm:$0xf] %v271
                %v273 = vld [vmem:[%s169 + $0x24c] sm:$0xf]
                %274 = vst [vmem:[%s170 + $0xcc] sm:$0xf] %v273
                %v275 = vld [vmem:[%s169 + $0x250] sm:$0xf]
                %276 = vst [vmem:[%s170 + $0xd0] sm:$0xf] %v275
                %v277 = vld [vmem:[%s169 + $0x254] sm:$0xf]
                %278 = vst [vmem:[%s170 + $0xd4] sm:$0xf] %v277
                %v279 = vld [vmem:[%s169 + $0x258] sm:$0xf]
                %280 = vst [vmem:[%s170 + $0xd8] sm:$0xf] %v279
                %v281 = vld [vmem:[%s169 + $0x25c] sm:$0xf]
                %282 = vst [vmem:[%s170 + $0xdc] sm:$0xf] %v281
                %v283 = vld [vmem:[%s169 + $0x260] sm:$0xf]
                %284 = vst [vmem:[%s170 + $0xe0] sm:$0xf] %v283
                %v285 = vld [vmem:[%s169 + $0x264] sm:$0xf]
                %286 = vst [vmem:[%s170 + $0xe4] sm:$0xf] %v285
                %v287 = vld [vmem:[%s169 + $0x268] sm:$0xf]
                %288 = vst [vmem:[%s170 + $0xe8] sm:$0xf] %v287
                %v289 = vld [vmem:[%s169 + $0x26c] sm:$0xf]
                %290 = vst [vmem:[%s170 + $0xec] sm:$0xf] %v289
                %v291 = vld [vmem:[%s169 + $0x270] sm:$0xf]
                %292 = vst [vmem:[%s170 + $0xf0] sm:$0xf] %v291
                %v293 = vld [vmem:[%s169 + $0x274] sm:$0xf]
                %294 = vst [vmem:[%s170 + $0xf4] sm:$0xf] %v293
                %v295 = vld [vmem:[%s169 + $0x278] sm:$0xf]
                %296 = vst [vmem:[%s170 + $0xf8] sm:$0xf] %v295
                %v297 = vld [vmem:[%s169 + $0x27c] sm:$0xf]
                %298 = vst [vmem:[%s170 + $0xfc] sm:$0xf] %v297
                %v299 = vld [vmem:[%s169 + $0x400] sm:$0xf]
                %300 = vst [vmem:[%s170 + $0x100] sm:$0xf] %v299
                %v301 = vld [vmem:[%s169 + $0x404] sm:$0xf]
                %302 = vst [vmem:[%s170 + $0x104] sm:$0xf] %v301
                %v303 = vld [vmem:[%s169 + $0x408] sm:$0xf]
                %304 = vst [vmem:[%s170 + $0x108] sm:$0xf] %v303
                %v305 = vld [vmem:[%s169 + $0x40c] sm:$0xf]
                %306 = vst [vmem:[%s170 + $0x10c] sm:$0xf] %v305
                %v307 = vld [vmem:[%s169 + $0x410] sm:$0xf]
                %308 = vst [vmem:[%s170 + $0x110] sm:$0xf] %v307
                %v309 = vld [vmem:[%s169 + $0x414] sm:$0xf]
                %310 = vst [vmem:[%s170 + $0x114] sm:$0xf] %v309
                %v311 = vld [vmem:[%s169 + $0x418] sm:$0xf]
                %312 = vst [vmem:[%s170 + $0x118] sm:$0xf] %v311
                %v313 = vld [vmem:[%s169 + $0x41c] sm:$0xf]
                %314 = vst [vmem:[%s170 + $0x11c] sm:$0xf] %v313
                %v315 = vld [vmem:[%s169 + $0x420] sm:$0xf]
                %316 = vst [vmem:[%s170 + $0x120] sm:$0xf] %v315
                %v317 = vld [vmem:[%s169 + $0x424] sm:$0xf]
                %318 = vst [vmem:[%s170 + $0x124] sm:$0xf] %v317
                %v319 = vld [vmem:[%s169 + $0x428] sm:$0xf]
                %320 = vst [vmem:[%s170 + $0x128] sm:$0xf] %v319
                %v321 = vld [vmem:[%s169 + $0x42c] sm:$0xf]
                %322 = vst [vmem:[%s170 + $0x12c] sm:$0xf] %v321
                %v323 = vld [vmem:[%s169 + $0x430] sm:$0xf]
                %324 = vst [vmem:[%s170 + $0x130] sm:$0xf] %v323
                %v325 = vld [vmem:[%s169 + $0x434] sm:$0xf]
                %326 = vst [vmem:[%s170 + $0x134] sm:$0xf] %v325
                %v327 = vld [vmem:[%s169 + $0x438] sm:$0xf]
                %328 = vst [vmem:[%s170 + $0x138] sm:$0xf] %v327
                %v329 = vld [vmem:[%s169 + $0x43c] sm:$0xf]
                %330 = vst [vmem:[%s170 + $0x13c] sm:$0xf] %v329
                %v331 = vld [vmem:[%s169 + $0x440] sm:$0xf]
                %332 = vst [vmem:[%s170 + $0x140] sm:$0xf] %v331
                %v333 = vld [vmem:[%s169 + $0x444] sm:$0xf]
                %334 = vst [vmem:[%s170 + $0x144] sm:$0xf] %v333
                %v335 = vld [vmem:[%s169 + $0x448] sm:$0xf]
                %336 = vst [vmem:[%s170 + $0x148] sm:$0xf] %v335
                %v337 = vld [vmem:[%s169 + $0x44c] sm:$0xf]
                %338 = vst [vmem:[%s170 + $0x14c] sm:$0xf] %v337
                %v339 = vld [vmem:[%s169 + $0x450] sm:$0xf]
                %340 = vst [vmem:[%s170 + $0x150] sm:$0xf] %v339
                %v341 = vld [vmem:[%s169 + $0x454] sm:$0xf]
                %342 = vst [vmem:[%s170 + $0x154] sm:$0xf] %v341
                %v343 = vld [vmem:[%s169 + $0x458] sm:$0xf]
                %344 = vst [vmem:[%s170 + $0x158] sm:$0xf] %v343
                %v345 = vld [vmem:[%s169 + $0x45c] sm:$0xf]
                %346 = vst [vmem:[%s170 + $0x15c] sm:$0xf] %v345
                %v347 = vld [vmem:[%s169 + $0x460] sm:$0xf]
                %348 = vst [vmem:[%s170 + $0x160] sm:$0xf] %v347
                %v349 = vld [vmem:[%s169 + $0x464] sm:$0xf]
                %350 = vst [vmem:[%s170 + $0x164] sm:$0xf] %v349
                %v351 = vld [vmem:[%s169 + $0x468] sm:$0xf]
                %352 = vst [vmem:[%s170 + $0x168] sm:$0xf] %v351
                %v353 = vld [vmem:[%s169 + $0x46c] sm:$0xf]
                %354 = vst [vmem:[%s170 + $0x16c] sm:$0xf] %v353
                %v355 = vld [vmem:[%s169 + $0x470] sm:$0xf]
                %356 = vst [vmem:[%s170 + $0x170] sm:$0xf] %v355
                %v357 = vld [vmem:[%s169 + $0x474] sm:$0xf]
                %358 = vst [vmem:[%s170 + $0x174] sm:$0xf] %v357
                %v359 = vld [vmem:[%s169 + $0x478] sm:$0xf]
                %360 = vst [vmem:[%s170 + $0x178] sm:$0xf] %v359
                %v361 = vld [vmem:[%s169 + $0x47c] sm:$0xf]
                %362 = vst [vmem:[%s170 + $0x17c] sm:$0xf] %v361
                %v363 = vld [vmem:[%s169 + $0x600] sm:$0xf]
                %364 = vst [vmem:[%s170 + $0x180] sm:$0xf] %v363
                %v365 = vld [vmem:[%s169 + $0x604] sm:$0xf]
                %366 = vst [vmem:[%s170 + $0x184] sm:$0xf] %v365
                %v367 = vld [vmem:[%s169 + $0x608] sm:$0xf]
                %368 = vst [vmem:[%s170 + $0x188] sm:$0xf] %v367
                %v369 = vld [vmem:[%s169 + $0x60c] sm:$0xf]
                %370 = vst [vmem:[%s170 + $0x18c] sm:$0xf] %v369
                %v371 = vld [vmem:[%s169 + $0x610] sm:$0xf]
                %372 = vst [vmem:[%s170 + $0x190] sm:$0xf] %v371
                %v373 = vld [vmem:[%s169 + $0x614] sm:$0xf]
                %374 = vst [vmem:[%s170 + $0x194] sm:$0xf] %v373
                %v375 = vld [vmem:[%s169 + $0x618] sm:$0xf]
                %376 = vst [vmem:[%s170 + $0x198] sm:$0xf] %v375
                %v377 = vld [vmem:[%s169 + $0x61c] sm:$0xf]
                %378 = vst [vmem:[%s170 + $0x19c] sm:$0xf] %v377
                %v379 = vld [vmem:[%s169 + $0x620] sm:$0xf]
                %380 = vst [vmem:[%s170 + $0x1a0] sm:$0xf] %v379
                %v381 = vld [vmem:[%s169 + $0x624] sm:$0xf]
                %382 = vst [vmem:[%s170 + $0x1a4] sm:$0xf] %v381
                %v383 = vld [vmem:[%s169 + $0x628] sm:$0xf]
                %384 = vst [vmem:[%s170 + $0x1a8] sm:$0xf] %v383
                %v385 = vld [vmem:[%s169 + $0x62c] sm:$0xf]
                %386 = vst [vmem:[%s170 + $0x1ac] sm:$0xf] %v385
                %v387 = vld [vmem:[%s169 + $0x630] sm:$0xf]
                %388 = vst [vmem:[%s170 + $0x1b0] sm:$0xf] %v387
                %v389 = vld [vmem:[%s169 + $0x634] sm:$0xf]
                %390 = vst [vmem:[%s170 + $0x1b4] sm:$0xf] %v389
                %v391 = vld [vmem:[%s169 + $0x638] sm:$0xf]
                %392 = vst [vmem:[%s170 + $0x1b8] sm:$0xf] %v391
                %v393 = vld [vmem:[%s169 + $0x63c] sm:$0xf]
                %394 = vst [vmem:[%s170 + $0x1bc] sm:$0xf] %v393
                %v395 = vld [vmem:[%s169 + $0x640] sm:$0xf]
                %396 = vst [vmem:[%s170 + $0x1c0] sm:$0xf] %v395
                %v397 = vld [vmem:[%s169 + $0x644] sm:$0xf]
                %398 = vst [vmem:[%s170 + $0x1c4] sm:$0xf] %v397
                %v399 = vld [vmem:[%s169 + $0x648] sm:$0xf]
                %400 = vst [vmem:[%s170 + $0x1c8] sm:$0xf] %v399
                %v401 = vld [vmem:[%s169 + $0x64c] sm:$0xf]
                %402 = vst [vmem:[%s170 + $0x1cc] sm:$0xf] %v401
                %v403 = vld [vmem:[%s169 + $0x650] sm:$0xf]
                %404 = vst [vmem:[%s170 + $0x1d0] sm:$0xf] %v403
                %v405 = vld [vmem:[%s169 + $0x654] sm:$0xf]
                %406 = vst [vmem:[%s170 + $0x1d4] sm:$0xf] %v405
                %v407 = vld [vmem:[%s169 + $0x658] sm:$0xf]
                %408 = vst [vmem:[%s170 + $0x1d8] sm:$0xf] %v407
                %v409 = vld [vmem:[%s169 + $0x65c] sm:$0xf]
                %410 = vst [vmem:[%s170 + $0x1dc] sm:$0xf] %v409
                %v411 = vld [vmem:[%s169 + $0x660] sm:$0xf]
                %412 = vst [vmem:[%s170 + $0x1e0] sm:$0xf] %v411
                %v413 = vld [vmem:[%s169 + $0x664] sm:$0xf]
                %414 = vst [vmem:[%s170 + $0x1e4] sm:$0xf] %v413
                %v415 = vld [vmem:[%s169 + $0x668] sm:$0xf]
                %416 = vst [vmem:[%s170 + $0x1e8] sm:$0xf] %v415
                %v417 = vld [vmem:[%s169 + $0x66c] sm:$0xf]
                %418 = vst [vmem:[%s170 + $0x1ec] sm:$0xf] %v417
                %v419 = vld [vmem:[%s169 + $0x670] sm:$0xf]
                %420 = vst [vmem:[%s170 + $0x1f0] sm:$0xf] %v419
                %v421 = vld [vmem:[%s169 + $0x674] sm:$0xf]
                %422 = vst [vmem:[%s170 + $0x1f4] sm:$0xf] %v421
                %v423 = vld [vmem:[%s169 + $0x678] sm:$0xf]
                %424 = vst [vmem:[%s170 + $0x1f8] sm:$0xf] %v423
                %v425 = vld [vmem:[%s169 + $0x67c] sm:$0xf]
                %426 = vst [vmem:[%s170 + $0x1fc] sm:$0xf] %v425
              $region45: #{modified_forward.4} parent=39 // loop_footer
                %s168 = sadd.s32 1, %s164
              $region46: #{modified_forward.4} parent=39 // loop_footer_branch
                %163 = sbr.rel target = $region42
              $region47: #{modified_forward.4} parent=39 // loop_exit
                _
            $region40: #{modified_forward.4} parent=31 // pred_fallthru
              _
          $region32: #{modified_forward.4} parent=27 // pred_fallthru
            _
          %702 = vnop
        $region28: #{modified_forward.4} parent=23 // pred_fallthru
          _
      $region24: #{modified_forward.4} parent=5 // pred_fallthru
        _
      %p703 = scmp.le.s32.totalorder 1, %s9
      %p704 = scmp.lt.s32.totalorder %s9, 9
      %p705 = pnand %p703, %p704
      %p706 = pneg %p705
      // Predicated region
      $region66: #{modified_forward.4} parent=5 // pred_check
        _
      $region67: #{modified_forward.4} parent=5 // pred_check_branch
        %708 = sbr.rel (%p705) target = $region69
      $region68: #{modified_forward.4} parent=5 // pred_region
        %s709 = ssub.s32 %s9, 1
        %s710 = sand.u32 %s36, 1
        %s711 = sand.u32 %s36, 1
        %s712 = smul.addr %s711, 512
        %s713 = scalar_lea.vmem [#allocation2], %s712
        // Predicated region
        $region70: #{modified_forward.4} parent=68 // pred_check
          %p714 = pneg %p49
        $region71: #{modified_forward.4} parent=68 // pred_check_branch
          %716 = sbr.rel (%p714) target = $region73
        $region72: #{modified_forward.4} parent=68 // pred_region
          _
        $region73: #{modified_forward.4} parent=68 // pred_fallthru
          _
        %s717 = sand.u32 %s36, 1
        %s718 = sand.u32 %s36, 1
        %s719 = smul.addr %s718, 512
        %s720 = scalar_lea.vmem [#allocation2], %s719
        %p721 = pneg %p49
        %p722 = pneg %p46
        %p723 = pneg %p70
        %p724 = pneg %p67
        %p725 = pneg %p91
        %p726 = pneg %p88
        %p727 = pneg %p119
        %p728 = pneg %p116
        %s729 = smul.u32 32, %s19
        %p730 = scmp.lt.s32.totalorder %s18, 1
        %s731 = scalar_select %p730, %s18, 1
        %p732 = scmp.lt.s32.totalorder %s729, 127
        %s733 = scalar_select %p732, %s729, 127
        %s734 = smul.addr %s731, 128
        %s735 = sadd.s32 %s733, %s734
        %s736 = smul.addr %s735, 8
        %s737 = scalar_lea.vmem %s3, %s736
        %s738 = smul.u32 32, %s19
        %s739 = smul.u32 32, %s19
        %p740 = scmp.lt.s32.totalorder %s18, 1
        %s741 = scalar_select %p740, %s18, 1
        %p742 = scmp.lt.s32.totalorder %s739, 127
        %s743 = scalar_select %p742, %s739, 127
        %s744 = smul.addr %s741, 128
        %s745 = sadd.s32 %s743, %s744
        %s746 = smul.addr %s745, 8
        %s747 = scalar_lea.vmem %s3, %s746
        %s748 = smul.u32 32, %s19
        %v750 = vld [vmem:[%s1] sm:$0xf]
        %v751 = vld [vmem:[%s1 + $0x4] sm:$0xf]
        %v752 = vld [vmem:[%s1 + $0x8] sm:$0xf]
        %v753 = vld [vmem:[%s1 + $0xc] sm:$0xf]
        %v754 = vld [vmem:[%s1 + $0x10] sm:$0xf]
        %v755 = vld [vmem:[%s1 + $0x14] sm:$0xf]
        %v756 = vld [vmem:[%s1 + $0x18] sm:$0xf]
        %v757 = vld [vmem:[%s1 + $0x1c] sm:$0xf]
        %v758 = vld [vmem:[%s1 + $0x20] sm:$0xf]
        %v759 = vld [vmem:[%s1 + $0x24] sm:$0x3]
        %v760 = vld [vmem:[%s713] sm:$0xf]
        %v761 = vld [vmem:[%s713 + $0x4] sm:$0xf]
        %v762 = vld [vmem:[%s713 + $0x8] sm:$0xf]
        %v763 = vld [vmem:[%s713 + $0xc] sm:$0xf]
        %v764 = vld [vmem:[%s713 + $0x10] sm:$0xf]
        %v765 = vld [vmem:[%s713 + $0x14] sm:$0xf]
        %v766 = vld [vmem:[%s713 + $0x18] sm:$0xf]
        %v767 = vld [vmem:[%s713 + $0x1c] sm:$0xf]
        %v768 = vld [vmem:[%s713 + $0x20] sm:$0xf]
        %v769 = vld [vmem:[%s713 + $0x24] sm:$0xf]
        %v770 = vld [vmem:[%s713 + $0x28] sm:$0xf]
        %v771 = vld [vmem:[%s713 + $0x2c] sm:$0xf]
        %v772 = vld [vmem:[%s713 + $0x30] sm:$0xf]
        %v773 = vld [vmem:[%s713 + $0x34] sm:$0xf]
        %v774 = vld [vmem:[%s713 + $0x38] sm:$0xf]
        %v775 = vld [vmem:[%s713 + $0x3c] sm:$0xf]
        %v776 = vld [vmem:[%s713 + $0x40] sm:$0xf]
        %v777 = vld [vmem:[%s713 + $0x44] sm:$0xf]
        %v778 = vld [vmem:[%s713 + $0x48] sm:$0xf]
        %v779 = vld [vmem:[%s713 + $0x4c] sm:$0xf]
        %v780 = vld [vmem:[%s713 + $0x50] sm:$0xf]
        %v781 = vld [vmem:[%s713 + $0x54] sm:$0xf]
        %v782 = vld [vmem:[%s713 + $0x58] sm:$0xf]
        %v783 = vld [vmem:[%s713 + $0x5c] sm:$0xf]
        %v784 = vld [vmem:[%s713 + $0x60] sm:$0xf]
        %v785 = vld [vmem:[%s713 + $0x64] sm:$0xf]
        %v786 = vld [vmem:[%s713 + $0x68] sm:$0xf]
        %v787 = vld [vmem:[%s713 + $0x6c] sm:$0xf]
        %v788 = vld [vmem:[%s713 + $0x70] sm:$0xf]
        %v789 = vld [vmem:[%s713 + $0x74] sm:$0xf]
        %v790 = vld [vmem:[%s713 + $0x78] sm:$0xf]
        %v791 = vld [vmem:[%s713 + $0x7c] sm:$0xf]
        %v824 = vunpack.c.l.b16 %v760
        %v825 = vunpack.c.l.b16 %v761
        %v826 = vunpack.c.l.b16 %v762
        %v827 = vunpack.c.l.b16 %v763
        %v828 = vunpack.c.l.b16 %v764
        %v829 = vunpack.c.l.b16 %v765
        %v830 = vunpack.c.l.b16 %v766
        %v831 = vunpack.c.l.b16 %v767
        %v832 = vunpack.c.l.b16 %v768
        %v833 = vunpack.c.l.b16 %v769
        %v834 = vunpack.c.l.b16 %v770
        %v835 = vunpack.c.l.b16 %v771
        %v836 = vunpack.c.l.b16 %v772
        %v837 = vunpack.c.l.b16 %v773
        %v838 = vunpack.c.l.b16 %v774
        %v839 = vunpack.c.l.b16 %v775
        %v840 = vunpack.c.l.b16 %v776
        %v841 = vunpack.c.l.b16 %v777
        %v842 = vunpack.c.l.b16 %v778
        %v843 = vunpack.c.l.b16 %v779
        %v844 = vunpack.c.l.b16 %v780
        %v845 = vunpack.c.l.b16 %v781
        %v846 = vunpack.c.l.b16 %v782
        %v847 = vunpack.c.l.b16 %v783
        %v848 = vunpack.c.l.b16 %v784
        %v849 = vunpack.c.l.b16 %v785
        %v850 = vunpack.c.l.b16 %v786
        %v851 = vunpack.c.l.b16 %v787
        %v852 = vunpack.c.l.b16 %v788
        %v853 = vunpack.c.l.b16 %v789
        %v854 = vunpack.c.l.b16 %v790
        %v855 = vunpack.c.l.b16 %v791
        %v856 = vpack.c.b16 %v825, %v824
        %v857 = vpack.c.b16 %v827, %v826
        %v858 = vpack.c.b16 %v829, %v828
        %v859 = vpack.c.b16 %v831, %v830
        %v860 = vpack.c.b16 %v833, %v832
        %v861 = vpack.c.b16 %v835, %v834
        %v862 = vpack.c.b16 %v837, %v836
        %v863 = vpack.c.b16 %v839, %v838
        %v864 = vpack.c.b16 %v841, %v840
        %v865 = vpack.c.b16 %v843, %v842
        %v866 = vpack.c.b16 %v845, %v844
        %v867 = vpack.c.b16 %v847, %v846
        %v868 = vpack.c.b16 %v849, %v848
        %v869 = vpack.c.b16 %v851, %v850
        %v870 = vpack.c.b16 %v853, %v852
        %v871 = vpack.c.b16 %v855, %v854
        %v882 = vunpack.c.l.b16 %v750
        %v883 = vunpack.c.l.b16 %v751
        %v884 = vunpack.c.l.b16 %v752
        %v885 = vunpack.c.l.b16 %v753
        %v886 = vunpack.c.l.b16 %v754
        %v887 = vunpack.c.l.b16 %v755
        %v888 = vunpack.c.l.b16 %v756
        %v889 = vunpack.c.l.b16 %v757
        %v890 = vunpack.c.l.b16 %v758
        %v891 = vunpack.c.l.b16 %v759
        %v892 = vpack.c.b16 %v883, %v882
        %v893 = vpack.c.b16 %v885, %v884
        %v894 = vpack.c.b16 %v887, %v886
        %v895 = vpack.c.b16 %v889, %v888
        %v896 = vpack.c.b16 %v891, %v890
        %vm901 = vcmask 613376
        %v903 = vsel %vm901, %v856, 0
        %v906 = vsel %vm901, %v857, 0
        %v909 = vsel %vm901, %v858, 0
        %v912 = vsel %vm901, %v859, 0
        %v915 = vsel %vm901, %v860, 0
        %v918 = vsel %vm901, %v861, 0
        %v921 = vsel %vm901, %v862, 0
        %v924 = vsel %vm901, %v863, 0
        %v927 = vsel %vm901, %v864, 0
        %v930 = vsel %vm901, %v865, 0
        %v933 = vsel %vm901, %v866, 0
        %v936 = vsel %vm901, %v867, 0
        %v939 = vsel %vm901, %v868, 0
        %v942 = vsel %vm901, %v869, 0
        %v945 = vsel %vm901, %v870, 0
        %v948 = vsel %vm901, %v871, 0
        %vm950 = vcmask 1044480
        %vm951 = vcmask 1045504
        %v952 = vsel %vm950, 4294967295, 65535
        %v953 = vsel %vm951, %v952, 0
        %v955 = vand.u32 %v896, %v953
        %957 = vmatprep.subr.bf16.mxu0 0
        %958 = vmatpush1.bf16.msra.mxu0 %v892
        %959 = vmatprep.subr.bf16.mxu0 0
        %960 = vmatpush1.bf16.msra.mxu0 %v893
        %961 = vmatprep.subr.bf16.mxu0 0
        %962 = vmatpush1.bf16.msra.mxu0 %v894
        %963 = vmatprep.subr.bf16.mxu0 0
        %964 = vmatpush1.bf16.msra.mxu0 %v895
        %965 = vmatprep.subr.bf16.mxu0 0
        %966 = vmatpush1.bf16.msra.mxu0 %v955
        %967 = vmatprep.subr.bf16.mxu0 0
        %968 = vmatpush1.bf16.msra.mxu0 0
        %969 = vmatprep.subr.bf16.mxu0 0
        %970 = vmatpush1.bf16.msra.mxu0 0
        %971 = vmatprep.subr.bf16.mxu0 0
        %972 = vmatpush1.bf16.msra.mxu0 0
        %973 = vmatprep.subr.bf16.mxu0 0
        %974 = vmatpush1.bf16.msra.mxu0 0
        %975 = vmatprep.subr.bf16.mxu0 0
        %976 = vmatpush1.bf16.msra.mxu0 0
        %977 = vmatprep.subr.bf16.mxu0 0
        %978 = vmatpush1.bf16.msra.mxu0 0
        %979 = vmatprep.subr.bf16.mxu0 0
        %980 = vmatpush1.bf16.msra.mxu0 0
        %981 = vmatprep.subr.bf16.mxu0 0
        %982 = vmatpush1.bf16.msra.mxu0 0
        %983 = vmatprep.subr.bf16.mxu0 0
        %984 = vmatpush1.bf16.msra.mxu0 0
        %985 = vmatprep.subr.bf16.mxu0 0
        %986 = vmatpush1.bf16.msra.mxu0 0
        %987 = vmatprep.subr.bf16.mxu0 0
        %988 = vmatpush1.bf16.msra.mxu0 0
        %989 = vmatprep.mubr.bf16.mxu0 0
        %990 = vmatmul.mubr.bf16.gmra.mrb[0].mxu0 %v903
        %v991 = vpop.f32.mrb[0].mxu0
        %v992 = vadd.f32 0.0, %v991
        %v993 = vpop.f32.mrb[0].mxu0
        %v994 = vpop.f32.mrb[0].mxu0
        %v995 = vadd.f32 0.0, %v994
        %v996 = vpop.f32.mrb[0].mxu0
        %997 = vmatprep.mubr.bf16.mxu0 0
        %998 = vmatmul.mubr.bf16.gmra.mrb[0].mxu0 %v906
        %v999 = vpop.f32.mrb[0].mxu0
        %v1000 = vadd.f32 0.0, %v999
        %v1001 = vpop.f32.mrb[0].mxu0
        %v1002 = vpop.f32.mrb[0].mxu0
        %v1003 = vadd.f32 0.0, %v1002
        %v1004 = vpop.f32.mrb[0].mxu0
        %1005 = vmatprep.mubr.bf16.mxu0 0
        %1006 = vmatmul.mubr.bf16.gmra.mrb[0].mxu0 %v909
        %v1007 = vpop.f32.mrb[0].mxu0
        %v1008 = vadd.f32 0.0, %v1007
        %v1009 = vpop.f32.mrb[0].mxu0
        %v1010 = vpop.f32.mrb[0].mxu0
        %v1011 = vadd.f32 0.0, %v1010
        %v1012 = vpop.f32.mrb[0].mxu0
        %1013 = vmatprep.mubr.bf16.mxu0 0
        %1014 = vmatmul.mubr.bf16.gmra.mrb[0].mxu0 %v912
        %v1015 = vpop.f32.mrb[0].mxu0
        %v1016 = vadd.f32 0.0, %v1015
        %v1017 = vpop.f32.mrb[0].mxu0
        %v1018 = vpop.f32.mrb[0].mxu0
        %v1019 = vadd.f32 0.0, %v1018
        %v1020 = vpop.f32.mrb[0].mxu0
        %1021 = vmatprep.mubr.bf16.mxu0 0
        %1022 = vmatmul.mubr.bf16.gmra.mrb[0].mxu0 %v915
        %v1023 = vpop.f32.mrb[0].mxu0
        %v1024 = vadd.f32 0.0, %v1023
        %v1025 = vpop.f32.mrb[0].mxu0
        %v1026 = vpop.f32.mrb[0].mxu0
        %v1027 = vadd.f32 0.0, %v1026
        %v1028 = vpop.f32.mrb[0].mxu0
        %1029 = vmatprep.mubr.bf16.mxu0 0
        %1030 = vmatmul.mubr.bf16.gmra.mrb[0].mxu0 %v918
        %v1031 = vpop.f32.mrb[0].mxu0
        %v1032 = vadd.f32 0.0, %v1031
        %v1033 = vpop.f32.mrb[0].mxu0
        %v1034 = vpop.f32.mrb[0].mxu0
        %v1035 = vadd.f32 0.0, %v1034
        %v1036 = vpop.f32.mrb[0].mxu0
        %1037 = vmatprep.mubr.bf16.mxu0 0
        %1038 = vmatmul.mubr.bf16.gmra.mrb[0].mxu0 %v921
        %v1039 = vpop.f32.mrb[0].mxu0
        %v1040 = vadd.f32 0.0, %v1039
        %v1041 = vpop.f32.mrb[0].mxu0
        %v1042 = vpop.f32.mrb[0].mxu0
        %v1043 = vadd.f32 0.0, %v1042
        %v1044 = vpop.f32.mrb[0].mxu0
        %1045 = vmatprep.mubr.bf16.mxu0 0
        %1046 = vmatmul.mubr.bf16.gmra.mrb[0].mxu0 %v924
        %v1047 = vpop.f32.mrb[0].mxu0
        %v1048 = vadd.f32 0.0, %v1047
        %v1049 = vpop.f32.mrb[0].mxu0
        %v1050 = vpop.f32.mrb[0].mxu0
        %v1051 = vadd.f32 0.0, %v1050
        %v1052 = vpop.f32.mrb[0].mxu0
        %1053 = vmatprep.mubr.bf16.mxu0 0
        %1054 = vmatmul.mubr.bf16.gmra.mrb[0].mxu0 %v927
        %v1055 = vpop.f32.mrb[0].mxu0
        %v1056 = vadd.f32 0.0, %v1055
        %v1057 = vpop.f32.mrb[0].mxu0
        %v1058 = vpop.f32.mrb[0].mxu0
        %v1059 = vadd.f32 0.0, %v1058
        %v1060 = vpop.f32.mrb[0].mxu0
        %1061 = vmatprep.mubr.bf16.mxu0 0
        %1062 = vmatmul.mubr.bf16.gmra.mrb[0].mxu0 %v930
        %v1063 = vpop.f32.mrb[0].mxu0
        %v1064 = vadd.f32 0.0, %v1063
        %v1065 = vpop.f32.mrb[0].mxu0
        %v1066 = vpop.f32.mrb[0].mxu0
        %v1067 = vadd.f32 0.0, %v1066
        %v1068 = vpop.f32.mrb[0].mxu0
        %1069 = vmatprep.mubr.bf16.mxu0 0
        %1070 = vmatmul.mubr.bf16.gmra.mrb[0].mxu0 %v933
        %v1071 = vpop.f32.mrb[0].mxu0
        %v1072 = vadd.f32 0.0, %v1071
        %v1073 = vpop.f32.mrb[0].mxu0
        %v1074 = vpop.f32.mrb[0].mxu0
        %v1075 = vadd.f32 0.0, %v1074
        %v1076 = vpop.f32.mrb[0].mxu0
        %1077 = vmatprep.mubr.bf16.mxu0 0
        %1078 = vmatmul.mubr.bf16.gmra.mrb[0].mxu0 %v936
        %v1079 = vpop.f32.mrb[0].mxu0
        %v1080 = vadd.f32 0.0, %v1079
        %v1081 = vpop.f32.mrb[0].mxu0
        %v1082 = vpop.f32.mrb[0].mxu0
        %v1083 = vadd.f32 0.0, %v1082
        %v1084 = vpop.f32.mrb[0].mxu0
        %1085 = vmatprep.mubr.bf16.mxu0 0
        %1086 = vmatmul.mubr.bf16.gmra.mrb[0].mxu0 %v939
        %v1087 = vpop.f32.mrb[0].mxu0
        %v1088 = vadd.f32 0.0, %v1087
        %v1089 = vpop.f32.mrb[0].mxu0
        %v1090 = vpop.f32.mrb[0].mxu0
        %v1091 = vadd.f32 0.0, %v1090
        %v1092 = vpop.f32.mrb[0].mxu0
        %1093 = vmatprep.mubr.bf16.mxu0 0
        %1094 = vmatmul.mubr.bf16.gmra.mrb[0].mxu0 %v942
        %v1095 = vpop.f32.mrb[0].mxu0
        %v1096 = vadd.f32 0.0, %v1095
        %v1097 = vpop.f32.mrb[0].mxu0
        %v1098 = vpop.f32.mrb[0].mxu0
        %v1099 = vadd.f32 0.0, %v1098
        %v1100 = vpop.f32.mrb[0].mxu0
        %1101 = vmatprep.mubr.bf16.mxu0 0
        %1102 = vmatmul.mubr.bf16.gmra.mrb[0].mxu0 %v945
        %v1103 = vpop.f32.mrb[0].mxu0
        %v1104 = vadd.f32 0.0, %v1103
        %v1105 = vpop.f32.mrb[0].mxu0
        %v1106 = vpop.f32.mrb[0].mxu0
        %v1107 = vadd.f32 0.0, %v1106
        %v1108 = vpop.f32.mrb[0].mxu0
        %1109 = vmatprep.mubr.bf16.mxu0 0
        %1110 = vmatmul.mubr.bf16.gmra.mrb[0].mxu0 %v948
        %v1111 = vpop.f32.mrb[0].mxu0
        %v1112 = vadd.f32 0.0, %v1111
        %v1113 = vpop.f32.mrb[0].mxu0
        %v1114 = vpop.f32.mrb[0].mxu0
        %v1115 = vadd.f32 0.0, %v1114
        %v1116 = vpop.f32.mrb[0].mxu0
        %1117 = vdwg.mxu0
        %s1118 = scalar_lea.vmem %s713, 128 [#allocation2]
        %v1119 = vld [vmem:[%s1118] sm:$0xf]
        %v1120 = vld [vmem:[%s1118 + $0x4] sm:$0xf]
        %v1121 = vld [vmem:[%s1118 + $0x8] sm:$0xf]
        %v1122 = vld [vmem:[%s1118 + $0xc] sm:$0xf]
        %v1123 = vld [vmem:[%s1118 + $0x10] sm:$0xf]
        %v1124 = vld [vmem:[%s1118 + $0x14] sm:$0xf]
        %v1125 = vld [vmem:[%s1118 + $0x18] sm:$0xf]
        %v1126 = vld [vmem:[%s1118 + $0x1c] sm:$0xf]
        %v1127 = vld [vmem:[%s1118 + $0x20] sm:$0xf]
        %v1128 = vld [vmem:[%s1118 + $0x24] sm:$0xf]
        %v1129 = vld [vmem:[%s1118 + $0x28] sm:$0xf]
        %v1130 = vld [vmem:[%s1118 + $0x2c] sm:$0xf]
        %v1131 = vld [vmem:[%s1118 + $0x30] sm:$0xf]
        %v1132 = vld [vmem:[%s1118 + $0x34] sm:$0xf]
        %v1133 = vld [vmem:[%s1118 + $0x38] sm:$0xf]
        %v1134 = vld [vmem:[%s1118 + $0x3c] sm:$0xf]
        %v1135 = vld [vmem:[%s1118 + $0x40] sm:$0xf]
        %v1136 = vld [vmem:[%s1118 + $0x44] sm:$0xf]
        %v1137 = vld [vmem:[%s1118 + $0x48] sm:$0xf]
        %v1138 = vld [vmem:[%s1118 + $0x4c] sm:$0xf]
        %v1139 = vld [vmem:[%s1118 + $0x50] sm:$0xf]
        %v1140 = vld [vmem:[%s1118 + $0x54] sm:$0xf]
        %v1141 = vld [vmem:[%s1118 + $0x58] sm:$0xf]
        %v1142 = vld [vmem:[%s1118 + $0x5c] sm:$0xf]
        %v1143 = vld [vmem:[%s1118 + $0x60] sm:$0xf]
        %v1144 = vld [vmem:[%s1118 + $0x64] sm:$0xf]
        %v1145 = vld [vmem:[%s1118 + $0x68] sm:$0xf]
        %v1146 = vld [vmem:[%s1118 + $0x6c] sm:$0xf]
        %v1147 = vld [vmem:[%s1118 + $0x70] sm:$0xf]
        %v1148 = vld [vmem:[%s1118 + $0x74] sm:$0xf]
        %v1149 = vld [vmem:[%s1118 + $0x78] sm:$0xf]
        %v1150 = vld [vmem:[%s1118 + $0x7c] sm:$0xf]
        %v1183 = vunpack.c.l.b16 %v1119
        %v1184 = vunpack.c.l.b16 %v1120
        %v1185 = vunpack.c.l.b16 %v1121
        %v1186 = vunpack.c.l.b16 %v1122
        %v1187 = vunpack.c.l.b16 %v1123
        %v1188 = vunpack.c.l.b16 %v1124
        %v1189 = vunpack.c.l.b16 %v1125
        %v1190 = vunpack.c.l.b16 %v1126
        %v1191 = vunpack.c.l.b16 %v1127
        %v1192 = vunpack.c.l.b16 %v1128
        %v1193 = vunpack.c.l.b16 %v1129
        %v1194 = vunpack.c.l.b16 %v1130
        %v1195 = vunpack.c.l.b16 %v1131
        %v1196 = vunpack.c.l.b16 %v1132
        %v1197 = vunpack.c.l.b16 %v1133
        %v1198 = vunpack.c.l.b16 %v1134
        %v1199 = vunpack.c.l.b16 %v1135
        %v1200 = vunpack.c.l.b16 %v1136
        %v1201 = vunpack.c.l.b16 %v1137
        %v1202 = vunpack.c.l.b16 %v1138
        %v1203 = vunpack.c.l.b16 %v1139
        %v1204 = vunpack.c.l.b16 %v1140
        %v1205 = vunpack.c.l.b16 %v1141
        %v1206 = vunpack.c.l.b16 %v1142
        %v1207 = vunpack.c.l.b16 %v1143
        %v1208 = vunpack.c.l.b16 %v1144
        %v1209 = vunpack.c.l.b16 %v1145
        %v1210 = vunpack.c.l.b16 %v1146
        %v1211 = vunpack.c.l.b16 %v1147
        %v1212 = vunpack.c.l.b16 %v1148
        %v1213 = vunpack.c.l.b16 %v1149
        %v1214 = vunpack.c.l.b16 %v1150
        %v1215 = vpack.c.b16 %v1184, %v1183
        %v1216 = vpack.c.b16 %v1186, %v1185
        %v1217 = vpack.c.b16 %v1188, %v1187
        %v1218 = vpack.c.b16 %v1190, %v1189
        %v1219 = vpack.c.b16 %v1192, %v1191
        %v1220 = vpack.c.b16 %v1194, %v1193
        %v1221 = vpack.c.b16 %v1196, %v1195
        %v1222 = vpack.c.b16 %v1198, %v1197
        %v1223 = vpack.c.b16 %v1200, %v1199
        %v1224 = vpack.c.b16 %v1202, %v1201
        %v1225 = vpack.c.b16 %v1204, %v1203
        %v1226 = vpack.c.b16 %v1206, %v1205
        %v1227 = vpack.c.b16 %v1208, %v1207
        %v1228 = vpack.c.b16 %v1210, %v1209
        %v1229 = vpack.c.b16 %v1212, %v1211
        %v1230 = vpack.c.b16 %v1214, %v1213
        %v1232 = vsel %vm901, %v1215, 0
        %v1235 = vsel %vm901, %v1216, 0
        %v1238 = vsel %vm901, %v1217, 0
        %v1241 = vsel %vm901, %v1218, 0
        %v1244 = vsel %vm901, %v1219, 0
        %v1247 = vsel %vm901, %v1220, 0
        %v1250 = vsel %vm901, %v1221, 0
        %v1253 = vsel %vm901, %v1222, 0
        %v1256 = vsel %vm901, %v1223, 0
        %v1259 = vsel %vm901, %v1224, 0
        %v1262 = vsel %vm901, %v1225, 0
        %v1265 = vsel %vm901, %v1226, 0
        %v1268 = vsel %vm901, %v1227, 0
        %v1271 = vsel %vm901, %v1228, 0
        %v1274 = vsel %vm901, %v1229, 0
        %v1277 = vsel %vm901, %v1230, 0
        %1279 = vmatprep.subr.bf16.mxu0 0
        %1280 = vmatpush1.bf16.msra.mxu0 %v892
        %1281 = vmatprep.subr.bf16.mxu0 0
        %1282 = vmatpush1.bf16.msra.mxu0 %v893
        %1283 = vmatprep.subr.bf16.mxu0 0
        %1284 = vmatpush1.bf16.msra.mxu0 %v894
        %1285 = vmatprep.subr.bf16.mxu0 0
        %1286 = vmatpush1.bf16.msra.mxu0 %v895
        %1287 = vmatprep.subr.bf16.mxu0 0
        %1288 = vmatpush1.bf16.msra.mxu0 %v955
        %1289 = vmatprep.subr.bf16.mxu0 0
        %1290 = vmatpush1.bf16.msra.mxu0 0
        %1291 = vmatprep.subr.bf16.mxu0 0
        %1292 = vmatpush1.bf16.msra.mxu0 0
        %1293 = vmatprep.subr.bf16.mxu0 0
        %1294 = vmatpush1.bf16.msra.mxu0 0
        %1295 = vmatprep.subr.bf16.mxu0 0
        %1296 = vmatpush1.bf16.msra.mxu0 0
        %1297 = vmatprep.subr.bf16.mxu0 0
        %1298 = vmatpush1.bf16.msra.mxu0 0
        %1299 = vmatprep.subr.bf16.mxu0 0
        %1300 = vmatpush1.bf16.msra.mxu0 0
        %1301 = vmatprep.subr.bf16.mxu0 0
        %1302 = vmatpush1.bf16.msra.mxu0 0
        %1303 = vmatprep.subr.bf16.mxu0 0
        %1304 = vmatpush1.bf16.msra.mxu0 0
        %1305 = vmatprep.subr.bf16.mxu0 0
        %1306 = vmatpush1.bf16.msra.mxu0 0
        %1307 = vmatprep.subr.bf16.mxu0 0
        %1308 = vmatpush1.bf16.msra.mxu0 0
        %1309 = vmatprep.subr.bf16.mxu0 0
        %1310 = vmatpush1.bf16.msra.mxu0 0
        %1311 = vmatprep.mubr.bf16.mxu0 0
        %1312 = vmatmul.mubr.bf16.gmra.mrb[0].mxu0 %v1232
        %v1313 = vpop.f32.mrb[0].mxu0
        %v1314 = vadd.f32 0.0, %v1313
        %v1315 = vpop.f32.mrb[0].mxu0
        %v1316 = vpop.f32.mrb[0].mxu0
        %v1317 = vadd.f32 0.0, %v1316
        %v1318 = vpop.f32.mrb[0].mxu0
        %1319 = vmatprep.mubr.bf16.mxu0 0
        %1320 = vmatmul.mubr.bf16.gmra.mrb[0].mxu0 %v1235
        %v1321 = vpop.f32.mrb[0].mxu0
        %v1322 = vadd.f32 0.0, %v1321
        %v1323 = vpop.f32.mrb[0].mxu0
        %v1324 = vpop.f32.mrb[0].mxu0
        %v1325 = vadd.f32 0.0, %v1324
        %v1326 = vpop.f32.mrb[0].mxu0
        %1327 = vmatprep.mubr.bf16.mxu0 0
        %1328 = vmatmul.mubr.bf16.gmra.mrb[0].mxu0 %v1238
        %v1329 = vpop.f32.mrb[0].mxu0
        %v1330 = vadd.f32 0.0, %v1329
        %v1331 = vpop.f32.mrb[0].mxu0
        %v1332 = vpop.f32.mrb[0].mxu0
        %v1333 = vadd.f32 0.0, %v1332
        %v1334 = vpop.f32.mrb[0].mxu0
        %1335 = vmatprep.mubr.bf16.mxu0 0
        %1336 = vmatmul.mubr.bf16.gmra.mrb[0].mxu0 %v1241
        %v1337 = vpop.f32.mrb[0].mxu0
        %v1338 = vadd.f32 0.0, %v1337
        %v1339 = vpop.f32.mrb[0].mxu0
        %v1340 = vpop.f32.mrb[0].mxu0
        %v1341 = vadd.f32 0.0, %v1340
        %v1342 = vpop.f32.mrb[0].mxu0
        %1343 = vmatprep.mubr.bf16.mxu0 0
        %1344 = vmatmul.mubr.bf16.gmra.mrb[0].mxu0 %v1244
        %v1345 = vpop.f32.mrb[0].mxu0
        %v1346 = vadd.f32 0.0, %v1345
        %v1347 = vpop.f32.mrb[0].mxu0
        %v1348 = vpop.f32.mrb[0].mxu0
        %v1349 = vadd.f32 0.0, %v1348
        %v1350 = vpop.f32.mrb[0].mxu0
        %1351 = vmatprep.mubr.bf16.mxu0 0
        %1352 = vmatmul.mubr.bf16.gmra.mrb[0].mxu0 %v1247
        %v1353 = vpop.f32.mrb[0].mxu0
        %v1354 = vadd.f32 0.0, %v1353
        %v1355 = vpop.f32.mrb[0].mxu0
        %v1356 = vpop.f32.mrb[0].mxu0
        %v1357 = vadd.f32 0.0, %v1356
        %v1358 = vpop.f32.mrb[0].mxu0
        %1359 = vmatprep.mubr.bf16.mxu0 0
        %1360 = vmatmul.mubr.bf16.gmra.mrb[0].mxu0 %v1250
        %v1361 = vpop.f32.mrb[0].mxu0
        %v1362 = vadd.f32 0.0, %v1361
        %v1363 = vpop.f32.mrb[0].mxu0
        %v1364 = vpop.f32.mrb[0].mxu0
        %v1365 = vadd.f32 0.0, %v1364
        %v1366 = vpop.f32.mrb[0].mxu0
        %1367 = vmatprep.mubr.bf16.mxu0 0
        %1368 = vmatmul.mubr.bf16.gmra.mrb[0].mxu0 %v1253
        %v1369 = vpop.f32.mrb[0].mxu0
        %v1370 = vadd.f32 0.0, %v1369
        %v1371 = vpop.f32.mrb[0].mxu0
        %v1372 = vpop.f32.mrb[0].mxu0
        %v1373 = vadd.f32 0.0, %v1372
        %v1374 = vpop.f32.mrb[0].mxu0
        %1375 = vmatprep.mubr.bf16.mxu0 0
        %1376 = vmatmul.mubr.bf16.gmra.mrb[0].mxu0 %v1256
        %v1377 = vpop.f32.mrb[0].mxu0
        %v1378 = vadd.f32 0.0, %v1377
        %v1379 = vpop.f32.mrb[0].mxu0
        %v1380 = vpop.f32.mrb[0].mxu0
        %v1381 = vadd.f32 0.0, %v1380
        %v1382 = vpop.f32.mrb[0].mxu0
        %1383 = vmatprep.mubr.bf16.mxu0 0
        %1384 = vmatmul.mubr.bf16.gmra.mrb[0].mxu0 %v1259
        %v1385 = vpop.f32.mrb[0].mxu0
        %v1386 = vadd.f32 0.0, %v1385
        %v1387 = vpop.f32.mrb[0].mxu0
        %v1388 = vpop.f32.mrb[0].mxu0
        %v1389 = vadd.f32 0.0, %v1388
        %v1390 = vpop.f32.mrb[0].mxu0
        %1391 = vmatprep.mubr.bf16.mxu0 0
        %1392 = vmatmul.mubr.bf16.gmra.mrb[0].mxu0 %v1262
        %v1393 = vpop.f32.mrb[0].mxu0
        %v1394 = vadd.f32 0.0, %v1393
        %v1395 = vpop.f32.mrb[0].mxu0
        %v1396 = vpop.f32.mrb[0].mxu0
        %v1397 = vadd.f32 0.0, %v1396
        %v1398 = vpop.f32.mrb[0].mxu0
        %1399 = vmatprep.mubr.bf16.mxu0 0
        %1400 = vmatmul.mubr.bf16.gmra.mrb[0].mxu0 %v1265
        %v1401 = vpop.f32.mrb[0].mxu0
        %v1402 = vadd.f32 0.0, %v1401
        %v1403 = vpop.f32.mrb[0].mxu0
        %v1404 = vpop.f32.mrb[0].mxu0
        %v1405 = vadd.f32 0.0, %v1404
        %v1406 = vpop.f32.mrb[0].mxu0
        %1407 = vmatprep.mubr.bf16.mxu0 0
        %1408 = vmatmul.mubr.bf16.gmra.mrb[0].mxu0 %v1268
        %v1409 = vpop.f32.mrb[0].mxu0
        %v1410 = vadd.f32 0.0, %v1409
        %v1411 = vpop.f32.mrb[0].mxu0
        %v1412 = vpop.f32.mrb[0].mxu0
        %v1413 = vadd.f32 0.0, %v1412
        %v1414 = vpop.f32.mrb[0].mxu0
        %1415 = vmatprep.mubr.bf16.mxu0 0
        %1416 = vmatmul.mubr.bf16.gmra.mrb[0].mxu0 %v1271
        %v1417 = vpop.f32.mrb[0].mxu0
        %v1418 = vadd.f32 0.0, %v1417
        %v1419 = vpop.f32.mrb[0].mxu0
        %v1420 = vpop.f32.mrb[0].mxu0
        %v1421 = vadd.f32 0.0, %v1420
        %v1422 = vpop.f32.mrb[0].mxu0
        %1423 = vmatprep.mubr.bf16.mxu0 0
        %1424 = vmatmul.mubr.bf16.gmra.mrb[0].mxu0 %v1274
        %v1425 = vpop.f32.mrb[0].mxu0
        %v1426 = vadd.f32 0.0, %v1425
        %v1427 = vpop.f32.mrb[0].mxu0
        %v1428 = vpop.f32.mrb[0].mxu0
        %v1429 = vadd.f32 0.0, %v1428
        %v1430 = vpop.f32.mrb[0].mxu0
        %1431 = vmatprep.mubr.bf16.mxu0 0
        %1432 = vmatmul.mubr.bf16.gmra.mrb[0].mxu0 %v1277
        %v1433 = vpop.f32.mrb[0].mxu0
        %v1434 = vadd.f32 0.0, %v1433
        %v1435 = vpop.f32.mrb[0].mxu0
        %v1436 = vpop.f32.mrb[0].mxu0
        %v1437 = vadd.f32 0.0, %v1436
        %v1438 = vpop.f32.mrb[0].mxu0
        %1439 = vdwg.mxu0
        %v1440 = vmax.f32 %v992, %v1314
        %v1441 = vmax.f32 %v995, %v1317
        %v1442 = vmax.f32 %v1000, %v1322
        %v1443 = vmax.f32 %v1003, %v1325
        %v1444 = vmax.f32 %v1008, %v1330
        %v1445 = vmax.f32 %v1011, %v1333
        %v1446 = vmax.f32 %v1016, %v1338
        %v1447 = vmax.f32 %v1019, %v1341
        %v1448 = vmax.f32 %v1024, %v1346
        %v1449 = vmax.f32 %v1027, %v1349
        %v1450 = vmax.f32 %v1032, %v1354
        %v1451 = vmax.f32 %v1035, %v1357
        %v1452 = vmax.f32 %v1040, %v1362
        %v1453 = vmax.f32 %v1043, %v1365
        %v1454 = vmax.f32 %v1048, %v1370
        %v1455 = vmax.f32 %v1051, %v1373
        %v1456 = vmax.f32 %v1056, %v1378
        %v1457 = vmax.f32 %v1059, %v1381
        %v1458 = vmax.f32 %v1064, %v1386
        %v1459 = vmax.f32 %v1067, %v1389
        %v1460 = vmax.f32 %v1072, %v1394
        %v1461 = vmax.f32 %v1075, %v1397
        %v1462 = vmax.f32 %v1080, %v1402
        %v1463 = vmax.f32 %v1083, %v1405
        %v1464 = vmax.f32 %v1088, %v1410
        %v1465 = vmax.f32 %v1091, %v1413
        %v1466 = vmax.f32 %v1096, %v1418
        %v1467 = vmax.f32 %v1099, %v1421
        %v1468 = vmax.f32 %v1104, %v1426
        %v1469 = vmax.f32 %v1107, %v1429
        %v1470 = vmax.f32 %v1112, %v1434
        %v1471 = vmax.f32 %v1115, %v1437
        %s1472 = scalar_lea.vmem %s713, 256 [#allocation2]
        %v1473 = vld [vmem:[%s1472] sm:$0xf]
        %v1474 = vld [vmem:[%s1472 + $0x4] sm:$0xf]
        %v1475 = vld [vmem:[%s1472 + $0x8] sm:$0xf]
        %v1476 = vld [vmem:[%s1472 + $0xc] sm:$0xf]
        %v1477 = vld [vmem:[%s1472 + $0x10] sm:$0xf]
        %v1478 = vld [vmem:[%s1472 + $0x14] sm:$0xf]
        %v1479 = vld [vmem:[%s1472 + $0x18] sm:$0xf]
        %v1480 = vld [vmem:[%s1472 + $0x1c] sm:$0xf]
        %v1481 = vld [vmem:[%s1472 + $0x20] sm:$0xf]
        %v1482 = vld [vmem:[%s1472 + $0x24] sm:$0xf]
        %v1483 = vld [vmem:[%s1472 + $0x28] sm:$0xf]
        %v1484 = vld [vmem:[%s1472 + $0x2c] sm:$0xf]
        %v1485 = vld [vmem:[%s1472 + $0x30] sm:$0xf]
        %v1486 = vld [vmem:[%s1472 + $0x34] sm:$0xf]
        %v1487 = vld [vmem:[%s1472 + $0x38] sm:$0xf]
        %v1488 = vld [vmem:[%s1472 + $0x3c] sm:$0xf]
        %v1489 = vld [vmem:[%s1472 + $0x40] sm:$0xf]
        %v1490 = vld [vmem:[%s1472 + $0x44] sm:$0xf]
        %v1491 = vld [vmem:[%s1472 + $0x48] sm:$0xf]
        %v1492 = vld [vmem:[%s1472 + $0x4c] sm:$0xf]
        %v1493 = vld [vmem:[%s1472 + $0x50] sm:$0xf]
        %v1494 = vld [vmem:[%s1472 + $0x54] sm:$0xf]
        %v1495 = vld [vmem:[%s1472 + $0x58] sm:$0xf]
        %v1496 = vld [vmem:[%s1472 + $0x5c] sm:$0xf]
        %v1497 = vld [vmem:[%s1472 + $0x60] sm:$0xf]
        %v1498 = vld [vmem:[%s1472 + $0x64] sm:$0xf]
        %v1499 = vld [vmem:[%s1472 + $0x68] sm:$0xf]
        %v1500 = vld [vmem:[%s1472 + $0x6c] sm:$0xf]
        %v1501 = vld [vmem:[%s1472 + $0x70] sm:$0xf]
        %v1502 = vld [vmem:[%s1472 + $0x74] sm:$0xf]
        %v1503 = vld [vmem:[%s1472 + $0x78] sm:$0xf]
        %v1504 = vld [vmem:[%s1472 + $0x7c] sm:$0xf]
        %v1537 = vunpack.c.l.b16 %v1473
        %v1538 = vunpack.c.l.b16 %v1474
        %v1539 = vunpack.c.l.b16 %v1475
        %v1540 = vunpack.c.l.b16 %v1476
        %v1541 = vunpack.c.l.b16 %v1477
        %v1542 = vunpack.c.l.b16 %v1478
        %v1543 = vunpack.c.l.b16 %v1479
        %v1544 = vunpack.c.l.b16 %v1480
        %v1545 = vunpack.c.l.b16 %v1481
        %v1546 = vunpack.c.l.b16 %v1482
        %v1547 = vunpack.c.l.b16 %v1483
        %v1548 = vunpack.c.l.b16 %v1484
        %v1549 = vunpack.c.l.b16 %v1485
        %v1550 = vunpack.c.l.b16 %v1486
        %v1551 = vunpack.c.l.b16 %v1487
        %v1552 = vunpack.c.l.b16 %v1488
        %v1553 = vunpack.c.l.b16 %v1489
        %v1554 = vunpack.c.l.b16 %v1490
        %v1555 = vunpack.c.l.b16 %v1491
        %v1556 = vunpack.c.l.b16 %v1492
        %v1557 = vunpack.c.l.b16 %v1493
        %v1558 = vunpack.c.l.b16 %v1494
        %v1559 = vunpack.c.l.b16 %v1495
        %v1560 = vunpack.c.l.b16 %v1496
        %v1561 = vunpack.c.l.b16 %v1497
        %v1562 = vunpack.c.l.b16 %v1498
        %v1563 = vunpack.c.l.b16 %v1499
        %v1564 = vunpack.c.l.b16 %v1500
        %v1565 = vunpack.c.l.b16 %v1501
        %v1566 = vunpack.c.l.b16 %v1502
        %v1567 = vunpack.c.l.b16 %v1503
        %v1568 = vunpack.c.l.b16 %v1504
        %v1569 = vpack.c.b16 %v1538, %v1537
        %v1570 = vpack.c.b16 %v1540, %v1539
        %v1571 = vpack.c.b16 %v1542, %v1541
        %v1572 = vpack.c.b16 %v1544, %v1543
        %v1573 = vpack.c.b16 %v1546, %v1545
        %v1574 = vpack.c.b16 %v1548, %v1547
        %v1575 = vpack.c.b16 %v1550, %v1549
        %v1576 = vpack.c.b16 %v1552, %v1551
        %v1577 = vpack.c.b16 %v1554, %v1553
        %v1578 = vpack.c.b16 %v1556, %v1555
        %v1579 = vpack.c.b16 %v1558, %v1557
        %v1580 = vpack.c.b16 %v1560, %v1559
        %v1581 = vpack.c.b16 %v1562, %v1561
        %v1582 = vpack.c.b16 %v1564, %v1563
        %v1583 = vpack.c.b16 %v1566, %v1565
        %v1584 = vpack.c.b16 %v1568, %v1567
        %v1586 = vsel %vm901, %v1569, 0
        %v1589 = vsel %vm901, %v1570, 0
        %v1592 = vsel %vm901, %v1571, 0
        %v1595 = vsel %vm901, %v1572, 0
        %v1598 = vsel %vm901, %v1573, 0
        %v1601 = vsel %vm901, %v1574, 0
        %v1604 = vsel %vm901, %v1575, 0
        %v1607 = vsel %vm901, %v1576, 0
        %v1610 = vsel %vm901, %v1577, 0
        %v1613 = vsel %vm901, %v1578, 0
        %v1616 = vsel %vm901, %v1579, 0
        %v1619 = vsel %vm901, %v1580, 0
        %v1622 = vsel %vm901, %v1581, 0
        %v1625 = vsel %vm901, %v1582, 0
        %v1628 = vsel %vm901, %v1583, 0
        %v1631 = vsel %vm901, %v1584, 0
        %1633 = vmatprep.subr.bf16.mxu0 0
        %1634 = vmatpush1.bf16.msra.mxu0 %v892
        %1635 = vmatprep.subr.bf16.mxu0 0
        %1636 = vmatpush1.bf16.msra.mxu0 %v893
        %1637 = vmatprep.subr.bf16.mxu0 0
        %1638 = vmatpush1.bf16.msra.mxu0 %v894
        %1639 = vmatprep.subr.bf16.mxu0 0
        %1640 = vmatpush1.bf16.msra.mxu0 %v895
        %1641 = vmatprep.subr.bf16.mxu0 0
        %1642 = vmatpush1.bf16.msra.mxu0 %v955
        %1643 = vmatprep.subr.bf16.mxu0 0
        %1644 = vmatpush1.bf16.msra.mxu0 0
        %1645 = vmatprep.subr.bf16.mxu0 0
        %1646 = vmatpush1.bf16.msra.mxu0 0
        %1647 = vmatprep.subr.bf16.mxu0 0
        %1648 = vmatpush1.bf16.msra.mxu0 0
        %1649 = vmatprep.subr.bf16.mxu0 0
        %1650 = vmatpush1.bf16.msra.mxu0 0
        %1651 = vmatprep.subr.bf16.mxu0 0
        %1652 = vmatpush1.bf16.msra.mxu0 0
        %1653 = vmatprep.subr.bf16.mxu0 0
        %1654 = vmatpush1.bf16.msra.mxu0 0
        %1655 = vmatprep.subr.bf16.mxu0 0
        %1656 = vmatpush1.bf16.msra.mxu0 0
        %1657 = vmatprep.subr.bf16.mxu0 0
        %1658 = vmatpush1.bf16.msra.mxu0 0
        %1659 = vmatprep.subr.bf16.mxu0 0
        %1660 = vmatpush1.bf16.msra.mxu0 0
        %1661 = vmatprep.subr.bf16.mxu0 0
        %1662 = vmatpush1.bf16.msra.mxu0 0
        %1663 = vmatprep.subr.bf16.mxu0 0
        %1664 = vmatpush1.bf16.msra.mxu0 0
        %1665 = vmatprep.mubr.bf16.mxu0 0
        %1666 = vmatmul.mubr.bf16.gmra.mrb[0].mxu0 %v1586
        %v1667 = vpop.f32.mrb[0].mxu0
        %v1668 = vadd.f32 0.0, %v1667
        %v1669 = vpop.f32.mrb[0].mxu0
        %v1670 = vpop.f32.mrb[0].mxu0
        %v1671 = vadd.f32 0.0, %v1670
        %v1672 = vpop.f32.mrb[0].mxu0
        %1673 = vmatprep.mubr.bf16.mxu0 0
        %1674 = vmatmul.mubr.bf16.gmra.mrb[0].mxu0 %v1589
        %v1675 = vpop.f32.mrb[0].mxu0
        %v1676 = vadd.f32 0.0, %v1675
        %v1677 = vpop.f32.mrb[0].mxu0
        %v1678 = vpop.f32.mrb[0].mxu0
        %v1679 = vadd.f32 0.0, %v1678
        %v1680 = vpop.f32.mrb[0].mxu0
        %1681 = vmatprep.mubr.bf16.mxu0 0
        %1682 = vmatmul.mubr.bf16.gmra.mrb[0].mxu0 %v1592
        %v1683 = vpop.f32.mrb[0].mxu0
        %v1684 = vadd.f32 0.0, %v1683
        %v1685 = vpop.f32.mrb[0].mxu0
        %v1686 = vpop.f32.mrb[0].mxu0
        %v1687 = vadd.f32 0.0, %v1686
        %v1688 = vpop.f32.mrb[0].mxu0
        %1689 = vmatprep.mubr.bf16.mxu0 0
        %1690 = vmatmul.mubr.bf16.gmra.mrb[0].mxu0 %v1595
        %v1691 = vpop.f32.mrb[0].mxu0
        %v1692 = vadd.f32 0.0, %v1691
        %v1693 = vpop.f32.mrb[0].mxu0
        %v1694 = vpop.f32.mrb[0].mxu0
        %v1695 = vadd.f32 0.0, %v1694
        %v1696 = vpop.f32.mrb[0].mxu0
        %1697 = vmatprep.mubr.bf16.mxu0 0
        %1698 = vmatmul.mubr.bf16.gmra.mrb[0].mxu0 %v1598
        %v1699 = vpop.f32.mrb[0].mxu0
        %v1700 = vadd.f32 0.0, %v1699
        %v1701 = vpop.f32.mrb[0].mxu0
        %v1702 = vpop.f32.mrb[0].mxu0
        %v1703 = vadd.f32 0.0, %v1702
        %v1704 = vpop.f32.mrb[0].mxu0
        %1705 = vmatprep.mubr.bf16.mxu0 0
        %1706 = vmatmul.mubr.bf16.gmra.mrb[0].mxu0 %v1601
        %v1707 = vpop.f32.mrb[0].mxu0
        %v1708 = vadd.f32 0.0, %v1707
        %v1709 = vpop.f32.mrb[0].mxu0
        %v1710 = vpop.f32.mrb[0].mxu0
        %v1711 = vadd.f32 0.0, %v1710
        %v1712 = vpop.f32.mrb[0].mxu0
        %1713 = vmatprep.mubr.bf16.mxu0 0
        %1714 = vmatmul.mubr.bf16.gmra.mrb[0].mxu0 %v1604
        %v1715 = vpop.f32.mrb[0].mxu0
        %v1716 = vadd.f32 0.0, %v1715
        %v1717 = vpop.f32.mrb[0].mxu0
        %v1718 = vpop.f32.mrb[0].mxu0
        %v1719 = vadd.f32 0.0, %v1718
        %v1720 = vpop.f32.mrb[0].mxu0
        %1721 = vmatprep.mubr.bf16.mxu0 0
        %1722 = vmatmul.mubr.bf16.gmra.mrb[0].mxu0 %v1607
        %v1723 = vpop.f32.mrb[0].mxu0
        %v1724 = vadd.f32 0.0, %v1723
        %v1725 = vpop.f32.mrb[0].mxu0
        %v1726 = vpop.f32.mrb[0].mxu0
        %v1727 = vadd.f32 0.0, %v1726
        %v1728 = vpop.f32.mrb[0].mxu0
        %1729 = vmatprep.mubr.bf16.mxu0 0
        %1730 = vmatmul.mubr.bf16.gmra.mrb[0].mxu0 %v1610
        %v1731 = vpop.f32.mrb[0].mxu0
        %v1732 = vadd.f32 0.0, %v1731
        %v1733 = vpop.f32.mrb[0].mxu0
        %v1734 = vpop.f32.mrb[0].mxu0
        %v1735 = vadd.f32 0.0, %v1734
        %v1736 = vpop.f32.mrb[0].mxu0
        %1737 = vmatprep.mubr.bf16.mxu0 0
        %1738 = vmatmul.mubr.bf16.gmra.mrb[0].mxu0 %v1613
        %v1739 = vpop.f32.mrb[0].mxu0
        %v1740 = vadd.f32 0.0, %v1739
        %v1741 = vpop.f32.mrb[0].mxu0
        %v1742 = vpop.f32.mrb[0].mxu0
        %v1743 = vadd.f32 0.0, %v1742
        %v1744 = vpop.f32.mrb[0].mxu0
        %1745 = vmatprep.mubr.bf16.mxu0 0
        %1746 = vmatmul.mubr.bf16.gmra.mrb[0].mxu0 %v1616
        %v1747 = vpop.f32.mrb[0].mxu0
        %v1748 = vadd.f32 0.0, %v1747
        %v1749 = vpop.f32.mrb[0].mxu0
        %v1750 = vpop.f32.mrb[0].mxu0
        %v1751 = vadd.f32 0.0, %v1750
        %v1752 = vpop.f32.mrb[0].mxu0
        %1753 = vmatprep.mubr.bf16.mxu0 0
        %1754 = vmatmul.mubr.bf16.gmra.mrb[0].mxu0 %v1619
        %v1755 = vpop.f32.mrb[0].mxu0
        %v1756 = vadd.f32 0.0, %v1755
        %v1757 = vpop.f32.mrb[0].mxu0
        %v1758 = vpop.f32.mrb[0].mxu0
        %v1759 = vadd.f32 0.0, %v1758
        %v1760 = vpop.f32.mrb[0].mxu0
        %1761 = vmatprep.mubr.bf16.mxu0 0
        %1762 = vmatmul.mubr.bf16.gmra.mrb[0].mxu0 %v1622
        %v1763 = vpop.f32.mrb[0].mxu0
        %v1764 = vadd.f32 0.0, %v1763
        %v1765 = vpop.f32.mrb[0].mxu0
        %v1766 = vpop.f32.mrb[0].mxu0
        %v1767 = vadd.f32 0.0, %v1766
        %v1768 = vpop.f32.mrb[0].mxu0
        %1769 = vmatprep.mubr.bf16.mxu0 0
        %1770 = vmatmul.mubr.bf16.gmra.mrb[0].mxu0 %v1625
        %v1771 = vpop.f32.mrb[0].mxu0
        %v1772 = vadd.f32 0.0, %v1771
        %v1773 = vpop.f32.mrb[0].mxu0
        %v1774 = vpop.f32.mrb[0].mxu0
        %v1775 = vadd.f32 0.0, %v1774
        %v1776 = vpop.f32.mrb[0].mxu0
        %1777 = vmatprep.mubr.bf16.mxu0 0
        %1778 = vmatmul.mubr.bf16.gmra.mrb[0].mxu0 %v1628
        %v1779 = vpop.f32.mrb[0].mxu0
        %v1780 = vadd.f32 0.0, %v1779
        %v1781 = vpop.f32.mrb[0].mxu0
        %v1782 = vpop.f32.mrb[0].mxu0
        %v1783 = vadd.f32 0.0, %v1782
        %v1784 = vpop.f32.mrb[0].mxu0
        %1785 = vmatprep.mubr.bf16.mxu0 0
        %1786 = vmatmul.mubr.bf16.gmra.mrb[0].mxu0 %v1631
        %v1787 = vpop.f32.mrb[0].mxu0
        %v1788 = vadd.f32 0.0, %v1787
        %v1789 = vpop.f32.mrb[0].mxu0
        %v1790 = vpop.f32.mrb[0].mxu0
        %v1791 = vadd.f32 0.0, %v1790
        %v1792 = vpop.f32.mrb[0].mxu0
        %1793 = vdwg.mxu0
        %v1794 = vmax.f32 %v1440, %v1668
        %v1795 = vmax.f32 %v1441, %v1671
        %v1796 = vmax.f32 %v1442, %v1676
        %v1797 = vmax.f32 %v1443, %v1679
        %v1798 = vmax.f32 %v1444, %v1684
        %v1799 = vmax.f32 %v1445, %v1687
        %v1800 = vmax.f32 %v1446, %v1692
        %v1801 = vmax.f32 %v1447, %v1695
        %v1802 = vmax.f32 %v1448, %v1700
        %v1803 = vmax.f32 %v1449, %v1703
        %v1804 = vmax.f32 %v1450, %v1708
        %v1805 = vmax.f32 %v1451, %v1711
        %v1806 = vmax.f32 %v1452, %v1716
        %v1807 = vmax.f32 %v1453, %v1719
        %v1808 = vmax.f32 %v1454, %v1724
        %v1809 = vmax.f32 %v1455, %v1727
        %v1810 = vmax.f32 %v1456, %v1732
        %v1811 = vmax.f32 %v1457, %v1735
        %v1812 = vmax.f32 %v1458, %v1740
        %v1813 = vmax.f32 %v1459, %v1743
        %v1814 = vmax.f32 %v1460, %v1748
        %v1815 = vmax.f32 %v1461, %v1751
        %v1816 = vmax.f32 %v1462, %v1756
        %v1817 = vmax.f32 %v1463, %v1759
        %v1818 = vmax.f32 %v1464, %v1764
        %v1819 = vmax.f32 %v1465, %v1767
        %v1820 = vmax.f32 %v1466, %v1772
        %v1821 = vmax.f32 %v1467, %v1775
        %v1822 = vmax.f32 %v1468, %v1780
        %v1823 = vmax.f32 %v1469, %v1783
        %v1824 = vmax.f32 %v1470, %v1788
        %v1825 = vmax.f32 %v1471, %v1791
        %s1826 = scalar_lea.vmem %s713, 384 [#allocation2]
        %v1827 = vld [vmem:[%s1826] sm:$0xf]
        %v1828 = vld [vmem:[%s1826 + $0x4] sm:$0xf]
        %v1829 = vld [vmem:[%s1826 + $0x8] sm:$0xf]
        %v1830 = vld [vmem:[%s1826 + $0xc] sm:$0xf]
        %v1831 = vld [vmem:[%s1826 + $0x10] sm:$0xf]
        %v1832 = vld [vmem:[%s1826 + $0x14] sm:$0xf]
        %v1833 = vld [vmem:[%s1826 + $0x18] sm:$0xf]
        %v1834 = vld [vmem:[%s1826 + $0x1c] sm:$0xf]
        %v1835 = vld [vmem:[%s1826 + $0x20] sm:$0xf]
        %v1836 = vld [vmem:[%s1826 + $0x24] sm:$0xf]
        %v1837 = vld [vmem:[%s1826 + $0x28] sm:$0xf]
        %v1838 = vld [vmem:[%s1826 + $0x2c] sm:$0xf]
        %v1839 = vld [vmem:[%s1826 + $0x30] sm:$0xf]
        %v1840 = vld [vmem:[%s1826 + $0x34] sm:$0xf]
        %v1841 = vld [vmem:[%s1826 + $0x38] sm:$0xf]
        %v1842 = vld [vmem:[%s1826 + $0x3c] sm:$0xf]
        %v1843 = vld [vmem:[%s1826 + $0x40] sm:$0xf]
        %v1844 = vld [vmem:[%s1826 + $0x44] sm:$0xf]
        %v1845 = vld [vmem:[%s1826 + $0x48] sm:$0xf]
        %v1846 = vld [vmem:[%s1826 + $0x4c] sm:$0xf]
        %v1847 = vld [vmem:[%s1826 + $0x50] sm:$0xf]
        %v1848 = vld [vmem:[%s1826 + $0x54] sm:$0xf]
        %v1849 = vld [vmem:[%s1826 + $0x58] sm:$0xf]
        %v1850 = vld [vmem:[%s1826 + $0x5c] sm:$0xf]
        %v1851 = vld [vmem:[%s1826 + $0x60] sm:$0xf]
        %v1852 = vld [vmem:[%s1826 + $0x64] sm:$0xf]
        %v1853 = vld [vmem:[%s1826 + $0x68] sm:$0xf]
        %v1854 = vld [vmem:[%s1826 + $0x6c] sm:$0xf]
        %v1855 = vld [vmem:[%s1826 + $0x70] sm:$0xf]
        %v1856 = vld [vmem:[%s1826 + $0x74] sm:$0xf]
        %v1857 = vld [vmem:[%s1826 + $0x78] sm:$0xf]
        %v1858 = vld [vmem:[%s1826 + $0x7c] sm:$0xf]
        %v1891 = vunpack.c.l.b16 %v1827
        %v1892 = vunpack.c.l.b16 %v1828
        %v1893 = vunpack.c.l.b16 %v1829
        %v1894 = vunpack.c.l.b16 %v1830
        %v1895 = vunpack.c.l.b16 %v1831
        %v1896 = vunpack.c.l.b16 %v1832
        %v1897 = vunpack.c.l.b16 %v1833
        %v1898 = vunpack.c.l.b16 %v1834
        %v1899 = vunpack.c.l.b16 %v1835
        %v1900 = vunpack.c.l.b16 %v1836
        %v1901 = vunpack.c.l.b16 %v1837
        %v1902 = vunpack.c.l.b16 %v1838
        %v1903 = vunpack.c.l.b16 %v1839
        %v1904 = vunpack.c.l.b16 %v1840
        %v1905 = vunpack.c.l.b16 %v1841
        %v1906 = vunpack.c.l.b16 %v1842
        %v1907 = vunpack.c.l.b16 %v1843
        %v1908 = vunpack.c.l.b16 %v1844
        %v1909 = vunpack.c.l.b16 %v1845
        %v1910 = vunpack.c.l.b16 %v1846
        %v1911 = vunpack.c.l.b16 %v1847
        %v1912 = vunpack.c.l.b16 %v1848
        %v1913 = vunpack.c.l.b16 %v1849
        %v1914 = vunpack.c.l.b16 %v1850
        %v1915 = vunpack.c.l.b16 %v1851
        %v1916 = vunpack.c.l.b16 %v1852
        %v1917 = vunpack.c.l.b16 %v1853
        %v1918 = vunpack.c.l.b16 %v1854
        %v1919 = vunpack.c.l.b16 %v1855
        %v1920 = vunpack.c.l.b16 %v1856
        %v1921 = vunpack.c.l.b16 %v1857
        %v1922 = vunpack.c.l.b16 %v1858
        %v1923 = vpack.c.b16 %v1892, %v1891
        %v1924 = vpack.c.b16 %v1894, %v1893
        %v1925 = vpack.c.b16 %v1896, %v1895
        %v1926 = vpack.c.b16 %v1898, %v1897
        %v1927 = vpack.c.b16 %v1900, %v1899
        %v1928 = vpack.c.b16 %v1902, %v1901
        %v1929 = vpack.c.b16 %v1904, %v1903
        %v1930 = vpack.c.b16 %v1906, %v1905
        %v1931 = vpack.c.b16 %v1908, %v1907
        %v1932 = vpack.c.b16 %v1910, %v1909
        %v1933 = vpack.c.b16 %v1912, %v1911
        %v1934 = vpack.c.b16 %v1914, %v1913
        %v1935 = vpack.c.b16 %v1916, %v1915
        %v1936 = vpack.c.b16 %v1918, %v1917
        %v1937 = vpack.c.b16 %v1920, %v1919
        %v1938 = vpack.c.b16 %v1922, %v1921
        %v1940 = vsel %vm901, %v1923, 0
        %v1943 = vsel %vm901, %v1924, 0
        %v1946 = vsel %vm901, %v1925, 0
        %v1949 = vsel %vm901, %v1926, 0
        %v1952 = vsel %vm901, %v1927, 0
        %v1955 = vsel %vm901, %v1928, 0
        %v1958 = vsel %vm901, %v1929, 0
        %v1961 = vsel %vm901, %v1930, 0
        %v1964 = vsel %vm901, %v1931, 0
        %v1967 = vsel %vm901, %v1932, 0
        %v1970 = vsel %vm901, %v1933, 0
        %v1973 = vsel %vm901, %v1934, 0
        %v1976 = vsel %vm901, %v1935, 0
        %v1979 = vsel %vm901, %v1936, 0
        %v1982 = vsel %vm901, %v1937, 0
        %v1985 = vsel %vm901, %v1938, 0
        %1987 = vmatprep.subr.bf16.mxu0 0
        %1988 = vmatpush1.bf16.msra.mxu0 %v892
        %1989 = vmatprep.subr.bf16.mxu0 0
        %1990 = vmatpush1.bf16.msra.mxu0 %v893
        %1991 = vmatprep.subr.bf16.mxu0 0
        %1992 = vmatpush1.bf16.msra.mxu0 %v894
        %1993 = vmatprep.subr.bf16.mxu0 0
        %1994 = vmatpush1.bf16.msra.mxu0 %v895
        %1995 = vmatprep.subr.bf16.mxu0 0
        %1996 = vmatpush1.bf16.msra.mxu0 %v955
        %1997 = vmatprep.subr.bf16.mxu0 0
        %1998 = vmatpush1.bf16.msra.mxu0 0
        %1999 = vmatprep.subr.bf16.mxu0 0
        %2000 = vmatpush1.bf16.msra.mxu0 0
        %2001 = vmatprep.subr.bf16.mxu0 0
        %2002 = vmatpush1.bf16.msra.mxu0 0
        %2003 = vmatprep.subr.bf16.mxu0 0
        %2004 = vmatpush1.bf16.msra.mxu0 0
        %2005 = vmatprep.subr.bf16.mxu0 0
        %2006 = vmatpush1.bf16.msra.mxu0 0
        %2007 = vmatprep.subr.bf16.mxu0 0
        %2008 = vmatpush1.bf16.msra.mxu0 0
        %2009 = vmatprep.subr.bf16.mxu0 0
        %2010 = vmatpush1.bf16.msra.mxu0 0
        %2011 = vmatprep.subr.bf16.mxu0 0
        %2012 = vmatpush1.bf16.msra.mxu0 0
        %2013 = vmatprep.subr.bf16.mxu0 0
        %2014 = vmatpush1.bf16.msra.mxu0 0
        %2015 = vmatprep.subr.bf16.mxu0 0
        %2016 = vmatpush1.bf16.msra.mxu0 0
        %2017 = vmatprep.subr.bf16.mxu0 0
        %2018 = vmatpush1.bf16.msra.mxu0 0
        %2019 = vmatprep.mubr.bf16.mxu0 0
        %2020 = vmatmul.mubr.bf16.gmra.mrb[0].mxu0 %v1940
        %v2021 = vpop.f32.mrb[0].mxu0
        %v2022 = vadd.f32 0.0, %v2021
        %v2023 = vpop.f32.mrb[0].mxu0
        %v2024 = vpop.f32.mrb[0].mxu0
        %v2025 = vadd.f32 0.0, %v2024
        %v2026 = vpop.f32.mrb[0].mxu0
        %2027 = vmatprep.mubr.bf16.mxu0 0
        %2028 = vmatmul.mubr.bf16.gmra.mrb[0].mxu0 %v1943
        %v2029 = vpop.f32.mrb[0].mxu0
        %v2030 = vadd.f32 0.0, %v2029
        %v2031 = vpop.f32.mrb[0].mxu0
        %v2032 = vpop.f32.mrb[0].mxu0
        %v2033 = vadd.f32 0.0, %v2032
        %v2034 = vpop.f32.mrb[0].mxu0
        %2035 = vmatprep.mubr.bf16.mxu0 0
        %2036 = vmatmul.mubr.bf16.gmra.mrb[0].mxu0 %v1946
        %v2037 = vpop.f32.mrb[0].mxu0
        %v2038 = vadd.f32 0.0, %v2037
        %v2039 = vpop.f32.mrb[0].mxu0
        %v2040 = vpop.f32.mrb[0].mxu0
        %v2041 = vadd.f32 0.0, %v2040
        %v2042 = vpop.f32.mrb[0].mxu0
        %2043 = vmatprep.mubr.bf16.mxu0 0
        %2044 = vmatmul.mubr.bf16.gmra.mrb[0].mxu0 %v1949
        %v2045 = vpop.f32.mrb[0].mxu0
        %v2046 = vadd.f32 0.0, %v2045
        %v2047 = vpop.f32.mrb[0].mxu0
        %v2048 = vpop.f32.mrb[0].mxu0
        %v2049 = vadd.f32 0.0, %v2048
        %v2050 = vpop.f32.mrb[0].mxu0
        %2051 = vmatprep.mubr.bf16.mxu0 0
        %2052 = vmatmul.mubr.bf16.gmra.mrb[0].mxu0 %v1952
        %v2053 = vpop.f32.mrb[0].mxu0
        %v2054 = vadd.f32 0.0, %v2053
        %v2055 = vpop.f32.mrb[0].mxu0
        %v2056 = vpop.f32.mrb[0].mxu0
        %v2057 = vadd.f32 0.0, %v2056
        %v2058 = vpop.f32.mrb[0].mxu0
        %2059 = vmatprep.mubr.bf16.mxu0 0
        %2060 = vmatmul.mubr.bf16.gmra.mrb[0].mxu0 %v1955
        %v2061 = vpop.f32.mrb[0].mxu0
        %v2062 = vadd.f32 0.0, %v2061
        %v2063 = vpop.f32.mrb[0].mxu0
        %v2064 = vpop.f32.mrb[0].mxu0
        %v2065 = vadd.f32 0.0, %v2064
        %v2066 = vpop.f32.mrb[0].mxu0
        %2067 = vmatprep.mubr.bf16.mxu0 0
        %2068 = vmatmul.mubr.bf16.gmra.mrb[0].mxu0 %v1958
        %v2069 = vpop.f32.mrb[0].mxu0
        %v2070 = vadd.f32 0.0, %v2069
        %v2071 = vpop.f32.mrb[0].mxu0
        %v2072 = vpop.f32.mrb[0].mxu0
        %v2073 = vadd.f32 0.0, %v2072
        %v2074 = vpop.f32.mrb[0].mxu0
        %2075 = vmatprep.mubr.bf16.mxu0 0
        %2076 = vmatmul.mubr.bf16.gmra.mrb[0].mxu0 %v1961
        %v2077 = vpop.f32.mrb[0].mxu0
        %v2078 = vadd.f32 0.0, %v2077
        %v2079 = vpop.f32.mrb[0].mxu0
        %v2080 = vpop.f32.mrb[0].mxu0
        %v2081 = vadd.f32 0.0, %v2080
        %v2082 = vpop.f32.mrb[0].mxu0
        %2083 = vmatprep.mubr.bf16.mxu0 0
        %2084 = vmatmul.mubr.bf16.gmra.mrb[0].mxu0 %v1964
        %v2085 = vpop.f32.mrb[0].mxu0
        %v2086 = vadd.f32 0.0, %v2085
        %v2087 = vpop.f32.mrb[0].mxu0
        %v2088 = vpop.f32.mrb[0].mxu0
        %v2089 = vadd.f32 0.0, %v2088
        %v2090 = vpop.f32.mrb[0].mxu0
        %2091 = vmatprep.mubr.bf16.mxu0 0
        %2092 = vmatmul.mubr.bf16.gmra.mrb[0].mxu0 %v1967
        %v2093 = vpop.f32.mrb[0].mxu0
        %v2094 = vadd.f32 0.0, %v2093
        %v2095 = vpop.f32.mrb[0].mxu0
        %v2096 = vpop.f32.mrb[0].mxu0
        %v2097 = vadd.f32 0.0, %v2096
        %v2098 = vpop.f32.mrb[0].mxu0
        %2099 = vmatprep.mubr.bf16.mxu0 0
        %2100 = vmatmul.mubr.bf16.gmra.mrb[0].mxu0 %v1970
        %v2101 = vpop.f32.mrb[0].mxu0
        %v2102 = vadd.f32 0.0, %v2101
        %v2103 = vpop.f32.mrb[0].mxu0
        %v2104 = vpop.f32.mrb[0].mxu0
        %v2105 = vadd.f32 0.0, %v2104
        %v2106 = vpop.f32.mrb[0].mxu0
        %2107 = vmatprep.mubr.bf16.mxu0 0
        %2108 = vmatmul.mubr.bf16.gmra.mrb[0].mxu0 %v1973
        %v2109 = vpop.f32.mrb[0].mxu0
        %v2110 = vadd.f32 0.0, %v2109
        %v2111 = vpop.f32.mrb[0].mxu0
        %v2112 = vpop.f32.mrb[0].mxu0
        %v2113 = vadd.f32 0.0, %v2112
        %v2114 = vpop.f32.mrb[0].mxu0
        %2115 = vmatprep.mubr.bf16.mxu0 0
        %2116 = vmatmul.mubr.bf16.gmra.mrb[0].mxu0 %v1976
        %v2117 = vpop.f32.mrb[0].mxu0
        %v2118 = vadd.f32 0.0, %v2117
        %v2119 = vpop.f32.mrb[0].mxu0
        %v2120 = vpop.f32.mrb[0].mxu0
        %v2121 = vadd.f32 0.0, %v2120
        %v2122 = vpop.f32.mrb[0].mxu0
        %2123 = vmatprep.mubr.bf16.mxu0 0
        %2124 = vmatmul.mubr.bf16.gmra.mrb[0].mxu0 %v1979
        %v2125 = vpop.f32.mrb[0].mxu0
        %v2126 = vadd.f32 0.0, %v2125
        %v2127 = vpop.f32.mrb[0].mxu0
        %v2128 = vpop.f32.mrb[0].mxu0
        %v2129 = vadd.f32 0.0, %v2128
        %v2130 = vpop.f32.mrb[0].mxu0
        %2131 = vmatprep.mubr.bf16.mxu0 0
        %2132 = vmatmul.mubr.bf16.gmra.mrb[0].mxu0 %v1982
        %v2133 = vpop.f32.mrb[0].mxu0
        %v2134 = vadd.f32 0.0, %v2133
        %v2135 = vpop.f32.mrb[0].mxu0
        %v2136 = vpop.f32.mrb[0].mxu0
        %v2137 = vadd.f32 0.0, %v2136
        %v2138 = vpop.f32.mrb[0].mxu0
        %2139 = vmatprep.mubr.bf16.mxu0 0
        %2140 = vmatmul.mubr.bf16.gmra.mrb[0].mxu0 %v1985
        %v2141 = vpop.f32.mrb[0].mxu0
        %v2142 = vadd.f32 0.0, %v2141
        %v2143 = vpop.f32.mrb[0].mxu0
        %v2144 = vpop.f32.mrb[0].mxu0
        %v2145 = vadd.f32 0.0, %v2144
        %v2146 = vpop.f32.mrb[0].mxu0
        %2147 = vdwg.mxu0
        %v2148 = vmax.f32 %v1794, %v2022
        %v2149 = vmax.f32 %v1795, %v2025
        %v2150 = vmax.f32 %v1796, %v2030
        %v2151 = vmax.f32 %v1797, %v2033
        %v2152 = vmax.f32 %v1798, %v2038
        %v2153 = vmax.f32 %v1799, %v2041
        %v2154 = vmax.f32 %v1800, %v2046
        %v2155 = vmax.f32 %v1801, %v2049
        %v2156 = vmax.f32 %v1802, %v2054
        %v2157 = vmax.f32 %v1803, %v2057
        %v2158 = vmax.f32 %v1804, %v2062
        %v2159 = vmax.f32 %v1805, %v2065
        %v2160 = vmax.f32 %v1806, %v2070
        %v2161 = vmax.f32 %v1807, %v2073
        %v2162 = vmax.f32 %v1808, %v2078
        %v2163 = vmax.f32 %v1809, %v2081
        %v2164 = vmax.f32 %v1810, %v2086
        %v2165 = vmax.f32 %v1811, %v2089
        %v2166 = vmax.f32 %v1812, %v2094
        %v2167 = vmax.f32 %v1813, %v2097
        %v2168 = vmax.f32 %v1814, %v2102
        %v2169 = vmax.f32 %v1815, %v2105
        %v2170 = vmax.f32 %v1816, %v2110
        %v2171 = vmax.f32 %v1817, %v2113
        %v2172 = vmax.f32 %v1818, %v2118
        %v2173 = vmax.f32 %v1819, %v2121
        %v2174 = vmax.f32 %v1820, %v2126
        %v2175 = vmax.f32 %v1821, %v2129
        %v2176 = vmax.f32 %v1822, %v2134
        %v2177 = vmax.f32 %v1823, %v2137
        %v2178 = vmax.f32 %v1824, %v2142
        %v2179 = vmax.f32 %v1825, %v2145
        %v2180 = vld [vmem:[%s2] sm:$0x1]
        %v2182 = vlaneseq
        %v2183 = vshrl.u32 %v2182, 7
        %v2184 = vsub.s32 0, %v2183
        %v2185 = vrot.slane %v2180, %v2184
        %v2187 = vadd.f32 %v2148, %v2185
        %v2188 = vadd.f32 %v2149, %v2185
        %v2189 = vadd.f32 %v2150, %v2185
        %v2190 = vadd.f32 %v2151, %v2185
        %v2191 = vadd.f32 %v2152, %v2185
        %v2192 = vadd.f32 %v2153, %v2185
        %v2193 = vadd.f32 %v2154, %v2185
        %v2194 = vadd.f32 %v2155, %v2185
        %v2195 = vadd.f32 %v2156, %v2185
        %v2196 = vadd.f32 %v2157, %v2185
        %v2197 = vadd.f32 %v2158, %v2185
        %v2198 = vadd.f32 %v2159, %v2185
        %v2199 = vadd.f32 %v2160, %v2185
        %v2200 = vadd.f32 %v2161, %v2185
        %v2201 = vadd.f32 %v2162, %v2185
        %v2202 = vadd.f32 %v2163, %v2185
        %v2203 = vadd.f32 %v2164, %v2185
        %v2204 = vadd.f32 %v2165, %v2185
        %v2205 = vadd.f32 %v2166, %v2185
        %v2206 = vadd.f32 %v2167, %v2185
        %v2207 = vadd.f32 %v2168, %v2185
        %v2208 = vadd.f32 %v2169, %v2185
        %v2209 = vadd.f32 %v2170, %v2185
        %v2210 = vadd.f32 %v2171, %v2185
        %v2211 = vadd.f32 %v2172, %v2185
        %v2212 = vadd.f32 %v2173, %v2185
        %v2213 = vadd.f32 %v2174, %v2185
        %v2214 = vadd.f32 %v2175, %v2185
        %v2215 = vadd.f32 %v2176, %v2185
        %v2216 = vadd.f32 %v2177, %v2185
        %v2217 = vadd.f32 %v2178, %v2185
        %v2218 = vadd.f32 %v2179, %v2185
        %v2219 = vmax.f32 %v2187, 0.0
        %v2220 = vmax.f32 %v2188, 0.0
        %v2221 = vmax.f32 %v2189, 0.0
        %v2222 = vmax.f32 %v2190, 0.0
        %v2223 = vmax.f32 %v2191, 0.0
        %v2224 = vmax.f32 %v2192, 0.0
        %v2225 = vmax.f32 %v2193, 0.0
        %v2226 = vmax.f32 %v2194, 0.0
        %v2227 = vmax.f32 %v2195, 0.0
        %v2228 = vmax.f32 %v2196, 0.0
        %v2229 = vmax.f32 %v2197, 0.0
        %v2230 = vmax.f32 %v2198, 0.0
        %v2231 = vmax.f32 %v2199, 0.0
        %v2232 = vmax.f32 %v2200, 0.0
        %v2233 = vmax.f32 %v2201, 0.0
        %v2234 = vmax.f32 %v2202, 0.0
        %v2235 = vmax.f32 %v2203, 0.0
        %v2236 = vmax.f32 %v2204, 0.0
        %v2237 = vmax.f32 %v2205, 0.0
        %v2238 = vmax.f32 %v2206, 0.0
        %v2239 = vmax.f32 %v2207, 0.0
        %v2240 = vmax.f32 %v2208, 0.0
        %v2241 = vmax.f32 %v2209, 0.0
        %v2242 = vmax.f32 %v2210, 0.0
        %v2243 = vmax.f32 %v2211, 0.0
        %v2244 = vmax.f32 %v2212, 0.0
        %v2245 = vmax.f32 %v2213, 0.0
        %v2246 = vmax.f32 %v2214, 0.0
        %v2247 = vmax.f32 %v2215, 0.0
        %v2248 = vmax.f32 %v2216, 0.0
        %v2249 = vmax.f32 %v2217, 0.0
        %v2250 = vmax.f32 %v2218, 0.0
        %vm2251 = vcmask 130048
        %2252 = vst.msk [vmem:[%s747] sm:$0xff] %vm2251, %v2219
        %2253 = vst.msk [vmem:[%s747 + $0x8] sm:$0xff] %vm2251, %v2220
        %2254 = vst.msk [vmem:[%s747 + $0x10] sm:$0xff] %vm2251, %v2221
        %2255 = vst.msk [vmem:[%s747 + $0x18] sm:$0xff] %vm2251, %v2222
        %2256 = vst.msk [vmem:[%s747 + $0x20] sm:$0xff] %vm2251, %v2223
        %2257 = vst.msk [vmem:[%s747 + $0x28] sm:$0xff] %vm2251, %v2224
        %2258 = vst.msk [vmem:[%s747 + $0x30] sm:$0xff] %vm2251, %v2225
        %2259 = vst.msk [vmem:[%s747 + $0x38] sm:$0xff] %vm2251, %v2226
        %2260 = vst.msk [vmem:[%s747 + $0x40] sm:$0xff] %vm2251, %v2227
        %2261 = vst.msk [vmem:[%s747 + $0x48] sm:$0xff] %vm2251, %v2228
        %2262 = vst.msk [vmem:[%s747 + $0x50] sm:$0xff] %vm2251, %v2229
        %2263 = vst.msk [vmem:[%s747 + $0x58] sm:$0xff] %vm2251, %v2230
        %2264 = vst.msk [vmem:[%s747 + $0x60] sm:$0xff] %vm2251, %v2231
        %2265 = vst.msk [vmem:[%s747 + $0x68] sm:$0xff] %vm2251, %v2232
        %2266 = vst.msk [vmem:[%s747 + $0x70] sm:$0xff] %vm2251, %v2233
        %2267 = vst.msk [vmem:[%s747 + $0x78] sm:$0xff] %vm2251, %v2234
        %2268 = vst.msk [vmem:[%s747 + $0x80] sm:$0xff] %vm2251, %v2235
        %2269 = vst.msk [vmem:[%s747 + $0x88] sm:$0xff] %vm2251, %v2236
        %2270 = vst.msk [vmem:[%s747 + $0x90] sm:$0xff] %vm2251, %v2237
        %2271 = vst.msk [vmem:[%s747 + $0x98] sm:$0xff] %vm2251, %v2238
        %2272 = vst.msk [vmem:[%s747 + $0xa0] sm:$0xff] %vm2251, %v2239
        %2273 = vst.msk [vmem:[%s747 + $0xa8] sm:$0xff] %vm2251, %v2240
        %2274 = vst.msk [vmem:[%s747 + $0xb0] sm:$0xff] %vm2251, %v2241
        %2275 = vst.msk [vmem:[%s747 + $0xb8] sm:$0xff] %vm2251, %v2242
        %2276 = vst.msk [vmem:[%s747 + $0xc0] sm:$0xff] %vm2251, %v2243
        %2277 = vst.msk [vmem:[%s747 + $0xc8] sm:$0xff] %vm2251, %v2244
        %2278 = vst.msk [vmem:[%s747 + $0xd0] sm:$0xff] %vm2251, %v2245
        %2279 = vst.msk [vmem:[%s747 + $0xd8] sm:$0xff] %vm2251, %v2246
        %2280 = vst.msk [vmem:[%s747 + $0xe0] sm:$0xff] %vm2251, %v2247
        %2281 = vst.msk [vmem:[%s747 + $0xe8] sm:$0xff] %vm2251, %v2248
        %2282 = vst.msk [vmem:[%s747 + $0xf0] sm:$0xff] %vm2251, %v2249
        %2283 = vst.msk [vmem:[%s747 + $0xf8] sm:$0xff] %vm2251, %v2250
        %s2284 = smul.u32 32, %s19
        %p2285 = scmp.lt.s32.totalorder %s18, 1
        %s2286 = scalar_select %p2285, %s18, 1
        %p2287 = scmp.lt.s32.totalorder %s2284, 127
        %s2288 = scalar_select %p2287, %s2284, 127
        %s2289 = smul.addr %s2286, 128
        %s2290 = sadd.s32 %s2288, %s2289
        %s2291 = smul.addr %s2290, 8
        %s2292 = scalar_lea.vmem %s3, %s2291
        // Predicated region
        $region74: #{modified_forward.4} parent=68 // pred_check
          %p2293 = pneg %p116
        $region75: #{modified_forward.4} parent=68 // pred_check_branch
          %2295 = sbr.rel (%p2293) target = $region77
        $region76: #{modified_forward.4} parent=68 // pred_region
          %s2296 = smul.u32 32, %s19
        $region77: #{modified_forward.4} parent=68 // pred_fallthru
          _
      $region69: #{modified_forward.4} parent=5 // pred_fallthru
        _
      %p2297 = scmp.le.s32.totalorder 2, %s9
      // Predicated region
      $region78: #{modified_forward.4} parent=5 // pred_check
        %p2298 = pneg %p2297
      $region79: #{modified_forward.4} parent=5 // pred_check_branch
        %2300 = sbr.rel (%p2298) target = $region81
      $region80: #{modified_forward.4} parent=5 // pred_region
        %s2301 = ssub.s32 %s9, 2
        // Predicated region
        $region82: #{modified_forward.4} parent=80 // pred_check
          %p2302 = pneg %p122
        $region83: #{modified_forward.4} parent=80 // pred_check_branch
          %2304 = sbr.rel (%p2302) target = $region85
        $region84: #{modified_forward.4} parent=80 // pred_region
          %s2305 = smul.u32 32, %s21
          %p2306 = scmp.lt.s32.totalorder %s20, 1
          %s2307 = scalar_select %p2306, %s20, 1
          %p2308 = scmp.lt.s32.totalorder %s2305, 127
          %s2309 = scalar_select %p2308, %s2305, 127
          %s2310 = smul.addr %s2307, 128
          %s2311 = sadd.s32 %s2309, %s2310
          %s2312 = smul.addr %s2311, 8
          %s2313 = scalar_lea.vmem %s3, %s2312
        $region85: #{modified_forward.4} parent=80 // pred_fallthru
          _
      $region81: #{modified_forward.4} parent=5 // pred_fallthru
        _
    $region6: #{modified_forward.4} parent=1 // loop_footer
      %s13 = sadd.s32 1, %s9
    $region7: #{modified_forward.4} parent=1 // loop_footer_branch
      %8 = sbr.rel target = $region3
    $region8: #{modified_forward.4} parent=1 // loop_exit
      _

// kernel: modified_forward.5
$region0: #{modified_forward.5}
  #allocation0 [shape = 'u32[]', space=smem, size = 0x4, offset = 0x4, fixed_abs, tag = 'smem constant byte address 0x4 - core index']
  #allocation1 [shape = 'u32[144,128]{1,0:T(1,128)}', space=vmem, size = 0x12000, scoped, tag = 'internal scratch']
  %s0 = inlined_call_operand.vmem [shape: bf16[2,4,256,400], index: 0, kind: input, shape index: {}]
  %s1 = inlined_call_operand.vmem [shape: bf16[400,64], index: 1, kind: input, shape index: {}]
  %s2 = inlined_call_operand.vmem [shape: f32[1,64], index: 2, kind: input, shape index: {}]
  %s3 = inlined_call_operand.vmem [shape: f32[2,256,64], index: 3, kind: output, shape index: {}]
  %s4 = sld [smem:[#allocation0]]
  $region68: #{modified_forward.5} parent=0
    _
  %s6 = ssub.s32 1, %s4
  %s7 = scalar_select 0, %s6, %s4
  $region1: #{modified_forward.5} parent=0
    #allocation2 [shape = 'u8[1048576]{0}', space=vmem, size = 0x100000, scoped, tag = 'input window, operand 0']
    loop: start=0, step=1, limit=6
    $region2: #{modified_forward.5} parent=1 // loop_pre_header
      _
    $region3: #{modified_forward.5} parent=1 // loop_header
      %s9 = sphi 0, %s13
      %p10 = scmp.ge.s32.totalorder %s9, 6
      %s16 = sphi 0, %s28
      %s17 = sphi 0, %s24
      %s18 = sphi 0, %s16
      %s19 = sphi 0, %s17
      %s20 = sphi 0, %s18
      %s21 = sphi 0, %s19
      %s33 = sphi 0, %s35
      %s36 = sphi 0, %s33
      %s37 = sphi 0, %s36
      %s53 = sphi 0, %s37
      %s57 = sphi 0, %s57
      %s59 = sphi 0, %s57
      %s60 = sphi 0, %s59
      %s74 = sphi 0, %s60
      %s78 = sphi 0, %s78
      %s80 = sphi 0, %s78
      %s81 = sphi 0, %s80
      %s95 = sphi 0, %s81
      %s103 = sphi 0, %s105
      %s106 = sphi 0, %s103
      %s107 = sphi 0, %s106
      %s123 = sphi 0, %s107
    $region4: #{modified_forward.5} parent=1 // loop_header_branch
      %12 = sbr.rel (%p10) target = $region8
    $region5: #{modified_forward.5} parent=1 // loop_body
      %s14 = ssub.s32 %s9, 1
      %s15 = ssub.s32 %s9, 2
      %s22 = sadd.s32 1, %s17
      %p23 = scmp.ge.s32.totalorder %s22, 2
      %s24 = scalar_select %p23, 0, %s22
      %s25 = sadd.s32 1, %s16
      %s26 = scalar_select %p23, %s25, %s16
      %p27 = scmp.ge.s32.totalorder %s26, 2
      %s28 = scalar_select %p27, 0, %s26
      %s29 = ssub.s32 %s16, %s28
      %s30 = ssub.s32 %s17, %s24
      %s31 = sor.u32 %s29, %s30
      %p32 = scmp.eq.s32.totalorder %s31, 0
      %s34 = sadd.s32 %s33, 1
      %s35 = scalar_select %p32, %s33, %s34
      %p38 = pneg %p32
      %p39 = scmp.eq.s32.totalorder %s9, 3
      %p40 = por %p38, %p39
      %p41 = scmp.ne.s32.totalorder %s33, %s36
      %p42 = scmp.eq.s32.totalorder %s9, 0
      %p43 = por %p41, %p42
      %p44 = scmp.ne.s32.totalorder %s33, %s36
      %p45 = scmp.eq.s32.totalorder %s14, 3
      %p46 = por %p44, %p45
      %p47 = scmp.ne.s32.totalorder %s36, %s37
      %p48 = scmp.eq.s32.totalorder %s14, 0
      %p49 = por %p47, %p48
      %p50 = scmp.ne.s32.totalorder %s36, %s37
      %p51 = scmp.eq.s32.totalorder %s15, 3
      %p52 = por %p50, %p51
      %p54 = scmp.ne.s32.totalorder %s37, %s53
      %p55 = scmp.eq.s32.totalorder %s15, 0
      %p56 = por %p54, %p55
      %s58 = sadd.s32 %s57, 1
      %p61 = scmp.eq.s32.totalorder %s9, 3
      %p62 = scmp.ne.s32.totalorder %s57, %s59
      %p63 = scmp.eq.s32.totalorder %s9, 0
      %p64 = por %p62, %p63
      %p65 = scmp.ne.s32.totalorder %s57, %s59
      %p66 = scmp.eq.s32.totalorder %s14, 3
      %p67 = por %p65, %p66
      %p68 = scmp.ne.s32.totalorder %s59, %s60
      %p69 = scmp.eq.s32.totalorder %s14, 0
      %p70 = por %p68, %p69
      %p71 = scmp.ne.s32.totalorder %s59, %s60
      %p72 = scmp.eq.s32.totalorder %s15, 3
      %p73 = por %p71, %p72
      %p75 = scmp.ne.s32.totalorder %s60, %s74
      %p76 = scmp.eq.s32.totalorder %s15, 0
      %p77 = por %p75, %p76
      %s79 = sadd.s32 %s78, 1
      %p82 = scmp.eq.s32.totalorder %s9, 3
      %p83 = scmp.ne.s32.totalorder %s78, %s80
      %p84 = scmp.eq.s32.totalorder %s9, 0
      %p85 = por %p83, %p84
      %p86 = scmp.ne.s32.totalorder %s78, %s80
      %p87 = scmp.eq.s32.totalorder %s14, 3
      %p88 = por %p86, %p87
      %p89 = scmp.ne.s32.totalorder %s80, %s81
      %p90 = scmp.eq.s32.totalorder %s14, 0
      %p91 = por %p89, %p90
      %p92 = scmp.ne.s32.totalorder %s80, %s81
      %p93 = scmp.eq.s32.totalorder %s15, 3
      %p94 = por %p92, %p93
      %p96 = scmp.ne.s32.totalorder %s81, %s95
      %p97 = scmp.eq.s32.totalorder %s15, 0
      %p98 = por %p96, %p97
      %s99 = ssub.s32 %s16, %s28
      %s100 = ssub.s32 %s17, %s24
      %s101 = sor.u32 %s99, %s100
      %p102 = scmp.eq.s32.totalorder %s101, 0
      %s104 = sadd.s32 %s103, 1
      %s105 = scalar_select %p102, %s103, %s104
      %p108 = pneg %p102
      %p109 = scmp.eq.s32.totalorder %s9, 3
      %p110 = por %p108, %p109
      %p111 = scmp.ne.s32.totalorder %s103, %s106
      %p112 = scmp.eq.s32.totalorder %s9, 0
      %p113 = por %p111, %p112
      %p114 = scmp.ne.s32.totalorder %s103, %s106
      %p115 = scmp.eq.s32.totalorder %s14, 3
      %p116 = por %p114, %p115
      %p117 = scmp.ne.s32.totalorder %s106, %s107
      %p118 = scmp.eq.s32.totalorder %s14, 0
      %p119 = por %p117, %p118
      %p120 = scmp.ne.s32.totalorder %s106, %s107
      %p121 = scmp.eq.s32.totalorder %s15, 3
      %p122 = por %p120, %p121
      %p124 = scmp.ne.s32.totalorder %s107, %s123
      %p125 = scmp.eq.s32.totalorder %s15, 0
      %p126 = por %p124, %p125
      %p127 = scmp.le.s32.totalorder 1, %s9
      %p128 = scmp.lt.s32.totalorder %s9, 5
      %p129 = pnand %p127, %p128
      %p130 = pneg %p129
      // Predicated region
      $region9: #{modified_forward.5} parent=5 // pred_check
        _
      $region10: #{modified_forward.5} parent=5 // pred_check_branch
        %132 = sbr.rel (%p129) target = $region12
      $region11: #{modified_forward.5} parent=5 // pred_region
        %s133 = ssub.s32 %s9, 1
        // Predicated region
        $region13: #{modified_forward.5} parent=11 // pred_check
          %p134 = pneg %p70
        $region14: #{modified_forward.5} parent=11 // pred_check_branch
          %136 = sbr.rel (%p134) target = $region16
        $region15: #{modified_forward.5} parent=11 // pred_region
          _
        $region16: #{modified_forward.5} parent=11 // pred_fallthru
          _
        // Predicated region
        $region17: #{modified_forward.5} parent=11 // pred_check
          %p137 = pneg %p91
        $region18: #{modified_forward.5} parent=11 // pred_check_branch
          %139 = sbr.rel (%p137) target = $region20
        $region19: #{modified_forward.5} parent=11 // pred_region
          _
        $region20: #{modified_forward.5} parent=11 // pred_fallthru
          _
      $region12: #{modified_forward.5} parent=5 // pred_fallthru
        _
      %p140 = scmp.lt.s32.totalorder %s9, 4
      // Predicated region
      $region21: #{modified_forward.5} parent=5 // pred_check
        %p141 = pneg %p140
      $region22: #{modified_forward.5} parent=5 // pred_check_branch
        %143 = sbr.rel (%p141) target = $region24
      $region23: #{modified_forward.5} parent=5 // pred_region
        // Predicated region
        $region25: #{modified_forward.5} parent=23 // pred_check
          %p144 = pneg %p43
        $region26: #{modified_forward.5} parent=23 // pred_check_branch
          %146 = sbr.rel (%p144) target = $region28
        $region27: #{modified_forward.5} parent=23 // pred_region
          %s147 = sand.u32 %s33, 1
          %s148 = sand.u32 %s33, 1
          %s149 = smul.addr %s148, 1024
          %s150 = scalar_lea.vmem [#allocation2], %s149
          %s151 = smul.u32 16, %s17
          %s152 = smul.addr %s151, 4
          %s153 = smul.addr %s16, 512
          %s154 = sadd.s32 %s152, %s153
          %s155 = smul.addr %s154, 4
          %s156 = scalar_lea.vmem %s0, %s155
          // Predicated region
          $region29: #{modified_forward.5} parent=27 // pred_check
            _
          $region30: #{modified_forward.5} parent=27 // pred_check_branch
            %158 = sbr.rel (0) target = $region32
          $region31: #{modified_forward.5} parent=27 // pred_region
            // Predicated region
            $region33: #{modified_forward.5} parent=31 // pred_check
              _
            $region34: #{modified_forward.5} parent=31 // pred_check_branch
              %160 = sbr.rel (0) target = $region36
            $region35: #{modified_forward.5} parent=31 // pred_region
              loop: start=0, step=1, limit=1
              $region37: #{modified_forward.5} parent=35 // loop_pre_header
                _
              $region38: #{modified_forward.5} parent=35 // loop_header
                %s162 = sphi 0, %s166
                %p163 = scmp.ge.s32.totalorder %s162, 1
                %s167 = sphi %s156, %s156
                %s168 = sphi %s150, %s150
              $region39: #{modified_forward.5} parent=35 // loop_header_branch
                %165 = sbr.rel (%p163) target = $region43
              $region40: #{modified_forward.5} parent=35 // loop_body
                %v169 = vld [vmem:[%s167] sm:$0xff]
                %170 = vst [vmem:[%s168] sm:$0xff] %v169
                %v171 = vld [vmem:[%s167 + $0x8] sm:$0xff]
                %172 = vst [vmem:[%s168 + $0x8] sm:$0xff] %v171
                %v173 = vld [vmem:[%s167 + $0x10] sm:$0xff]
                %174 = vst [vmem:[%s168 + $0x10] sm:$0xff] %v173
                %v175 = vld [vmem:[%s167 + $0x18] sm:$0xff]
                %176 = vst [vmem:[%s168 + $0x18] sm:$0xff] %v175
                %v177 = vld [vmem:[%s167 + $0x20] sm:$0xff]
                %178 = vst [vmem:[%s168 + $0x20] sm:$0xff] %v177
                %v179 = vld [vmem:[%s167 + $0x28] sm:$0xff]
                %180 = vst [vmem:[%s168 + $0x28] sm:$0xff] %v179
                %v181 = vld [vmem:[%s167 + $0x30] sm:$0xff]
                %182 = vst [vmem:[%s168 + $0x30] sm:$0xff] %v181
                %v183 = vld [vmem:[%s167 + $0x38] sm:$0xff]
                %184 = vst [vmem:[%s168 + $0x38] sm:$0xff] %v183
                %v185 = vld [vmem:[%s167 + $0x40] sm:$0xff]
                %186 = vst [vmem:[%s168 + $0x40] sm:$0xff] %v185
                %v187 = vld [vmem:[%s167 + $0x48] sm:$0xff]
                %188 = vst [vmem:[%s168 + $0x48] sm:$0xff] %v187
                %v189 = vld [vmem:[%s167 + $0x50] sm:$0xff]
                %190 = vst [vmem:[%s168 + $0x50] sm:$0xff] %v189
                %v191 = vld [vmem:[%s167 + $0x58] sm:$0xff]
                %192 = vst [vmem:[%s168 + $0x58] sm:$0xff] %v191
                %v193 = vld [vmem:[%s167 + $0x60] sm:$0xff]
                %194 = vst [vmem:[%s168 + $0x60] sm:$0xff] %v193
                %v195 = vld [vmem:[%s167 + $0x68] sm:$0xff]
                %196 = vst [vmem:[%s168 + $0x68] sm:$0xff] %v195
                %v197 = vld [vmem:[%s167 + $0x70] sm:$0xff]
                %198 = vst [vmem:[%s168 + $0x70] sm:$0xff] %v197
                %v199 = vld [vmem:[%s167 + $0x78] sm:$0xff]
                %200 = vst [vmem:[%s168 + $0x78] sm:$0xff] %v199
                %v201 = vld [vmem:[%s167 + $0x80] sm:$0xff]
                %202 = vst [vmem:[%s168 + $0x80] sm:$0xff] %v201
                %v203 = vld [vmem:[%s167 + $0x88] sm:$0xff]
                %204 = vst [vmem:[%s168 + $0x88] sm:$0xff] %v203
                %v205 = vld [vmem:[%s167 + $0x90] sm:$0xff]
                %206 = vst [vmem:[%s168 + $0x90] sm:$0xff] %v205
                %v207 = vld [vmem:[%s167 + $0x98] sm:$0xff]
                %208 = vst [vmem:[%s168 + $0x98] sm:$0xff] %v207
                %v209 = vld [vmem:[%s167 + $0xa0] sm:$0xff]
                %210 = vst [vmem:[%s168 + $0xa0] sm:$0xff] %v209
                %v211 = vld [vmem:[%s167 + $0xa8] sm:$0xff]
                %212 = vst [vmem:[%s168 + $0xa8] sm:$0xff] %v211
                %v213 = vld [vmem:[%s167 + $0xb0] sm:$0xff]
                %214 = vst [vmem:[%s168 + $0xb0] sm:$0xff] %v213
                %v215 = vld [vmem:[%s167 + $0xb8] sm:$0xff]
                %216 = vst [vmem:[%s168 + $0xb8] sm:$0xff] %v215
                %v217 = vld [vmem:[%s167 + $0xc0] sm:$0xff]
                %218 = vst [vmem:[%s168 + $0xc0] sm:$0xff] %v217
                %v219 = vld [vmem:[%s167 + $0xc8] sm:$0xff]
                %220 = vst [vmem:[%s168 + $0xc8] sm:$0xff] %v219
                %v221 = vld [vmem:[%s167 + $0xd0] sm:$0xff]
                %222 = vst [vmem:[%s168 + $0xd0] sm:$0xff] %v221
                %v223 = vld [vmem:[%s167 + $0xd8] sm:$0xff]
                %224 = vst [vmem:[%s168 + $0xd8] sm:$0xff] %v223
                %v225 = vld [vmem:[%s167 + $0xe0] sm:$0xff]
                %226 = vst [vmem:[%s168 + $0xe0] sm:$0xff] %v225
                %v227 = vld [vmem:[%s167 + $0xe8] sm:$0xff]
                %228 = vst [vmem:[%s168 + $0xe8] sm:$0xff] %v227
                %v229 = vld [vmem:[%s167 + $0xf0] sm:$0xff]
                %230 = vst [vmem:[%s168 + $0xf0] sm:$0xff] %v229
                %v231 = vld [vmem:[%s167 + $0xf8] sm:$0xff]
                %232 = vst [vmem:[%s168 + $0xf8] sm:$0xff] %v231
                %v233 = vld [vmem:[%s167 + $0x200] sm:$0xff]
                %234 = vst [vmem:[%s168 + $0x100] sm:$0xff] %v233
                %v235 = vld [vmem:[%s167 + $0x208] sm:$0xff]
                %236 = vst [vmem:[%s168 + $0x108] sm:$0xff] %v235
                %v237 = vld [vmem:[%s167 + $0x210] sm:$0xff]
                %238 = vst [vmem:[%s168 + $0x110] sm:$0xff] %v237
                %v239 = vld [vmem:[%s167 + $0x218] sm:$0xff]
                %240 = vst [vmem:[%s168 + $0x118] sm:$0xff] %v239
                %v241 = vld [vmem:[%s167 + $0x220] sm:$0xff]
                %242 = vst [vmem:[%s168 + $0x120] sm:$0xff] %v241
                %v243 = vld [vmem:[%s167 + $0x228] sm:$0xff]
                %244 = vst [vmem:[%s168 + $0x128] sm:$0xff] %v243
                %v245 = vld [vmem:[%s167 + $0x230] sm:$0xff]
                %246 = vst [vmem:[%s168 + $0x130] sm:$0xff] %v245
                %v247 = vld [vmem:[%s167 + $0x238] sm:$0xff]
                %248 = vst [vmem:[%s168 + $0x138] sm:$0xff] %v247
                %v249 = vld [vmem:[%s167 + $0x240] sm:$0xff]
                %250 = vst [vmem:[%s168 + $0x140] sm:$0xff] %v249
                %v251 = vld [vmem:[%s167 + $0x248] sm:$0xff]
                %252 = vst [vmem:[%s168 + $0x148] sm:$0xff] %v251
                %v253 = vld [vmem:[%s167 + $0x250] sm:$0xff]
                %254 = vst [vmem:[%s168 + $0x150] sm:$0xff] %v253
                %v255 = vld [vmem:[%s167 + $0x258] sm:$0xff]
                %256 = vst [vmem:[%s168 + $0x158] sm:$0xff] %v255
                %v257 = vld [vmem:[%s167 + $0x260] sm:$0xff]
                %258 = vst [vmem:[%s168 + $0x160] sm:$0xff] %v257
                %v259 = vld [vmem:[%s167 + $0x268] sm:$0xff]
                %260 = vst [vmem:[%s168 + $0x168] sm:$0xff] %v259
                %v261 = vld [vmem:[%s167 + $0x270] sm:$0xff]
                %262 = vst [vmem:[%s168 + $0x170] sm:$0xff] %v261
                %v263 = vld [vmem:[%s167 + $0x278] sm:$0xff]
                %264 = vst [vmem:[%s168 + $0x178] sm:$0xff] %v263
                %v265 = vld [vmem:[%s167 + $0x280] sm:$0xff]
                %266 = vst [vmem:[%s168 + $0x180] sm:$0xff] %v265
                %v267 = vld [vmem:[%s167 + $0x288] sm:$0xff]
                %268 = vst [vmem:[%s168 + $0x188] sm:$0xff] %v267
                %v269 = vld [vmem:[%s167 + $0x290] sm:$0xff]
                %270 = vst [vmem:[%s168 + $0x190] sm:$0xff] %v269
                %v271 = vld [vmem:[%s167 + $0x298] sm:$0xff]
                %272 = vst [vmem:[%s168 + $0x198] sm:$0xff] %v271
                %v273 = vld [vmem:[%s167 + $0x2a0] sm:$0xff]
                %274 = vst [vmem:[%s168 + $0x1a0] sm:$0xff] %v273
                %v275 = vld [vmem:[%s167 + $0x2a8] sm:$0xff]
                %276 = vst [vmem:[%s168 + $0x1a8] sm:$0xff] %v275
                %v277 = vld [vmem:[%s167 + $0x2b0] sm:$0xff]
                %278 = vst [vmem:[%s168 + $0x1b0] sm:$0xff] %v277
                %v279 = vld [vmem:[%s167 + $0x2b8] sm:$0xff]
                %280 = vst [vmem:[%s168 + $0x1b8] sm:$0xff] %v279
                %v281 = vld [vmem:[%s167 + $0x2c0] sm:$0xff]
                %282 = vst [vmem:[%s168 + $0x1c0] sm:$0xff] %v281
                %v283 = vld [vmem:[%s167 + $0x2c8] sm:$0xff]
                %284 = vst [vmem:[%s168 + $0x1c8] sm:$0xff] %v283
                %v285 = vld [vmem:[%s167 + $0x2d0] sm:$0xff]
                %286 = vst [vmem:[%s168 + $0x1d0] sm:$0xff] %v285
                %v287 = vld [vmem:[%s167 + $0x2d8] sm:$0xff]
                %288 = vst [vmem:[%s168 + $0x1d8] sm:$0xff] %v287
                %v289 = vld [vmem:[%s167 + $0x2e0] sm:$0xff]
                %290 = vst [vmem:[%s168 + $0x1e0] sm:$0xff] %v289
                %v291 = vld [vmem:[%s167 + $0x2e8] sm:$0xff]
                %292 = vst [vmem:[%s168 + $0x1e8] sm:$0xff] %v291
                %v293 = vld [vmem:[%s167 + $0x2f0] sm:$0xff]
                %294 = vst [vmem:[%s168 + $0x1f0] sm:$0xff] %v293
                %v295 = vld [vmem:[%s167 + $0x2f8] sm:$0xff]
                %296 = vst [vmem:[%s168 + $0x1f8] sm:$0xff] %v295
                %v297 = vld [vmem:[%s167 + $0x400] sm:$0xff]
                %298 = vst [vmem:[%s168 + $0x200] sm:$0xff] %v297
                %v299 = vld [vmem:[%s167 + $0x408] sm:$0xff]
                %300 = vst [vmem:[%s168 + $0x208] sm:$0xff] %v299
                %v301 = vld [vmem:[%s167 + $0x410] sm:$0xff]
                %302 = vst [vmem:[%s168 + $0x210] sm:$0xff] %v301
                %v303 = vld [vmem:[%s167 + $0x418] sm:$0xff]
                %304 = vst [vmem:[%s168 + $0x218] sm:$0xff] %v303
                %v305 = vld [vmem:[%s167 + $0x420] sm:$0xff]
                %306 = vst [vmem:[%s168 + $0x220] sm:$0xff] %v305
                %v307 = vld [vmem:[%s167 + $0x428] sm:$0xff]
                %308 = vst [vmem:[%s168 + $0x228] sm:$0xff] %v307
                %v309 = vld [vmem:[%s167 + $0x430] sm:$0xff]
                %310 = vst [vmem:[%s168 + $0x230] sm:$0xff] %v309
                %v311 = vld [vmem:[%s167 + $0x438] sm:$0xff]
                %312 = vst [vmem:[%s168 + $0x238] sm:$0xff] %v311
                %v313 = vld [vmem:[%s167 + $0x440] sm:$0xff]
                %314 = vst [vmem:[%s168 + $0x240] sm:$0xff] %v313
                %v315 = vld [vmem:[%s167 + $0x448] sm:$0xff]
                %316 = vst [vmem:[%s168 + $0x248] sm:$0xff] %v315
                %v317 = vld [vmem:[%s167 + $0x450] sm:$0xff]
                %318 = vst [vmem:[%s168 + $0x250] sm:$0xff] %v317
                %v319 = vld [vmem:[%s167 + $0x458] sm:$0xff]
                %320 = vst [vmem:[%s168 + $0x258] sm:$0xff] %v319
                %v321 = vld [vmem:[%s167 + $0x460] sm:$0xff]
                %322 = vst [vmem:[%s168 + $0x260] sm:$0xff] %v321
                %v323 = vld [vmem:[%s167 + $0x468] sm:$0xff]
                %324 = vst [vmem:[%s168 + $0x268] sm:$0xff] %v323
                %v325 = vld [vmem:[%s167 + $0x470] sm:$0xff]
                %326 = vst [vmem:[%s168 + $0x270] sm:$0xff] %v325
                %v327 = vld [vmem:[%s167 + $0x478] sm:$0xff]
                %328 = vst [vmem:[%s168 + $0x278] sm:$0xff] %v327
                %v329 = vld [vmem:[%s167 + $0x480] sm:$0xff]
                %330 = vst [vmem:[%s168 + $0x280] sm:$0xff] %v329
                %v331 = vld [vmem:[%s167 + $0x488] sm:$0xff]
                %332 = vst [vmem:[%s168 + $0x288] sm:$0xff] %v331
                %v333 = vld [vmem:[%s167 + $0x490] sm:$0xff]
                %334 = vst [vmem:[%s168 + $0x290] sm:$0xff] %v333
                %v335 = vld [vmem:[%s167 + $0x498] sm:$0xff]
                %336 = vst [vmem:[%s168 + $0x298] sm:$0xff] %v335
                %v337 = vld [vmem:[%s167 + $0x4a0] sm:$0xff]
                %338 = vst [vmem:[%s168 + $0x2a0] sm:$0xff] %v337
                %v339 = vld [vmem:[%s167 + $0x4a8] sm:$0xff]
                %340 = vst [vmem:[%s168 + $0x2a8] sm:$0xff] %v339
                %v341 = vld [vmem:[%s167 + $0x4b0] sm:$0xff]
                %342 = vst [vmem:[%s168 + $0x2b0] sm:$0xff] %v341
                %v343 = vld [vmem:[%s167 + $0x4b8] sm:$0xff]
                %344 = vst [vmem:[%s168 + $0x2b8] sm:$0xff] %v343
                %v345 = vld [vmem:[%s167 + $0x4c0] sm:$0xff]
                %346 = vst [vmem:[%s168 + $0x2c0] sm:$0xff] %v345
                %v347 = vld [vmem:[%s167 + $0x4c8] sm:$0xff]
                %348 = vst [vmem:[%s168 + $0x2c8] sm:$0xff] %v347
                %v349 = vld [vmem:[%s167 + $0x4d0] sm:$0xff]
                %350 = vst [vmem:[%s168 + $0x2d0] sm:$0xff] %v349
                %v351 = vld [vmem:[%s167 + $0x4d8] sm:$0xff]
                %352 = vst [vmem:[%s168 + $0x2d8] sm:$0xff] %v351
                %v353 = vld [vmem:[%s167 + $0x4e0] sm:$0xff]
                %354 = vst [vmem:[%s168 + $0x2e0] sm:$0xff] %v353
                %v355 = vld [vmem:[%s167 + $0x4e8] sm:$0xff]
                %356 = vst [vmem:[%s168 + $0x2e8] sm:$0xff] %v355
                %v357 = vld [vmem:[%s167 + $0x4f0] sm:$0xff]
                %358 = vst [vmem:[%s168 + $0x2f0] sm:$0xff] %v357
                %v359 = vld [vmem:[%s167 + $0x4f8] sm:$0xff]
                %360 = vst [vmem:[%s168 + $0x2f8] sm:$0xff] %v359
                %v361 = vld [vmem:[%s167 + $0x600] sm:$0xff]
                %362 = vst [vmem:[%s168 + $0x300] sm:$0xff] %v361
                %v363 = vld [vmem:[%s167 + $0x608] sm:$0xff]
                %364 = vst [vmem:[%s168 + $0x308] sm:$0xff] %v363
                %v365 = vld [vmem:[%s167 + $0x610] sm:$0xff]
                %366 = vst [vmem:[%s168 + $0x310] sm:$0xff] %v365
                %v367 = vld [vmem:[%s167 + $0x618] sm:$0xff]
                %368 = vst [vmem:[%s168 + $0x318] sm:$0xff] %v367
                %v369 = vld [vmem:[%s167 + $0x620] sm:$0xff]
                %370 = vst [vmem:[%s168 + $0x320] sm:$0xff] %v369
                %v371 = vld [vmem:[%s167 + $0x628] sm:$0xff]
                %372 = vst [vmem:[%s168 + $0x328] sm:$0xff] %v371
                %v373 = vld [vmem:[%s167 + $0x630] sm:$0xff]
                %374 = vst [vmem:[%s168 + $0x330] sm:$0xff] %v373
                %v375 = vld [vmem:[%s167 + $0x638] sm:$0xff]
                %376 = vst [vmem:[%s168 + $0x338] sm:$0xff] %v375
                %v377 = vld [vmem:[%s167 + $0x640] sm:$0xff]
                %378 = vst [vmem:[%s168 + $0x340] sm:$0xff] %v377
                %v379 = vld [vmem:[%s167 + $0x648] sm:$0xff]
                %380 = vst [vmem:[%s168 + $0x348] sm:$0xff] %v379
                %v381 = vld [vmem:[%s167 + $0x650] sm:$0xff]
                %382 = vst [vmem:[%s168 + $0x350] sm:$0xff] %v381
                %v383 = vld [vmem:[%s167 + $0x658] sm:$0xff]
                %384 = vst [vmem:[%s168 + $0x358] sm:$0xff] %v383
                %v385 = vld [vmem:[%s167 + $0x660] sm:$0xff]
                %386 = vst [vmem:[%s168 + $0x360] sm:$0xff] %v385
                %v387 = vld [vmem:[%s167 + $0x668] sm:$0xff]
                %388 = vst [vmem:[%s168 + $0x368] sm:$0xff] %v387
                %v389 = vld [vmem:[%s167 + $0x670] sm:$0xff]
                %390 = vst [vmem:[%s168 + $0x370] sm:$0xff] %v389
                %v391 = vld [vmem:[%s167 + $0x678] sm:$0xff]
                %392 = vst [vmem:[%s168 + $0x378] sm:$0xff] %v391
                %v393 = vld [vmem:[%s167 + $0x680] sm:$0xff]
                %394 = vst [vmem:[%s168 + $0x380] sm:$0xff] %v393
                %v395 = vld [vmem:[%s167 + $0x688] sm:$0xff]
                %396 = vst [vmem:[%s168 + $0x388] sm:$0xff] %v395
                %v397 = vld [vmem:[%s167 + $0x690] sm:$0xff]
                %398 = vst [vmem:[%s168 + $0x390] sm:$0xff] %v397
                %v399 = vld [vmem:[%s167 + $0x698] sm:$0xff]
                %400 = vst [vmem:[%s168 + $0x398] sm:$0xff] %v399
                %v401 = vld [vmem:[%s167 + $0x6a0] sm:$0xff]
                %402 = vst [vmem:[%s168 + $0x3a0] sm:$0xff] %v401
                %v403 = vld [vmem:[%s167 + $0x6a8] sm:$0xff]
                %404 = vst [vmem:[%s168 + $0x3a8] sm:$0xff] %v403
                %v405 = vld [vmem:[%s167 + $0x6b0] sm:$0xff]
                %406 = vst [vmem:[%s168 + $0x3b0] sm:$0xff] %v405
                %v407 = vld [vmem:[%s167 + $0x6b8] sm:$0xff]
                %408 = vst [vmem:[%s168 + $0x3b8] sm:$0xff] %v407
                %v409 = vld [vmem:[%s167 + $0x6c0] sm:$0xff]
                %410 = vst [vmem:[%s168 + $0x3c0] sm:$0xff] %v409
                %v411 = vld [vmem:[%s167 + $0x6c8] sm:$0xff]
                %412 = vst [vmem:[%s168 + $0x3c8] sm:$0xff] %v411
                %v413 = vld [vmem:[%s167 + $0x6d0] sm:$0xff]
                %414 = vst [vmem:[%s168 + $0x3d0] sm:$0xff] %v413
                %v415 = vld [vmem:[%s167 + $0x6d8] sm:$0xff]
                %416 = vst [vmem:[%s168 + $0x3d8] sm:$0xff] %v415
                %v417 = vld [vmem:[%s167 + $0x6e0] sm:$0xff]
                %418 = vst [vmem:[%s168 + $0x3e0] sm:$0xff] %v417
                %v419 = vld [vmem:[%s167 + $0x6e8] sm:$0xff]
                %420 = vst [vmem:[%s168 + $0x3e8] sm:$0xff] %v419
                %v421 = vld [vmem:[%s167 + $0x6f0] sm:$0xff]
                %422 = vst [vmem:[%s168 + $0x3f0] sm:$0xff] %v421
                %v423 = vld [vmem:[%s167 + $0x6f8] sm:$0xff]
                %424 = vst [vmem:[%s168 + $0x3f8] sm:$0xff] %v423
              $region41: #{modified_forward.5} parent=35 // loop_footer
                %s166 = sadd.s32 1, %s162
              $region42: #{modified_forward.5} parent=35 // loop_footer_branch
                %161 = sbr.rel target = $region38
              $region43: #{modified_forward.5} parent=35 // loop_exit
                _
            $region36: #{modified_forward.5} parent=31 // pred_fallthru
              _
            // Predicated region
            $region44: #{modified_forward.5} parent=31 // pred_check
              _
            $region45: #{modified_forward.5} parent=31 // pred_check_branch
              %426 = sbr.rel target = $region47
            $region46: #{modified_forward.5} parent=31 // pred_region
              _
            $region47: #{modified_forward.5} parent=31 // pred_fallthru
              _
          $region32: #{modified_forward.5} parent=27 // pred_fallthru
            _
          %427 = vnop
        $region28: #{modified_forward.5} parent=23 // pred_fallthru
          _
      $region24: #{modified_forward.5} parent=5 // pred_fallthru
        _
      %p428 = scmp.le.s32.totalorder 1, %s9
      %p429 = scmp.lt.s32.totalorder %s9, 5
      %p430 = pnand %p428, %p429
      %p431 = pneg %p430
      // Predicated region
      $region48: #{modified_forward.5} parent=5 // pred_check
        _
      $region49: #{modified_forward.5} parent=5 // pred_check_branch
        %433 = sbr.rel (%p430) target = $region51
      $region50: #{modified_forward.5} parent=5 // pred_region
        %s434 = ssub.s32 %s9, 1
        %s435 = sand.u32 %s36, 1
        %s436 = sand.u32 %s36, 1
        %s437 = smul.addr %s436, 1024
        %s438 = scalar_lea.vmem [#allocation2], %s437
        // Predicated region
        $region52: #{modified_forward.5} parent=50 // pred_check
          %p439 = pneg %p49
        $region53: #{modified_forward.5} parent=50 // pred_check_branch
          %441 = sbr.rel (%p439) target = $region55
        $region54: #{modified_forward.5} parent=50 // pred_region
          _
        $region55: #{modified_forward.5} parent=50 // pred_fallthru
          _
        %s442 = sand.u32 %s36, 1
        %s443 = sand.u32 %s36, 1
        %s444 = smul.addr %s443, 1024
        %s445 = scalar_lea.vmem [#allocation2], %s444
        %p446 = pneg %p49
        %p447 = pneg %p46
        %p448 = pneg %p70
        %p449 = pneg %p67
        %p450 = pneg %p91
        %p451 = pneg %p88
        %p452 = pneg %p119
        %p453 = pneg %p116
        %s454 = smul.u32 16, %s19
        %p455 = scmp.lt.s32.totalorder %s18, 1
        %s456 = scalar_select %p455, %s18, 1
        %p457 = scmp.lt.s32.totalorder %s454, 31
        %s458 = scalar_select %p457, %s454, 31
        %s459 = smul.addr %s456, 32
        %s460 = sadd.s32 %s458, %s459
        %s461 = smul.addr %s460, 8
        %s462 = scalar_lea.vmem %s3, %s461
        %s463 = smul.u32 16, %s19
        %s464 = smul.u32 16, %s19
        %p465 = scmp.lt.s32.totalorder %s18, 1
        %s466 = scalar_select %p465, %s18, 1
        %p467 = scmp.lt.s32.totalorder %s464, 31
        %s468 = scalar_select %p467, %s464, 31
        %s469 = smul.addr %s466, 32
        %s470 = sadd.s32 %s468, %s469
        %s471 = smul.addr %s470, 8
        %s472 = scalar_lea.vmem %s3, %s471
        %s473 = smul.u32 16, %s19
        %v475 = vld [vmem:[%s1] sm:$0xf]
        %v476 = vld [vmem:[%s1 + $0x4] sm:$0xf]
        %v477 = vld [vmem:[%s1 + $0x8] sm:$0xf]
        %v478 = vld [vmem:[%s1 + $0xc] sm:$0xf]
        %v479 = vld [vmem:[%s1 + $0x10] sm:$0xf]
        %v480 = vld [vmem:[%s1 + $0x14] sm:$0xf]
        %v481 = vld [vmem:[%s1 + $0x18] sm:$0xf]
        %v482 = vld [vmem:[%s1 + $0x1c] sm:$0xf]
        %v483 = vld [vmem:[%s1 + $0x20] sm:$0xf]
        %v484 = vld [vmem:[%s1 + $0x24] sm:$0xf]
        %v485 = vld [vmem:[%s1 + $0x28] sm:$0xf]
        %v486 = vld [vmem:[%s1 + $0x2c] sm:$0xf]
        %v487 = vld [vmem:[%s1 + $0x30] sm:$0xf]
        %v488 = vld [vmem:[%s1 + $0x34] sm:$0xf]
        %v489 = vld [vmem:[%s1 + $0x38] sm:$0xf]
        %v490 = vld [vmem:[%s1 + $0x3c] sm:$0xf]
        %v491 = vld [vmem:[%s1 + $0x40] sm:$0xf]
        %v492 = vld [vmem:[%s1 + $0x44] sm:$0xf]
        %v493 = vld [vmem:[%s1 + $0x48] sm:$0xf]
        %v494 = vld [vmem:[%s1 + $0x4c] sm:$0xf]
        %v495 = vld [vmem:[%s1 + $0x50] sm:$0xf]
        %v496 = vld [vmem:[%s1 + $0x54] sm:$0xf]
        %v497 = vld [vmem:[%s1 + $0x58] sm:$0xf]
        %v498 = vld [vmem:[%s1 + $0x5c] sm:$0xf]
        %v499 = vld [vmem:[%s1 + $0x60] sm:$0xf]
        %v500 = vld [vmem:[%s1 + $0x64] sm:$0xf]
        %v501 = vld [vmem:[%s1 + $0x68] sm:$0xf]
        %v502 = vld [vmem:[%s1 + $0x6c] sm:$0xf]
        %v503 = vld [vmem:[%s1 + $0x70] sm:$0xf]
        %v504 = vld [vmem:[%s1 + $0x74] sm:$0xf]
        %v505 = vld [vmem:[%s1 + $0x78] sm:$0xf]
        %v506 = vld [vmem:[%s1 + $0x7c] sm:$0xf]
        %v507 = vld [vmem:[%s1 + $0x80] sm:$0xf]
        %v508 = vld [vmem:[%s1 + $0x84] sm:$0xf]
        %v509 = vld [vmem:[%s1 + $0x88] sm:$0xf]
        %v510 = vld [vmem:[%s1 + $0x8c] sm:$0xf]
        %v511 = vld [vmem:[%s1 + $0x90] sm:$0xf]
        %v512 = vld [vmem:[%s1 + $0x94] sm:$0xf]
        %v513 = vld [vmem:[%s1 + $0x98] sm:$0xf]
        %v514 = vld [vmem:[%s1 + $0x9c] sm:$0xf]
        %v515 = vld [vmem:[%s1 + $0xa0] sm:$0xf]
        %v516 = vld [vmem:[%s1 + $0xa4] sm:$0xf]
        %v517 = vld [vmem:[%s1 + $0xa8] sm:$0xf]
        %v518 = vld [vmem:[%s1 + $0xac] sm:$0xf]
        %v519 = vld [vmem:[%s1 + $0xb0] sm:$0xf]
        %v520 = vld [vmem:[%s1 + $0xb4] sm:$0xf]
        %v521 = vld [vmem:[%s1 + $0xb8] sm:$0xf]
        %v522 = vld [vmem:[%s1 + $0xbc] sm:$0xf]
        %v523 = vld [vmem:[%s1 + $0xc0] sm:$0xf]
        %v524 = vld [vmem:[%s1 + $0xc4] sm:$0xf]
        %v525 = vld [vmem:[%s438] sm:$0xff]
        %v526 = vld [vmem:[%s438 + $0x8] sm:$0xff]
        %v527 = vld [vmem:[%s438 + $0x10] sm:$0xff]
        %v528 = vld [vmem:[%s438 + $0x18] sm:$0xff]
        %v529 = vld [vmem:[%s438 + $0x20] sm:$0xff]
        %v530 = vld [vmem:[%s438 + $0x28] sm:$0xff]
        %v531 = vld [vmem:[%s438 + $0x30] sm:$0xff]
        %v532 = vld [vmem:[%s438 + $0x38] sm:$0xff]
        %v533 = vld [vmem:[%s438 + $0x40] sm:$0xff]
        %v534 = vld [vmem:[%s438 + $0x48] sm:$0xff]
        %v535 = vld [vmem:[%s438 + $0x50] sm:$0xff]
        %v536 = vld [vmem:[%s438 + $0x58] sm:$0xff]
        %v537 = vld [vmem:[%s438 + $0x60] sm:$0xff]
        %v538 = vld [vmem:[%s438 + $0x68] sm:$0xff]
        %v539 = vld [vmem:[%s438 + $0x70] sm:$0xff]
        %v540 = vld [vmem:[%s438 + $0x78] sm:$0xff]
        %v541 = vld [vmem:[%s438 + $0x80] sm:$0xff]
        %v542 = vld [vmem:[%s438 + $0x88] sm:$0xff]
        %v543 = vld [vmem:[%s438 + $0x90] sm:$0xff]
        %v544 = vld [vmem:[%s438 + $0x98] sm:$0xff]
        %v545 = vld [vmem:[%s438 + $0xa0] sm:$0xff]
        %v546 = vld [vmem:[%s438 + $0xa8] sm:$0xff]
        %v547 = vld [vmem:[%s438 + $0xb0] sm:$0xff]
        %v548 = vld [vmem:[%s438 + $0xb8] sm:$0xff]
        %v549 = vld [vmem:[%s438 + $0xc0] sm:$0xff]
        %v550 = vld [vmem:[%s438 + $0xc8] sm:$0xff]
        %v551 = vld [vmem:[%s438 + $0xd0] sm:$0xff]
        %v552 = vld [vmem:[%s438 + $0xd8] sm:$0xff]
        %v553 = vld [vmem:[%s438 + $0xe0] sm:$0xff]
        %v554 = vld [vmem:[%s438 + $0xe8] sm:$0xff]
        %v555 = vld [vmem:[%s438 + $0xf0] sm:$0xff]
        %v556 = vld [vmem:[%s438 + $0xf8] sm:$0xff]
        %v589 = vunpack.c.l.b16 %v525
        %v590 = vunpack.c.h.b16 %v525
        %v591 = vunpack.c.l.b16 %v526
        %v592 = vunpack.c.h.b16 %v526
        %v593 = vunpack.c.l.b16 %v527
        %v594 = vunpack.c.h.b16 %v527
        %v595 = vunpack.c.l.b16 %v528
        %v596 = vunpack.c.h.b16 %v528
        %v597 = vunpack.c.l.b16 %v529
        %v598 = vunpack.c.h.b16 %v529
        %v599 = vunpack.c.l.b16 %v530
        %v600 = vunpack.c.h.b16 %v530
        %v601 = vunpack.c.l.b16 %v531
        %v602 = vunpack.c.h.b16 %v531
        %v603 = vunpack.c.l.b16 %v532
        %v604 = vunpack.c.h.b16 %v532
        %v605 = vunpack.c.l.b16 %v533
        %v606 = vunpack.c.h.b16 %v533
        %v607 = vunpack.c.l.b16 %v534
        %v608 = vunpack.c.h.b16 %v534
        %v609 = vunpack.c.l.b16 %v535
        %v610 = vunpack.c.h.b16 %v535
        %v611 = vunpack.c.l.b16 %v536
        %v612 = vunpack.c.h.b16 %v536
        %v613 = vunpack.c.l.b16 %v537
        %v614 = vunpack.c.h.b16 %v537
        %v615 = vunpack.c.l.b16 %v538
        %v616 = vunpack.c.h.b16 %v538
        %v617 = vunpack.c.l.b16 %v539
        %v618 = vunpack.c.h.b16 %v539
        %v619 = vunpack.c.l.b16 %v540
        %v620 = vunpack.c.h.b16 %v540
        %v621 = vunpack.c.l.b16 %v541
        %v622 = vunpack.c.h.b16 %v541
        %v623 = vunpack.c.l.b16 %v542
        %v624 = vunpack.c.h.b16 %v542
        %v625 = vunpack.c.l.b16 %v543
        %v626 = vunpack.c.h.b16 %v543
        %v627 = vunpack.c.l.b16 %v544
        %v628 = vunpack.c.h.b16 %v544
        %v629 = vunpack.c.l.b16 %v545
        %v630 = vunpack.c.h.b16 %v545
        %v631 = vunpack.c.l.b16 %v546
        %v632 = vunpack.c.h.b16 %v546
        %v633 = vunpack.c.l.b16 %v547
        %v634 = vunpack.c.h.b16 %v547
        %v635 = vunpack.c.l.b16 %v548
        %v636 = vunpack.c.h.b16 %v548
        %v637 = vunpack.c.l.b16 %v549
        %v638 = vunpack.c.h.b16 %v549
        %v639 = vunpack.c.l.b16 %v550
        %v640 = vunpack.c.h.b16 %v550
        %v641 = vunpack.c.l.b16 %v551
        %v642 = vunpack.c.h.b16 %v551
        %v643 = vunpack.c.l.b16 %v552
        %v644 = vunpack.c.h.b16 %v552
        %v645 = vunpack.c.l.b16 %v553
        %v646 = vunpack.c.h.b16 %v553
        %v647 = vunpack.c.l.b16 %v554
        %v648 = vunpack.c.h.b16 %v554
        %v649 = vunpack.c.l.b16 %v555
        %v650 = vunpack.c.h.b16 %v555
        %v651 = vunpack.c.l.b16 %v556
        %v652 = vunpack.c.h.b16 %v556
        %v653 = vpack.c.b16 %v593, %v589
        %v654 = vpack.c.b16 %v594, %v590
        %v655 = vpack.c.b16 %v595, %v591
        %v656 = vpack.c.b16 %v596, %v592
        %v657 = vpack.c.b16 %v601, %v597
        %v658 = vpack.c.b16 %v602, %v598
        %v659 = vpack.c.b16 %v603, %v599
        %v660 = vpack.c.b16 %v604, %v600
        %v661 = vpack.c.b16 %v609, %v605
        %v662 = vpack.c.b16 %v610, %v606
        %v663 = vpack.c.b16 %v611, %v607
        %v664 = vpack.c.b16 %v612, %v608
        %v665 = vpack.c.b16 %v617, %v613
        %v666 = vpack.c.b16 %v618, %v614
        %v667 = vpack.c.b16 %v619, %v615
        %v668 = vpack.c.b16 %v620, %v616
        %v669 = vpack.c.b16 %v625, %v621
        %v670 = vpack.c.b16 %v626, %v622
        %v671 = vpack.c.b16 %v627, %v623
        %v672 = vpack.c.b16 %v628, %v624
        %v673 = vpack.c.b16 %v633, %v629
        %v674 = vpack.c.b16 %v634, %v630
        %v675 = vpack.c.b16 %v635, %v631
        %v676 = vpack.c.b16 %v636, %v632
        %v677 = vpack.c.b16 %v641, %v637
        %v678 = vpack.c.b16 %v642, %v638
        %v679 = vpack.c.b16 %v643, %v639
        %v680 = vpack.c.b16 %v644, %v640
        %v681 = vpack.c.b16 %v649, %v645
        %v682 = vpack.c.b16 %v650, %v646
        %v683 = vpack.c.b16 %v651, %v647
        %v684 = vpack.c.b16 %v652, %v648
        %v759 = vunpack.c.l.b16 %v475
        %v760 = vunpack.c.l.b16 %v476
        %v761 = vunpack.c.l.b16 %v477
        %v762 = vunpack.c.l.b16 %v478
        %v763 = vunpack.c.l.b16 %v479
        %v764 = vunpack.c.l.b16 %v480
        %v765 = vunpack.c.l.b16 %v481
        %v766 = vunpack.c.l.b16 %v482
        %v767 = vunpack.c.l.b16 %v483
        %v768 = vunpack.c.l.b16 %v484
        %v769 = vunpack.c.l.b16 %v485
        %v770 = vunpack.c.l.b16 %v486
        %v771 = vunpack.c.l.b16 %v487
        %v772 = vunpack.c.l.b16 %v488
        %v773 = vunpack.c.l.b16 %v489
        %v774 = vunpack.c.l.b16 %v490
        %v775 = vunpack.c.l.b16 %v491
        %v776 = vunpack.c.l.b16 %v492
        %v777 = vunpack.c.l.b16 %v493
        %v778 = vunpack.c.l.b16 %v494
        %v779 = vunpack.c.l.b16 %v495
        %v780 = vunpack.c.l.b16 %v496
        %v781 = vunpack.c.l.b16 %v497
        %v782 = vunpack.c.l.b16 %v498
        %v783 = vunpack.c.l.b16 %v499
        %v784 = vunpack.c.l.b16 %v500
        %v785 = vunpack.c.l.b16 %v501
        %v786 = vunpack.c.l.b16 %v502
        %v787 = vunpack.c.l.b16 %v503
        %v788 = vunpack.c.l.b16 %v504
        %v789 = vunpack.c.l.b16 %v505
        %v790 = vunpack.c.l.b16 %v506
        %v791 = vunpack.c.l.b16 %v507
        %v792 = vunpack.c.l.b16 %v508
        %v793 = vunpack.c.l.b16 %v509
        %v794 = vunpack.c.l.b16 %v510
        %v795 = vunpack.c.l.b16 %v511
        %v796 = vunpack.c.l.b16 %v512
        %v797 = vunpack.c.l.b16 %v513
        %v798 = vunpack.c.l.b16 %v514
        %v799 = vunpack.c.l.b16 %v515
        %v800 = vunpack.c.l.b16 %v516
        %v801 = vunpack.c.l.b16 %v517
        %v802 = vunpack.c.l.b16 %v518
        %v803 = vunpack.c.l.b16 %v519
        %v804 = vunpack.c.l.b16 %v520
        %v805 = vunpack.c.l.b16 %v521
        %v806 = vunpack.c.l.b16 %v522
        %v807 = vunpack.c.l.b16 %v523
        %v808 = vunpack.c.l.b16 %v524
        %v809 = vpack.c.b16 %v760, %v759
        %v810 = vpack.c.b16 %v762, %v761
        %v811 = vpack.c.b16 %v764, %v763
        %v812 = vpack.c.b16 %v766, %v765
        %v813 = vpack.c.b16 %v768, %v767
        %v814 = vpack.c.b16 %v770, %v769
        %v815 = vpack.c.b16 %v772, %v771
        %v816 = vpack.c.b16 %v774, %v773
        %v817 = vpack.c.b16 %v776, %v775
        %v818 = vpack.c.b16 %v778, %v777
        %v819 = vpack.c.b16 %v780, %v779
        %v820 = vpack.c.b16 %v782, %v781
        %v821 = vpack.c.b16 %v784, %v783
        %v822 = vpack.c.b16 %v786, %v785
        %v823 = vpack.c.b16 %v788, %v787
        %v824 = vpack.c.b16 %v790, %v789
        %v825 = vpack.c.b16 %v792, %v791
        %v826 = vpack.c.b16 %v794, %v793
        %v827 = vpack.c.b16 %v796, %v795
        %v828 = vpack.c.b16 %v798, %v797
        %v829 = vpack.c.b16 %v800, %v799
        %v830 = vpack.c.b16 %v802, %v801
        %v831 = vpack.c.b16 %v804, %v803
        %v832 = vpack.c.b16 %v806, %v805
        %v833 = vpack.c.b16 %v808, %v807
        %vm859 = vcmask 130048
        %v861 = vsel %vm859, %v656, 0
        %v864 = vsel %vm859, %v660, 0
        %v867 = vsel %vm859, %v664, 0
        %v870 = vsel %vm859, %v668, 0
        %v873 = vsel %vm859, %v672, 0
        %v876 = vsel %vm859, %v676, 0
        %v879 = vsel %vm859, %v680, 0
        %v882 = vsel %vm859, %v684, 0
        %884 = vmatprep.subr.bf16.mxu0 0
        %885 = vmatpush1.bf16.msra.mxu0 %v809
        %886 = vmatprep.subr.bf16.mxu0 0
        %887 = vmatpush1.bf16.msra.mxu0 %v810
        %888 = vmatprep.subr.bf16.mxu0 0
        %889 = vmatpush1.bf16.msra.mxu0 %v811
        %890 = vmatprep.subr.bf16.mxu0 0
        %891 = vmatpush1.bf16.msra.mxu0 %v812
        %892 = vmatprep.subr.bf16.mxu0 0
        %893 = vmatpush1.bf16.msra.mxu0 %v813
        %894 = vmatprep.subr.bf16.mxu0 0
        %895 = vmatpush1.bf16.msra.mxu0 %v814
        %896 = vmatprep.subr.bf16.mxu0 0
        %897 = vmatpush1.bf16.msra.mxu0 %v815
        %898 = vmatprep.subr.bf16.mxu0 0
        %899 = vmatpush1.bf16.msra.mxu0 %v816
        %900 = vmatprep.subr.bf16.mxu0 0
        %901 = vmatpush1.bf16.msra.mxu0 %v817
        %902 = vmatprep.subr.bf16.mxu0 0
        %903 = vmatpush1.bf16.msra.mxu0 %v818
        %904 = vmatprep.subr.bf16.mxu0 0
        %905 = vmatpush1.bf16.msra.mxu0 %v819
        %906 = vmatprep.subr.bf16.mxu0 0
        %907 = vmatpush1.bf16.msra.mxu0 %v820
        %908 = vmatprep.subr.bf16.mxu0 0
        %909 = vmatpush1.bf16.msra.mxu0 %v821
        %910 = vmatprep.subr.bf16.mxu0 0
        %911 = vmatpush1.bf16.msra.mxu0 %v822
        %912 = vmatprep.subr.bf16.mxu0 0
        %913 = vmatpush1.bf16.msra.mxu0 %v823
        %914 = vmatprep.subr.bf16.mxu0 0
        %915 = vmatpush1.bf16.msra.mxu0 %v824
        %916 = vmatprep.mubr.bf16.mxu0 %v654
        %917 = vmatmul.mubr.bf16.gmra.mrb[0].mxu0 %v653
        %v918 = vpop.f32.mrb[0].mxu0
        %v919 = vadd.f32 0.0, %v918
        %v920 = vpop.f32.mrb[0].mxu0
        %v921 = vpop.f32.mrb[0].mxu0
        %v922 = vadd.f32 0.0, %v921
        %v923 = vpop.f32.mrb[0].mxu0
        %924 = vmatprep.mubr.bf16.mxu0 %v658
        %925 = vmatmul.mubr.bf16.gmra.mrb[0].mxu0 %v657
        %v926 = vpop.f32.mrb[0].mxu0
        %v927 = vadd.f32 0.0, %v926
        %v928 = vpop.f32.mrb[0].mxu0
        %v929 = vpop.f32.mrb[0].mxu0
        %v930 = vadd.f32 0.0, %v929
        %v931 = vpop.f32.mrb[0].mxu0
        %932 = vmatprep.mubr.bf16.mxu0 %v662
        %933 = vmatmul.mubr.bf16.gmra.mrb[0].mxu0 %v661
        %v934 = vpop.f32.mrb[0].mxu0
        %v935 = vadd.f32 0.0, %v934
        %v936 = vpop.f32.mrb[0].mxu0
        %v937 = vpop.f32.mrb[0].mxu0
        %v938 = vadd.f32 0.0, %v937
        %v939 = vpop.f32.mrb[0].mxu0
        %940 = vmatprep.mubr.bf16.mxu0 %v666
        %941 = vmatmul.mubr.bf16.gmra.mrb[0].mxu0 %v665
        %v942 = vpop.f32.mrb[0].mxu0
        %v943 = vadd.f32 0.0, %v942
        %v944 = vpop.f32.mrb[0].mxu0
        %v945 = vpop.f32.mrb[0].mxu0
        %v946 = vadd.f32 0.0, %v945
        %v947 = vpop.f32.mrb[0].mxu0
        %948 = vmatprep.mubr.bf16.mxu0 %v670
        %949 = vmatmul.mubr.bf16.gmra.mrb[0].mxu0 %v669
        %v950 = vpop.f32.mrb[0].mxu0
        %v951 = vadd.f32 0.0, %v950
        %v952 = vpop.f32.mrb[0].mxu0
        %v953 = vpop.f32.mrb[0].mxu0
        %v954 = vadd.f32 0.0, %v953
        %v955 = vpop.f32.mrb[0].mxu0
        %956 = vmatprep.mubr.bf16.mxu0 %v674
        %957 = vmatmul.mubr.bf16.gmra.mrb[0].mxu0 %v673
        %v958 = vpop.f32.mrb[0].mxu0
        %v959 = vadd.f32 0.0, %v958
        %v960 = vpop.f32.mrb[0].mxu0
        %v961 = vpop.f32.mrb[0].mxu0
        %v962 = vadd.f32 0.0, %v961
        %v963 = vpop.f32.mrb[0].mxu0
        %964 = vmatprep.mubr.bf16.mxu0 %v678
        %965 = vmatmul.mubr.bf16.gmra.mrb[0].mxu0 %v677
        %v966 = vpop.f32.mrb[0].mxu0
        %v967 = vadd.f32 0.0, %v966
        %v968 = vpop.f32.mrb[0].mxu0
        %v969 = vpop.f32.mrb[0].mxu0
        %v970 = vadd.f32 0.0, %v969
        %v971 = vpop.f32.mrb[0].mxu0
        %972 = vmatprep.mubr.bf16.mxu0 %v682
        %973 = vmatmul.mubr.bf16.gmra.mrb[0].mxu0 %v681
        %v974 = vpop.f32.mrb[0].mxu0
        %v975 = vadd.f32 0.0, %v974
        %v976 = vpop.f32.mrb[0].mxu0
        %v977 = vpop.f32.mrb[0].mxu0
        %v978 = vadd.f32 0.0, %v977
        %v979 = vpop.f32.mrb[0].mxu0
        %980 = vdwg.mxu0
        %981 = vmatprep.subr.bf16.mxu0 0
        %982 = vmatpush1.bf16.msra.mxu0 %v825
        %983 = vmatprep.subr.bf16.mxu0 0
        %984 = vmatpush1.bf16.msra.mxu0 %v826
        %985 = vmatprep.subr.bf16.mxu0 0
        %986 = vmatpush1.bf16.msra.mxu0 %v827
        %987 = vmatprep.subr.bf16.mxu0 0
        %988 = vmatpush1.bf16.msra.mxu0 %v828
        %989 = vmatprep.subr.bf16.mxu0 0
        %990 = vmatpush1.bf16.msra.mxu0 %v829
        %991 = vmatprep.subr.bf16.mxu0 0
        %992 = vmatpush1.bf16.msra.mxu0 %v830
        %993 = vmatprep.subr.bf16.mxu0 0
        %994 = vmatpush1.bf16.msra.mxu0 %v831
        %995 = vmatprep.subr.bf16.mxu0 0
        %996 = vmatpush1.bf16.msra.mxu0 %v832
        %997 = vmatprep.subr.bf16.mxu0 0
        %998 = vmatpush1.bf16.msra.mxu0 %v833
        %999 = vmatprep.subr.bf16.mxu0 0
        %1000 = vmatpush1.bf16.msra.mxu0 0
        %1001 = vmatprep.subr.bf16.mxu0 0
        %1002 = vmatpush1.bf16.msra.mxu0 0
        %1003 = vmatprep.subr.bf16.mxu0 0
        %1004 = vmatpush1.bf16.msra.mxu0 0
        %1005 = vmatprep.subr.bf16.mxu0 0
        %1006 = vmatpush1.bf16.msra.mxu0 0
        %1007 = vmatprep.subr.bf16.mxu0 0
        %1008 = vmatpush1.bf16.msra.mxu0 0
        %1009 = vmatprep.subr.bf16.mxu0 0
        %1010 = vmatpush1.bf16.msra.mxu0 0
        %1011 = vmatprep.subr.bf16.mxu0 0
        %1012 = vmatpush1.bf16.msra.mxu0 0
        %1013 = vmatprep.mubr.bf16.mxu0 %v861
        %1014 = vmatmul.mubr.bf16.gmra.mrb[0].mxu0 %v655
        %v1015 = vpop.f32.mrb[0].mxu0
        %v1016 = vadd.f32 %v919, %v1015
        %v1017 = vpop.f32.mrb[0].mxu0
        %v1018 = vpop.f32.mrb[0].mxu0
        %v1019 = vadd.f32 %v922, %v1018
        %v1020 = vpop.f32.mrb[0].mxu0
        %1021 = vmatprep.mubr.bf16.mxu0 %v864
        %1022 = vmatmul.mubr.bf16.gmra.mrb[0].mxu0 %v659
        %v1023 = vpop.f32.mrb[0].mxu0
        %v1024 = vadd.f32 %v927, %v1023
        %v1025 = vpop.f32.mrb[0].mxu0
        %v1026 = vpop.f32.mrb[0].mxu0
        %v1027 = vadd.f32 %v930, %v1026
        %v1028 = vpop.f32.mrb[0].mxu0
        %1029 = vmatprep.mubr.bf16.mxu0 %v867
        %1030 = vmatmul.mubr.bf16.gmra.mrb[0].mxu0 %v663
        %v1031 = vpop.f32.mrb[0].mxu0
        %v1032 = vadd.f32 %v935, %v1031
        %v1033 = vpop.f32.mrb[0].mxu0
        %v1034 = vpop.f32.mrb[0].mxu0
        %v1035 = vadd.f32 %v938, %v1034
        %v1036 = vpop.f32.mrb[0].mxu0
        %1037 = vmatprep.mubr.bf16.mxu0 %v870
        %1038 = vmatmul.mubr.bf16.gmra.mrb[0].mxu0 %v667
        %v1039 = vpop.f32.mrb[0].mxu0
        %v1040 = vadd.f32 %v943, %v1039
        %v1041 = vpop.f32.mrb[0].mxu0
        %v1042 = vpop.f32.mrb[0].mxu0
        %v1043 = vadd.f32 %v946, %v1042
        %v1044 = vpop.f32.mrb[0].mxu0
        %1045 = vmatprep.mubr.bf16.mxu0 %v873
        %1046 = vmatmul.mubr.bf16.gmra.mrb[0].mxu0 %v671
        %v1047 = vpop.f32.mrb[0].mxu0
        %v1048 = vadd.f32 %v951, %v1047
        %v1049 = vpop.f32.mrb[0].mxu0
        %v1050 = vpop.f32.mrb[0].mxu0
        %v1051 = vadd.f32 %v954, %v1050
        %v1052 = vpop.f32.mrb[0].mxu0
        %1053 = vmatprep.mubr.bf16.mxu0 %v876
        %1054 = vmatmul.mubr.bf16.gmra.mrb[0].mxu0 %v675
        %v1055 = vpop.f32.mrb[0].mxu0
        %v1056 = vadd.f32 %v959, %v1055
        %v1057 = vpop.f32.mrb[0].mxu0
        %v1058 = vpop.f32.mrb[0].mxu0
        %v1059 = vadd.f32 %v962, %v1058
        %v1060 = vpop.f32.mrb[0].mxu0
        %1061 = vmatprep.mubr.bf16.mxu0 %v879
        %1062 = vmatmul.mubr.bf16.gmra.mrb[0].mxu0 %v679
        %v1063 = vpop.f32.mrb[0].mxu0
        %v1064 = vadd.f32 %v967, %v1063
        %v1065 = vpop.f32.mrb[0].mxu0
        %v1066 = vpop.f32.mrb[0].mxu0
        %v1067 = vadd.f32 %v970, %v1066
        %v1068 = vpop.f32.mrb[0].mxu0
        %1069 = vmatprep.mubr.bf16.mxu0 %v882
        %1070 = vmatmul.mubr.bf16.gmra.mrb[0].mxu0 %v683
        %v1071 = vpop.f32.mrb[0].mxu0
        %v1072 = vadd.f32 %v975, %v1071
        %v1073 = vpop.f32.mrb[0].mxu0
        %v1074 = vpop.f32.mrb[0].mxu0
        %v1075 = vadd.f32 %v978, %v1074
        %v1076 = vpop.f32.mrb[0].mxu0
        %1077 = vdwg.mxu0
        %s1078 = scalar_lea.vmem %s438, 256 [#allocation2]
        %v1079 = vld [vmem:[%s1078] sm:$0xff]
        %v1080 = vld [vmem:[%s1078 + $0x8] sm:$0xff]
        %v1081 = vld [vmem:[%s1078 + $0x10] sm:$0xff]
        %v1082 = vld [vmem:[%s1078 + $0x18] sm:$0xff]
        %v1083 = vld [vmem:[%s1078 + $0x20] sm:$0xff]
        %v1084 = vld [vmem:[%s1078 + $0x28] sm:$0xff]
        %v1085 = vld [vmem:[%s1078 + $0x30] sm:$0xff]
        %v1086 = vld [vmem:[%s1078 + $0x38] sm:$0xff]
        %v1087 = vld [vmem:[%s1078 + $0x40] sm:$0xff]
        %v1088 = vld [vmem:[%s1078 + $0x48] sm:$0xff]
        %v1089 = vld [vmem:[%s1078 + $0x50] sm:$0xff]
        %v1090 = vld [vmem:[%s1078 + $0x58] sm:$0xff]
        %v1091 = vld [vmem:[%s1078 + $0x60] sm:$0xff]
        %v1092 = vld [vmem:[%s1078 + $0x68] sm:$0xff]
        %v1093 = vld [vmem:[%s1078 + $0x70] sm:$0xff]
        %v1094 = vld [vmem:[%s1078 + $0x78] sm:$0xff]
        %v1095 = vld [vmem:[%s1078 + $0x80] sm:$0xff]
        %v1096 = vld [vmem:[%s1078 + $0x88] sm:$0xff]
        %v1097 = vld [vmem:[%s1078 + $0x90] sm:$0xff]
        %v1098 = vld [vmem:[%s1078 + $0x98] sm:$0xff]
        %v1099 = vld [vmem:[%s1078 + $0xa0] sm:$0xff]
        %v1100 = vld [vmem:[%s1078 + $0xa8] sm:$0xff]
        %v1101 = vld [vmem:[%s1078 + $0xb0] sm:$0xff]
        %v1102 = vld [vmem:[%s1078 + $0xb8] sm:$0xff]
        %v1103 = vld [vmem:[%s1078 + $0xc0] sm:$0xff]
        %v1104 = vld [vmem:[%s1078 + $0xc8] sm:$0xff]
        %v1105 = vld [vmem:[%s1078 + $0xd0] sm:$0xff]
        %v1106 = vld [vmem:[%s1078 + $0xd8] sm:$0xff]
        %v1107 = vld [vmem:[%s1078 + $0xe0] sm:$0xff]
        %v1108 = vld [vmem:[%s1078 + $0xe8] sm:$0xff]
        %v1109 = vld [vmem:[%s1078 + $0xf0] sm:$0xff]
        %v1110 = vld [vmem:[%s1078 + $0xf8] sm:$0xff]
        %v1143 = vunpack.c.l.b16 %v1079
        %v1144 = vunpack.c.h.b16 %v1079
        %v1145 = vunpack.c.l.b16 %v1080
        %v1146 = vunpack.c.h.b16 %v1080
        %v1147 = vunpack.c.l.b16 %v1081
        %v1148 = vunpack.c.h.b16 %v1081
        %v1149 = vunpack.c.l.b16 %v1082
        %v1150 = vunpack.c.h.b16 %v1082
        %v1151 = vunpack.c.l.b16 %v1083
        %v1152 = vunpack.c.h.b16 %v1083
        %v1153 = vunpack.c.l.b16 %v1084
        %v1154 = vunpack.c.h.b16 %v1084
        %v1155 = vunpack.c.l.b16 %v1085
        %v1156 = vunpack.c.h.b16 %v1085
        %v1157 = vunpack.c.l.b16 %v1086
        %v1158 = vunpack.c.h.b16 %v1086
        %v1159 = vunpack.c.l.b16 %v1087
        %v1160 = vunpack.c.h.b16 %v1087
        %v1161 = vunpack.c.l.b16 %v1088
        %v1162 = vunpack.c.h.b16 %v1088
        %v1163 = vunpack.c.l.b16 %v1089
        %v1164 = vunpack.c.h.b16 %v1089
        %v1165 = vunpack.c.l.b16 %v1090
        %v1166 = vunpack.c.h.b16 %v1090
        %v1167 = vunpack.c.l.b16 %v1091
        %v1168 = vunpack.c.h.b16 %v1091
        %v1169 = vunpack.c.l.b16 %v1092
        %v1170 = vunpack.c.h.b16 %v1092
        %v1171 = vunpack.c.l.b16 %v1093
        %v1172 = vunpack.c.h.b16 %v1093
        %v1173 = vunpack.c.l.b16 %v1094
        %v1174 = vunpack.c.h.b16 %v1094
        %v1175 = vunpack.c.l.b16 %v1095
        %v1176 = vunpack.c.h.b16 %v1095
        %v1177 = vunpack.c.l.b16 %v1096
        %v1178 = vunpack.c.h.b16 %v1096
        %v1179 = vunpack.c.l.b16 %v1097
        %v1180 = vunpack.c.h.b16 %v1097
        %v1181 = vunpack.c.l.b16 %v1098
        %v1182 = vunpack.c.h.b16 %v1098
        %v1183 = vunpack.c.l.b16 %v1099
        %v1184 = vunpack.c.h.b16 %v1099
        %v1185 = vunpack.c.l.b16 %v1100
        %v1186 = vunpack.c.h.b16 %v1100
        %v1187 = vunpack.c.l.b16 %v1101
        %v1188 = vunpack.c.h.b16 %v1101
        %v1189 = vunpack.c.l.b16 %v1102
        %v1190 = vunpack.c.h.b16 %v1102
        %v1191 = vunpack.c.l.b16 %v1103
        %v1192 = vunpack.c.h.b16 %v1103
        %v1193 = vunpack.c.l.b16 %v1104
        %v1194 = vunpack.c.h.b16 %v1104
        %v1195 = vunpack.c.l.b16 %v1105
        %v1196 = vunpack.c.h.b16 %v1105
        %v1197 = vunpack.c.l.b16 %v1106
        %v1198 = vunpack.c.h.b16 %v1106
        %v1199 = vunpack.c.l.b16 %v1107
        %v1200 = vunpack.c.h.b16 %v1107
        %v1201 = vunpack.c.l.b16 %v1108
        %v1202 = vunpack.c.h.b16 %v1108
        %v1203 = vunpack.c.l.b16 %v1109
        %v1204 = vunpack.c.h.b16 %v1109
        %v1205 = vunpack.c.l.b16 %v1110
        %v1206 = vunpack.c.h.b16 %v1110
        %v1207 = vpack.c.b16 %v1147, %v1143
        %v1208 = vpack.c.b16 %v1148, %v1144
        %v1209 = vpack.c.b16 %v1149, %v1145
        %v1210 = vpack.c.b16 %v1150, %v1146
        %v1211 = vpack.c.b16 %v1155, %v1151
        %v1212 = vpack.c.b16 %v1156, %v1152
        %v1213 = vpack.c.b16 %v1157, %v1153
        %v1214 = vpack.c.b16 %v1158, %v1154
        %v1215 = vpack.c.b16 %v1163, %v1159
        %v1216 = vpack.c.b16 %v1164, %v1160
        %v1217 = vpack.c.b16 %v1165, %v1161
        %v1218 = vpack.c.b16 %v1166, %v1162
        %v1219 = vpack.c.b16 %v1171, %v1167
        %v1220 = vpack.c.b16 %v1172, %v1168
        %v1221 = vpack.c.b16 %v1173, %v1169
        %v1222 = vpack.c.b16 %v1174, %v1170
        %v1223 = vpack.c.b16 %v1179, %v1175
        %v1224 = vpack.c.b16 %v1180, %v1176
        %v1225 = vpack.c.b16 %v1181, %v1177
        %v1226 = vpack.c.b16 %v1182, %v1178
        %v1227 = vpack.c.b16 %v1187, %v1183
        %v1228 = vpack.c.b16 %v1188, %v1184
        %v1229 = vpack.c.b16 %v1189, %v1185
        %v1230 = vpack.c.b16 %v1190, %v1186
        %v1231 = vpack.c.b16 %v1195, %v1191
        %v1232 = vpack.c.b16 %v1196, %v1192
        %v1233 = vpack.c.b16 %v1197, %v1193
        %v1234 = vpack.c.b16 %v1198, %v1194
        %v1235 = vpack.c.b16 %v1203, %v1199
        %v1236 = vpack.c.b16 %v1204, %v1200
        %v1237 = vpack.c.b16 %v1205, %v1201
        %v1238 = vpack.c.b16 %v1206, %v1202
        %v1264 = vsel %vm859, %v1210, 0
        %v1267 = vsel %vm859, %v1214, 0
        %v1270 = vsel %vm859, %v1218, 0
        %v1273 = vsel %vm859, %v1222, 0
        %v1276 = vsel %vm859, %v1226, 0
        %v1279 = vsel %vm859, %v1230, 0
        %v1282 = vsel %vm859, %v1234, 0
        %v1285 = vsel %vm859, %v1238, 0
        %1287 = vmatprep.subr.bf16.mxu0 0
        %1288 = vmatpush1.bf16.msra.mxu0 %v809
        %1289 = vmatprep.subr.bf16.mxu0 0
        %1290 = vmatpush1.bf16.msra.mxu0 %v810
        %1291 = vmatprep.subr.bf16.mxu0 0
        %1292 = vmatpush1.bf16.msra.mxu0 %v811
        %1293 = vmatprep.subr.bf16.mxu0 0
        %1294 = vmatpush1.bf16.msra.mxu0 %v812
        %1295 = vmatprep.subr.bf16.mxu0 0
        %1296 = vmatpush1.bf16.msra.mxu0 %v813
        %1297 = vmatprep.subr.bf16.mxu0 0
        %1298 = vmatpush1.bf16.msra.mxu0 %v814
        %1299 = vmatprep.subr.bf16.mxu0 0
        %1300 = vmatpush1.bf16.msra.mxu0 %v815
        %1301 = vmatprep.subr.bf16.mxu0 0
        %1302 = vmatpush1.bf16.msra.mxu0 %v816
        %1303 = vmatprep.subr.bf16.mxu0 0
        %1304 = vmatpush1.bf16.msra.mxu0 %v817
        %1305 = vmatprep.subr.bf16.mxu0 0
        %1306 = vmatpush1.bf16.msra.mxu0 %v818
        %1307 = vmatprep.subr.bf16.mxu0 0
        %1308 = vmatpush1.bf16.msra.mxu0 %v819
        %1309 = vmatprep.subr.bf16.mxu0 0
        %1310 = vmatpush1.bf16.msra.mxu0 %v820
        %1311 = vmatprep.subr.bf16.mxu0 0
        %1312 = vmatpush1.bf16.msra.mxu0 %v821
        %1313 = vmatprep.subr.bf16.mxu0 0
        %1314 = vmatpush1.bf16.msra.mxu0 %v822
        %1315 = vmatprep.subr.bf16.mxu0 0
        %1316 = vmatpush1.bf16.msra.mxu0 %v823
        %1317 = vmatprep.subr.bf16.mxu0 0
        %1318 = vmatpush1.bf16.msra.mxu0 %v824
        %1319 = vmatprep.mubr.bf16.mxu0 %v1208
        %1320 = vmatmul.mubr.bf16.gmra.mrb[0].mxu0 %v1207
        %v1321 = vpop.f32.mrb[0].mxu0
        %v1322 = vadd.f32 0.0, %v1321
        %v1323 = vpop.f32.mrb[0].mxu0
        %v1324 = vpop.f32.mrb[0].mxu0
        %v1325 = vadd.f32 0.0, %v1324
        %v1326 = vpop.f32.mrb[0].mxu0
        %1327 = vmatprep.mubr.bf16.mxu0 %v1212
        %1328 = vmatmul.mubr.bf16.gmra.mrb[0].mxu0 %v1211
        %v1329 = vpop.f32.mrb[0].mxu0
        %v1330 = vadd.f32 0.0, %v1329
        %v1331 = vpop.f32.mrb[0].mxu0
        %v1332 = vpop.f32.mrb[0].mxu0
        %v1333 = vadd.f32 0.0, %v1332
        %v1334 = vpop.f32.mrb[0].mxu0
        %1335 = vmatprep.mubr.bf16.mxu0 %v1216
        %1336 = vmatmul.mubr.bf16.gmra.mrb[0].mxu0 %v1215
        %v1337 = vpop.f32.mrb[0].mxu0
        %v1338 = vadd.f32 0.0, %v1337
        %v1339 = vpop.f32.mrb[0].mxu0
        %v1340 = vpop.f32.mrb[0].mxu0
        %v1341 = vadd.f32 0.0, %v1340
        %v1342 = vpop.f32.mrb[0].mxu0
        %1343 = vmatprep.mubr.bf16.mxu0 %v1220
        %1344 = vmatmul.mubr.bf16.gmra.mrb[0].mxu0 %v1219
        %v1345 = vpop.f32.mrb[0].mxu0
        %v1346 = vadd.f32 0.0, %v1345
        %v1347 = vpop.f32.mrb[0].mxu0
        %v1348 = vpop.f32.mrb[0].mxu0
        %v1349 = vadd.f32 0.0, %v1348
        %v1350 = vpop.f32.mrb[0].mxu0
        %1351 = vmatprep.mubr.bf16.mxu0 %v1224
        %1352 = vmatmul.mubr.bf16.gmra.mrb[0].mxu0 %v1223
        %v1353 = vpop.f32.mrb[0].mxu0
        %v1354 = vadd.f32 0.0, %v1353
        %v1355 = vpop.f32.mrb[0].mxu0
        %v1356 = vpop.f32.mrb[0].mxu0
        %v1357 = vadd.f32 0.0, %v1356
        %v1358 = vpop.f32.mrb[0].mxu0
        %1359 = vmatprep.mubr.bf16.mxu0 %v1228
        %1360 = vmatmul.mubr.bf16.gmra.mrb[0].mxu0 %v1227
        %v1361 = vpop.f32.mrb[0].mxu0
        %v1362 = vadd.f32 0.0, %v1361
        %v1363 = vpop.f32.mrb[0].mxu0
        %v1364 = vpop.f32.mrb[0].mxu0
        %v1365 = vadd.f32 0.0, %v1364
        %v1366 = vpop.f32.mrb[0].mxu0
        %1367 = vmatprep.mubr.bf16.mxu0 %v1232
        %1368 = vmatmul.mubr.bf16.gmra.mrb[0].mxu0 %v1231
        %v1369 = vpop.f32.mrb[0].mxu0
        %v1370 = vadd.f32 0.0, %v1369
        %v1371 = vpop.f32.mrb[0].mxu0
        %v1372 = vpop.f32.mrb[0].mxu0
        %v1373 = vadd.f32 0.0, %v1372
        %v1374 = vpop.f32.mrb[0].mxu0
        %1375 = vmatprep.mubr.bf16.mxu0 %v1236
        %1376 = vmatmul.mubr.bf16.gmra.mrb[0].mxu0 %v1235
        %v1377 = vpop.f32.mrb[0].mxu0
        %v1378 = vadd.f32 0.0, %v1377
        %v1379 = vpop.f32.mrb[0].mxu0
        %v1380 = vpop.f32.mrb[0].mxu0
        %v1381 = vadd.f32 0.0, %v1380
        %v1382 = vpop.f32.mrb[0].mxu0
        %1383 = vdwg.mxu0
        %1384 = vmatprep.subr.bf16.mxu0 0
        %1385 = vmatpush1.bf16.msra.mxu0 %v825
        %1386 = vmatprep.subr.bf16.mxu0 0
        %1387 = vmatpush1.bf16.msra.mxu0 %v826
        %1388 = vmatprep.subr.bf16.mxu0 0
        %1389 = vmatpush1.bf16.msra.mxu0 %v827
        %1390 = vmatprep.subr.bf16.mxu0 0
        %1391 = vmatpush1.bf16.msra.mxu0 %v828
        %1392 = vmatprep.subr.bf16.mxu0 0
        %1393 = vmatpush1.bf16.msra.mxu0 %v829
        %1394 = vmatprep.subr.bf16.mxu0 0
        %1395 = vmatpush1.bf16.msra.mxu0 %v830
        %1396 = vmatprep.subr.bf16.mxu0 0
        %1397 = vmatpush1.bf16.msra.mxu0 %v831
        %1398 = vmatprep.subr.bf16.mxu0 0
        %1399 = vmatpush1.bf16.msra.mxu0 %v832
        %1400 = vmatprep.subr.bf16.mxu0 0
        %1401 = vmatpush1.bf16.msra.mxu0 %v833
        %1402 = vmatprep.subr.bf16.mxu0 0
        %1403 = vmatpush1.bf16.msra.mxu0 0
        %1404 = vmatprep.subr.bf16.mxu0 0
        %1405 = vmatpush1.bf16.msra.mxu0 0
        %1406 = vmatprep.subr.bf16.mxu0 0
        %1407 = vmatpush1.bf16.msra.mxu0 0
        %1408 = vmatprep.subr.bf16.mxu0 0
        %1409 = vmatpush1.bf16.msra.mxu0 0
        %1410 = vmatprep.subr.bf16.mxu0 0
        %1411 = vmatpush1.bf16.msra.mxu0 0
        %1412 = vmatprep.subr.bf16.mxu0 0
        %1413 = vmatpush1.bf16.msra.mxu0 0
        %1414 = vmatprep.subr.bf16.mxu0 0
        %1415 = vmatpush1.bf16.msra.mxu0 0
        %1416 = vmatprep.mubr.bf16.mxu0 %v1264
        %1417 = vmatmul.mubr.bf16.gmra.mrb[0].mxu0 %v1209
        %v1418 = vpop.f32.mrb[0].mxu0
        %v1419 = vadd.f32 %v1322, %v1418
        %v1420 = vpop.f32.mrb[0].mxu0
        %v1421 = vpop.f32.mrb[0].mxu0
        %v1422 = vadd.f32 %v1325, %v1421
        %v1423 = vpop.f32.mrb[0].mxu0
        %1424 = vmatprep.mubr.bf16.mxu0 %v1267
        %1425 = vmatmul.mubr.bf16.gmra.mrb[0].mxu0 %v1213
        %v1426 = vpop.f32.mrb[0].mxu0
        %v1427 = vadd.f32 %v1330, %v1426
        %v1428 = vpop.f32.mrb[0].mxu0
        %v1429 = vpop.f32.mrb[0].mxu0
        %v1430 = vadd.f32 %v1333, %v1429
        %v1431 = vpop.f32.mrb[0].mxu0
        %1432 = vmatprep.mubr.bf16.mxu0 %v1270
        %1433 = vmatmul.mubr.bf16.gmra.mrb[0].mxu0 %v1217
        %v1434 = vpop.f32.mrb[0].mxu0
        %v1435 = vadd.f32 %v1338, %v1434
        %v1436 = vpop.f32.mrb[0].mxu0
        %v1437 = vpop.f32.mrb[0].mxu0
        %v1438 = vadd.f32 %v1341, %v1437
        %v1439 = vpop.f32.mrb[0].mxu0
        %1440 = vmatprep.mubr.bf16.mxu0 %v1273
        %1441 = vmatmul.mubr.bf16.gmra.mrb[0].mxu0 %v1221
        %v1442 = vpop.f32.mrb[0].mxu0
        %v1443 = vadd.f32 %v1346, %v1442
        %v1444 = vpop.f32.mrb[0].mxu0
        %v1445 = vpop.f32.mrb[0].mxu0
        %v1446 = vadd.f32 %v1349, %v1445
        %v1447 = vpop.f32.mrb[0].mxu0
        %1448 = vmatprep.mubr.bf16.mxu0 %v1276
        %1449 = vmatmul.mubr.bf16.gmra.mrb[0].mxu0 %v1225
        %v1450 = vpop.f32.mrb[0].mxu0
        %v1451 = vadd.f32 %v1354, %v1450
        %v1452 = vpop.f32.mrb[0].mxu0
        %v1453 = vpop.f32.mrb[0].mxu0
        %v1454 = vadd.f32 %v1357, %v1453
        %v1455 = vpop.f32.mrb[0].mxu0
        %1456 = vmatprep.mubr.bf16.mxu0 %v1279
        %1457 = vmatmul.mubr.bf16.gmra.mrb[0].mxu0 %v1229
        %v1458 = vpop.f32.mrb[0].mxu0
        %v1459 = vadd.f32 %v1362, %v1458
        %v1460 = vpop.f32.mrb[0].mxu0
        %v1461 = vpop.f32.mrb[0].mxu0
        %v1462 = vadd.f32 %v1365, %v1461
        %v1463 = vpop.f32.mrb[0].mxu0
        %1464 = vmatprep.mubr.bf16.mxu0 %v1282
        %1465 = vmatmul.mubr.bf16.gmra.mrb[0].mxu0 %v1233
        %v1466 = vpop.f32.mrb[0].mxu0
        %v1467 = vadd.f32 %v1370, %v1466
        %v1468 = vpop.f32.mrb[0].mxu0
        %v1469 = vpop.f32.mrb[0].mxu0
        %v1470 = vadd.f32 %v1373, %v1469
        %v1471 = vpop.f32.mrb[0].mxu0
        %1472 = vmatprep.mubr.bf16.mxu0 %v1285
        %1473 = vmatmul.mubr.bf16.gmra.mrb[0].mxu0 %v1237
        %v1474 = vpop.f32.mrb[0].mxu0
        %v1475 = vadd.f32 %v1378, %v1474
        %v1476 = vpop.f32.mrb[0].mxu0
        %v1477 = vpop.f32.mrb[0].mxu0
        %v1478 = vadd.f32 %v1381, %v1477
        %v1479 = vpop.f32.mrb[0].mxu0
        %1480 = vdwg.mxu0
        %v1481 = vmax.f32 %v1016, %v1419
        %v1482 = vmax.f32 %v1019, %v1422
        %v1483 = vmax.f32 %v1024, %v1427
        %v1484 = vmax.f32 %v1027, %v1430
        %v1485 = vmax.f32 %v1032, %v1435
        %v1486 = vmax.f32 %v1035, %v1438
        %v1487 = vmax.f32 %v1040, %v1443
        %v1488 = vmax.f32 %v1043, %v1446
        %v1489 = vmax.f32 %v1048, %v1451
        %v1490 = vmax.f32 %v1051, %v1454
        %v1491 = vmax.f32 %v1056, %v1459
        %v1492 = vmax.f32 %v1059, %v1462
        %v1493 = vmax.f32 %v1064, %v1467
        %v1494 = vmax.f32 %v1067, %v1470
        %v1495 = vmax.f32 %v1072, %v1475
        %v1496 = vmax.f32 %v1075, %v1478
        %s1497 = scalar_lea.vmem %s438, 512 [#allocation2]
        %v1498 = vld [vmem:[%s1497] sm:$0xff]
        %v1499 = vld [vmem:[%s1497 + $0x8] sm:$0xff]
        %v1500 = vld [vmem:[%s1497 + $0x10] sm:$0xff]
        %v1501 = vld [vmem:[%s1497 + $0x18] sm:$0xff]
        %v1502 = vld [vmem:[%s1497 + $0x20] sm:$0xff]
        %v1503 = vld [vmem:[%s1497 + $0x28] sm:$0xff]
        %v1504 = vld [vmem:[%s1497 + $0x30] sm:$0xff]
        %v1505 = vld [vmem:[%s1497 + $0x38] sm:$0xff]
        %v1506 = vld [vmem:[%s1497 + $0x40] sm:$0xff]
        %v1507 = vld [vmem:[%s1497 + $0x48] sm:$0xff]
        %v1508 = vld [vmem:[%s1497 + $0x50] sm:$0xff]
        %v1509 = vld [vmem:[%s1497 + $0x58] sm:$0xff]
        %v1510 = vld [vmem:[%s1497 + $0x60] sm:$0xff]
        %v1511 = vld [vmem:[%s1497 + $0x68] sm:$0xff]
        %v1512 = vld [vmem:[%s1497 + $0x70] sm:$0xff]
        %v1513 = vld [vmem:[%s1497 + $0x78] sm:$0xff]
        %v1514 = vld [vmem:[%s1497 + $0x80] sm:$0xff]
        %v1515 = vld [vmem:[%s1497 + $0x88] sm:$0xff]
        %v1516 = vld [vmem:[%s1497 + $0x90] sm:$0xff]
        %v1517 = vld [vmem:[%s1497 + $0x98] sm:$0xff]
        %v1518 = vld [vmem:[%s1497 + $0xa0] sm:$0xff]
        %v1519 = vld [vmem:[%s1497 + $0xa8] sm:$0xff]
        %v1520 = vld [vmem:[%s1497 + $0xb0] sm:$0xff]
        %v1521 = vld [vmem:[%s1497 + $0xb8] sm:$0xff]
        %v1522 = vld [vmem:[%s1497 + $0xc0] sm:$0xff]
        %v1523 = vld [vmem:[%s1497 + $0xc8] sm:$0xff]
        %v1524 = vld [vmem:[%s1497 + $0xd0] sm:$0xff]
        %v1525 = vld [vmem:[%s1497 + $0xd8] sm:$0xff]
        %v1526 = vld [vmem:[%s1497 + $0xe0] sm:$0xff]
        %v1527 = vld [vmem:[%s1497 + $0xe8] sm:$0xff]
        %v1528 = vld [vmem:[%s1497 + $0xf0] sm:$0xff]
        %v1529 = vld [vmem:[%s1497 + $0xf8] sm:$0xff]
        %v1562 = vunpack.c.l.b16 %v1498
        %v1563 = vunpack.c.h.b16 %v1498
        %v1564 = vunpack.c.l.b16 %v1499
        %v1565 = vunpack.c.h.b16 %v1499
        %v1566 = vunpack.c.l.b16 %v1500
        %v1567 = vunpack.c.h.b16 %v1500
        %v1568 = vunpack.c.l.b16 %v1501
        %v1569 = vunpack.c.h.b16 %v1501
        %v1570 = vunpack.c.l.b16 %v1502
        %v1571 = vunpack.c.h.b16 %v1502
        %v1572 = vunpack.c.l.b16 %v1503
        %v1573 = vunpack.c.h.b16 %v1503
        %v1574 = vunpack.c.l.b16 %v1504
        %v1575 = vunpack.c.h.b16 %v1504
        %v1576 = vunpack.c.l.b16 %v1505
        %v1577 = vunpack.c.h.b16 %v1505
        %v1578 = vunpack.c.l.b16 %v1506
        %v1579 = vunpack.c.h.b16 %v1506
        %v1580 = vunpack.c.l.b16 %v1507
        %v1581 = vunpack.c.h.b16 %v1507
        %v1582 = vunpack.c.l.b16 %v1508
        %v1583 = vunpack.c.h.b16 %v1508
        %v1584 = vunpack.c.l.b16 %v1509
        %v1585 = vunpack.c.h.b16 %v1509
        %v1586 = vunpack.c.l.b16 %v1510
        %v1587 = vunpack.c.h.b16 %v1510
        %v1588 = vunpack.c.l.b16 %v1511
        %v1589 = vunpack.c.h.b16 %v1511
        %v1590 = vunpack.c.l.b16 %v1512
        %v1591 = vunpack.c.h.b16 %v1512
        %v1592 = vunpack.c.l.b16 %v1513
        %v1593 = vunpack.c.h.b16 %v1513
        %v1594 = vunpack.c.l.b16 %v1514
        %v1595 = vunpack.c.h.b16 %v1514
        %v1596 = vunpack.c.l.b16 %v1515
        %v1597 = vunpack.c.h.b16 %v1515
        %v1598 = vunpack.c.l.b16 %v1516
        %v1599 = vunpack.c.h.b16 %v1516
        %v1600 = vunpack.c.l.b16 %v1517
        %v1601 = vunpack.c.h.b16 %v1517
        %v1602 = vunpack.c.l.b16 %v1518
        %v1603 = vunpack.c.h.b16 %v1518
        %v1604 = vunpack.c.l.b16 %v1519
        %v1605 = vunpack.c.h.b16 %v1519
        %v1606 = vunpack.c.l.b16 %v1520
        %v1607 = vunpack.c.h.b16 %v1520
        %v1608 = vunpack.c.l.b16 %v1521
        %v1609 = vunpack.c.h.b16 %v1521
        %v1610 = vunpack.c.l.b16 %v1522
        %v1611 = vunpack.c.h.b16 %v1522
        %v1612 = vunpack.c.l.b16 %v1523
        %v1613 = vunpack.c.h.b16 %v1523
        %v1614 = vunpack.c.l.b16 %v1524
        %v1615 = vunpack.c.h.b16 %v1524
        %v1616 = vunpack.c.l.b16 %v1525
        %v1617 = vunpack.c.h.b16 %v1525
        %v1618 = vunpack.c.l.b16 %v1526
        %v1619 = vunpack.c.h.b16 %v1526
        %v1620 = vunpack.c.l.b16 %v1527
        %v1621 = vunpack.c.h.b16 %v1527
        %v1622 = vunpack.c.l.b16 %v1528
        %v1623 = vunpack.c.h.b16 %v1528
        %v1624 = vunpack.c.l.b16 %v1529
        %v1625 = vunpack.c.h.b16 %v1529
        %v1626 = vpack.c.b16 %v1566, %v1562
        %v1627 = vpack.c.b16 %v1567, %v1563
        %v1628 = vpack.c.b16 %v1568, %v1564
        %v1629 = vpack.c.b16 %v1569, %v1565
        %v1630 = vpack.c.b16 %v1574, %v1570
        %v1631 = vpack.c.b16 %v1575, %v1571
        %v1632 = vpack.c.b16 %v1576, %v1572
        %v1633 = vpack.c.b16 %v1577, %v1573
        %v1634 = vpack.c.b16 %v1582, %v1578
        %v1635 = vpack.c.b16 %v1583, %v1579
        %v1636 = vpack.c.b16 %v1584, %v1580
        %v1637 = vpack.c.b16 %v1585, %v1581
        %v1638 = vpack.c.b16 %v1590, %v1586
        %v1639 = vpack.c.b16 %v1591, %v1587
        %v1640 = vpack.c.b16 %v1592, %v1588
        %v1641 = vpack.c.b16 %v1593, %v1589
        %v1642 = vpack.c.b16 %v1598, %v1594
        %v1643 = vpack.c.b16 %v1599, %v1595
        %v1644 = vpack.c.b16 %v1600, %v1596
        %v1645 = vpack.c.b16 %v1601, %v1597
        %v1646 = vpack.c.b16 %v1606, %v1602
        %v1647 = vpack.c.b16 %v1607, %v1603
        %v1648 = vpack.c.b16 %v1608, %v1604
        %v1649 = vpack.c.b16 %v1609, %v1605
        %v1650 = vpack.c.b16 %v1614, %v1610
        %v1651 = vpack.c.b16 %v1615, %v1611
        %v1652 = vpack.c.b16 %v1616, %v1612
        %v1653 = vpack.c.b16 %v1617, %v1613
        %v1654 = vpack.c.b16 %v1622, %v1618
        %v1655 = vpack.c.b16 %v1623, %v1619
        %v1656 = vpack.c.b16 %v1624, %v1620
        %v1657 = vpack.c.b16 %v1625, %v1621
        %v1683 = vsel %vm859, %v1629, 0
        %v1686 = vsel %vm859, %v1633, 0
        %v1689 = vsel %vm859, %v1637, 0
        %v1692 = vsel %vm859, %v1641, 0
        %v1695 = vsel %vm859, %v1645, 0
        %v1698 = vsel %vm859, %v1649, 0
        %v1701 = vsel %vm859, %v1653, 0
        %v1704 = vsel %vm859, %v1657, 0
        %1706 = vmatprep.subr.bf16.mxu0 0
        %1707 = vmatpush1.bf16.msra.mxu0 %v809
        %1708 = vmatprep.subr.bf16.mxu0 0
        %1709 = vmatpush1.bf16.msra.mxu0 %v810
        %1710 = vmatprep.subr.bf16.mxu0 0
        %1711 = vmatpush1.bf16.msra.mxu0 %v811
        %1712 = vmatprep.subr.bf16.mxu0 0
        %1713 = vmatpush1.bf16.msra.mxu0 %v812
        %1714 = vmatprep.subr.bf16.mxu0 0
        %1715 = vmatpush1.bf16.msra.mxu0 %v813
        %1716 = vmatprep.subr.bf16.mxu0 0
        %1717 = vmatpush1.bf16.msra.mxu0 %v814
        %1718 = vmatprep.subr.bf16.mxu0 0
        %1719 = vmatpush1.bf16.msra.mxu0 %v815
        %1720 = vmatprep.subr.bf16.mxu0 0
        %1721 = vmatpush1.bf16.msra.mxu0 %v816
        %1722 = vmatprep.subr.bf16.mxu0 0
        %1723 = vmatpush1.bf16.msra.mxu0 %v817
        %1724 = vmatprep.subr.bf16.mxu0 0
        %1725 = vmatpush1.bf16.msra.mxu0 %v818
        %1726 = vmatprep.subr.bf16.mxu0 0
        %1727 = vmatpush1.bf16.msra.mxu0 %v819
        %1728 = vmatprep.subr.bf16.mxu0 0
        %1729 = vmatpush1.bf16.msra.mxu0 %v820
        %1730 = vmatprep.subr.bf16.mxu0 0
        %1731 = vmatpush1.bf16.msra.mxu0 %v821
        %1732 = vmatprep.subr.bf16.mxu0 0
        %1733 = vmatpush1.bf16.msra.mxu0 %v822
        %1734 = vmatprep.subr.bf16.mxu0 0
        %1735 = vmatpush1.bf16.msra.mxu0 %v823
        %1736 = vmatprep.subr.bf16.mxu0 0
        %1737 = vmatpush1.bf16.msra.mxu0 %v824
        %1738 = vmatprep.mubr.bf16.mxu0 %v1627
        %1739 = vmatmul.mubr.bf16.gmra.mrb[0].mxu0 %v1626
        %v1740 = vpop.f32.mrb[0].mxu0
        %v1741 = vadd.f32 0.0, %v1740
        %v1742 = vpop.f32.mrb[0].mxu0
        %v1743 = vpop.f32.mrb[0].mxu0
        %v1744 = vadd.f32 0.0, %v1743
        %v1745 = vpop.f32.mrb[0].mxu0
        %1746 = vmatprep.mubr.bf16.mxu0 %v1631
        %1747 = vmatmul.mubr.bf16.gmra.mrb[0].mxu0 %v1630
        %v1748 = vpop.f32.mrb[0].mxu0
        %v1749 = vadd.f32 0.0, %v1748
        %v1750 = vpop.f32.mrb[0].mxu0
        %v1751 = vpop.f32.mrb[0].mxu0
        %v1752 = vadd.f32 0.0, %v1751
        %v1753 = vpop.f32.mrb[0].mxu0
        %1754 = vmatprep.mubr.bf16.mxu0 %v1635
        %1755 = vmatmul.mubr.bf16.gmra.mrb[0].mxu0 %v1634
        %v1756 = vpop.f32.mrb[0].mxu0
        %v1757 = vadd.f32 0.0, %v1756
        %v1758 = vpop.f32.mrb[0].mxu0
        %v1759 = vpop.f32.mrb[0].mxu0
        %v1760 = vadd.f32 0.0, %v1759
        %v1761 = vpop.f32.mrb[0].mxu0
        %1762 = vmatprep.mubr.bf16.mxu0 %v1639
        %1763 = vmatmul.mubr.bf16.gmra.mrb[0].mxu0 %v1638
        %v1764 = vpop.f32.mrb[0].mxu0
        %v1765 = vadd.f32 0.0, %v1764
        %v1766 = vpop.f32.mrb[0].mxu0
        %v1767 = vpop.f32.mrb[0].mxu0
        %v1768 = vadd.f32 0.0, %v1767
        %v1769 = vpop.f32.mrb[0].mxu0
        %1770 = vmatprep.mubr.bf16.mxu0 %v1643
        %1771 = vmatmul.mubr.bf16.gmra.mrb[0].mxu0 %v1642
        %v1772 = vpop.f32.mrb[0].mxu0
        %v1773 = vadd.f32 0.0, %v1772
        %v1774 = vpop.f32.mrb[0].mxu0
        %v1775 = vpop.f32.mrb[0].mxu0
        %v1776 = vadd.f32 0.0, %v1775
        %v1777 = vpop.f32.mrb[0].mxu0
        %1778 = vmatprep.mubr.bf16.mxu0 %v1647
        %1779 = vmatmul.mubr.bf16.gmra.mrb[0].mxu0 %v1646
        %v1780 = vpop.f32.mrb[0].mxu0
        %v1781 = vadd.f32 0.0, %v1780
        %v1782 = vpop.f32.mrb[0].mxu0
        %v1783 = vpop.f32.mrb[0].mxu0
        %v1784 = vadd.f32 0.0, %v1783
        %v1785 = vpop.f32.mrb[0].mxu0
        %1786 = vmatprep.mubr.bf16.mxu0 %v1651
        %1787 = vmatmul.mubr.bf16.gmra.mrb[0].mxu0 %v1650
        %v1788 = vpop.f32.mrb[0].mxu0
        %v1789 = vadd.f32 0.0, %v1788
        %v1790 = vpop.f32.mrb[0].mxu0
        %v1791 = vpop.f32.mrb[0].mxu0
        %v1792 = vadd.f32 0.0, %v1791
        %v1793 = vpop.f32.mrb[0].mxu0
        %1794 = vmatprep.mubr.bf16.mxu0 %v1655
        %1795 = vmatmul.mubr.bf16.gmra.mrb[0].mxu0 %v1654
        %v1796 = vpop.f32.mrb[0].mxu0
        %v1797 = vadd.f32 0.0, %v1796
        %v1798 = vpop.f32.mrb[0].mxu0
        %v1799 = vpop.f32.mrb[0].mxu0
        %v1800 = vadd.f32 0.0, %v1799
        %v1801 = vpop.f32.mrb[0].mxu0
        %1802 = vdwg.mxu0
        %1803 = vmatprep.subr.bf16.mxu0 0
        %1804 = vmatpush1.bf16.msra.mxu0 %v825
        %1805 = vmatprep.subr.bf16.mxu0 0
        %1806 = vmatpush1.bf16.msra.mxu0 %v826
        %1807 = vmatprep.subr.bf16.mxu0 0
        %1808 = vmatpush1.bf16.msra.mxu0 %v827
        %1809 = vmatprep.subr.bf16.mxu0 0
        %1810 = vmatpush1.bf16.msra.mxu0 %v828
        %1811 = vmatprep.subr.bf16.mxu0 0
        %1812 = vmatpush1.bf16.msra.mxu0 %v829
        %1813 = vmatprep.subr.bf16.mxu0 0
        %1814 = vmatpush1.bf16.msra.mxu0 %v830
        %1815 = vmatprep.subr.bf16.mxu0 0
        %1816 = vmatpush1.bf16.msra.mxu0 %v831
        %1817 = vmatprep.subr.bf16.mxu0 0
        %1818 = vmatpush1.bf16.msra.mxu0 %v832
        %1819 = vmatprep.subr.bf16.mxu0 0
        %1820 = vmatpush1.bf16.msra.mxu0 %v833
        %1821 = vmatprep.subr.bf16.mxu0 0
        %1822 = vmatpush1.bf16.msra.mxu0 0
        %1823 = vmatprep.subr.bf16.mxu0 0
        %1824 = vmatpush1.bf16.msra.mxu0 0
        %1825 = vmatprep.subr.bf16.mxu0 0
        %1826 = vmatpush1.bf16.msra.mxu0 0
        %1827 = vmatprep.subr.bf16.mxu0 0
        %1828 = vmatpush1.bf16.msra.mxu0 0
        %1829 = vmatprep.subr.bf16.mxu0 0
        %1830 = vmatpush1.bf16.msra.mxu0 0
        %1831 = vmatprep.subr.bf16.mxu0 0
        %1832 = vmatpush1.bf16.msra.mxu0 0
        %1833 = vmatprep.subr.bf16.mxu0 0
        %1834 = vmatpush1.bf16.msra.mxu0 0
        %1835 = vmatprep.mubr.bf16.mxu0 %v1683
        %1836 = vmatmul.mubr.bf16.gmra.mrb[0].mxu0 %v1628
        %v1837 = vpop.f32.mrb[0].mxu0
        %v1838 = vadd.f32 %v1741, %v1837
        %v1839 = vpop.f32.mrb[0].mxu0
        %v1840 = vpop.f32.mrb[0].mxu0
        %v1841 = vadd.f32 %v1744, %v1840
        %v1842 = vpop.f32.mrb[0].mxu0
        %1843 = vmatprep.mubr.bf16.mxu0 %v1686
        %1844 = vmatmul.mubr.bf16.gmra.mrb[0].mxu0 %v1632
        %v1845 = vpop.f32.mrb[0].mxu0
        %v1846 = vadd.f32 %v1749, %v1845
        %v1847 = vpop.f32.mrb[0].mxu0
        %v1848 = vpop.f32.mrb[0].mxu0
        %v1849 = vadd.f32 %v1752, %v1848
        %v1850 = vpop.f32.mrb[0].mxu0
        %1851 = vmatprep.mubr.bf16.mxu0 %v1689
        %1852 = vmatmul.mubr.bf16.gmra.mrb[0].mxu0 %v1636
        %v1853 = vpop.f32.mrb[0].mxu0
        %v1854 = vadd.f32 %v1757, %v1853
        %v1855 = vpop.f32.mrb[0].mxu0
        %v1856 = vpop.f32.mrb[0].mxu0
        %v1857 = vadd.f32 %v1760, %v1856
        %v1858 = vpop.f32.mrb[0].mxu0
        %1859 = vmatprep.mubr.bf16.mxu0 %v1692
        %1860 = vmatmul.mubr.bf16.gmra.mrb[0].mxu0 %v1640
        %v1861 = vpop.f32.mrb[0].mxu0
        %v1862 = vadd.f32 %v1765, %v1861
        %v1863 = vpop.f32.mrb[0].mxu0
        %v1864 = vpop.f32.mrb[0].mxu0
        %v1865 = vadd.f32 %v1768, %v1864
        %v1866 = vpop.f32.mrb[0].mxu0
        %1867 = vmatprep.mubr.bf16.mxu0 %v1695
        %1868 = vmatmul.mubr.bf16.gmra.mrb[0].mxu0 %v1644
        %v1869 = vpop.f32.mrb[0].mxu0
        %v1870 = vadd.f32 %v1773, %v1869
        %v1871 = vpop.f32.mrb[0].mxu0
        %v1872 = vpop.f32.mrb[0].mxu0
        %v1873 = vadd.f32 %v1776, %v1872
        %v1874 = vpop.f32.mrb[0].mxu0
        %1875 = vmatprep.mubr.bf16.mxu0 %v1698
        %1876 = vmatmul.mubr.bf16.gmra.mrb[0].mxu0 %v1648
        %v1877 = vpop.f32.mrb[0].mxu0
        %v1878 = vadd.f32 %v1781, %v1877
        %v1879 = vpop.f32.mrb[0].mxu0
        %v1880 = vpop.f32.mrb[0].mxu0
        %v1881 = vadd.f32 %v1784, %v1880
        %v1882 = vpop.f32.mrb[0].mxu0
        %1883 = vmatprep.mubr.bf16.mxu0 %v1701
        %1884 = vmatmul.mubr.bf16.gmra.mrb[0].mxu0 %v1652
        %v1885 = vpop.f32.mrb[0].mxu0
        %v1886 = vadd.f32 %v1789, %v1885
        %v1887 = vpop.f32.mrb[0].mxu0
        %v1888 = vpop.f32.mrb[0].mxu0
        %v1889 = vadd.f32 %v1792, %v1888
        %v1890 = vpop.f32.mrb[0].mxu0
        %1891 = vmatprep.mubr.bf16.mxu0 %v1704
        %1892 = vmatmul.mubr.bf16.gmra.mrb[0].mxu0 %v1656
        %v1893 = vpop.f32.mrb[0].mxu0
        %v1894 = vadd.f32 %v1797, %v1893
        %v1895 = vpop.f32.mrb[0].mxu0
        %v1896 = vpop.f32.mrb[0].mxu0
        %v1897 = vadd.f32 %v1800, %v1896
        %v1898 = vpop.f32.mrb[0].mxu0
        %1899 = vdwg.mxu0
        %v1900 = vmax.f32 %v1481, %v1838
        %v1901 = vmax.f32 %v1482, %v1841
        %v1902 = vmax.f32 %v1483, %v1846
        %v1903 = vmax.f32 %v1484, %v1849
        %v1904 = vmax.f32 %v1485, %v1854
        %v1905 = vmax.f32 %v1486, %v1857
        %v1906 = vmax.f32 %v1487, %v1862
        %v1907 = vmax.f32 %v1488, %v1865
        %v1908 = vmax.f32 %v1489, %v1870
        %v1909 = vmax.f32 %v1490, %v1873
        %v1910 = vmax.f32 %v1491, %v1878
        %v1911 = vmax.f32 %v1492, %v1881
        %v1912 = vmax.f32 %v1493, %v1886
        %v1913 = vmax.f32 %v1494, %v1889
        %v1914 = vmax.f32 %v1495, %v1894
        %v1915 = vmax.f32 %v1496, %v1897
        %s1916 = scalar_lea.vmem %s438, 768 [#allocation2]
        %v1917 = vld [vmem:[%s1916] sm:$0xff]
        %v1918 = vld [vmem:[%s1916 + $0x8] sm:$0xff]
        %v1919 = vld [vmem:[%s1916 + $0x10] sm:$0xff]
        %v1920 = vld [vmem:[%s1916 + $0x18] sm:$0xff]
        %v1921 = vld [vmem:[%s1916 + $0x20] sm:$0xff]
        %v1922 = vld [vmem:[%s1916 + $0x28] sm:$0xff]
        %v1923 = vld [vmem:[%s1916 + $0x30] sm:$0xff]
        %v1924 = vld [vmem:[%s1916 + $0x38] sm:$0xff]
        %v1925 = vld [vmem:[%s1916 + $0x40] sm:$0xff]
        %v1926 = vld [vmem:[%s1916 + $0x48] sm:$0xff]
        %v1927 = vld [vmem:[%s1916 + $0x50] sm:$0xff]
        %v1928 = vld [vmem:[%s1916 + $0x58] sm:$0xff]
        %v1929 = vld [vmem:[%s1916 + $0x60] sm:$0xff]
        %v1930 = vld [vmem:[%s1916 + $0x68] sm:$0xff]
        %v1931 = vld [vmem:[%s1916 + $0x70] sm:$0xff]
        %v1932 = vld [vmem:[%s1916 + $0x78] sm:$0xff]
        %v1933 = vld [vmem:[%s1916 + $0x80] sm:$0xff]
        %v1934 = vld [vmem:[%s1916 + $0x88] sm:$0xff]
        %v1935 = vld [vmem:[%s1916 + $0x90] sm:$0xff]
        %v1936 = vld [vmem:[%s1916 + $0x98] sm:$0xff]
        %v1937 = vld [vmem:[%s1916 + $0xa0] sm:$0xff]
        %v1938 = vld [vmem:[%s1916 + $0xa8] sm:$0xff]
        %v1939 = vld [vmem:[%s1916 + $0xb0] sm:$0xff]
        %v1940 = vld [vmem:[%s1916 + $0xb8] sm:$0xff]
        %v1941 = vld [vmem:[%s1916 + $0xc0] sm:$0xff]
        %v1942 = vld [vmem:[%s1916 + $0xc8] sm:$0xff]
        %v1943 = vld [vmem:[%s1916 + $0xd0] sm:$0xff]
        %v1944 = vld [vmem:[%s1916 + $0xd8] sm:$0xff]
        %v1945 = vld [vmem:[%s1916 + $0xe0] sm:$0xff]
        %v1946 = vld [vmem:[%s1916 + $0xe8] sm:$0xff]
        %v1947 = vld [vmem:[%s1916 + $0xf0] sm:$0xff]
        %v1948 = vld [vmem:[%s1916 + $0xf8] sm:$0xff]
        %v1981 = vunpack.c.l.b16 %v1917
        %v1982 = vunpack.c.h.b16 %v1917
        %v1983 = vunpack.c.l.b16 %v1918
        %v1984 = vunpack.c.h.b16 %v1918
        %v1985 = vunpack.c.l.b16 %v1919
        %v1986 = vunpack.c.h.b16 %v1919
        %v1987 = vunpack.c.l.b16 %v1920
        %v1988 = vunpack.c.h.b16 %v1920
        %v1989 = vunpack.c.l.b16 %v1921
        %v1990 = vunpack.c.h.b16 %v1921
        %v1991 = vunpack.c.l.b16 %v1922
        %v1992 = vunpack.c.h.b16 %v1922
        %v1993 = vunpack.c.l.b16 %v1923
        %v1994 = vunpack.c.h.b16 %v1923
        %v1995 = vunpack.c.l.b16 %v1924
        %v1996 = vunpack.c.h.b16 %v1924
        %v1997 = vunpack.c.l.b16 %v1925
        %v1998 = vunpack.c.h.b16 %v1925
        %v1999 = vunpack.c.l.b16 %v1926
        %v2000 = vunpack.c.h.b16 %v1926
        %v2001 = vunpack.c.l.b16 %v1927
        %v2002 = vunpack.c.h.b16 %v1927
        %v2003 = vunpack.c.l.b16 %v1928
        %v2004 = vunpack.c.h.b16 %v1928
        %v2005 = vunpack.c.l.b16 %v1929
        %v2006 = vunpack.c.h.b16 %v1929
        %v2007 = vunpack.c.l.b16 %v1930
        %v2008 = vunpack.c.h.b16 %v1930
        %v2009 = vunpack.c.l.b16 %v1931
        %v2010 = vunpack.c.h.b16 %v1931
        %v2011 = vunpack.c.l.b16 %v1932
        %v2012 = vunpack.c.h.b16 %v1932
        %v2013 = vunpack.c.l.b16 %v1933
        %v2014 = vunpack.c.h.b16 %v1933
        %v2015 = vunpack.c.l.b16 %v1934
        %v2016 = vunpack.c.h.b16 %v1934
        %v2017 = vunpack.c.l.b16 %v1935
        %v2018 = vunpack.c.h.b16 %v1935
        %v2019 = vunpack.c.l.b16 %v1936
        %v2020 = vunpack.c.h.b16 %v1936
        %v2021 = vunpack.c.l.b16 %v1937
        %v2022 = vunpack.c.h.b16 %v1937
        %v2023 = vunpack.c.l.b16 %v1938
        %v2024 = vunpack.c.h.b16 %v1938
        %v2025 = vunpack.c.l.b16 %v1939
        %v2026 = vunpack.c.h.b16 %v1939
        %v2027 = vunpack.c.l.b16 %v1940
        %v2028 = vunpack.c.h.b16 %v1940
        %v2029 = vunpack.c.l.b16 %v1941
        %v2030 = vunpack.c.h.b16 %v1941
        %v2031 = vunpack.c.l.b16 %v1942
        %v2032 = vunpack.c.h.b16 %v1942
        %v2033 = vunpack.c.l.b16 %v1943
        %v2034 = vunpack.c.h.b16 %v1943
        %v2035 = vunpack.c.l.b16 %v1944
        %v2036 = vunpack.c.h.b16 %v1944
        %v2037 = vunpack.c.l.b16 %v1945
        %v2038 = vunpack.c.h.b16 %v1945
        %v2039 = vunpack.c.l.b16 %v1946
        %v2040 = vunpack.c.h.b16 %v1946
        %v2041 = vunpack.c.l.b16 %v1947
        %v2042 = vunpack.c.h.b16 %v1947
        %v2043 = vunpack.c.l.b16 %v1948
        %v2044 = vunpack.c.h.b16 %v1948
        %v2045 = vpack.c.b16 %v1985, %v1981
        %v2046 = vpack.c.b16 %v1986, %v1982
        %v2047 = vpack.c.b16 %v1987, %v1983
        %v2048 = vpack.c.b16 %v1988, %v1984
        %v2049 = vpack.c.b16 %v1993, %v1989
        %v2050 = vpack.c.b16 %v1994, %v1990
        %v2051 = vpack.c.b16 %v1995, %v1991
        %v2052 = vpack.c.b16 %v1996, %v1992
        %v2053 = vpack.c.b16 %v2001, %v1997
        %v2054 = vpack.c.b16 %v2002, %v1998
        %v2055 = vpack.c.b16 %v2003, %v1999
        %v2056 = vpack.c.b16 %v2004, %v2000
        %v2057 = vpack.c.b16 %v2009, %v2005
        %v2058 = vpack.c.b16 %v2010, %v2006
        %v2059 = vpack.c.b16 %v2011, %v2007
        %v2060 = vpack.c.b16 %v2012, %v2008
        %v2061 = vpack.c.b16 %v2017, %v2013
        %v2062 = vpack.c.b16 %v2018, %v2014
        %v2063 = vpack.c.b16 %v2019, %v2015
        %v2064 = vpack.c.b16 %v2020, %v2016
        %v2065 = vpack.c.b16 %v2025, %v2021
        %v2066 = vpack.c.b16 %v2026, %v2022
        %v2067 = vpack.c.b16 %v2027, %v2023
        %v2068 = vpack.c.b16 %v2028, %v2024
        %v2069 = vpack.c.b16 %v2033, %v2029
        %v2070 = vpack.c.b16 %v2034, %v2030
        %v2071 = vpack.c.b16 %v2035, %v2031
        %v2072 = vpack.c.b16 %v2036, %v2032
        %v2073 = vpack.c.b16 %v2041, %v2037
        %v2074 = vpack.c.b16 %v2042, %v2038
        %v2075 = vpack.c.b16 %v2043, %v2039
        %v2076 = vpack.c.b16 %v2044, %v2040
        %v2102 = vsel %vm859, %v2048, 0
        %v2105 = vsel %vm859, %v2052, 0
        %v2108 = vsel %vm859, %v2056, 0
        %v2111 = vsel %vm859, %v2060, 0
        %v2114 = vsel %vm859, %v2064, 0
        %v2117 = vsel %vm859, %v2068, 0
        %v2120 = vsel %vm859, %v2072, 0
        %v2123 = vsel %vm859, %v2076, 0
        %2125 = vmatprep.subr.bf16.mxu0 0
        %2126 = vmatpush1.bf16.msra.mxu0 %v809
        %2127 = vmatprep.subr.bf16.mxu0 0
        %2128 = vmatpush1.bf16.msra.mxu0 %v810
        %2129 = vmatprep.subr.bf16.mxu0 0
        %2130 = vmatpush1.bf16.msra.mxu0 %v811
        %2131 = vmatprep.subr.bf16.mxu0 0
        %2132 = vmatpush1.bf16.msra.mxu0 %v812
        %2133 = vmatprep.subr.bf16.mxu0 0
        %2134 = vmatpush1.bf16.msra.mxu0 %v813
        %2135 = vmatprep.subr.bf16.mxu0 0
        %2136 = vmatpush1.bf16.msra.mxu0 %v814
        %2137 = vmatprep.subr.bf16.mxu0 0
        %2138 = vmatpush1.bf16.msra.mxu0 %v815
        %2139 = vmatprep.subr.bf16.mxu0 0
        %2140 = vmatpush1.bf16.msra.mxu0 %v816
        %2141 = vmatprep.subr.bf16.mxu0 0
        %2142 = vmatpush1.bf16.msra.mxu0 %v817
        %2143 = vmatprep.subr.bf16.mxu0 0
        %2144 = vmatpush1.bf16.msra.mxu0 %v818
        %2145 = vmatprep.subr.bf16.mxu0 0
        %2146 = vmatpush1.bf16.msra.mxu0 %v819
        %2147 = vmatprep.subr.bf16.mxu0 0
        %2148 = vmatpush1.bf16.msra.mxu0 %v820
        %2149 = vmatprep.subr.bf16.mxu0 0
        %2150 = vmatpush1.bf16.msra.mxu0 %v821
        %2151 = vmatprep.subr.bf16.mxu0 0
        %2152 = vmatpush1.bf16.msra.mxu0 %v822
        %2153 = vmatprep.subr.bf16.mxu0 0
        %2154 = vmatpush1.bf16.msra.mxu0 %v823
        %2155 = vmatprep.subr.bf16.mxu0 0
        %2156 = vmatpush1.bf16.msra.mxu0 %v824
        %2157 = vmatprep.mubr.bf16.mxu0 %v2046
        %2158 = vmatmul.mubr.bf16.gmra.mrb[0].mxu0 %v2045
        %v2159 = vpop.f32.mrb[0].mxu0
        %v2160 = vadd.f32 0.0, %v2159
        %v2161 = vpop.f32.mrb[0].mxu0
        %v2162 = vpop.f32.mrb[0].mxu0
        %v2163 = vadd.f32 0.0, %v2162
        %v2164 = vpop.f32.mrb[0].mxu0
        %2165 = vmatprep.mubr.bf16.mxu0 %v2050
        %2166 = vmatmul.mubr.bf16.gmra.mrb[0].mxu0 %v2049
        %v2167 = vpop.f32.mrb[0].mxu0
        %v2168 = vadd.f32 0.0, %v2167
        %v2169 = vpop.f32.mrb[0].mxu0
        %v2170 = vpop.f32.mrb[0].mxu0
        %v2171 = vadd.f32 0.0, %v2170
        %v2172 = vpop.f32.mrb[0].mxu0
        %2173 = vmatprep.mubr.bf16.mxu0 %v2054
        %2174 = vmatmul.mubr.bf16.gmra.mrb[0].mxu0 %v2053
        %v2175 = vpop.f32.mrb[0].mxu0
        %v2176 = vadd.f32 0.0, %v2175
        %v2177 = vpop.f32.mrb[0].mxu0
        %v2178 = vpop.f32.mrb[0].mxu0
        %v2179 = vadd.f32 0.0, %v2178
        %v2180 = vpop.f32.mrb[0].mxu0
        %2181 = vmatprep.mubr.bf16.mxu0 %v2058
        %2182 = vmatmul.mubr.bf16.gmra.mrb[0].mxu0 %v2057
        %v2183 = vpop.f32.mrb[0].mxu0
        %v2184 = vadd.f32 0.0, %v2183
        %v2185 = vpop.f32.mrb[0].mxu0
        %v2186 = vpop.f32.mrb[0].mxu0
        %v2187 = vadd.f32 0.0, %v2186
        %v2188 = vpop.f32.mrb[0].mxu0
        %2189 = vmatprep.mubr.bf16.mxu0 %v2062
        %2190 = vmatmul.mubr.bf16.gmra.mrb[0].mxu0 %v2061
        %v2191 = vpop.f32.mrb[0].mxu0
        %v2192 = vadd.f32 0.0, %v2191
        %v2193 = vpop.f32.mrb[0].mxu0
        %v2194 = vpop.f32.mrb[0].mxu0
        %v2195 = vadd.f32 0.0, %v2194
        %v2196 = vpop.f32.mrb[0].mxu0
        %2197 = vmatprep.mubr.bf16.mxu0 %v2066
        %2198 = vmatmul.mubr.bf16.gmra.mrb[0].mxu0 %v2065
        %v2199 = vpop.f32.mrb[0].mxu0
        %v2200 = vadd.f32 0.0, %v2199
        %v2201 = vpop.f32.mrb[0].mxu0
        %v2202 = vpop.f32.mrb[0].mxu0
        %v2203 = vadd.f32 0.0, %v2202
        %v2204 = vpop.f32.mrb[0].mxu0
        %2205 = vmatprep.mubr.bf16.mxu0 %v2070
        %2206 = vmatmul.mubr.bf16.gmra.mrb[0].mxu0 %v2069
        %v2207 = vpop.f32.mrb[0].mxu0
        %v2208 = vadd.f32 0.0, %v2207
        %v2209 = vpop.f32.mrb[0].mxu0
        %v2210 = vpop.f32.mrb[0].mxu0
        %v2211 = vadd.f32 0.0, %v2210
        %v2212 = vpop.f32.mrb[0].mxu0
        %2213 = vmatprep.mubr.bf16.mxu0 %v2074
        %2214 = vmatmul.mubr.bf16.gmra.mrb[0].mxu0 %v2073
        %v2215 = vpop.f32.mrb[0].mxu0
        %v2216 = vadd.f32 0.0, %v2215
        %v2217 = vpop.f32.mrb[0].mxu0
        %v2218 = vpop.f32.mrb[0].mxu0
        %v2219 = vadd.f32 0.0, %v2218
        %v2220 = vpop.f32.mrb[0].mxu0
        %2221 = vdwg.mxu0
        %2222 = vmatprep.subr.bf16.mxu0 0
        %2223 = vmatpush1.bf16.msra.mxu0 %v825
        %2224 = vmatprep.subr.bf16.mxu0 0
        %2225 = vmatpush1.bf16.msra.mxu0 %v826
        %2226 = vmatprep.subr.bf16.mxu0 0
        %2227 = vmatpush1.bf16.msra.mxu0 %v827
        %2228 = vmatprep.subr.bf16.mxu0 0
        %2229 = vmatpush1.bf16.msra.mxu0 %v828
        %2230 = vmatprep.subr.bf16.mxu0 0
        %2231 = vmatpush1.bf16.msra.mxu0 %v829
        %2232 = vmatprep.subr.bf16.mxu0 0
        %2233 = vmatpush1.bf16.msra.mxu0 %v830
        %2234 = vmatprep.subr.bf16.mxu0 0
        %2235 = vmatpush1.bf16.msra.mxu0 %v831
        %2236 = vmatprep.subr.bf16.mxu0 0
        %2237 = vmatpush1.bf16.msra.mxu0 %v832
        %2238 = vmatprep.subr.bf16.mxu0 0
        %2239 = vmatpush1.bf16.msra.mxu0 %v833
        %2240 = vmatprep.subr.bf16.mxu0 0
        %2241 = vmatpush1.bf16.msra.mxu0 0
        %2242 = vmatprep.subr.bf16.mxu0 0
        %2243 = vmatpush1.bf16.msra.mxu0 0
        %2244 = vmatprep.subr.bf16.mxu0 0
        %2245 = vmatpush1.bf16.msra.mxu0 0
        %2246 = vmatprep.subr.bf16.mxu0 0
        %2247 = vmatpush1.bf16.msra.mxu0 0
        %2248 = vmatprep.subr.bf16.mxu0 0
        %2249 = vmatpush1.bf16.msra.mxu0 0
        %2250 = vmatprep.subr.bf16.mxu0 0
        %2251 = vmatpush1.bf16.msra.mxu0 0
        %2252 = vmatprep.subr.bf16.mxu0 0
        %2253 = vmatpush1.bf16.msra.mxu0 0
        %2254 = vmatprep.mubr.bf16.mxu0 %v2102
        %2255 = vmatmul.mubr.bf16.gmra.mrb[0].mxu0 %v2047
        %v2256 = vpop.f32.mrb[0].mxu0
        %v2257 = vadd.f32 %v2160, %v2256
        %v2258 = vpop.f32.mrb[0].mxu0
        %v2259 = vpop.f32.mrb[0].mxu0
        %v2260 = vadd.f32 %v2163, %v2259
        %v2261 = vpop.f32.mrb[0].mxu0
        %2262 = vmatprep.mubr.bf16.mxu0 %v2105
        %2263 = vmatmul.mubr.bf16.gmra.mrb[0].mxu0 %v2051
        %v2264 = vpop.f32.mrb[0].mxu0
        %v2265 = vadd.f32 %v2168, %v2264
        %v2266 = vpop.f32.mrb[0].mxu0
        %v2267 = vpop.f32.mrb[0].mxu0
        %v2268 = vadd.f32 %v2171, %v2267
        %v2269 = vpop.f32.mrb[0].mxu0
        %2270 = vmatprep.mubr.bf16.mxu0 %v2108
        %2271 = vmatmul.mubr.bf16.gmra.mrb[0].mxu0 %v2055
        %v2272 = vpop.f32.mrb[0].mxu0
        %v2273 = vadd.f32 %v2176, %v2272
        %v2274 = vpop.f32.mrb[0].mxu0
        %v2275 = vpop.f32.mrb[0].mxu0
        %v2276 = vadd.f32 %v2179, %v2275
        %v2277 = vpop.f32.mrb[0].mxu0
        %2278 = vmatprep.mubr.bf16.mxu0 %v2111
        %2279 = vmatmul.mubr.bf16.gmra.mrb[0].mxu0 %v2059
        %v2280 = vpop.f32.mrb[0].mxu0
        %v2281 = vadd.f32 %v2184, %v2280
        %v2282 = vpop.f32.mrb[0].mxu0
        %v2283 = vpop.f32.mrb[0].mxu0
        %v2284 = vadd.f32 %v2187, %v2283
        %v2285 = vpop.f32.mrb[0].mxu0
        %2286 = vmatprep.mubr.bf16.mxu0 %v2114
        %2287 = vmatmul.mubr.bf16.gmra.mrb[0].mxu0 %v2063
        %v2288 = vpop.f32.mrb[0].mxu0
        %v2289 = vadd.f32 %v2192, %v2288
        %v2290 = vpop.f32.mrb[0].mxu0
        %v2291 = vpop.f32.mrb[0].mxu0
        %v2292 = vadd.f32 %v2195, %v2291
        %v2293 = vpop.f32.mrb[0].mxu0
        %2294 = vmatprep.mubr.bf16.mxu0 %v2117
        %2295 = vmatmul.mubr.bf16.gmra.mrb[0].mxu0 %v2067
        %v2296 = vpop.f32.mrb[0].mxu0
        %v2297 = vadd.f32 %v2200, %v2296
        %v2298 = vpop.f32.mrb[0].mxu0
        %v2299 = vpop.f32.mrb[0].mxu0
        %v2300 = vadd.f32 %v2203, %v2299
        %v2301 = vpop.f32.mrb[0].mxu0
        %2302 = vmatprep.mubr.bf16.mxu0 %v2120
        %2303 = vmatmul.mubr.bf16.gmra.mrb[0].mxu0 %v2071
        %v2304 = vpop.f32.mrb[0].mxu0
        %v2305 = vadd.f32 %v2208, %v2304
        %v2306 = vpop.f32.mrb[0].mxu0
        %v2307 = vpop.f32.mrb[0].mxu0
        %v2308 = vadd.f32 %v2211, %v2307
        %v2309 = vpop.f32.mrb[0].mxu0
        %2310 = vmatprep.mubr.bf16.mxu0 %v2123
        %2311 = vmatmul.mubr.bf16.gmra.mrb[0].mxu0 %v2075
        %v2312 = vpop.f32.mrb[0].mxu0
        %v2313 = vadd.f32 %v2216, %v2312
        %v2314 = vpop.f32.mrb[0].mxu0
        %v2315 = vpop.f32.mrb[0].mxu0
        %v2316 = vadd.f32 %v2219, %v2315
        %v2317 = vpop.f32.mrb[0].mxu0
        %2318 = vdwg.mxu0
        %v2319 = vmax.f32 %v1900, %v2257
        %v2320 = vmax.f32 %v1901, %v2260
        %v2321 = vmax.f32 %v1902, %v2265
        %v2322 = vmax.f32 %v1903, %v2268
        %v2323 = vmax.f32 %v1904, %v2273
        %v2324 = vmax.f32 %v1905, %v2276
        %v2325 = vmax.f32 %v1906, %v2281
        %v2326 = vmax.f32 %v1907, %v2284
        %v2327 = vmax.f32 %v1908, %v2289
        %v2328 = vmax.f32 %v1909, %v2292
        %v2329 = vmax.f32 %v1910, %v2297
        %v2330 = vmax.f32 %v1911, %v2300
        %v2331 = vmax.f32 %v1912, %v2305
        %v2332 = vmax.f32 %v1913, %v2308
        %v2333 = vmax.f32 %v1914, %v2313
        %v2334 = vmax.f32 %v1915, %v2316
        %v2335 = vld [vmem:[%s2] sm:$0x1]
        %v2337 = vlaneseq
        %v2338 = vshrl.u32 %v2337, 7
        %v2339 = vsub.s32 0, %v2338
        %v2340 = vrot.slane %v2335, %v2339
        %v2342 = vadd.f32 %v2319, %v2340
        %v2343 = vadd.f32 %v2320, %v2340
        %v2344 = vadd.f32 %v2321, %v2340
        %v2345 = vadd.f32 %v2322, %v2340
        %v2346 = vadd.f32 %v2323, %v2340
        %v2347 = vadd.f32 %v2324, %v2340
        %v2348 = vadd.f32 %v2325, %v2340
        %v2349 = vadd.f32 %v2326, %v2340
        %v2350 = vadd.f32 %v2327, %v2340
        %v2351 = vadd.f32 %v2328, %v2340
        %v2352 = vadd.f32 %v2329, %v2340
        %v2353 = vadd.f32 %v2330, %v2340
        %v2354 = vadd.f32 %v2331, %v2340
        %v2355 = vadd.f32 %v2332, %v2340
        %v2356 = vadd.f32 %v2333, %v2340
        %v2357 = vadd.f32 %v2334, %v2340
        %v2358 = vmax.f32 %v2342, 0.0
        %v2359 = vmax.f32 %v2343, 0.0
        %v2360 = vmax.f32 %v2344, 0.0
        %v2361 = vmax.f32 %v2345, 0.0
        %v2362 = vmax.f32 %v2346, 0.0
        %v2363 = vmax.f32 %v2347, 0.0
        %v2364 = vmax.f32 %v2348, 0.0
        %v2365 = vmax.f32 %v2349, 0.0
        %v2366 = vmax.f32 %v2350, 0.0
        %v2367 = vmax.f32 %v2351, 0.0
        %v2368 = vmax.f32 %v2352, 0.0
        %v2369 = vmax.f32 %v2353, 0.0
        %v2370 = vmax.f32 %v2354, 0.0
        %v2371 = vmax.f32 %v2355, 0.0
        %v2372 = vmax.f32 %v2356, 0.0
        %v2373 = vmax.f32 %v2357, 0.0
        %vm2374 = vcmask 523264
        %2375 = vst.msk [vmem:[%s472] sm:$0xff] %vm2374, %v2358
        %2376 = vst.msk [vmem:[%s472 + $0x8] sm:$0xff] %vm2374, %v2359
        %2377 = vst.msk [vmem:[%s472 + $0x10] sm:$0xff] %vm2374, %v2360
        %2378 = vst.msk [vmem:[%s472 + $0x18] sm:$0xff] %vm2374, %v2361
        %2379 = vst.msk [vmem:[%s472 + $0x20] sm:$0xff] %vm2374, %v2362
        %2380 = vst.msk [vmem:[%s472 + $0x28] sm:$0xff] %vm2374, %v2363
        %2381 = vst.msk [vmem:[%s472 + $0x30] sm:$0xff] %vm2374, %v2364
        %2382 = vst.msk [vmem:[%s472 + $0x38] sm:$0xff] %vm2374, %v2365
        %2383 = vst.msk [vmem:[%s472 + $0x40] sm:$0xff] %vm2374, %v2366
        %2384 = vst.msk [vmem:[%s472 + $0x48] sm:$0xff] %vm2374, %v2367
        %2385 = vst.msk [vmem:[%s472 + $0x50] sm:$0xff] %vm2374, %v2368
        %2386 = vst.msk [vmem:[%s472 + $0x58] sm:$0xff] %vm2374, %v2369
        %2387 = vst.msk [vmem:[%s472 + $0x60] sm:$0xff] %vm2374, %v2370
        %2388 = vst.msk [vmem:[%s472 + $0x68] sm:$0xff] %vm2374, %v2371
        %2389 = vst.msk [vmem:[%s472 + $0x70] sm:$0xff] %vm2374, %v2372
        %2390 = vst.msk [vmem:[%s472 + $0x78] sm:$0xff] %vm2374, %v2373
        %s2391 = smul.u32 16, %s19
        %p2392 = scmp.lt.s32.totalorder %s18, 1
        %s2393 = scalar_select %p2392, %s18, 1
        %p2394 = scmp.lt.s32.totalorder %s2391, 31
        %s2395 = scalar_select %p2394, %s2391, 31
        %s2396 = smul.addr %s2393, 32
        %s2397 = sadd.s32 %s2395, %s2396
        %s2398 = smul.addr %s2397, 8
        %s2399 = scalar_lea.vmem %s3, %s2398
        // Predicated region
        $region56: #{modified_forward.5} parent=50 // pred_check
          %p2400 = pneg %p116
        $region57: #{modified_forward.5} parent=50 // pred_check_branch
          %2402 = sbr.rel (%p2400) target = $region59
        $region58: #{modified_forward.5} parent=50 // pred_region
          %s2403 = smul.u32 16, %s19
        $region59: #{modified_forward.5} parent=50 // pred_fallthru
          _
      $region51: #{modified_forward.5} parent=5 // pred_fallthru
        _
      %p2404 = scmp.le.s32.totalorder 2, %s9
      // Predicated region
      $region60: #{modified_forward.5} parent=5 // pred_check
        %p2405 = pneg %p2404
      $region61: #{modified_forward.5} parent=5 // pred_check_branch
        %2407 = sbr.rel (%p2405) target = $region63
      $region62: #{modified_forward.5} parent=5 // pred_region
        %s2408 = ssub.s32 %s9, 2
        // Predicated region
        $region64: #{modified_forward.5} parent=62 // pred_check
          %p2409 = pneg %p122
        $region65: #{modified_forward.5} parent=62 // pred_check_branch
          %2411 = sbr.rel (%p2409) target = $region67
        $region66: #{modified_forward.5} parent=62 // pred_region
          %s2412 = smul.u32 16, %s21
          %p2413 = scmp.lt.s32.totalorder %s20, 1
          %s2414 = scalar_select %p2413, %s20, 1
          %p2415 = scmp.lt.s32.totalorder %s2412, 31
          %s2416 = scalar_select %p2415, %s2412, 31
          %s2417 = smul.addr %s2414, 32
          %s2418 = sadd.s32 %s2416, %s2417
          %s2419 = smul.addr %s2418, 8
          %s2420 = scalar_lea.vmem %s3, %s2419
        $region67: #{modified_forward.5} parent=62 // pred_fallthru
          _
      $region63: #{modified_forward.5} parent=5 // pred_fallthru
        _
    $region6: #{modified_forward.5} parent=1 // loop_footer
      %s13 = sadd.s32 1, %s9
    $region7: #{modified_forward.5} parent=1 // loop_footer_branch
      %8 = sbr.rel target = $region3
    $region8: #{modified_forward.5} parent=1 // loop_exit
      _

// kernel: modified_forward.6
$region0: #{modified_forward.6}
  #allocation0 [shape = 'u32[]', space=smem, size = 0x4, offset = 0x4, fixed_abs, tag = 'smem constant byte address 0x4 - core index']
  #allocation1 [shape = 'u32[144,128]{1,0:T(1,128)}', space=vmem, size = 0x12000, scoped, tag = 'internal scratch']
  %s0 = inlined_call_operand.vmem [shape: bf16[2,4,64,1600], index: 0, kind: input, shape index: {}]
  %s1 = inlined_call_operand.vmem [shape: bf16[1600,128], index: 1, kind: input, shape index: {}]
  %s2 = inlined_call_operand.vmem [shape: f32[1,128], index: 2, kind: input, shape index: {}]
  %s3 = inlined_call_operand.vmem [shape: f32[2,64,128], index: 3, kind: output, shape index: {}]
  %s4 = sld [smem:[#allocation0]]
  $region45: #{modified_forward.6} parent=0
    _
  %s6 = ssub.s32 1, %s4
  %s7 = scalar_select 0, %s6, %s4
  loop: start=0, step=1, limit=4
  $region2: #{modified_forward.6} parent=0 // loop_pre_header
    _
  $region3: #{modified_forward.6} parent=0 // loop_header
    %s9 = sphi 0, %s13
    %p10 = scmp.ge.s32.totalorder %s9, 4
    %s16 = sphi 0, %s28
    %s17 = sphi 0, %s24
    %s18 = sphi 0, %s16
    %s19 = sphi 0, %s17
    %s20 = sphi 0, %s18
    %s21 = sphi 0, %s19
    %s33 = sphi 0, %s35
    %s36 = sphi 0, %s33
    %s37 = sphi 0, %s36
    %s53 = sphi 0, %s37
    %s57 = sphi 0, %s57
    %s59 = sphi 0, %s57
    %s60 = sphi 0, %s59
    %s74 = sphi 0, %s60
    %s78 = sphi 0, %s78
    %s80 = sphi 0, %s78
    %s81 = sphi 0, %s80
    %s95 = sphi 0, %s81
    %s103 = sphi 0, %s105
    %s106 = sphi 0, %s103
    %s107 = sphi 0, %s106
    %s123 = sphi 0, %s107
  $region4: #{modified_forward.6} parent=0 // loop_header_branch
    %12 = sbr.rel (%p10) target = $region8
  $region5: #{modified_forward.6} parent=0 // loop_body
    %s14 = ssub.s32 %s9, 1
    %s15 = ssub.s32 %s9, 2
    %s22 = sadd.s32 1, %s17
    %p23 = scmp.ge.s32.totalorder %s22, 1
    %s24 = scalar_select %p23, 0, %s22
    %s25 = sadd.s32 1, %s16
    %s26 = scalar_select %p23, %s25, %s16
    %p27 = scmp.ge.s32.totalorder %s26, 2
    %s28 = scalar_select %p27, 0, %s26
    %s29 = ssub.s32 %s16, %s28
    %s30 = ssub.s32 %s17, %s24
    %s31 = sor.u32 %s29, %s30
    %p32 = scmp.eq.s32.totalorder %s31, 0
    %s34 = sadd.s32 %s33, 1
    %s35 = scalar_select %p32, %s33, %s34
    %p38 = pneg %p32
    %p39 = scmp.eq.s32.totalorder %s9, 1
    %p40 = por %p38, %p39
    %p41 = scmp.ne.s32.totalorder %s33, %s36
    %p42 = scmp.eq.s32.totalorder %s9, 0
    %p43 = por %p41, %p42
    %p44 = scmp.ne.s32.totalorder %s33, %s36
    %p45 = scmp.eq.s32.totalorder %s14, 1
    %p46 = por %p44, %p45
    %p47 = scmp.ne.s32.totalorder %s36, %s37
    %p48 = scmp.eq.s32.totalorder %s14, 0
    %p49 = por %p47, %p48
    %p50 = scmp.ne.s32.totalorder %s36, %s37
    %p51 = scmp.eq.s32.totalorder %s15, 1
    %p52 = por %p50, %p51
    %p54 = scmp.ne.s32.totalorder %s37, %s53
    %p55 = scmp.eq.s32.totalorder %s15, 0
    %p56 = por %p54, %p55
    %s58 = sadd.s32 %s57, 1
    %p61 = scmp.eq.s32.totalorder %s9, 1
    %p62 = scmp.ne.s32.totalorder %s57, %s59
    %p63 = scmp.eq.s32.totalorder %s9, 0
    %p64 = por %p62, %p63
    %p65 = scmp.ne.s32.totalorder %s57, %s59
    %p66 = scmp.eq.s32.totalorder %s14, 1
    %p67 = por %p65, %p66
    %p68 = scmp.ne.s32.totalorder %s59, %s60
    %p69 = scmp.eq.s32.totalorder %s14, 0
    %p70 = por %p68, %p69
    %p71 = scmp.ne.s32.totalorder %s59, %s60
    %p72 = scmp.eq.s32.totalorder %s15, 1
    %p73 = por %p71, %p72
    %p75 = scmp.ne.s32.totalorder %s60, %s74
    %p76 = scmp.eq.s32.totalorder %s15, 0
    %p77 = por %p75, %p76
    %s79 = sadd.s32 %s78, 1
    %p82 = scmp.eq.s32.totalorder %s9, 1
    %p83 = scmp.ne.s32.totalorder %s78, %s80
    %p84 = scmp.eq.s32.totalorder %s9, 0
    %p85 = por %p83, %p84
    %p86 = scmp.ne.s32.totalorder %s78, %s80
    %p87 = scmp.eq.s32.totalorder %s14, 1
    %p88 = por %p86, %p87
    %p89 = scmp.ne.s32.totalorder %s80, %s81
    %p90 = scmp.eq.s32.totalorder %s14, 0
    %p91 = por %p89, %p90
    %p92 = scmp.ne.s32.totalorder %s80, %s81
    %p93 = scmp.eq.s32.totalorder %s15, 1
    %p94 = por %p92, %p93
    %p96 = scmp.ne.s32.totalorder %s81, %s95
    %p97 = scmp.eq.s32.totalorder %s15, 0
    %p98 = por %p96, %p97
    %s99 = ssub.s32 %s16, %s28
    %s100 = ssub.s32 %s17, %s24
    %s101 = sor.u32 %s99, %s100
    %p102 = scmp.eq.s32.totalorder %s101, 0
    %s104 = sadd.s32 %s103, 1
    %s105 = scalar_select %p102, %s103, %s104
    %p108 = pneg %p102
    %p109 = scmp.eq.s32.totalorder %s9, 1
    %p110 = por %p108, %p109
    %p111 = scmp.ne.s32.totalorder %s103, %s106
    %p112 = scmp.eq.s32.totalorder %s9, 0
    %p113 = por %p111, %p112
    %p114 = scmp.ne.s32.totalorder %s103, %s106
    %p115 = scmp.eq.s32.totalorder %s14, 1
    %p116 = por %p114, %p115
    %p117 = scmp.ne.s32.totalorder %s106, %s107
    %p118 = scmp.eq.s32.totalorder %s14, 0
    %p119 = por %p117, %p118
    %p120 = scmp.ne.s32.totalorder %s106, %s107
    %p121 = scmp.eq.s32.totalorder %s15, 1
    %p122 = por %p120, %p121
    %p124 = scmp.ne.s32.totalorder %s107, %s123
    %p125 = scmp.eq.s32.totalorder %s15, 0
    %p126 = por %p124, %p125
    %p127 = scmp.le.s32.totalorder 1, %s9
    %p128 = scmp.lt.s32.totalorder %s9, 3
    %p129 = pnand %p127, %p128
    %p130 = pneg %p129
    // Predicated region
    $region9: #{modified_forward.6} parent=5 // pred_check
      _
    $region10: #{modified_forward.6} parent=5 // pred_check_branch
      %132 = sbr.rel (%p129) target = $region12
    $region11: #{modified_forward.6} parent=5 // pred_region
      %s133 = ssub.s32 %s9, 1
      // Predicated region
      $region13: #{modified_forward.6} parent=11 // pred_check
        %p134 = pneg %p70
      $region14: #{modified_forward.6} parent=11 // pred_check_branch
        %136 = sbr.rel (%p134) target = $region16
      $region15: #{modified_forward.6} parent=11 // pred_region
        _
      $region16: #{modified_forward.6} parent=11 // pred_fallthru
        _
      // Predicated region
      $region17: #{modified_forward.6} parent=11 // pred_check
        %p137 = pneg %p91
      $region18: #{modified_forward.6} parent=11 // pred_check_branch
        %139 = sbr.rel (%p137) target = $region20
      $region19: #{modified_forward.6} parent=11 // pred_region
        _
      $region20: #{modified_forward.6} parent=11 // pred_fallthru
        _
    $region12: #{modified_forward.6} parent=5 // pred_fallthru
      _
    %p140 = scmp.lt.s32.totalorder %s9, 2
    // Predicated region
    $region21: #{modified_forward.6} parent=5 // pred_check
      %p141 = pneg %p140
    $region22: #{modified_forward.6} parent=5 // pred_check_branch
      %143 = sbr.rel (%p141) target = $region24
    $region23: #{modified_forward.6} parent=5 // pred_region
      // Predicated region
      $region25: #{modified_forward.6} parent=23 // pred_check
        %p144 = pneg %p43
      $region26: #{modified_forward.6} parent=23 // pred_check_branch
        %146 = sbr.rel (%p144) target = $region28
      $region27: #{modified_forward.6} parent=23 // pred_region
        %s147 = smul.u32 8, %s17
        %p148 = scmp.lt.s32.totalorder %s16, 1
        %s149 = scalar_select %p148, %s16, 1
        %p150 = scmp.lt.s32.totalorder %s147, 7
        %s151 = scalar_select %p150, %s147, 7
        %s152 = smul.addr %s151, 13
        %s153 = smul.addr %s149, 416
        %s154 = sadd.s32 %s152, %s153
        %s155 = smul.addr %s154, 4
        %s156 = scalar_lea.vmem %s0, %s155
        %s157 = smul.u32 8, %s17
      $region28: #{modified_forward.6} parent=23 // pred_fallthru
        _
    $region24: #{modified_forward.6} parent=5 // pred_fallthru
      _
    %p158 = scmp.le.s32.totalorder 1, %s9
    %p159 = scmp.lt.s32.totalorder %s9, 3
    %p160 = pnand %p158, %p159
    %p161 = pneg %p160
    // Predicated region
    $region29: #{modified_forward.6} parent=5 // pred_check
      _
    $region30: #{modified_forward.6} parent=5 // pred_check_branch
      %163 = sbr.rel (%p160) target = $region32
    $region31: #{modified_forward.6} parent=5 // pred_region
      %s164 = ssub.s32 %s9, 1
      %s165 = smul.u32 8, %s19
      %p166 = scmp.lt.s32.totalorder %s18, 1
      %s167 = scalar_select %p166, %s18, 1
      %p168 = scmp.lt.s32.totalorder %s165, 7
      %s169 = scalar_select %p168, %s165, 7
      %s170 = smul.addr %s169, 13
      %s171 = smul.addr %s167, 416
      %s172 = sadd.s32 %s170, %s171
      %s173 = smul.addr %s172, 4
      %s174 = scalar_lea.vmem %s0, %s173
      %p175 = pneg %p49
      %p176 = pneg %p46
      %p177 = pneg %p70
      %p178 = pneg %p67
      %p179 = pneg %p91
      %p180 = pneg %p88
      %p181 = pneg %p119
      %p182 = pneg %p116
      %s183 = smul.u32 8, %s19
      %p184 = scmp.lt.s32.totalorder %s18, 1
      %s185 = scalar_select %p184, %s18, 1
      %p186 = scmp.lt.s32.totalorder %s183, 7
      %s187 = scalar_select %p186, %s183, 7
      %s188 = smul.addr %s185, 8
      %s189 = sadd.s32 %s187, %s188
      %s190 = smul.addr %s189, 8
      %s191 = scalar_lea.vmem %s3, %s190
      %s192 = smul.u32 8, %s19
      %p193 = scmp.lt.s32.totalorder %s18, 1
      %s194 = scalar_select %p193, %s18, 1
      %p195 = scmp.lt.s32.totalorder %s192, 7
      %s196 = scalar_select %p195, %s192, 7
      %s197 = smul.addr %s196, 13
      %s198 = smul.addr %s194, 416
      %s199 = sadd.s32 %s197, %s198
      %s200 = smul.addr %s199, 4
      %s201 = scalar_lea.vmem %s0, %s200
      %s202 = smul.u32 8, %s19
      %s203 = smul.u32 8, %s19
      %p204 = scmp.lt.s32.totalorder %s18, 1
      %s205 = scalar_select %p204, %s18, 1
      %p206 = scmp.lt.s32.totalorder %s203, 7
      %s207 = scalar_select %p206, %s203, 7
      %s208 = smul.addr %s205, 8
      %s209 = sadd.s32 %s207, %s208
      %s210 = smul.addr %s209, 8
      %s211 = scalar_lea.vmem %s3, %s210
      %s212 = smul.u32 8, %s19
      %v214 = vld [vmem:[%s1] sm:$0xf]
      %v215 = vld [vmem:[%s1 + $0x4] sm:$0xf]
      %v216 = vld [vmem:[%s1 + $0x8] sm:$0xf]
      %v217 = vld [vmem:[%s1 + $0xc] sm:$0xf]
      %v218 = vld [vmem:[%s1 + $0x10] sm:$0xf]
      %v219 = vld [vmem:[%s1 + $0x14] sm:$0xf]
      %v220 = vld [vmem:[%s1 + $0x18] sm:$0xf]
      %v221 = vld [vmem:[%s1 + $0x1c] sm:$0xf]
      %v222 = vld [vmem:[%s1 + $0x20] sm:$0xf]
      %v223 = vld [vmem:[%s1 + $0x24] sm:$0xf]
      %v224 = vld [vmem:[%s1 + $0x28] sm:$0xf]
      %v225 = vld [vmem:[%s1 + $0x2c] sm:$0xf]
      %v226 = vld [vmem:[%s1 + $0x30] sm:$0xf]
      %v227 = vld [vmem:[%s1 + $0x34] sm:$0xf]
      %v228 = vld [vmem:[%s1 + $0x38] sm:$0xf]
      %v229 = vld [vmem:[%s1 + $0x3c] sm:$0xf]
      %v230 = vld [vmem:[%s1 + $0x40] sm:$0xf]
      %v231 = vld [vmem:[%s1 + $0x44] sm:$0xf]
      %v232 = vld [vmem:[%s1 + $0x48] sm:$0xf]
      %v233 = vld [vmem:[%s1 + $0x4c] sm:$0xf]
      %v234 = vld [vmem:[%s1 + $0x50] sm:$0xf]
      %v235 = vld [vmem:[%s1 + $0x54] sm:$0xf]
      %v236 = vld [vmem:[%s1 + $0x58] sm:$0xf]
      %v237 = vld [vmem:[%s1 + $0x5c] sm:$0xf]
      %v238 = vld [vmem:[%s1 + $0x60] sm:$0xf]
      %v239 = vld [vmem:[%s1 + $0x64] sm:$0xf]
      %v240 = vld [vmem:[%s1 + $0x68] sm:$0xf]
      %v241 = vld [vmem:[%s1 + $0x6c] sm:$0xf]
      %v242 = vld [vmem:[%s1 + $0x70] sm:$0xf]
      %v243 = vld [vmem:[%s1 + $0x74] sm:$0xf]
      %v244 = vld [vmem:[%s1 + $0x78] sm:$0xf]
      %v245 = vld [vmem:[%s1 + $0x7c] sm:$0xf]
      %v246 = vld [vmem:[%s1 + $0x80] sm:$0xf]
      %v247 = vld [vmem:[%s1 + $0x84] sm:$0xf]
      %v248 = vld [vmem:[%s1 + $0x88] sm:$0xf]
      %v249 = vld [vmem:[%s1 + $0x8c] sm:$0xf]
      %v250 = vld [vmem:[%s1 + $0x90] sm:$0xf]
      %v251 = vld [vmem:[%s1 + $0x94] sm:$0xf]
      %v252 = vld [vmem:[%s1 + $0x98] sm:$0xf]
      %v253 = vld [vmem:[%s1 + $0x9c] sm:$0xf]
      %v254 = vld [vmem:[%s1 + $0xa0] sm:$0xf]
      %v255 = vld [vmem:[%s1 + $0xa4] sm:$0xf]
      %v256 = vld [vmem:[%s1 + $0xa8] sm:$0xf]
      %v257 = vld [vmem:[%s1 + $0xac] sm:$0xf]
      %v258 = vld [vmem:[%s1 + $0xb0] sm:$0xf]
      %v259 = vld [vmem:[%s1 + $0xb4] sm:$0xf]
      %v260 = vld [vmem:[%s1 + $0xb8] sm:$0xf]
      %v261 = vld [vmem:[%s1 + $0xbc] sm:$0xf]
      %v262 = vld [vmem:[%s1 + $0xc0] sm:$0xf]
      %v263 = vld [vmem:[%s1 + $0xc4] sm:$0xf]
      %v264 = vld [vmem:[%s1 + $0xc8] sm:$0xf]
      %v265 = vld [vmem:[%s1 + $0xcc] sm:$0xf]
      %v266 = vld [vmem:[%s1 + $0xd0] sm:$0xf]
      %v267 = vld [vmem:[%s1 + $0xd4] sm:$0xf]
      %v268 = vld [vmem:[%s1 + $0xd8] sm:$0xf]
      %v269 = vld [vmem:[%s1 + $0xdc] sm:$0xf]
      %v270 = vld [vmem:[%s1 + $0xe0] sm:$0xf]
      %v271 = vld [vmem:[%s1 + $0xe4] sm:$0xf]
      %v272 = vld [vmem:[%s1 + $0xe8] sm:$0xf]
      %v273 = vld [vmem:[%s1 + $0xec] sm:$0xf]
      %v274 = vld [vmem:[%s1 + $0xf0] sm:$0xf]
      %v275 = vld [vmem:[%s1 + $0xf4] sm:$0xf]
      %v276 = vld [vmem:[%s1 + $0xf8] sm:$0xf]
      %v277 = vld [vmem:[%s1 + $0xfc] sm:$0xf]
      %v278 = vld [vmem:[%s1 + $0x100] sm:$0xf]
      %v279 = vld [vmem:[%s1 + $0x104] sm:$0xf]
      %v280 = vld [vmem:[%s1 + $0x108] sm:$0xf]
      %v281 = vld [vmem:[%s1 + $0x10c] sm:$0xf]
      %v282 = vld [vmem:[%s1 + $0x110] sm:$0xf]
      %v283 = vld [vmem:[%s1 + $0x114] sm:$0xf]
      %v284 = vld [vmem:[%s1 + $0x118] sm:$0xf]
      %v285 = vld [vmem:[%s1 + $0x11c] sm:$0xf]
      %v286 = vld [vmem:[%s1 + $0x120] sm:$0xf]
      %v287 = vld [vmem:[%s1 + $0x124] sm:$0xf]
      %v288 = vld [vmem:[%s1 + $0x128] sm:$0xf]
      %v289 = vld [vmem:[%s1 + $0x12c] sm:$0xf]
      %v290 = vld [vmem:[%s1 + $0x130] sm:$0xf]
      %v291 = vld [vmem:[%s1 + $0x134] sm:$0xf]
      %v292 = vld [vmem:[%s1 + $0x138] sm:$0xf]
      %v293 = vld [vmem:[%s1 + $0x13c] sm:$0xf]
      %v294 = vld [vmem:[%s1 + $0x140] sm:$0xf]
      %v295 = vld [vmem:[%s1 + $0x144] sm:$0xf]
      %v296 = vld [vmem:[%s1 + $0x148] sm:$0xf]
      %v297 = vld [vmem:[%s1 + $0x14c] sm:$0xf]
      %v298 = vld [vmem:[%s1 + $0x150] sm:$0xf]
      %v299 = vld [vmem:[%s1 + $0x154] sm:$0xf]
      %v300 = vld [vmem:[%s1 + $0x158] sm:$0xf]
      %v301 = vld [vmem:[%s1 + $0x15c] sm:$0xf]
      %v302 = vld [vmem:[%s1 + $0x160] sm:$0xf]
      %v303 = vld [vmem:[%s1 + $0x164] sm:$0xf]
      %v304 = vld [vmem:[%s1 + $0x168] sm:$0xf]
      %v305 = vld [vmem:[%s1 + $0x16c] sm:$0xf]
      %v306 = vld [vmem:[%s1 + $0x170] sm:$0xf]
      %v307 = vld [vmem:[%s1 + $0x174] sm:$0xf]
      %v308 = vld [vmem:[%s1 + $0x178] sm:$0xf]
      %v309 = vld [vmem:[%s1 + $0x17c] sm:$0xf]
      %v310 = vld [vmem:[%s1 + $0x180] sm:$0xf]
      %v311 = vld [vmem:[%s1 + $0x184] sm:$0xf]
      %v312 = vld [vmem:[%s1 + $0x188] sm:$0xf]
      %v313 = vld [vmem:[%s1 + $0x18c] sm:$0xf]
      %v314 = vld [vmem:[%s1 + $0x190] sm:$0xf]
      %v315 = vld [vmem:[%s1 + $0x194] sm:$0xf]
      %v316 = vld [vmem:[%s1 + $0x198] sm:$0xf]
      %v317 = vld [vmem:[%s1 + $0x19c] sm:$0xf]
      %v318 = vld [vmem:[%s1 + $0x1a0] sm:$0xf]
      %v319 = vld [vmem:[%s1 + $0x1a4] sm:$0xf]
      %v320 = vld [vmem:[%s1 + $0x1a8] sm:$0xf]
      %v321 = vld [vmem:[%s1 + $0x1ac] sm:$0xf]
      %v322 = vld [vmem:[%s1 + $0x1b0] sm:$0xf]
      %v323 = vld [vmem:[%s1 + $0x1b4] sm:$0xf]
      %v324 = vld [vmem:[%s1 + $0x1b8] sm:$0xf]
      %v325 = vld [vmem:[%s1 + $0x1bc] sm:$0xf]
      %v326 = vld [vmem:[%s1 + $0x1c0] sm:$0xf]
      %v327 = vld [vmem:[%s1 + $0x1c4] sm:$0xf]
      %v328 = vld [vmem:[%s1 + $0x1c8] sm:$0xf]
      %v329 = vld [vmem:[%s1 + $0x1cc] sm:$0xf]
      %v330 = vld [vmem:[%s1 + $0x1d0] sm:$0xf]
      %v331 = vld [vmem:[%s1 + $0x1d4] sm:$0xf]
      %v332 = vld [vmem:[%s1 + $0x1d8] sm:$0xf]
      %v333 = vld [vmem:[%s1 + $0x1dc] sm:$0xf]
      %v334 = vld [vmem:[%s1 + $0x1e0] sm:$0xf]
      %v335 = vld [vmem:[%s1 + $0x1e4] sm:$0xf]
      %v336 = vld [vmem:[%s1 + $0x1e8] sm:$0xf]
      %v337 = vld [vmem:[%s1 + $0x1ec] sm:$0xf]
      %v338 = vld [vmem:[%s1 + $0x1f0] sm:$0xf]
      %v339 = vld [vmem:[%s1 + $0x1f4] sm:$0xf]
      %v340 = vld [vmem:[%s1 + $0x1f8] sm:$0xf]
      %v341 = vld [vmem:[%s1 + $0x1fc] sm:$0xf]
      %v342 = vld [vmem:[%s1 + $0x200] sm:$0xf]
      %v343 = vld [vmem:[%s1 + $0x204] sm:$0xf]
      %v344 = vld [vmem:[%s1 + $0x208] sm:$0xf]
      %v345 = vld [vmem:[%s1 + $0x20c] sm:$0xf]
      %v346 = vld [vmem:[%s1 + $0x210] sm:$0xf]
      %v347 = vld [vmem:[%s1 + $0x214] sm:$0xf]
      %v348 = vld [vmem:[%s1 + $0x218] sm:$0xf]
      %v349 = vld [vmem:[%s1 + $0x21c] sm:$0xf]
      %v350 = vld [vmem:[%s1 + $0x220] sm:$0xf]
      %v351 = vld [vmem:[%s1 + $0x224] sm:$0xf]
      %v352 = vld [vmem:[%s1 + $0x228] sm:$0xf]
      %v353 = vld [vmem:[%s1 + $0x22c] sm:$0xf]
      %v354 = vld [vmem:[%s1 + $0x230] sm:$0xf]
      %v355 = vld [vmem:[%s1 + $0x234] sm:$0xf]
      %v356 = vld [vmem:[%s1 + $0x238] sm:$0xf]
      %v357 = vld [vmem:[%s1 + $0x23c] sm:$0xf]
      %v358 = vld [vmem:[%s1 + $0x240] sm:$0xf]
      %v359 = vld [vmem:[%s1 + $0x244] sm:$0xf]
      %v360 = vld [vmem:[%s1 + $0x248] sm:$0xf]
      %v361 = vld [vmem:[%s1 + $0x24c] sm:$0xf]
      %v362 = vld [vmem:[%s1 + $0x250] sm:$0xf]
      %v363 = vld [vmem:[%s1 + $0x254] sm:$0xf]
      %v364 = vld [vmem:[%s1 + $0x258] sm:$0xf]
      %v365 = vld [vmem:[%s1 + $0x25c] sm:$0xf]
      %v366 = vld [vmem:[%s1 + $0x260] sm:$0xf]
      %v367 = vld [vmem:[%s1 + $0x264] sm:$0xf]
      %v368 = vld [vmem:[%s1 + $0x268] sm:$0xf]
      %v369 = vld [vmem:[%s1 + $0x26c] sm:$0xf]
      %v370 = vld [vmem:[%s1 + $0x270] sm:$0xf]
      %v371 = vld [vmem:[%s1 + $0x274] sm:$0xf]
      %v372 = vld [vmem:[%s1 + $0x278] sm:$0xf]
      %v373 = vld [vmem:[%s1 + $0x27c] sm:$0xf]
      %v374 = vld [vmem:[%s1 + $0x280] sm:$0xf]
      %v375 = vld [vmem:[%s1 + $0x284] sm:$0xf]
      %v376 = vld [vmem:[%s1 + $0x288] sm:$0xf]
      %v377 = vld [vmem:[%s1 + $0x28c] sm:$0xf]
      %v378 = vld [vmem:[%s1 + $0x290] sm:$0xf]
      %v379 = vld [vmem:[%s1 + $0x294] sm:$0xf]
      %v380 = vld [vmem:[%s1 + $0x298] sm:$0xf]
      %v381 = vld [vmem:[%s1 + $0x29c] sm:$0xf]
      %v382 = vld [vmem:[%s1 + $0x2a0] sm:$0xf]
      %v383 = vld [vmem:[%s1 + $0x2a4] sm:$0xf]
      %v384 = vld [vmem:[%s1 + $0x2a8] sm:$0xf]
      %v385 = vld [vmem:[%s1 + $0x2ac] sm:$0xf]
      %v386 = vld [vmem:[%s1 + $0x2b0] sm:$0xf]
      %v387 = vld [vmem:[%s1 + $0x2b4] sm:$0xf]
      %v388 = vld [vmem:[%s1 + $0x2b8] sm:$0xf]
      %v389 = vld [vmem:[%s1 + $0x2bc] sm:$0xf]
      %v390 = vld [vmem:[%s1 + $0x2c0] sm:$0xf]
      %v391 = vld [vmem:[%s1 + $0x2c4] sm:$0xf]
      %v392 = vld [vmem:[%s1 + $0x2c8] sm:$0xf]
      %v393 = vld [vmem:[%s1 + $0x2cc] sm:$0xf]
      %v394 = vld [vmem:[%s1 + $0x2d0] sm:$0xf]
      %v395 = vld [vmem:[%s1 + $0x2d4] sm:$0xf]
      %v396 = vld [vmem:[%s1 + $0x2d8] sm:$0xf]
      %v397 = vld [vmem:[%s1 + $0x2dc] sm:$0xf]
      %v398 = vld [vmem:[%s1 + $0x2e0] sm:$0xf]
      %v399 = vld [vmem:[%s1 + $0x2e4] sm:$0xf]
      %v400 = vld [vmem:[%s1 + $0x2e8] sm:$0xf]
      %v401 = vld [vmem:[%s1 + $0x2ec] sm:$0xf]
      %v402 = vld [vmem:[%s1 + $0x2f0] sm:$0xf]
      %v403 = vld [vmem:[%s1 + $0x2f4] sm:$0xf]
      %v404 = vld [vmem:[%s1 + $0x2f8] sm:$0xf]
      %v405 = vld [vmem:[%s1 + $0x2fc] sm:$0xf]
      %v406 = vld [vmem:[%s1 + $0x300] sm:$0xf]
      %v407 = vld [vmem:[%s1 + $0x304] sm:$0xf]
      %v408 = vld [vmem:[%s1 + $0x308] sm:$0xf]
      %v409 = vld [vmem:[%s1 + $0x30c] sm:$0xf]
      %v410 = vld [vmem:[%s1 + $0x310] sm:$0xf]
      %v411 = vld [vmem:[%s1 + $0x314] sm:$0xf]
      %v412 = vld [vmem:[%s1 + $0x318] sm:$0xf]
      %v413 = vld [vmem:[%s1 + $0x31c] sm:$0xf]
      %v414 = vld [vmem:[%s201] sm:$0xff]
      %v415 = vld [vmem:[%s201 + $0x8] sm:$0xff]
      %v416 = vld [vmem:[%s201 + $0x10] sm:$0xff]
      %v417 = vld [vmem:[%s201 + $0x18] sm:$0xff]
      %v418 = vld [vmem:[%s201 + $0x20] sm:$0xff]
      %v419 = vld [vmem:[%s201 + $0x28] sm:$0xff]
      %v420 = vld [vmem:[%s201 + $0x30] sm:$0xf]
      %v421 = vld [vmem:[%s201 + $0x34] sm:$0xff]
      %v422 = vld [vmem:[%s201 + $0x3c] sm:$0xff]
      %v423 = vld [vmem:[%s201 + $0x44] sm:$0xff]
      %v424 = vld [vmem:[%s201 + $0x4c] sm:$0xff]
      %v425 = vld [vmem:[%s201 + $0x54] sm:$0xff]
      %v426 = vld [vmem:[%s201 + $0x5c] sm:$0xff]
      %v427 = vld [vmem:[%s201 + $0x64] sm:$0xf]
      %v428 = vld [vmem:[%s201 + $0x68] sm:$0xff]
      %v429 = vld [vmem:[%s201 + $0x70] sm:$0xff]
      %v430 = vld [vmem:[%s201 + $0x78] sm:$0xff]
      %v431 = vld [vmem:[%s201 + $0x80] sm:$0xff]
      %v432 = vld [vmem:[%s201 + $0x88] sm:$0xff]
      %v433 = vld [vmem:[%s201 + $0x90] sm:$0xff]
      %v434 = vld [vmem:[%s201 + $0x98] sm:$0xf]
      %v435 = vld [vmem:[%s201 + $0x9c] sm:$0xff]
      %v436 = vld [vmem:[%s201 + $0xa4] sm:$0xff]
      %v437 = vld [vmem:[%s201 + $0xac] sm:$0xff]
      %v438 = vld [vmem:[%s201 + $0xb4] sm:$0xff]
      %v439 = vld [vmem:[%s201 + $0xbc] sm:$0xff]
      %v440 = vld [vmem:[%s201 + $0xc4] sm:$0xff]
      %v441 = vld [vmem:[%s201 + $0xcc] sm:$0xf]
      %v442 = vld [vmem:[%s201 + $0xd0] sm:$0xff]
      %v443 = vld [vmem:[%s201 + $0xd8] sm:$0xff]
      %v444 = vld [vmem:[%s201 + $0xe0] sm:$0xff]
      %v445 = vld [vmem:[%s201 + $0xe8] sm:$0xff]
      %v446 = vld [vmem:[%s201 + $0xf0] sm:$0xff]
      %v447 = vld [vmem:[%s201 + $0xf8] sm:$0xff]
      %v448 = vld [vmem:[%s201 + $0x100] sm:$0xf]
      %v449 = vld [vmem:[%s201 + $0x104] sm:$0xff]
      %v450 = vld [vmem:[%s201 + $0x10c] sm:$0xff]
      %v451 = vld [vmem:[%s201 + $0x114] sm:$0xff]
      %v452 = vld [vmem:[%s201 + $0x11c] sm:$0xff]
      %v453 = vld [vmem:[%s201 + $0x124] sm:$0xff]
      %v454 = vld [vmem:[%s201 + $0x12c] sm:$0xff]
      %v455 = vld [vmem:[%s201 + $0x134] sm:$0xf]
      %v456 = vld [vmem:[%s201 + $0x138] sm:$0xff]
      %v457 = vld [vmem:[%s201 + $0x140] sm:$0xff]
      %v458 = vld [vmem:[%s201 + $0x148] sm:$0xff]
      %v459 = vld [vmem:[%s201 + $0x150] sm:$0xff]
      %v460 = vld [vmem:[%s201 + $0x158] sm:$0xff]
      %v461 = vld [vmem:[%s201 + $0x160] sm:$0xff]
      %v462 = vld [vmem:[%s201 + $0x168] sm:$0xf]
      %v463 = vld [vmem:[%s201 + $0x16c] sm:$0xff]
      %v464 = vld [vmem:[%s201 + $0x174] sm:$0xff]
      %v465 = vld [vmem:[%s201 + $0x17c] sm:$0xff]
      %v466 = vld [vmem:[%s201 + $0x184] sm:$0xff]
      %v467 = vld [vmem:[%s201 + $0x18c] sm:$0xff]
      %v468 = vld [vmem:[%s201 + $0x194] sm:$0xff]
      %v469 = vld [vmem:[%s201 + $0x19c] sm:$0xf]
      %v526 = vunpack.c.l.b16 %v414
      %v527 = vunpack.c.h.b16 %v414
      %v528 = vunpack.c.l.b16 %v415
      %v529 = vunpack.c.h.b16 %v415
      %v530 = vunpack.c.l.b16 %v416
      %v531 = vunpack.c.h.b16 %v416
      %v532 = vunpack.c.l.b16 %v417
      %v533 = vunpack.c.h.b16 %v417
      %v534 = vunpack.c.l.b16 %v418
      %v535 = vunpack.c.h.b16 %v418
      %v536 = vunpack.c.l.b16 %v419
      %v537 = vunpack.c.h.b16 %v419
      %v538 = vunpack.c.l.b16 %v420
      %v539 = vunpack.c.l.b16 %v421
      %v540 = vunpack.c.h.b16 %v421
      %v541 = vunpack.c.l.b16 %v422
      %v542 = vunpack.c.h.b16 %v422
      %v543 = vunpack.c.l.b16 %v423
      %v544 = vunpack.c.h.b16 %v423
      %v545 = vunpack.c.l.b16 %v424
      %v546 = vunpack.c.h.b16 %v424
      %v547 = vunpack.c.l.b16 %v425
      %v548 = vunpack.c.h.b16 %v425
      %v549 = vunpack.c.l.b16 %v426
      %v550 = vunpack.c.h.b16 %v426
      %v551 = vunpack.c.l.b16 %v427
      %v552 = vunpack.c.l.b16 %v428
      %v553 = vunpack.c.h.b16 %v428
      %v554 = vunpack.c.l.b16 %v429
      %v555 = vunpack.c.h.b16 %v429
      %v556 = vunpack.c.l.b16 %v430
      %v557 = vunpack.c.h.b16 %v430
      %v558 = vunpack.c.l.b16 %v431
      %v559 = vunpack.c.h.b16 %v431
      %v560 = vunpack.c.l.b16 %v432
      %v561 = vunpack.c.h.b16 %v432
      %v562 = vunpack.c.l.b16 %v433
      %v563 = vunpack.c.h.b16 %v433
      %v564 = vunpack.c.l.b16 %v434
      %v565 = vunpack.c.l.b16 %v435
      %v566 = vunpack.c.h.b16 %v435
      %v567 = vunpack.c.l.b16 %v436
      %v568 = vunpack.c.h.b16 %v436
      %v569 = vunpack.c.l.b16 %v437
      %v570 = vunpack.c.h.b16 %v437
      %v571 = vunpack.c.l.b16 %v438
      %v572 = vunpack.c.h.b16 %v438
      %v573 = vunpack.c.l.b16 %v439
      %v574 = vunpack.c.h.b16 %v439
      %v575 = vunpack.c.l.b16 %v440
      %v576 = vunpack.c.h.b16 %v440
      %v577 = vunpack.c.l.b16 %v441
      %v578 = vunpack.c.l.b16 %v442
      %v579 = vunpack.c.h.b16 %v442
      %v580 = vunpack.c.l.b16 %v443
      %v581 = vunpack.c.h.b16 %v443
      %v582 = vunpack.c.l.b16 %v444
      %v583 = vunpack.c.h.b16 %v444
      %v584 = vunpack.c.l.b16 %v445
      %v585 = vunpack.c.h.b16 %v445
      %v586 = vunpack.c.l.b16 %v446
      %v587 = vunpack.c.h.b16 %v446
      %v588 = vunpack.c.l.b16 %v447
      %v589 = vunpack.c.h.b16 %v447
      %v590 = vunpack.c.l.b16 %v448
      %v591 = vunpack.c.l.b16 %v449
      %v592 = vunpack.c.h.b16 %v449
      %v593 = vunpack.c.l.b16 %v450
      %v594 = vunpack.c.h.b16 %v450
      %v595 = vunpack.c.l.b16 %v451
      %v596 = vunpack.c.h.b16 %v451
      %v597 = vunpack.c.l.b16 %v452
      %v598 = vunpack.c.h.b16 %v452
      %v599 = vunpack.c.l.b16 %v453
      %v600 = vunpack.c.h.b16 %v453
      %v601 = vunpack.c.l.b16 %v454
      %v602 = vunpack.c.h.b16 %v454
      %v603 = vunpack.c.l.b16 %v455
      %v604 = vunpack.c.l.b16 %v456
      %v605 = vunpack.c.h.b16 %v456
      %v606 = vunpack.c.l.b16 %v457
      %v607 = vunpack.c.h.b16 %v457
      %v608 = vunpack.c.l.b16 %v458
      %v609 = vunpack.c.h.b16 %v458
      %v610 = vunpack.c.l.b16 %v459
      %v611 = vunpack.c.h.b16 %v459
      %v612 = vunpack.c.l.b16 %v460
      %v613 = vunpack.c.h.b16 %v460
      %v614 = vunpack.c.l.b16 %v461
      %v615 = vunpack.c.h.b16 %v461
      %v616 = vunpack.c.l.b16 %v462
      %v617 = vunpack.c.l.b16 %v463
      %v618 = vunpack.c.h.b16 %v463
      %v619 = vunpack.c.l.b16 %v464
      %v620 = vunpack.c.h.b16 %v464
      %v621 = vunpack.c.l.b16 %v465
      %v622 = vunpack.c.h.b16 %v465
      %v623 = vunpack.c.l.b16 %v466
      %v624 = vunpack.c.h.b16 %v466
      %v625 = vunpack.c.l.b16 %v467
      %v626 = vunpack.c.h.b16 %v467
      %v627 = vunpack.c.l.b16 %v468
      %v628 = vunpack.c.h.b16 %v468
      %v629 = vunpack.c.l.b16 %v469
      %v630 = vpack.c.b16 %v539, %v526
      %v631 = vpack.c.b16 %v540, %v527
      %v632 = vpack.c.b16 %v541, %v528
      %v633 = vpack.c.b16 %v542, %v529
      %v634 = vpack.c.b16 %v543, %v530
      %v635 = vpack.c.b16 %v544, %v531
      %v636 = vpack.c.b16 %v545, %v532
      %v637 = vpack.c.b16 %v546, %v533
      %v638 = vpack.c.b16 %v547, %v534
      %v639 = vpack.c.b16 %v548, %v535
      %v640 = vpack.c.b16 %v549, %v536
      %v641 = vpack.c.b16 %v550, %v537
      %v642 = vpack.c.b16 %v551, %v538
      %v643 = vpack.c.b16 %v565, %v552
      %v644 = vpack.c.b16 %v566, %v553
      %v645 = vpack.c.b16 %v567, %v554
      %v646 = vpack.c.b16 %v568, %v555
      %v647 = vpack.c.b16 %v569, %v556
      %v648 = vpack.c.b16 %v570, %v557
      %v649 = vpack.c.b16 %v571, %v558
      %v650 = vpack.c.b16 %v572, %v559
      %v651 = vpack.c.b16 %v573, %v560
      %v652 = vpack.c.b16 %v574, %v561
      %v653 = vpack.c.b16 %v575, %v562
      %v654 = vpack.c.b16 %v576, %v563
      %v655 = vpack.c.b16 %v577, %v564
      %v656 = vpack.c.b16 %v591, %v578
      %v657 = vpack.c.b16 %v592, %v579
      %v658 = vpack.c.b16 %v593, %v580
      %v659 = vpack.c.b16 %v594, %v581
      %v660 = vpack.c.b16 %v595, %v582
      %v661 = vpack.c.b16 %v596, %v583
      %v662 = vpack.c.b16 %v597, %v584
      %v663 = vpack.c.b16 %v598, %v585
      %v664 = vpack.c.b16 %v599, %v586
      %v665 = vpack.c.b16 %v600, %v587
      %v666 = vpack.c.b16 %v601, %v588
      %v667 = vpack.c.b16 %v602, %v589
      %v668 = vpack.c.b16 %v603, %v590
      %v669 = vpack.c.b16 %v617, %v604
      %v670 = vpack.c.b16 %v618, %v605
      %v671 = vpack.c.b16 %v619, %v606
      %v672 = vpack.c.b16 %v620, %v607
      %v673 = vpack.c.b16 %v621, %v608
      %v674 = vpack.c.b16 %v622, %v609
      %v675 = vpack.c.b16 %v623, %v610
      %v676 = vpack.c.b16 %v624, %v611
      %v677 = vpack.c.b16 %v625, %v612
      %v678 = vpack.c.b16 %v626, %v613
      %v679 = vpack.c.b16 %v627, %v614
      %v680 = vpack.c.b16 %v628, %v615
      %v681 = vpack.c.b16 %v629, %v616
      %v930 = vunpack.c.l.b16 %v214
      %v931 = vunpack.c.l.b16 %v215
      %v932 = vunpack.c.l.b16 %v216
      %v933 = vunpack.c.l.b16 %v217
      %v934 = vunpack.c.l.b16 %v218
      %v935 = vunpack.c.l.b16 %v219
      %v936 = vunpack.c.l.b16 %v220
      %v937 = vunpack.c.l.b16 %v221
      %v938 = vunpack.c.l.b16 %v222
      %v939 = vunpack.c.l.b16 %v223
      %v940 = vunpack.c.l.b16 %v224
      %v941 = vunpack.c.l.b16 %v225
      %v942 = vunpack.c.l.b16 %v226
      %v943 = vunpack.c.l.b16 %v227
      %v944 = vunpack.c.l.b16 %v228
      %v945 = vunpack.c.l.b16 %v229
      %v946 = vunpack.c.l.b16 %v230
      %v947 = vunpack.c.l.b16 %v231
      %v948 = vunpack.c.l.b16 %v232
      %v949 = vunpack.c.l.b16 %v233
      %v950 = vunpack.c.l.b16 %v234
      %v951 = vunpack.c.l.b16 %v235
      %v952 = vunpack.c.l.b16 %v236
      %v953 = vunpack.c.l.b16 %v237
      %v954 = vunpack.c.l.b16 %v238
      %v955 = vunpack.c.l.b16 %v239
      %v956 = vunpack.c.l.b16 %v240
      %v957 = vunpack.c.l.b16 %v241
      %v958 = vunpack.c.l.b16 %v242
      %v959 = vunpack.c.l.b16 %v243
      %v960 = vunpack.c.l.b16 %v244
      %v961 = vunpack.c.l.b16 %v245
      %v962 = vunpack.c.l.b16 %v246
      %v963 = vunpack.c.l.b16 %v247
      %v964 = vunpack.c.l.b16 %v248
      %v965 = vunpack.c.l.b16 %v249
      %v966 = vunpack.c.l.b16 %v250
      %v967 = vunpack.c.l.b16 %v251
      %v968 = vunpack.c.l.b16 %v252
      %v969 = vunpack.c.l.b16 %v253
      %v970 = vunpack.c.l.b16 %v254
      %v971 = vunpack.c.l.b16 %v255
      %v972 = vunpack.c.l.b16 %v256
      %v973 = vunpack.c.l.b16 %v257
      %v974 = vunpack.c.l.b16 %v258
      %v975 = vunpack.c.l.b16 %v259
      %v976 = vunpack.c.l.b16 %v260
      %v977 = vunpack.c.l.b16 %v261
      %v978 = vunpack.c.l.b16 %v262
      %v979 = vunpack.c.l.b16 %v263
      %v980 = vunpack.c.l.b16 %v264
      %v981 = vunpack.c.l.b16 %v265
      %v982 = vunpack.c.l.b16 %v266
      %v983 = vunpack.c.l.b16 %v267
      %v984 = vunpack.c.l.b16 %v268
      %v985 = vunpack.c.l.b16 %v269
      %v986 = vunpack.c.l.b16 %v270
      %v987 = vunpack.c.l.b16 %v271
      %v988 = vunpack.c.l.b16 %v272
      %v989 = vunpack.c.l.b16 %v273
      %v990 = vunpack.c.l.b16 %v274
      %v991 = vunpack.c.l.b16 %v275
      %v992 = vunpack.c.l.b16 %v276
      %v993 = vunpack.c.l.b16 %v277
      %v994 = vunpack.c.l.b16 %v278
      %v995 = vunpack.c.l.b16 %v279
      %v996 = vunpack.c.l.b16 %v280
      %v997 = vunpack.c.l.b16 %v281
      %v998 = vunpack.c.l.b16 %v282
      %v999 = vunpack.c.l.b16 %v283
      %v1000 = vunpack.c.l.b16 %v284
      %v1001 = vunpack.c.l.b16 %v285
      %v1002 = vunpack.c.l.b16 %v286
      %v1003 = vunpack.c.l.b16 %v287
      %v1004 = vunpack.c.l.b16 %v288
      %v1005 = vunpack.c.l.b16 %v289
      %v1006 = vunpack.c.l.b16 %v290
      %v1007 = vunpack.c.l.b16 %v291
      %v1008 = vunpack.c.l.b16 %v292
      %v1009 = vunpack.c.l.b16 %v293
      %v1010 = vunpack.c.l.b16 %v294
      %v1011 = vunpack.c.l.b16 %v295
      %v1012 = vunpack.c.l.b16 %v296
      %v1013 = vunpack.c.l.b16 %v297
      %v1014 = vunpack.c.l.b16 %v298
      %v1015 = vunpack.c.l.b16 %v299
      %v1016 = vunpack.c.l.b16 %v300
      %v1017 = vunpack.c.l.b16 %v301
      %v1018 = vunpack.c.l.b16 %v302
      %v1019 = vunpack.c.l.b16 %v303
      %v1020 = vunpack.c.l.b16 %v304
      %v1021 = vunpack.c.l.b16 %v305
      %v1022 = vunpack.c.l.b16 %v306
      %v1023 = vunpack.c.l.b16 %v307
      %v1024 = vunpack.c.l.b16 %v308
      %v1025 = vunpack.c.l.b16 %v309
      %v1026 = vunpack.c.l.b16 %v310
      %v1027 = vunpack.c.l.b16 %v311
      %v1028 = vunpack.c.l.b16 %v312
      %v1029 = vunpack.c.l.b16 %v313
      %v1030 = vunpack.c.l.b16 %v314
      %v1031 = vunpack.c.l.b16 %v315
      %v1032 = vunpack.c.l.b16 %v316
      %v1033 = vunpack.c.l.b16 %v317
      %v1034 = vunpack.c.l.b16 %v318
      %v1035 = vunpack.c.l.b16 %v319
      %v1036 = vunpack.c.l.b16 %v320
      %v1037 = vunpack.c.l.b16 %v321
      %v1038 = vunpack.c.l.b16 %v322
      %v1039 = vunpack.c.l.b16 %v323
      %v1040 = vunpack.c.l.b16 %v324
      %v1041 = vunpack.c.l.b16 %v325
      %v1042 = vunpack.c.l.b16 %v326
      %v1043 = vunpack.c.l.b16 %v327
      %v1044 = vunpack.c.l.b16 %v328
      %v1045 = vunpack.c.l.b16 %v329
      %v1046 = vunpack.c.l.b16 %v330
      %v1047 = vunpack.c.l.b16 %v331
      %v1048 = vunpack.c.l.b16 %v332
      %v1049 = vunpack.c.l.b16 %v333
      %v1050 = vunpack.c.l.b16 %v334
      %v1051 = vunpack.c.l.b16 %v335
      %v1052 = vunpack.c.l.b16 %v336
      %v1053 = vunpack.c.l.b16 %v337
      %v1054 = vunpack.c.l.b16 %v338
      %v1055 = vunpack.c.l.b16 %v339
      %v1056 = vunpack.c.l.b16 %v340
      %v1057 = vunpack.c.l.b16 %v341
      %v1058 = vunpack.c.l.b16 %v342
      %v1059 = vunpack.c.l.b16 %v343
      %v1060 = vunpack.c.l.b16 %v344
      %v1061 = vunpack.c.l.b16 %v345
      %v1062 = vunpack.c.l.b16 %v346
      %v1063 = vunpack.c.l.b16 %v347
      %v1064 = vunpack.c.l.b16 %v348
      %v1065 = vunpack.c.l.b16 %v349
      %v1066 = vunpack.c.l.b16 %v350
      %v1067 = vunpack.c.l.b16 %v351
      %v1068 = vunpack.c.l.b16 %v352
      %v1069 = vunpack.c.l.b16 %v353
      %v1070 = vunpack.c.l.b16 %v354
      %v1071 = vunpack.c.l.b16 %v355
      %v1072 = vunpack.c.l.b16 %v356
      %v1073 = vunpack.c.l.b16 %v357
      %v1074 = vunpack.c.l.b16 %v358
      %v1075 = vunpack.c.l.b16 %v359
      %v1076 = vunpack.c.l.b16 %v360
      %v1077 = vunpack.c.l.b16 %v361
      %v1078 = vunpack.c.l.b16 %v362
      %v1079 = vunpack.c.l.b16 %v363
      %v1080 = vunpack.c.l.b16 %v364
      %v1081 = vunpack.c.l.b16 %v365
      %v1082 = vunpack.c.l.b16 %v366
      %v1083 = vunpack.c.l.b16 %v367
      %v1084 = vunpack.c.l.b16 %v368
      %v1085 = vunpack.c.l.b16 %v369
      %v1086 = vunpack.c.l.b16 %v370
      %v1087 = vunpack.c.l.b16 %v371
      %v1088 = vunpack.c.l.b16 %v372
      %v1089 = vunpack.c.l.b16 %v373
      %v1090 = vunpack.c.l.b16 %v374
      %v1091 = vunpack.c.l.b16 %v375
      %v1092 = vunpack.c.l.b16 %v376
      %v1093 = vunpack.c.l.b16 %v377
      %v1094 = vunpack.c.l.b16 %v378
      %v1095 = vunpack.c.l.b16 %v379
      %v1096 = vunpack.c.l.b16 %v380
      %v1097 = vunpack.c.l.b16 %v381
      %v1098 = vunpack.c.l.b16 %v382
      %v1099 = vunpack.c.l.b16 %v383
      %v1100 = vunpack.c.l.b16 %v384
      %v1101 = vunpack.c.l.b16 %v385
      %v1102 = vunpack.c.l.b16 %v386
      %v1103 = vunpack.c.l.b16 %v387
      %v1104 = vunpack.c.l.b16 %v388
      %v1105 = vunpack.c.l.b16 %v389
      %v1106 = vunpack.c.l.b16 %v390
      %v1107 = vunpack.c.l.b16 %v391
      %v1108 = vunpack.c.l.b16 %v392
      %v1109 = vunpack.c.l.b16 %v393
      %v1110 = vunpack.c.l.b16 %v394
      %v1111 = vunpack.c.l.b16 %v395
      %v1112 = vunpack.c.l.b16 %v396
      %v1113 = vunpack.c.l.b16 %v397
      %v1114 = vunpack.c.l.b16 %v398
      %v1115 = vunpack.c.l.b16 %v399
      %v1116 = vunpack.c.l.b16 %v400
      %v1117 = vunpack.c.l.b16 %v401
      %v1118 = vunpack.c.l.b16 %v402
      %v1119 = vunpack.c.l.b16 %v403
      %v1120 = vunpack.c.l.b16 %v404
      %v1121 = vunpack.c.l.b16 %v405
      %v1122 = vunpack.c.l.b16 %v406
      %v1123 = vunpack.c.l.b16 %v407
      %v1124 = vunpack.c.l.b16 %v408
      %v1125 = vunpack.c.l.b16 %v409
      %v1126 = vunpack.c.l.b16 %v410
      %v1127 = vunpack.c.l.b16 %v411
      %v1128 = vunpack.c.l.b16 %v412
      %v1129 = vunpack.c.l.b16 %v413
      %v1130 = vpack.c.b16 %v931, %v930
      %v1131 = vpack.c.b16 %v933, %v932
      %v1132 = vpack.c.b16 %v935, %v934
      %v1133 = vpack.c.b16 %v937, %v936
      %v1134 = vpack.c.b16 %v939, %v938
      %v1135 = vpack.c.b16 %v941, %v940
      %v1136 = vpack.c.b16 %v943, %v942
      %v1137 = vpack.c.b16 %v945, %v944
      %v1138 = vpack.c.b16 %v947, %v946
      %v1139 = vpack.c.b16 %v949, %v948
      %v1140 = vpack.c.b16 %v951, %v950
      %v1141 = vpack.c.b16 %v953, %v952
      %v1142 = vpack.c.b16 %v955, %v954
      %v1143 = vpack.c.b16 %v957, %v956
      %v1144 = vpack.c.b16 %v959, %v958
      %v1145 = vpack.c.b16 %v961, %v960
      %v1146 = vpack.c.b16 %v963, %v962
      %v1147 = vpack.c.b16 %v965, %v964
      %v1148 = vpack.c.b16 %v967, %v966
      %v1149 = vpack.c.b16 %v969, %v968
      %v1150 = vpack.c.b16 %v971, %v970
      %v1151 = vpack.c.b16 %v973, %v972
      %v1152 = vpack.c.b16 %v975, %v974
      %v1153 = vpack.c.b16 %v977, %v976
      %v1154 = vpack.c.b16 %v979, %v978
      %v1155 = vpack.c.b16 %v981, %v980
      %v1156 = vpack.c.b16 %v983, %v982
      %v1157 = vpack.c.b16 %v985, %v984
      %v1158 = vpack.c.b16 %v987, %v986
      %v1159 = vpack.c.b16 %v989, %v988
      %v1160 = vpack.c.b16 %v991, %v990
      %v1161 = vpack.c.b16 %v993, %v992
      %v1162 = vpack.c.b16 %v995, %v994
      %v1163 = vpack.c.b16 %v997, %v996
      %v1164 = vpack.c.b16 %v999, %v998
      %v1165 = vpack.c.b16 %v1001, %v1000
      %v1166 = vpack.c.b16 %v1003, %v1002
      %v1167 = vpack.c.b16 %v1005, %v1004
      %v1168 = vpack.c.b16 %v1007, %v1006
      %v1169 = vpack.c.b16 %v1009, %v1008
      %v1170 = vpack.c.b16 %v1011, %v1010
      %v1171 = vpack.c.b16 %v1013, %v1012
      %v1172 = vpack.c.b16 %v1015, %v1014
      %v1173 = vpack.c.b16 %v1017, %v1016
      %v1174 = vpack.c.b16 %v1019, %v1018
      %v1175 = vpack.c.b16 %v1021, %v1020
      %v1176 = vpack.c.b16 %v1023, %v1022
      %v1177 = vpack.c.b16 %v1025, %v1024
      %v1178 = vpack.c.b16 %v1027, %v1026
      %v1179 = vpack.c.b16 %v1029, %v1028
      %v1180 = vpack.c.b16 %v1031, %v1030
      %v1181 = vpack.c.b16 %v1033, %v1032
      %v1182 = vpack.c.b16 %v1035, %v1034
      %v1183 = vpack.c.b16 %v1037, %v1036
      %v1184 = vpack.c.b16 %v1039, %v1038
      %v1185 = vpack.c.b16 %v1041, %v1040
      %v1186 = vpack.c.b16 %v1043, %v1042
      %v1187 = vpack.c.b16 %v1045, %v1044
      %v1188 = vpack.c.b16 %v1047, %v1046
      %v1189 = vpack.c.b16 %v1049, %v1048
      %v1190 = vpack.c.b16 %v1051, %v1050
      %v1191 = vpack.c.b16 %v1053, %v1052
      %v1192 = vpack.c.b16 %v1055, %v1054
      %v1193 = vpack.c.b16 %v1057, %v1056
      %v1194 = vpack.c.b16 %v1059, %v1058
      %v1195 = vpack.c.b16 %v1061, %v1060
      %v1196 = vpack.c.b16 %v1063, %v1062
      %v1197 = vpack.c.b16 %v1065, %v1064
      %v1198 = vpack.c.b16 %v1067, %v1066
      %v1199 = vpack.c.b16 %v1069, %v1068
      %v1200 = vpack.c.b16 %v1071, %v1070
      %v1201 = vpack.c.b16 %v1073, %v1072
      %v1202 = vpack.c.b16 %v1075, %v1074
      %v1203 = vpack.c.b16 %v1077, %v1076
      %v1204 = vpack.c.b16 %v1079, %v1078
      %v1205 = vpack.c.b16 %v1081, %v1080
      %v1206 = vpack.c.b16 %v1083, %v1082
      %v1207 = vpack.c.b16 %v1085, %v1084
      %v1208 = vpack.c.b16 %v1087, %v1086
      %v1209 = vpack.c.b16 %v1089, %v1088
      %v1210 = vpack.c.b16 %v1091, %v1090
      %v1211 = vpack.c.b16 %v1093, %v1092
      %v1212 = vpack.c.b16 %v1095, %v1094
      %v1213 = vpack.c.b16 %v1097, %v1096
      %v1214 = vpack.c.b16 %v1099, %v1098
      %v1215 = vpack.c.b16 %v1101, %v1100
      %v1216 = vpack.c.b16 %v1103, %v1102
      %v1217 = vpack.c.b16 %v1105, %v1104
      %v1218 = vpack.c.b16 %v1107, %v1106
      %v1219 = vpack.c.b16 %v1109, %v1108
      %v1220 = vpack.c.b16 %v1111, %v1110
      %v1221 = vpack.c.b16 %v1113, %v1112
      %v1222 = vpack.c.b16 %v1115, %v1114
      %v1223 = vpack.c.b16 %v1117, %v1116
      %v1224 = vpack.c.b16 %v1119, %v1118
      %v1225 = vpack.c.b16 %v1121, %v1120
      %v1226 = vpack.c.b16 %v1123, %v1122
      %v1227 = vpack.c.b16 %v1125, %v1124
      %v1228 = vpack.c.b16 %v1127, %v1126
      %v1229 = vpack.c.b16 %v1129, %v1128
      %vm1330 = vcmask 523264
      %v1332 = vsel %vm1330, %v642, 0
      %v1335 = vsel %vm1330, %v655, 0
      %v1338 = vsel %vm1330, %v668, 0
      %v1341 = vsel %vm1330, %v681, 0
      %1343 = vmatprep.subr.bf16.mxu0 0
      %1344 = vmatpush1.bf16.msra.mxu0 %v1130
      %1345 = vmatprep.subr.bf16.mxu0 0
      %1346 = vmatpush1.bf16.msra.mxu0 %v1131
      %1347 = vmatprep.subr.bf16.mxu0 0
      %1348 = vmatpush1.bf16.msra.mxu0 %v1132
      %1349 = vmatprep.subr.bf16.mxu0 0
      %1350 = vmatpush1.bf16.msra.mxu0 %v1133
      %1351 = vmatprep.subr.bf16.mxu0 0
      %1352 = vmatpush1.bf16.msra.mxu0 %v1134
      %1353 = vmatprep.subr.bf16.mxu0 0
      %1354 = vmatpush1.bf16.msra.mxu0 %v1135
      %1355 = vmatprep.subr.bf16.mxu0 0
      %1356 = vmatpush1.bf16.msra.mxu0 %v1136
      %1357 = vmatprep.subr.bf16.mxu0 0
      %1358 = vmatpush1.bf16.msra.mxu0 %v1137
      %1359 = vmatprep.subr.bf16.mxu0 0
      %1360 = vmatpush1.bf16.msra.mxu0 %v1138
      %1361 = vmatprep.subr.bf16.mxu0 0
      %1362 = vmatpush1.bf16.msra.mxu0 %v1139
      %1363 = vmatprep.subr.bf16.mxu0 0
      %1364 = vmatpush1.bf16.msra.mxu0 %v1140
      %1365 = vmatprep.subr.bf16.mxu0 0
      %1366 = vmatpush1.bf16.msra.mxu0 %v1141
      %1367 = vmatprep.subr.bf16.mxu0 0
      %1368 = vmatpush1.bf16.msra.mxu0 %v1142
      %1369 = vmatprep.subr.bf16.mxu0 0
      %1370 = vmatpush1.bf16.msra.mxu0 %v1143
      %1371 = vmatprep.subr.bf16.mxu0 0
      %1372 = vmatpush1.bf16.msra.mxu0 %v1144
      %1373 = vmatprep.subr.bf16.mxu0 0
      %1374 = vmatpush1.bf16.msra.mxu0 %v1145
      %1375 = vmatprep.mubr.bf16.mxu0 %v631
      %1376 = vmatmul.mubr.bf16.gmra.mrb[0].mxu0 %v630
      %v1377 = vpop.f32.mrb[0].mxu0
      %v1378 = vadd.f32 0.0, %v1377
      %v1379 = vpop.f32.mrb[0].mxu0
      %v1380 = vpop.f32.mrb[0].mxu0
      %v1381 = vadd.f32 0.0, %v1380
      %v1382 = vpop.f32.mrb[0].mxu0
      %1383 = vmatprep.mubr.bf16.mxu0 %v644
      %1384 = vmatmul.mubr.bf16.gmra.mrb[0].mxu0 %v643
      %v1385 = vpop.f32.mrb[0].mxu0
      %v1386 = vadd.f32 0.0, %v1385
      %v1387 = vpop.f32.mrb[0].mxu0
      %v1388 = vpop.f32.mrb[0].mxu0
      %v1389 = vadd.f32 0.0, %v1388
      %v1390 = vpop.f32.mrb[0].mxu0
      %1391 = vmatprep.mubr.bf16.mxu0 %v657
      %1392 = vmatmul.mubr.bf16.gmra.mrb[0].mxu0 %v656
      %v1393 = vpop.f32.mrb[0].mxu0
      %v1394 = vadd.f32 0.0, %v1393
      %v1395 = vpop.f32.mrb[0].mxu0
      %v1396 = vpop.f32.mrb[0].mxu0
      %v1397 = vadd.f32 0.0, %v1396
      %v1398 = vpop.f32.mrb[0].mxu0
      %1399 = vmatprep.mubr.bf16.mxu0 %v670
      %1400 = vmatmul.mubr.bf16.gmra.mrb[0].mxu0 %v669
      %v1401 = vpop.f32.mrb[0].mxu0
      %v1402 = vadd.f32 0.0, %v1401
      %v1403 = vpop.f32.mrb[0].mxu0
      %v1404 = vpop.f32.mrb[0].mxu0
      %v1405 = vadd.f32 0.0, %v1404
      %v1406 = vpop.f32.mrb[0].mxu0
      %1407 = vdwg.mxu0
      %1408 = vmatprep.subr.bf16.mxu0 0
      %1409 = vmatpush1.bf16.msra.mxu0 %v1146
      %1410 = vmatprep.subr.bf16.mxu0 0
      %1411 = vmatpush1.bf16.msra.mxu0 %v1147
      %1412 = vmatprep.subr.bf16.mxu0 0
      %1413 = vmatpush1.bf16.msra.mxu0 %v1148
      %1414 = vmatprep.subr.bf16.mxu0 0
      %1415 = vmatpush1.bf16.msra.mxu0 %v1149
      %1416 = vmatprep.subr.bf16.mxu0 0
      %1417 = vmatpush1.bf16.msra.mxu0 %v1150
      %1418 = vmatprep.subr.bf16.mxu0 0
      %1419 = vmatpush1.bf16.msra.mxu0 %v1151
      %1420 = vmatprep.subr.bf16.mxu0 0
      %1421 = vmatpush1.bf16.msra.mxu0 %v1152
      %1422 = vmatprep.subr.bf16.mxu0 0
      %1423 = vmatpush1.bf16.msra.mxu0 %v1153
      %1424 = vmatprep.subr.bf16.mxu0 0
      %1425 = vmatpush1.bf16.msra.mxu0 %v1154
      %1426 = vmatprep.subr.bf16.mxu0 0
      %1427 = vmatpush1.bf16.msra.mxu0 %v1155
      %1428 = vmatprep.subr.bf16.mxu0 0
      %1429 = vmatpush1.bf16.msra.mxu0 %v1156
      %1430 = vmatprep.subr.bf16.mxu0 0
      %1431 = vmatpush1.bf16.msra.mxu0 %v1157
      %1432 = vmatprep.subr.bf16.mxu0 0
      %1433 = vmatpush1.bf16.msra.mxu0 %v1158
      %1434 = vmatprep.subr.bf16.mxu0 0
      %1435 = vmatpush1.bf16.msra.mxu0 %v1159
      %1436 = vmatprep.subr.bf16.mxu0 0
      %1437 = vmatpush1.bf16.msra.mxu0 %v1160
      %1438 = vmatprep.subr.bf16.mxu0 0
      %1439 = vmatpush1.bf16.msra.mxu0 %v1161
      %1440 = vmatprep.mubr.bf16.mxu0 %v633
      %1441 = vmatmul.mubr.bf16.gmra.mrb[0].mxu0 %v632
      %v1442 = vpop.f32.mrb[0].mxu0
      %v1443 = vadd.f32 %v1378, %v1442
      %v1444 = vpop.f32.mrb[0].mxu0
      %v1445 = vpop.f32.mrb[0].mxu0
      %v1446 = vadd.f32 %v1381, %v1445
      %v1447 = vpop.f32.mrb[0].mxu0
      %1448 = vmatprep.mubr.bf16.mxu0 %v646
      %1449 = vmatmul.mubr.bf16.gmra.mrb[0].mxu0 %v645
      %v1450 = vpop.f32.mrb[0].mxu0
      %v1451 = vadd.f32 %v1386, %v1450
      %v1452 = vpop.f32.mrb[0].mxu0
      %v1453 = vpop.f32.mrb[0].mxu0
      %v1454 = vadd.f32 %v1389, %v1453
      %v1455 = vpop.f32.mrb[0].mxu0
      %1456 = vmatprep.mubr.bf16.mxu0 %v659
      %1457 = vmatmul.mubr.bf16.gmra.mrb[0].mxu0 %v658
      %v1458 = vpop.f32.mrb[0].mxu0
      %v1459 = vadd.f32 %v1394, %v1458
      %v1460 = vpop.f32.mrb[0].mxu0
      %v1461 = vpop.f32.mrb[0].mxu0
      %v1462 = vadd.f32 %v1397, %v1461
      %v1463 = vpop.f32.mrb[0].mxu0
      %1464 = vmatprep.mubr.bf16.mxu0 %v672
      %1465 = vmatmul.mubr.bf16.gmra.mrb[0].mxu0 %v671
      %v1466 = vpop.f32.mrb[0].mxu0
      %v1467 = vadd.f32 %v1402, %v1466
      %v1468 = vpop.f32.mrb[0].mxu0
      %v1469 = vpop.f32.mrb[0].mxu0
      %v1470 = vadd.f32 %v1405, %v1469
      %v1471 = vpop.f32.mrb[0].mxu0
      %1472 = vdwg.mxu0
      %1473 = vmatprep.subr.bf16.mxu0 0
      %1474 = vmatpush1.bf16.msra.mxu0 %v1162
      %1475 = vmatprep.subr.bf16.mxu0 0
      %1476 = vmatpush1.bf16.msra.mxu0 %v1163
      %1477 = vmatprep.subr.bf16.mxu0 0
      %1478 = vmatpush1.bf16.msra.mxu0 %v1164
      %1479 = vmatprep.subr.bf16.mxu0 0
      %1480 = vmatpush1.bf16.msra.mxu0 %v1165
      %1481 = vmatprep.subr.bf16.mxu0 0
      %1482 = vmatpush1.bf16.msra.mxu0 %v1166
      %1483 = vmatprep.subr.bf16.mxu0 0
      %1484 = vmatpush1.bf16.msra.mxu0 %v1167
      %1485 = vmatprep.subr.bf16.mxu0 0
      %1486 = vmatpush1.bf16.msra.mxu0 %v1168
      %1487 = vmatprep.subr.bf16.mxu0 0
      %1488 = vmatpush1.bf16.msra.mxu0 %v1169
      %1489 = vmatprep.subr.bf16.mxu0 0
      %1490 = vmatpush1.bf16.msra.mxu0 %v1170
      %1491 = vmatprep.subr.bf16.mxu0 0
      %1492 = vmatpush1.bf16.msra.mxu0 %v1171
      %1493 = vmatprep.subr.bf16.mxu0 0
      %1494 = vmatpush1.bf16.msra.mxu0 %v1172
      %1495 = vmatprep.subr.bf16.mxu0 0
      %1496 = vmatpush1.bf16.msra.mxu0 %v1173
      %1497 = vmatprep.subr.bf16.mxu0 0
      %1498 = vmatpush1.bf16.msra.mxu0 %v1174
      %1499 = vmatprep.subr.bf16.mxu0 0
      %1500 = vmatpush1.bf16.msra.mxu0 %v1175
      %1501 = vmatprep.subr.bf16.mxu0 0
      %1502 = vmatpush1.bf16.msra.mxu0 %v1176
      %1503 = vmatprep.subr.bf16.mxu0 0
      %1504 = vmatpush1.bf16.msra.mxu0 %v1177
      %1505 = vmatprep.mubr.bf16.mxu0 %v635
      %1506 = vmatmul.mubr.bf16.gmra.mrb[0].mxu0 %v634
      %v1507 = vpop.f32.mrb[0].mxu0
      %v1508 = vadd.f32 %v1443, %v1507
      %v1509 = vpop.f32.mrb[0].mxu0
      %v1510 = vpop.f32.mrb[0].mxu0
      %v1511 = vadd.f32 %v1446, %v1510
      %v1512 = vpop.f32.mrb[0].mxu0
      %1513 = vmatprep.mubr.bf16.mxu0 %v648
      %1514 = vmatmul.mubr.bf16.gmra.mrb[0].mxu0 %v647
      %v1515 = vpop.f32.mrb[0].mxu0
      %v1516 = vadd.f32 %v1451, %v1515
      %v1517 = vpop.f32.mrb[0].mxu0
      %v1518 = vpop.f32.mrb[0].mxu0
      %v1519 = vadd.f32 %v1454, %v1518
      %v1520 = vpop.f32.mrb[0].mxu0
      %1521 = vmatprep.mubr.bf16.mxu0 %v661
      %1522 = vmatmul.mubr.bf16.gmra.mrb[0].mxu0 %v660
      %v1523 = vpop.f32.mrb[0].mxu0
      %v1524 = vadd.f32 %v1459, %v1523
      %v1525 = vpop.f32.mrb[0].mxu0
      %v1526 = vpop.f32.mrb[0].mxu0
      %v1527 = vadd.f32 %v1462, %v1526
      %v1528 = vpop.f32.mrb[0].mxu0
      %1529 = vmatprep.mubr.bf16.mxu0 %v674
      %1530 = vmatmul.mubr.bf16.gmra.mrb[0].mxu0 %v673
      %v1531 = vpop.f32.mrb[0].mxu0
      %v1532 = vadd.f32 %v1467, %v1531
      %v1533 = vpop.f32.mrb[0].mxu0
      %v1534 = vpop.f32.mrb[0].mxu0
      %v1535 = vadd.f32 %v1470, %v1534
      %v1536 = vpop.f32.mrb[0].mxu0
      %1537 = vdwg.mxu0
      %1538 = vmatprep.subr.bf16.mxu0 0
      %1539 = vmatpush1.bf16.msra.mxu0 %v1178
      %1540 = vmatprep.subr.bf16.mxu0 0
      %1541 = vmatpush1.bf16.msra.mxu0 %v1179
      %1542 = vmatprep.subr.bf16.mxu0 0
      %1543 = vmatpush1.bf16.msra.mxu0 %v1180
      %1544 = vmatprep.subr.bf16.mxu0 0
      %1545 = vmatpush1.bf16.msra.mxu0 %v1181
      %1546 = vmatprep.subr.bf16.mxu0 0
      %1547 = vmatpush1.bf16.msra.mxu0 %v1182
      %1548 = vmatprep.subr.bf16.mxu0 0
      %1549 = vmatpush1.bf16.msra.mxu0 %v1183
      %1550 = vmatprep.subr.bf16.mxu0 0
      %1551 = vmatpush1.bf16.msra.mxu0 %v1184
      %1552 = vmatprep.subr.bf16.mxu0 0
      %1553 = vmatpush1.bf16.msra.mxu0 %v1185
      %1554 = vmatprep.subr.bf16.mxu0 0
      %1555 = vmatpush1.bf16.msra.mxu0 %v1186
      %1556 = vmatprep.subr.bf16.mxu0 0
      %1557 = vmatpush1.bf16.msra.mxu0 %v1187
      %1558 = vmatprep.subr.bf16.mxu0 0
      %1559 = vmatpush1.bf16.msra.mxu0 %v1188
      %1560 = vmatprep.subr.bf16.mxu0 0
      %1561 = vmatpush1.bf16.msra.mxu0 %v1189
      %1562 = vmatprep.subr.bf16.mxu0 0
      %1563 = vmatpush1.bf16.msra.mxu0 %v1190
      %1564 = vmatprep.subr.bf16.mxu0 0
      %1565 = vmatpush1.bf16.msra.mxu0 %v1191
      %1566 = vmatprep.subr.bf16.mxu0 0
      %1567 = vmatpush1.bf16.msra.mxu0 %v1192
      %1568 = vmatprep.subr.bf16.mxu0 0
      %1569 = vmatpush1.bf16.msra.mxu0 %v1193
      %1570 = vmatprep.mubr.bf16.mxu0 %v637
      %1571 = vmatmul.mubr.bf16.gmra.mrb[0].mxu0 %v636
      %v1572 = vpop.f32.mrb[0].mxu0
      %v1573 = vadd.f32 %v1508, %v1572
      %v1574 = vpop.f32.mrb[0].mxu0
      %v1575 = vpop.f32.mrb[0].mxu0
      %v1576 = vadd.f32 %v1511, %v1575
      %v1577 = vpop.f32.mrb[0].mxu0
      %1578 = vmatprep.mubr.bf16.mxu0 %v650
      %1579 = vmatmul.mubr.bf16.gmra.mrb[0].mxu0 %v649
      %v1580 = vpop.f32.mrb[0].mxu0
      %v1581 = vadd.f32 %v1516, %v1580
      %v1582 = vpop.f32.mrb[0].mxu0
      %v1583 = vpop.f32.mrb[0].mxu0
      %v1584 = vadd.f32 %v1519, %v1583
      %v1585 = vpop.f32.mrb[0].mxu0
      %1586 = vmatprep.mubr.bf16.mxu0 %v663
      %1587 = vmatmul.mubr.bf16.gmra.mrb[0].mxu0 %v662
      %v1588 = vpop.f32.mrb[0].mxu0
      %v1589 = vadd.f32 %v1524, %v1588
      %v1590 = vpop.f32.mrb[0].mxu0
      %v1591 = vpop.f32.mrb[0].mxu0
      %v1592 = vadd.f32 %v1527, %v1591
      %v1593 = vpop.f32.mrb[0].mxu0
      %1594 = vmatprep.mubr.bf16.mxu0 %v676
      %1595 = vmatmul.mubr.bf16.gmra.mrb[0].mxu0 %v675
      %v1596 = vpop.f32.mrb[0].mxu0
      %v1597 = vadd.f32 %v1532, %v1596
      %v1598 = vpop.f32.mrb[0].mxu0
      %v1599 = vpop.f32.mrb[0].mxu0
      %v1600 = vadd.f32 %v1535, %v1599
      %v1601 = vpop.f32.mrb[0].mxu0
      %1602 = vdwg.mxu0
      %1603 = vmatprep.subr.bf16.mxu0 0
      %1604 = vmatpush1.bf16.msra.mxu0 %v1194
      %1605 = vmatprep.subr.bf16.mxu0 0
      %1606 = vmatpush1.bf16.msra.mxu0 %v1195
      %1607 = vmatprep.subr.bf16.mxu0 0
      %1608 = vmatpush1.bf16.msra.mxu0 %v1196
      %1609 = vmatprep.subr.bf16.mxu0 0
      %1610 = vmatpush1.bf16.msra.mxu0 %v1197
      %1611 = vmatprep.subr.bf16.mxu0 0
      %1612 = vmatpush1.bf16.msra.mxu0 %v1198
      %1613 = vmatprep.subr.bf16.mxu0 0
      %1614 = vmatpush1.bf16.msra.mxu0 %v1199
      %1615 = vmatprep.subr.bf16.mxu0 0
      %1616 = vmatpush1.bf16.msra.mxu0 %v1200
      %1617 = vmatprep.subr.bf16.mxu0 0
      %1618 = vmatpush1.bf16.msra.mxu0 %v1201
      %1619 = vmatprep.subr.bf16.mxu0 0
      %1620 = vmatpush1.bf16.msra.mxu0 %v1202
      %1621 = vmatprep.subr.bf16.mxu0 0
      %1622 = vmatpush1.bf16.msra.mxu0 %v1203
      %1623 = vmatprep.subr.bf16.mxu0 0
      %1624 = vmatpush1.bf16.msra.mxu0 %v1204
      %1625 = vmatprep.subr.bf16.mxu0 0
      %1626 = vmatpush1.bf16.msra.mxu0 %v1205
      %1627 = vmatprep.subr.bf16.mxu0 0
      %1628 = vmatpush1.bf16.msra.mxu0 %v1206
      %1629 = vmatprep.subr.bf16.mxu0 0
      %1630 = vmatpush1.bf16.msra.mxu0 %v1207
      %1631 = vmatprep.subr.bf16.mxu0 0
      %1632 = vmatpush1.bf16.msra.mxu0 %v1208
      %1633 = vmatprep.subr.bf16.mxu0 0
      %1634 = vmatpush1.bf16.msra.mxu0 %v1209
      %1635 = vmatprep.mubr.bf16.mxu0 %v639
      %1636 = vmatmul.mubr.bf16.gmra.mrb[0].mxu0 %v638
      %v1637 = vpop.f32.mrb[0].mxu0
      %v1638 = vadd.f32 %v1573, %v1637
      %v1639 = vpop.f32.mrb[0].mxu0
      %v1640 = vpop.f32.mrb[0].mxu0
      %v1641 = vadd.f32 %v1576, %v1640
      %v1642 = vpop.f32.mrb[0].mxu0
      %1643 = vmatprep.mubr.bf16.mxu0 %v652
      %1644 = vmatmul.mubr.bf16.gmra.mrb[0].mxu0 %v651
      %v1645 = vpop.f32.mrb[0].mxu0
      %v1646 = vadd.f32 %v1581, %v1645
      %v1647 = vpop.f32.mrb[0].mxu0
      %v1648 = vpop.f32.mrb[0].mxu0
      %v1649 = vadd.f32 %v1584, %v1648
      %v1650 = vpop.f32.mrb[0].mxu0
      %1651 = vmatprep.mubr.bf16.mxu0 %v665
      %1652 = vmatmul.mubr.bf16.gmra.mrb[0].mxu0 %v664
      %v1653 = vpop.f32.mrb[0].mxu0
      %v1654 = vadd.f32 %v1589, %v1653
      %v1655 = vpop.f32.mrb[0].mxu0
      %v1656 = vpop.f32.mrb[0].mxu0
      %v1657 = vadd.f32 %v1592, %v1656
      %v1658 = vpop.f32.mrb[0].mxu0
      %1659 = vmatprep.mubr.bf16.mxu0 %v678
      %1660 = vmatmul.mubr.bf16.gmra.mrb[0].mxu0 %v677
      %v1661 = vpop.f32.mrb[0].mxu0
      %v1662 = vadd.f32 %v1597, %v1661
      %v1663 = vpop.f32.mrb[0].mxu0
      %v1664 = vpop.f32.mrb[0].mxu0
      %v1665 = vadd.f32 %v1600, %v1664
      %v1666 = vpop.f32.mrb[0].mxu0
      %1667 = vdwg.mxu0
      %1668 = vmatprep.subr.bf16.mxu0 0
      %1669 = vmatpush1.bf16.msra.mxu0 %v1210
      %1670 = vmatprep.subr.bf16.mxu0 0
      %1671 = vmatpush1.bf16.msra.mxu0 %v1211
      %1672 = vmatprep.subr.bf16.mxu0 0
      %1673 = vmatpush1.bf16.msra.mxu0 %v1212
      %1674 = vmatprep.subr.bf16.mxu0 0
      %1675 = vmatpush1.bf16.msra.mxu0 %v1213
      %1676 = vmatprep.subr.bf16.mxu0 0
      %1677 = vmatpush1.bf16.msra.mxu0 %v1214
      %1678 = vmatprep.subr.bf16.mxu0 0
      %1679 = vmatpush1.bf16.msra.mxu0 %v1215
      %1680 = vmatprep.subr.bf16.mxu0 0
      %1681 = vmatpush1.bf16.msra.mxu0 %v1216
      %1682 = vmatprep.subr.bf16.mxu0 0
      %1683 = vmatpush1.bf16.msra.mxu0 %v1217
      %1684 = vmatprep.subr.bf16.mxu0 0
      %1685 = vmatpush1.bf16.msra.mxu0 %v1218
      %1686 = vmatprep.subr.bf16.mxu0 0
      %1687 = vmatpush1.bf16.msra.mxu0 %v1219
      %1688 = vmatprep.subr.bf16.mxu0 0
      %1689 = vmatpush1.bf16.msra.mxu0 %v1220
      %1690 = vmatprep.subr.bf16.mxu0 0
      %1691 = vmatpush1.bf16.msra.mxu0 %v1221
      %1692 = vmatprep.subr.bf16.mxu0 0
      %1693 = vmatpush1.bf16.msra.mxu0 %v1222
      %1694 = vmatprep.subr.bf16.mxu0 0
      %1695 = vmatpush1.bf16.msra.mxu0 %v1223
      %1696 = vmatprep.subr.bf16.mxu0 0
      %1697 = vmatpush1.bf16.msra.mxu0 %v1224
      %1698 = vmatprep.subr.bf16.mxu0 0
      %1699 = vmatpush1.bf16.msra.mxu0 %v1225
      %1700 = vmatprep.mubr.bf16.mxu0 %v641
      %1701 = vmatmul.mubr.bf16.gmra.mrb[0].mxu0 %v640
      %v1702 = vpop.f32.mrb[0].mxu0
      %v1703 = vadd.f32 %v1638, %v1702
      %v1704 = vpop.f32.mrb[0].mxu0
      %v1705 = vpop.f32.mrb[0].mxu0
      %v1706 = vadd.f32 %v1641, %v1705
      %v1707 = vpop.f32.mrb[0].mxu0
      %1708 = vmatprep.mubr.bf16.mxu0 %v654
      %1709 = vmatmul.mubr.bf16.gmra.mrb[0].mxu0 %v653
      %v1710 = vpop.f32.mrb[0].mxu0
      %v1711 = vadd.f32 %v1646, %v1710
      %v1712 = vpop.f32.mrb[0].mxu0
      %v1713 = vpop.f32.mrb[0].mxu0
      %v1714 = vadd.f32 %v1649, %v1713
      %v1715 = vpop.f32.mrb[0].mxu0
      %1716 = vmatprep.mubr.bf16.mxu0 %v667
      %1717 = vmatmul.mubr.bf16.gmra.mrb[0].mxu0 %v666
      %v1718 = vpop.f32.mrb[0].mxu0
      %v1719 = vadd.f32 %v1654, %v1718
      %v1720 = vpop.f32.mrb[0].mxu0
      %v1721 = vpop.f32.mrb[0].mxu0
      %v1722 = vadd.f32 %v1657, %v1721
      %v1723 = vpop.f32.mrb[0].mxu0
      %1724 = vmatprep.mubr.bf16.mxu0 %v680
      %1725 = vmatmul.mubr.bf16.gmra.mrb[0].mxu0 %v679
      %v1726 = vpop.f32.mrb[0].mxu0
      %v1727 = vadd.f32 %v1662, %v1726
      %v1728 = vpop.f32.mrb[0].mxu0
      %v1729 = vpop.f32.mrb[0].mxu0
      %v1730 = vadd.f32 %v1665, %v1729
      %v1731 = vpop.f32.mrb[0].mxu0
      %1732 = vdwg.mxu0
      %1733 = vmatprep.subr.bf16.mxu0 0
      %1734 = vmatpush1.bf16.msra.mxu0 %v1226
      %1735 = vmatprep.subr.bf16.mxu0 0
      %1736 = vmatpush1.bf16.msra.mxu0 %v1227
      %1737 = vmatprep.subr.bf16.mxu0 0
      %1738 = vmatpush1.bf16.msra.mxu0 %v1228
      %1739 = vmatprep.subr.bf16.mxu0 0
      %1740 = vmatpush1.bf16.msra.mxu0 %v1229
      %1741 = vmatprep.subr.bf16.mxu0 0
      %1742 = vmatpush1.bf16.msra.mxu0 0
      %1743 = vmatprep.subr.bf16.mxu0 0
      %1744 = vmatpush1.bf16.msra.mxu0 0
      %1745 = vmatprep.subr.bf16.mxu0 0
      %1746 = vmatpush1.bf16.msra.mxu0 0
      %1747 = vmatprep.subr.bf16.mxu0 0
      %1748 = vmatpush1.bf16.msra.mxu0 0
      %1749 = vmatprep.subr.bf16.mxu0 0
      %1750 = vmatpush1.bf16.msra.mxu0 0
      %1751 = vmatprep.subr.bf16.mxu0 0
      %1752 = vmatpush1.bf16.msra.mxu0 0
      %1753 = vmatprep.subr.bf16.mxu0 0
      %1754 = vmatpush1.bf16.msra.mxu0 0
      %1755 = vmatprep.subr.bf16.mxu0 0
      %1756 = vmatpush1.bf16.msra.mxu0 0
      %1757 = vmatprep.subr.bf16.mxu0 0
      %1758 = vmatpush1.bf16.msra.mxu0 0
      %1759 = vmatprep.subr.bf16.mxu0 0
      %1760 = vmatpush1.bf16.msra.mxu0 0
      %1761 = vmatprep.subr.bf16.mxu0 0
      %1762 = vmatpush1.bf16.msra.mxu0 0
      %1763 = vmatprep.subr.bf16.mxu0 0
      %1764 = vmatpush1.bf16.msra.mxu0 0
      %1765 = vmatprep.mubr.bf16.mxu0 0
      %1766 = vmatmul.mubr.bf16.gmra.mrb[0].mxu0 %v1332
      %v1767 = vpop.f32.mrb[0].mxu0
      %v1768 = vadd.f32 %v1703, %v1767
      %v1769 = vpop.f32.mrb[0].mxu0
      %v1770 = vpop.f32.mrb[0].mxu0
      %v1771 = vadd.f32 %v1706, %v1770
      %v1772 = vpop.f32.mrb[0].mxu0
      %1773 = vmatprep.mubr.bf16.mxu0 0
      %1774 = vmatmul.mubr.bf16.gmra.mrb[0].mxu0 %v1335
      %v1775 = vpop.f32.mrb[0].mxu0
      %v1776 = vadd.f32 %v1711, %v1775
      %v1777 = vpop.f32.mrb[0].mxu0
      %v1778 = vpop.f32.mrb[0].mxu0
      %v1779 = vadd.f32 %v1714, %v1778
      %v1780 = vpop.f32.mrb[0].mxu0
      %1781 = vmatprep.mubr.bf16.mxu0 0
      %1782 = vmatmul.mubr.bf16.gmra.mrb[0].mxu0 %v1338
      %v1783 = vpop.f32.mrb[0].mxu0
      %v1784 = vadd.f32 %v1719, %v1783
      %v1785 = vpop.f32.mrb[0].mxu0
      %v1786 = vpop.f32.mrb[0].mxu0
      %v1787 = vadd.f32 %v1722, %v1786
      %v1788 = vpop.f32.mrb[0].mxu0
      %1789 = vmatprep.mubr.bf16.mxu0 0
      %1790 = vmatmul.mubr.bf16.gmra.mrb[0].mxu0 %v1341
      %v1791 = vpop.f32.mrb[0].mxu0
      %v1792 = vadd.f32 %v1727, %v1791
      %v1793 = vpop.f32.mrb[0].mxu0
      %v1794 = vpop.f32.mrb[0].mxu0
      %v1795 = vadd.f32 %v1730, %v1794
      %v1796 = vpop.f32.mrb[0].mxu0
      %1797 = vdwg.mxu0
      %s1798 = scalar_lea.vmem %s201, 416
      %v1799 = vld [vmem:[%s1798] sm:$0xff]
      %v1800 = vld [vmem:[%s1798 + $0x8] sm:$0xff]
      %v1801 = vld [vmem:[%s1798 + $0x10] sm:$0xff]
      %v1802 = vld [vmem:[%s1798 + $0x18] sm:$0xff]
      %v1803 = vld [vmem:[%s1798 + $0x20] sm:$0xff]
      %v1804 = vld [vmem:[%s1798 + $0x28] sm:$0xff]
      %v1805 = vld [vmem:[%s1798 + $0x30] sm:$0xf]
      %v1806 = vld [vmem:[%s1798 + $0x34] sm:$0xff]
      %v1807 = vld [vmem:[%s1798 + $0x3c] sm:$0xff]
      %v1808 = vld [vmem:[%s1798 + $0x44] sm:$0xff]
      %v1809 = vld [vmem:[%s1798 + $0x4c] sm:$0xff]
      %v1810 = vld [vmem:[%s1798 + $0x54] sm:$0xff]
      %v1811 = vld [vmem:[%s1798 + $0x5c] sm:$0xff]
      %v1812 = vld [vmem:[%s1798 + $0x64] sm:$0xf]
      %v1813 = vld [vmem:[%s1798 + $0x68] sm:$0xff]
      %v1814 = vld [vmem:[%s1798 + $0x70] sm:$0xff]
      %v1815 = vld [vmem:[%s1798 + $0x78] sm:$0xff]
      %v1816 = vld [vmem:[%s1798 + $0x80] sm:$0xff]
      %v1817 = vld [vmem:[%s1798 + $0x88] sm:$0xff]
      %v1818 = vld [vmem:[%s1798 + $0x90] sm:$0xff]
      %v1819 = vld [vmem:[%s1798 + $0x98] sm:$0xf]
      %v1820 = vld [vmem:[%s1798 + $0x9c] sm:$0xff]
      %v1821 = vld [vmem:[%s1798 + $0xa4] sm:$0xff]
      %v1822 = vld [vmem:[%s1798 + $0xac] sm:$0xff]
      %v1823 = vld [vmem:[%s1798 + $0xb4] sm:$0xff]
      %v1824 = vld [vmem:[%s1798 + $0xbc] sm:$0xff]
      %v1825 = vld [vmem:[%s1798 + $0xc4] sm:$0xff]
      %v1826 = vld [vmem:[%s1798 + $0xcc] sm:$0xf]
      %v1827 = vld [vmem:[%s1798 + $0xd0] sm:$0xff]
      %v1828 = vld [vmem:[%s1798 + $0xd8] sm:$0xff]
      %v1829 = vld [vmem:[%s1798 + $0xe0] sm:$0xff]
      %v1830 = vld [vmem:[%s1798 + $0xe8] sm:$0xff]
      %v1831 = vld [vmem:[%s1798 + $0xf0] sm:$0xff]
      %v1832 = vld [vmem:[%s1798 + $0xf8] sm:$0xff]
      %v1833 = vld [vmem:[%s1798 + $0x100] sm:$0xf]
      %v1834 = vld [vmem:[%s1798 + $0x104] sm:$0xff]
      %v1835 = vld [vmem:[%s1798 + $0x10c] sm:$0xff]
      %v1836 = vld [vmem:[%s1798 + $0x114] sm:$0xff]
      %v1837 = vld [vmem:[%s1798 + $0x11c] sm:$0xff]
      %v1838 = vld [vmem:[%s1798 + $0x124] sm:$0xff]
      %v1839 = vld [vmem:[%s1798 + $0x12c] sm:$0xff]
      %v1840 = vld [vmem:[%s1798 + $0x134] sm:$0xf]
      %v1841 = vld [vmem:[%s1798 + $0x138] sm:$0xff]
      %v1842 = vld [vmem:[%s1798 + $0x140] sm:$0xff]
      %v1843 = vld [vmem:[%s1798 + $0x148] sm:$0xff]
      %v1844 = vld [vmem:[%s1798 + $0x150] sm:$0xff]
      %v1845 = vld [vmem:[%s1798 + $0x158] sm:$0xff]
      %v1846 = vld [vmem:[%s1798 + $0x160] sm:$0xff]
      %v1847 = vld [vmem:[%s1798 + $0x168] sm:$0xf]
      %v1848 = vld [vmem:[%s1798 + $0x16c] sm:$0xff]
      %v1849 = vld [vmem:[%s1798 + $0x174] sm:$0xff]
      %v1850 = vld [vmem:[%s1798 + $0x17c] sm:$0xff]
      %v1851 = vld [vmem:[%s1798 + $0x184] sm:$0xff]
      %v1852 = vld [vmem:[%s1798 + $0x18c] sm:$0xff]
      %v1853 = vld [vmem:[%s1798 + $0x194] sm:$0xff]
      %v1854 = vld [vmem:[%s1798 + $0x19c] sm:$0xf]
      %v1911 = vunpack.c.l.b16 %v1799
      %v1912 = vunpack.c.h.b16 %v1799
      %v1913 = vunpack.c.l.b16 %v1800
      %v1914 = vunpack.c.h.b16 %v1800
      %v1915 = vunpack.c.l.b16 %v1801
      %v1916 = vunpack.c.h.b16 %v1801
      %v1917 = vunpack.c.l.b16 %v1802
      %v1918 = vunpack.c.h.b16 %v1802
      %v1919 = vunpack.c.l.b16 %v1803
      %v1920 = vunpack.c.h.b16 %v1803
      %v1921 = vunpack.c.l.b16 %v1804
      %v1922 = vunpack.c.h.b16 %v1804
      %v1923 = vunpack.c.l.b16 %v1805
      %v1924 = vunpack.c.l.b16 %v1806
      %v1925 = vunpack.c.h.b16 %v1806
      %v1926 = vunpack.c.l.b16 %v1807
      %v1927 = vunpack.c.h.b16 %v1807
      %v1928 = vunpack.c.l.b16 %v1808
      %v1929 = vunpack.c.h.b16 %v1808
      %v1930 = vunpack.c.l.b16 %v1809
      %v1931 = vunpack.c.h.b16 %v1809
      %v1932 = vunpack.c.l.b16 %v1810
      %v1933 = vunpack.c.h.b16 %v1810
      %v1934 = vunpack.c.l.b16 %v1811
      %v1935 = vunpack.c.h.b16 %v1811
      %v1936 = vunpack.c.l.b16 %v1812
      %v1937 = vunpack.c.l.b16 %v1813
      %v1938 = vunpack.c.h.b16 %v1813
      %v1939 = vunpack.c.l.b16 %v1814
      %v1940 = vunpack.c.h.b16 %v1814
      %v1941 = vunpack.c.l.b16 %v1815
      %v1942 = vunpack.c.h.b16 %v1815
      %v1943 = vunpack.c.l.b16 %v1816
      %v1944 = vunpack.c.h.b16 %v1816
      %v1945 = vunpack.c.l.b16 %v1817
      %v1946 = vunpack.c.h.b16 %v1817
      %v1947 = vunpack.c.l.b16 %v1818
      %v1948 = vunpack.c.h.b16 %v1818
      %v1949 = vunpack.c.l.b16 %v1819
      %v1950 = vunpack.c.l.b16 %v1820
      %v1951 = vunpack.c.h.b16 %v1820
      %v1952 = vunpack.c.l.b16 %v1821
      %v1953 = vunpack.c.h.b16 %v1821
      %v1954 = vunpack.c.l.b16 %v1822
      %v1955 = vunpack.c.h.b16 %v1822
      %v1956 = vunpack.c.l.b16 %v1823
      %v1957 = vunpack.c.h.b16 %v1823
      %v1958 = vunpack.c.l.b16 %v1824
      %v1959 = vunpack.c.h.b16 %v1824
      %v1960 = vunpack.c.l.b16 %v1825
      %v1961 = vunpack.c.h.b16 %v1825
      %v1962 = vunpack.c.l.b16 %v1826
      %v1963 = vunpack.c.l.b16 %v1827
      %v1964 = vunpack.c.h.b16 %v1827
      %v1965 = vunpack.c.l.b16 %v1828
      %v1966 = vunpack.c.h.b16 %v1828
      %v1967 = vunpack.c.l.b16 %v1829
      %v1968 = vunpack.c.h.b16 %v1829
      %v1969 = vunpack.c.l.b16 %v1830
      %v1970 = vunpack.c.h.b16 %v1830
      %v1971 = vunpack.c.l.b16 %v1831
      %v1972 = vunpack.c.h.b16 %v1831
      %v1973 = vunpack.c.l.b16 %v1832
      %v1974 = vunpack.c.h.b16 %v1832
      %v1975 = vunpack.c.l.b16 %v1833
      %v1976 = vunpack.c.l.b16 %v1834
      %v1977 = vunpack.c.h.b16 %v1834
      %v1978 = vunpack.c.l.b16 %v1835
      %v1979 = vunpack.c.h.b16 %v1835
      %v1980 = vunpack.c.l.b16 %v1836
      %v1981 = vunpack.c.h.b16 %v1836
      %v1982 = vunpack.c.l.b16 %v1837
      %v1983 = vunpack.c.h.b16 %v1837
      %v1984 = vunpack.c.l.b16 %v1838
      %v1985 = vunpack.c.h.b16 %v1838
      %v1986 = vunpack.c.l.b16 %v1839
      %v1987 = vunpack.c.h.b16 %v1839
      %v1988 = vunpack.c.l.b16 %v1840
      %v1989 = vunpack.c.l.b16 %v1841
      %v1990 = vunpack.c.h.b16 %v1841
      %v1991 = vunpack.c.l.b16 %v1842
      %v1992 = vunpack.c.h.b16 %v1842
      %v1993 = vunpack.c.l.b16 %v1843
      %v1994 = vunpack.c.h.b16 %v1843
      %v1995 = vunpack.c.l.b16 %v1844
      %v1996 = vunpack.c.h.b16 %v1844
      %v1997 = vunpack.c.l.b16 %v1845
      %v1998 = vunpack.c.h.b16 %v1845
      %v1999 = vunpack.c.l.b16 %v1846
      %v2000 = vunpack.c.h.b16 %v1846
      %v2001 = vunpack.c.l.b16 %v1847
      %v2002 = vunpack.c.l.b16 %v1848
      %v2003 = vunpack.c.h.b16 %v1848
      %v2004 = vunpack.c.l.b16 %v1849
      %v2005 = vunpack.c.h.b16 %v1849
      %v2006 = vunpack.c.l.b16 %v1850
      %v2007 = vunpack.c.h.b16 %v1850
      %v2008 = vunpack.c.l.b16 %v1851
      %v2009 = vunpack.c.h.b16 %v1851
      %v2010 = vunpack.c.l.b16 %v1852
      %v2011 = vunpack.c.h.b16 %v1852
      %v2012 = vunpack.c.l.b16 %v1853
      %v2013 = vunpack.c.h.b16 %v1853
      %v2014 = vunpack.c.l.b16 %v1854
      %v2015 = vpack.c.b16 %v1924, %v1911
      %v2016 = vpack.c.b16 %v1925, %v1912
      %v2017 = vpack.c.b16 %v1926, %v1913
      %v2018 = vpack.c.b16 %v1927, %v1914
      %v2019 = vpack.c.b16 %v1928, %v1915
      %v2020 = vpack.c.b16 %v1929, %v1916
      %v2021 = vpack.c.b16 %v1930, %v1917
      %v2022 = vpack.c.b16 %v1931, %v1918
      %v2023 = vpack.c.b16 %v1932, %v1919
      %v2024 = vpack.c.b16 %v1933, %v1920
      %v2025 = vpack.c.b16 %v1934, %v1921
      %v2026 = vpack.c.b16 %v1935, %v1922
      %v2027 = vpack.c.b16 %v1936, %v1923
      %v2028 = vpack.c.b16 %v1950, %v1937
      %v2029 = vpack.c.b16 %v1951, %v1938
      %v2030 = vpack.c.b16 %v1952, %v1939
      %v2031 = vpack.c.b16 %v1953, %v1940
      %v2032 = vpack.c.b16 %v1954, %v1941
      %v2033 = vpack.c.b16 %v1955, %v1942
      %v2034 = vpack.c.b16 %v1956, %v1943
      %v2035 = vpack.c.b16 %v1957, %v1944
      %v2036 = vpack.c.b16 %v1958, %v1945
      %v2037 = vpack.c.b16 %v1959, %v1946
      %v2038 = vpack.c.b16 %v1960, %v1947
      %v2039 = vpack.c.b16 %v1961, %v1948
      %v2040 = vpack.c.b16 %v1962, %v1949
      %v2041 = vpack.c.b16 %v1976, %v1963
      %v2042 = vpack.c.b16 %v1977, %v1964
      %v2043 = vpack.c.b16 %v1978, %v1965
      %v2044 = vpack.c.b16 %v1979, %v1966
      %v2045 = vpack.c.b16 %v1980, %v1967
      %v2046 = vpack.c.b16 %v1981, %v1968
      %v2047 = vpack.c.b16 %v1982, %v1969
      %v2048 = vpack.c.b16 %v1983, %v1970
      %v2049 = vpack.c.b16 %v1984, %v1971
      %v2050 = vpack.c.b16 %v1985, %v1972
      %v2051 = vpack.c.b16 %v1986, %v1973
      %v2052 = vpack.c.b16 %v1987, %v1974
      %v2053 = vpack.c.b16 %v1988, %v1975
      %v2054 = vpack.c.b16 %v2002, %v1989
      %v2055 = vpack.c.b16 %v2003, %v1990
      %v2056 = vpack.c.b16 %v2004, %v1991
      %v2057 = vpack.c.b16 %v2005, %v1992
      %v2058 = vpack.c.b16 %v2006, %v1993
      %v2059 = vpack.c.b16 %v2007, %v1994
      %v2060 = vpack.c.b16 %v2008, %v1995
      %v2061 = vpack.c.b16 %v2009, %v1996
      %v2062 = vpack.c.b16 %v2010, %v1997
      %v2063 = vpack.c.b16 %v2011, %v1998
      %v2064 = vpack.c.b16 %v2012, %v1999
      %v2065 = vpack.c.b16 %v2013, %v2000
      %v2066 = vpack.c.b16 %v2014, %v2001
      %v2116 = vsel %vm1330, %v2027, 0
      %v2119 = vsel %vm1330, %v2040, 0
      %v2122 = vsel %vm1330, %v2053, 0
      %v2125 = vsel %vm1330, %v2066, 0
      %2127 = vmatprep.subr.bf16.mxu0 0
      %2128 = vmatpush1.bf16.msra.mxu0 %v1130
      %2129 = vmatprep.subr.bf16.mxu0 0
      %2130 = vmatpush1.bf16.msra.mxu0 %v1131
      %2131 = vmatprep.subr.bf16.mxu0 0
      %2132 = vmatpush1.bf16.msra.mxu0 %v1132
      %2133 = vmatprep.subr.bf16.mxu0 0
      %2134 = vmatpush1.bf16.msra.mxu0 %v1133
      %2135 = vmatprep.subr.bf16.mxu0 0
      %2136 = vmatpush1.bf16.msra.mxu0 %v1134
      %2137 = vmatprep.subr.bf16.mxu0 0
      %2138 = vmatpush1.bf16.msra.mxu0 %v1135
      %2139 = vmatprep.subr.bf16.mxu0 0
      %2140 = vmatpush1.bf16.msra.mxu0 %v1136
      %2141 = vmatprep.subr.bf16.mxu0 0
      %2142 = vmatpush1.bf16.msra.mxu0 %v1137
      %2143 = vmatprep.subr.bf16.mxu0 0
      %2144 = vmatpush1.bf16.msra.mxu0 %v1138
      %2145 = vmatprep.subr.bf16.mxu0 0
      %2146 = vmatpush1.bf16.msra.mxu0 %v1139
      %2147 = vmatprep.subr.bf16.mxu0 0
      %2148 = vmatpush1.bf16.msra.mxu0 %v1140
      %2149 = vmatprep.subr.bf16.mxu0 0
      %2150 = vmatpush1.bf16.msra.mxu0 %v1141
      %2151 = vmatprep.subr.bf16.mxu0 0
      %2152 = vmatpush1.bf16.msra.mxu0 %v1142
      %2153 = vmatprep.subr.bf16.mxu0 0
      %2154 = vmatpush1.bf16.msra.mxu0 %v1143
      %2155 = vmatprep.subr.bf16.mxu0 0
      %2156 = vmatpush1.bf16.msra.mxu0 %v1144
      %2157 = vmatprep.subr.bf16.mxu0 0
      %2158 = vmatpush1.bf16.msra.mxu0 %v1145
      %2159 = vmatprep.mubr.bf16.mxu0 %v2016
      %2160 = vmatmul.mubr.bf16.gmra.mrb[0].mxu0 %v2015
      %v2161 = vpop.f32.mrb[0].mxu0
      %v2162 = vadd.f32 0.0, %v2161
      %v2163 = vpop.f32.mrb[0].mxu0
      %v2164 = vpop.f32.mrb[0].mxu0
      %v2165 = vadd.f32 0.0, %v2164
      %v2166 = vpop.f32.mrb[0].mxu0
      %2167 = vmatprep.mubr.bf16.mxu0 %v2029
      %2168 = vmatmul.mubr.bf16.gmra.mrb[0].mxu0 %v2028
      %v2169 = vpop.f32.mrb[0].mxu0
      %v2170 = vadd.f32 0.0, %v2169
      %v2171 = vpop.f32.mrb[0].mxu0
      %v2172 = vpop.f32.mrb[0].mxu0
      %v2173 = vadd.f32 0.0, %v2172
      %v2174 = vpop.f32.mrb[0].mxu0
      %2175 = vmatprep.mubr.bf16.mxu0 %v2042
      %2176 = vmatmul.mubr.bf16.gmra.mrb[0].mxu0 %v2041
      %v2177 = vpop.f32.mrb[0].mxu0
      %v2178 = vadd.f32 0.0, %v2177
      %v2179 = vpop.f32.mrb[0].mxu0
      %v2180 = vpop.f32.mrb[0].mxu0
      %v2181 = vadd.f32 0.0, %v2180
      %v2182 = vpop.f32.mrb[0].mxu0
      %2183 = vmatprep.mubr.bf16.mxu0 %v2055
      %2184 = vmatmul.mubr.bf16.gmra.mrb[0].mxu0 %v2054
      %v2185 = vpop.f32.mrb[0].mxu0
      %v2186 = vadd.f32 0.0, %v2185
      %v2187 = vpop.f32.mrb[0].mxu0
      %v2188 = vpop.f32.mrb[0].mxu0
      %v2189 = vadd.f32 0.0, %v2188
      %v2190 = vpop.f32.mrb[0].mxu0
      %2191 = vdwg.mxu0
      %2192 = vmatprep.subr.bf16.mxu0 0
      %2193 = vmatpush1.bf16.msra.mxu0 %v1146
      %2194 = vmatprep.subr.bf16.mxu0 0
      %2195 = vmatpush1.bf16.msra.mxu0 %v1147
      %2196 = vmatprep.subr.bf16.mxu0 0
      %2197 = vmatpush1.bf16.msra.mxu0 %v1148
      %2198 = vmatprep.subr.bf16.mxu0 0
      %2199 = vmatpush1.bf16.msra.mxu0 %v1149
      %2200 = vmatprep.subr.bf16.mxu0 0
      %2201 = vmatpush1.bf16.msra.mxu0 %v1150
      %2202 = vmatprep.subr.bf16.mxu0 0
      %2203 = vmatpush1.bf16.msra.mxu0 %v1151
      %2204 = vmatprep.subr.bf16.mxu0 0
      %2205 = vmatpush1.bf16.msra.mxu0 %v1152
      %2206 = vmatprep.subr.bf16.mxu0 0
      %2207 = vmatpush1.bf16.msra.mxu0 %v1153
      %2208 = vmatprep.subr.bf16.mxu0 0
      %2209 = vmatpush1.bf16.msra.mxu0 %v1154
      %2210 = vmatprep.subr.bf16.mxu0 0
      %2211 = vmatpush1.bf16.msra.mxu0 %v1155
      %2212 = vmatprep.subr.bf16.mxu0 0
      %2213 = vmatpush1.bf16.msra.mxu0 %v1156
      %2214 = vmatprep.subr.bf16.mxu0 0
      %2215 = vmatpush1.bf16.msra.mxu0 %v1157
      %2216 = vmatprep.subr.bf16.mxu0 0
      %2217 = vmatpush1.bf16.msra.mxu0 %v1158
      %2218 = vmatprep.subr.bf16.mxu0 0
      %2219 = vmatpush1.bf16.msra.mxu0 %v1159
      %2220 = vmatprep.subr.bf16.mxu0 0
      %2221 = vmatpush1.bf16.msra.mxu0 %v1160
      %2222 = vmatprep.subr.bf16.mxu0 0
      %2223 = vmatpush1.bf16.msra.mxu0 %v1161
      %2224 = vmatprep.mubr.bf16.mxu0 %v2018
      %2225 = vmatmul.mubr.bf16.gmra.mrb[0].mxu0 %v2017
      %v2226 = vpop.f32.mrb[0].mxu0
      %v2227 = vadd.f32 %v2162, %v2226
      %v2228 = vpop.f32.mrb[0].mxu0
      %v2229 = vpop.f32.mrb[0].mxu0
      %v2230 = vadd.f32 %v2165, %v2229
      %v2231 = vpop.f32.mrb[0].mxu0
      %2232 = vmatprep.mubr.bf16.mxu0 %v2031
      %2233 = vmatmul.mubr.bf16.gmra.mrb[0].mxu0 %v2030
      %v2234 = vpop.f32.mrb[0].mxu0
      %v2235 = vadd.f32 %v2170, %v2234
      %v2236 = vpop.f32.mrb[0].mxu0
      %v2237 = vpop.f32.mrb[0].mxu0
      %v2238 = vadd.f32 %v2173, %v2237
      %v2239 = vpop.f32.mrb[0].mxu0
      %2240 = vmatprep.mubr.bf16.mxu0 %v2044
      %2241 = vmatmul.mubr.bf16.gmra.mrb[0].mxu0 %v2043
      %v2242 = vpop.f32.mrb[0].mxu0
      %v2243 = vadd.f32 %v2178, %v2242
      %v2244 = vpop.f32.mrb[0].mxu0
      %v2245 = vpop.f32.mrb[0].mxu0
      %v2246 = vadd.f32 %v2181, %v2245
      %v2247 = vpop.f32.mrb[0].mxu0
      %2248 = vmatprep.mubr.bf16.mxu0 %v2057
      %2249 = vmatmul.mubr.bf16.gmra.mrb[0].mxu0 %v2056
      %v2250 = vpop.f32.mrb[0].mxu0
      %v2251 = vadd.f32 %v2186, %v2250
      %v2252 = vpop.f32.mrb[0].mxu0
      %v2253 = vpop.f32.mrb[0].mxu0
      %v2254 = vadd.f32 %v2189, %v2253
      %v2255 = vpop.f32.mrb[0].mxu0
      %2256 = vdwg.mxu0
      %2257 = vmatprep.subr.bf16.mxu0 0
      %2258 = vmatpush1.bf16.msra.mxu0 %v1162
      %2259 = vmatprep.subr.bf16.mxu0 0
      %2260 = vmatpush1.bf16.msra.mxu0 %v1163
      %2261 = vmatprep.subr.bf16.mxu0 0
      %2262 = vmatpush1.bf16.msra.mxu0 %v1164
      %2263 = vmatprep.subr.bf16.mxu0 0
      %2264 = vmatpush1.bf16.msra.mxu0 %v1165
      %2265 = vmatprep.subr.bf16.mxu0 0
      %2266 = vmatpush1.bf16.msra.mxu0 %v1166
      %2267 = vmatprep.subr.bf16.mxu0 0
      %2268 = vmatpush1.bf16.msra.mxu0 %v1167
      %2269 = vmatprep.subr.bf16.mxu0 0
      %2270 = vmatpush1.bf16.msra.mxu0 %v1168
      %2271 = vmatprep.subr.bf16.mxu0 0
      %2272 = vmatpush1.bf16.msra.mxu0 %v1169
      %2273 = vmatprep.subr.bf16.mxu0 0
      %2274 = vmatpush1.bf16.msra.mxu0 %v1170
      %2275 = vmatprep.subr.bf16.mxu0 0
      %2276 = vmatpush1.bf16.msra.mxu0 %v1171
      %2277 = vmatprep.subr.bf16.mxu0 0
      %2278 = vmatpush1.bf16.msra.mxu0 %v1172
      %2279 = vmatprep.subr.bf16.mxu0 0
      %2280 = vmatpush1.bf16.msra.mxu0 %v1173
      %2281 = vmatprep.subr.bf16.mxu0 0
      %2282 = vmatpush1.bf16.msra.mxu0 %v1174
      %2283 = vmatprep.subr.bf16.mxu0 0
      %2284 = vmatpush1.bf16.msra.mxu0 %v1175
      %2285 = vmatprep.subr.bf16.mxu0 0
      %2286 = vmatpush1.bf16.msra.mxu0 %v1176
      %2287 = vmatprep.subr.bf16.mxu0 0
      %2288 = vmatpush1.bf16.msra.mxu0 %v1177
      %2289 = vmatprep.mubr.bf16.mxu0 %v2020
      %2290 = vmatmul.mubr.bf16.gmra.mrb[0].mxu0 %v2019
      %v2291 = vpop.f32.mrb[0].mxu0
      %v2292 = vadd.f32 %v2227, %v2291
      %v2293 = vpop.f32.mrb[0].mxu0
      %v2294 = vpop.f32.mrb[0].mxu0
      %v2295 = vadd.f32 %v2230, %v2294
      %v2296 = vpop.f32.mrb[0].mxu0
      %2297 = vmatprep.mubr.bf16.mxu0 %v2033
      %2298 = vmatmul.mubr.bf16.gmra.mrb[0].mxu0 %v2032
      %v2299 = vpop.f32.mrb[0].mxu0
      %v2300 = vadd.f32 %v2235, %v2299
      %v2301 = vpop.f32.mrb[0].mxu0
      %v2302 = vpop.f32.mrb[0].mxu0
      %v2303 = vadd.f32 %v2238, %v2302
      %v2304 = vpop.f32.mrb[0].mxu0
      %2305 = vmatprep.mubr.bf16.mxu0 %v2046
      %2306 = vmatmul.mubr.bf16.gmra.mrb[0].mxu0 %v2045
      %v2307 = vpop.f32.mrb[0].mxu0
      %v2308 = vadd.f32 %v2243, %v2307
      %v2309 = vpop.f32.mrb[0].mxu0
      %v2310 = vpop.f32.mrb[0].mxu0
      %v2311 = vadd.f32 %v2246, %v2310
      %v2312 = vpop.f32.mrb[0].mxu0
      %2313 = vmatprep.mubr.bf16.mxu0 %v2059
      %2314 = vmatmul.mubr.bf16.gmra.mrb[0].mxu0 %v2058
      %v2315 = vpop.f32.mrb[0].mxu0
      %v2316 = vadd.f32 %v2251, %v2315
      %v2317 = vpop.f32.mrb[0].mxu0
      %v2318 = vpop.f32.mrb[0].mxu0
      %v2319 = vadd.f32 %v2254, %v2318
      %v2320 = vpop.f32.mrb[0].mxu0
      %2321 = vdwg.mxu0
      %2322 = vmatprep.subr.bf16.mxu0 0
      %2323 = vmatpush1.bf16.msra.mxu0 %v1178
      %2324 = vmatprep.subr.bf16.mxu0 0
      %2325 = vmatpush1.bf16.msra.mxu0 %v1179
      %2326 = vmatprep.subr.bf16.mxu0 0
      %2327 = vmatpush1.bf16.msra.mxu0 %v1180
      %2328 = vmatprep.subr.bf16.mxu0 0
      %2329 = vmatpush1.bf16.msra.mxu0 %v1181
      %2330 = vmatprep.subr.bf16.mxu0 0
      %2331 = vmatpush1.bf16.msra.mxu0 %v1182
      %2332 = vmatprep.subr.bf16.mxu0 0
      %2333 = vmatpush1.bf16.msra.mxu0 %v1183
      %2334 = vmatprep.subr.bf16.mxu0 0
      %2335 = vmatpush1.bf16.msra.mxu0 %v1184
      %2336 = vmatprep.subr.bf16.mxu0 0
      %2337 = vmatpush1.bf16.msra.mxu0 %v1185
      %2338 = vmatprep.subr.bf16.mxu0 0
      %2339 = vmatpush1.bf16.msra.mxu0 %v1186
      %2340 = vmatprep.subr.bf16.mxu0 0
      %2341 = vmatpush1.bf16.msra.mxu0 %v1187
      %2342 = vmatprep.subr.bf16.mxu0 0
      %2343 = vmatpush1.bf16.msra.mxu0 %v1188
      %2344 = vmatprep.subr.bf16.mxu0 0
      %2345 = vmatpush1.bf16.msra.mxu0 %v1189
      %2346 = vmatprep.subr.bf16.mxu0 0
      %2347 = vmatpush1.bf16.msra.mxu0 %v1190
      %2348 = vmatprep.subr.bf16.mxu0 0
      %2349 = vmatpush1.bf16.msra.mxu0 %v1191
      %2350 = vmatprep.subr.bf16.mxu0 0
      %2351 = vmatpush1.bf16.msra.mxu0 %v1192
      %2352 = vmatprep.subr.bf16.mxu0 0
      %2353 = vmatpush1.bf16.msra.mxu0 %v1193
      %2354 = vmatprep.mubr.bf16.mxu0 %v2022
      %2355 = vmatmul.mubr.bf16.gmra.mrb[0].mxu0 %v2021
      %v2356 = vpop.f32.mrb[0].mxu0
      %v2357 = vadd.f32 %v2292, %v2356
      %v2358 = vpop.f32.mrb[0].mxu0
      %v2359 = vpop.f32.mrb[0].mxu0
      %v2360 = vadd.f32 %v2295, %v2359
      %v2361 = vpop.f32.mrb[0].mxu0
      %2362 = vmatprep.mubr.bf16.mxu0 %v2035
      %2363 = vmatmul.mubr.bf16.gmra.mrb[0].mxu0 %v2034
      %v2364 = vpop.f32.mrb[0].mxu0
      %v2365 = vadd.f32 %v2300, %v2364
      %v2366 = vpop.f32.mrb[0].mxu0
      %v2367 = vpop.f32.mrb[0].mxu0
      %v2368 = vadd.f32 %v2303, %v2367
      %v2369 = vpop.f32.mrb[0].mxu0
      %2370 = vmatprep.mubr.bf16.mxu0 %v2048
      %2371 = vmatmul.mubr.bf16.gmra.mrb[0].mxu0 %v2047
      %v2372 = vpop.f32.mrb[0].mxu0
      %v2373 = vadd.f32 %v2308, %v2372
      %v2374 = vpop.f32.mrb[0].mxu0
      %v2375 = vpop.f32.mrb[0].mxu0
      %v2376 = vadd.f32 %v2311, %v2375
      %v2377 = vpop.f32.mrb[0].mxu0
      %2378 = vmatprep.mubr.bf16.mxu0 %v2061
      %2379 = vmatmul.mubr.bf16.gmra.mrb[0].mxu0 %v2060
      %v2380 = vpop.f32.mrb[0].mxu0
      %v2381 = vadd.f32 %v2316, %v2380
      %v2382 = vpop.f32.mrb[0].mxu0
      %v2383 = vpop.f32.mrb[0].mxu0
      %v2384 = vadd.f32 %v2319, %v2383
      %v2385 = vpop.f32.mrb[0].mxu0
      %2386 = vdwg.mxu0
      %2387 = vmatprep.subr.bf16.mxu0 0
      %2388 = vmatpush1.bf16.msra.mxu0 %v1194
      %2389 = vmatprep.subr.bf16.mxu0 0
      %2390 = vmatpush1.bf16.msra.mxu0 %v1195
      %2391 = vmatprep.subr.bf16.mxu0 0
      %2392 = vmatpush1.bf16.msra.mxu0 %v1196
      %2393 = vmatprep.subr.bf16.mxu0 0
      %2394 = vmatpush1.bf16.msra.mxu0 %v1197
      %2395 = vmatprep.subr.bf16.mxu0 0
      %2396 = vmatpush1.bf16.msra.mxu0 %v1198
      %2397 = vmatprep.subr.bf16.mxu0 0
      %2398 = vmatpush1.bf16.msra.mxu0 %v1199
      %2399 = vmatprep.subr.bf16.mxu0 0
      %2400 = vmatpush1.bf16.msra.mxu0 %v1200
      %2401 = vmatprep.subr.bf16.mxu0 0
      %2402 = vmatpush1.bf16.msra.mxu0 %v1201
      %2403 = vmatprep.subr.bf16.mxu0 0
      %2404 = vmatpush1.bf16.msra.mxu0 %v1202
      %2405 = vmatprep.subr.bf16.mxu0 0
      %2406 = vmatpush1.bf16.msra.mxu0 %v1203
      %2407 = vmatprep.subr.bf16.mxu0 0
      %2408 = vmatpush1.bf16.msra.mxu0 %v1204
      %2409 = vmatprep.subr.bf16.mxu0 0
      %2410 = vmatpush1.bf16.msra.mxu0 %v1205
      %2411 = vmatprep.subr.bf16.mxu0 0
      %2412 = vmatpush1.bf16.msra.mxu0 %v1206
      %2413 = vmatprep.subr.bf16.mxu0 0
      %2414 = vmatpush1.bf16.msra.mxu0 %v1207
      %2415 = vmatprep.subr.bf16.mxu0 0
      %2416 = vmatpush1.bf16.msra.mxu0 %v1208
      %2417 = vmatprep.subr.bf16.mxu0 0
      %2418 = vmatpush1.bf16.msra.mxu0 %v1209
      %2419 = vmatprep.mubr.bf16.mxu0 %v2024
      %2420 = vmatmul.mubr.bf16.gmra.mrb[0].mxu0 %v2023
      %v2421 = vpop.f32.mrb[0].mxu0
      %v2422 = vadd.f32 %v2357, %v2421
      %v2423 = vpop.f32.mrb[0].mxu0
      %v2424 = vpop.f32.mrb[0].mxu0
      %v2425 = vadd.f32 %v2360, %v2424
      %v2426 = vpop.f32.mrb[0].mxu0
      %2427 = vmatprep.mubr.bf16.mxu0 %v2037
      %2428 = vmatmul.mubr.bf16.gmra.mrb[0].mxu0 %v2036
      %v2429 = vpop.f32.mrb[0].mxu0
      %v2430 = vadd.f32 %v2365, %v2429
      %v2431 = vpop.f32.mrb[0].mxu0
      %v2432 = vpop.f32.mrb[0].mxu0
      %v2433 = vadd.f32 %v2368, %v2432
      %v2434 = vpop.f32.mrb[0].mxu0
      %2435 = vmatprep.mubr.bf16.mxu0 %v2050
      %2436 = vmatmul.mubr.bf16.gmra.mrb[0].mxu0 %v2049
      %v2437 = vpop.f32.mrb[0].mxu0
      %v2438 = vadd.f32 %v2373, %v2437
      %v2439 = vpop.f32.mrb[0].mxu0
      %v2440 = vpop.f32.mrb[0].mxu0
      %v2441 = vadd.f32 %v2376, %v2440
      %v2442 = vpop.f32.mrb[0].mxu0
      %2443 = vmatprep.mubr.bf16.mxu0 %v2063
      %2444 = vmatmul.mubr.bf16.gmra.mrb[0].mxu0 %v2062
      %v2445 = vpop.f32.mrb[0].mxu0
      %v2446 = vadd.f32 %v2381, %v2445
      %v2447 = vpop.f32.mrb[0].mxu0
      %v2448 = vpop.f32.mrb[0].mxu0
      %v2449 = vadd.f32 %v2384, %v2448
      %v2450 = vpop.f32.mrb[0].mxu0
      %2451 = vdwg.mxu0
      %2452 = vmatprep.subr.bf16.mxu0 0
      %2453 = vmatpush1.bf16.msra.mxu0 %v1210
      %2454 = vmatprep.subr.bf16.mxu0 0
      %2455 = vmatpush1.bf16.msra.mxu0 %v1211
      %2456 = vmatprep.subr.bf16.mxu0 0
      %2457 = vmatpush1.bf16.msra.mxu0 %v1212
      %2458 = vmatprep.subr.bf16.mxu0 0
      %2459 = vmatpush1.bf16.msra.mxu0 %v1213
      %2460 = vmatprep.subr.bf16.mxu0 0
      %2461 = vmatpush1.bf16.msra.mxu0 %v1214
      %2462 = vmatprep.subr.bf16.mxu0 0
      %2463 = vmatpush1.bf16.msra.mxu0 %v1215
      %2464 = vmatprep.subr.bf16.mxu0 0
      %2465 = vmatpush1.bf16.msra.mxu0 %v1216
      %2466 = vmatprep.subr.bf16.mxu0 0
      %2467 = vmatpush1.bf16.msra.mxu0 %v1217
      %2468 = vmatprep.subr.bf16.mxu0 0
      %2469 = vmatpush1.bf16.msra.mxu0 %v1218
      %2470 = vmatprep.subr.bf16.mxu0 0
      %2471 = vmatpush1.bf16.msra.mxu0 %v1219
      %2472 = vmatprep.subr.bf16.mxu0 0
      %2473 = vmatpush1.bf16.msra.mxu0 %v1220
      %2474 = vmatprep.subr.bf16.mxu0 0
      %2475 = vmatpush1.bf16.msra.mxu0 %v1221
      %2476 = vmatprep.subr.bf16.mxu0 0
      %2477 = vmatpush1.bf16.msra.mxu0 %v1222
      %2478 = vmatprep.subr.bf16.mxu0 0
      %2479 = vmatpush1.bf16.msra.mxu0 %v1223
      %2480 = vmatprep.subr.bf16.mxu0 0
      %2481 = vmatpush1.bf16.msra.mxu0 %v1224
      %2482 = vmatprep.subr.bf16.mxu0 0
      %2483 = vmatpush1.bf16.msra.mxu0 %v1225
      %2484 = vmatprep.mubr.bf16.mxu0 %v2026
      %2485 = vmatmul.mubr.bf16.gmra.mrb[0].mxu0 %v2025
      %v2486 = vpop.f32.mrb[0].mxu0
      %v2487 = vadd.f32 %v2422, %v2486
      %v2488 = vpop.f32.mrb[0].mxu0
      %v2489 = vpop.f32.mrb[0].mxu0
      %v2490 = vadd.f32 %v2425, %v2489
      %v2491 = vpop.f32.mrb[0].mxu0
      %2492 = vmatprep.mubr.bf16.mxu0 %v2039
      %2493 = vmatmul.mubr.bf16.gmra.mrb[0].mxu0 %v2038
      %v2494 = vpop.f32.mrb[0].mxu0
      %v2495 = vadd.f32 %v2430, %v2494
      %v2496 = vpop.f32.mrb[0].mxu0
      %v2497 = vpop.f32.mrb[0].mxu0
      %v2498 = vadd.f32 %v2433, %v2497
      %v2499 = vpop.f32.mrb[0].mxu0
      %2500 = vmatprep.mubr.bf16.mxu0 %v2052
      %2501 = vmatmul.mubr.bf16.gmra.mrb[0].mxu0 %v2051
      %v2502 = vpop.f32.mrb[0].mxu0
      %v2503 = vadd.f32 %v2438, %v2502
      %v2504 = vpop.f32.mrb[0].mxu0
      %v2505 = vpop.f32.mrb[0].mxu0
      %v2506 = vadd.f32 %v2441, %v2505
      %v2507 = vpop.f32.mrb[0].mxu0
      %2508 = vmatprep.mubr.bf16.mxu0 %v2065
      %2509 = vmatmul.mubr.bf16.gmra.mrb[0].mxu0 %v2064
      %v2510 = vpop.f32.mrb[0].mxu0
      %v2511 = vadd.f32 %v2446, %v2510
      %v2512 = vpop.f32.mrb[0].mxu0
      %v2513 = vpop.f32.mrb[0].mxu0
      %v2514 = vadd.f32 %v2449, %v2513
      %v2515 = vpop.f32.mrb[0].mxu0
      %2516 = vdwg.mxu0
      %2517 = vmatprep.subr.bf16.mxu0 0
      %2518 = vmatpush1.bf16.msra.mxu0 %v1226
      %2519 = vmatprep.subr.bf16.mxu0 0
      %2520 = vmatpush1.bf16.msra.mxu0 %v1227
      %2521 = vmatprep.subr.bf16.mxu0 0
      %2522 = vmatpush1.bf16.msra.mxu0 %v1228
      %2523 = vmatprep.subr.bf16.mxu0 0
      %2524 = vmatpush1.bf16.msra.mxu0 %v1229
      %2525 = vmatprep.subr.bf16.mxu0 0
      %2526 = vmatpush1.bf16.msra.mxu0 0
      %2527 = vmatprep.subr.bf16.mxu0 0
      %2528 = vmatpush1.bf16.msra.mxu0 0
      %2529 = vmatprep.subr.bf16.mxu0 0
      %2530 = vmatpush1.bf16.msra.mxu0 0
      %2531 = vmatprep.subr.bf16.mxu0 0
      %2532 = vmatpush1.bf16.msra.mxu0 0
      %2533 = vmatprep.subr.bf16.mxu0 0
      %2534 = vmatpush1.bf16.msra.mxu0 0
      %2535 = vmatprep.subr.bf16.mxu0 0
      %2536 = vmatpush1.bf16.msra.mxu0 0
      %2537 = vmatprep.subr.bf16.mxu0 0
      %2538 = vmatpush1.bf16.msra.mxu0 0
      %2539 = vmatprep.subr.bf16.mxu0 0
      %2540 = vmatpush1.bf16.msra.mxu0 0
      %2541 = vmatprep.subr.bf16.mxu0 0
      %2542 = vmatpush1.bf16.msra.mxu0 0
      %2543 = vmatprep.subr.bf16.mxu0 0
      %2544 = vmatpush1.bf16.msra.mxu0 0
      %2545 = vmatprep.subr.bf16.mxu0 0
      %2546 = vmatpush1.bf16.msra.mxu0 0
      %2547 = vmatprep.subr.bf16.mxu0 0
      %2548 = vmatpush1.bf16.msra.mxu0 0
      %2549 = vmatprep.mubr.bf16.mxu0 0
      %2550 = vmatmul.mubr.bf16.gmra.mrb[0].mxu0 %v2116
      %v2551 = vpop.f32.mrb[0].mxu0
      %v2552 = vadd.f32 %v2487, %v2551
      %v2553 = vpop.f32.mrb[0].mxu0
      %v2554 = vpop.f32.mrb[0].mxu0
      %v2555 = vadd.f32 %v2490, %v2554
      %v2556 = vpop.f32.mrb[0].mxu0
      %2557 = vmatprep.mubr.bf16.mxu0 0
      %2558 = vmatmul.mubr.bf16.gmra.mrb[0].mxu0 %v2119
      %v2559 = vpop.f32.mrb[0].mxu0
      %v2560 = vadd.f32 %v2495, %v2559
      %v2561 = vpop.f32.mrb[0].mxu0
      %v2562 = vpop.f32.mrb[0].mxu0
      %v2563 = vadd.f32 %v2498, %v2562
      %v2564 = vpop.f32.mrb[0].mxu0
      %2565 = vmatprep.mubr.bf16.mxu0 0
      %2566 = vmatmul.mubr.bf16.gmra.mrb[0].mxu0 %v2122
      %v2567 = vpop.f32.mrb[0].mxu0
      %v2568 = vadd.f32 %v2503, %v2567
      %v2569 = vpop.f32.mrb[0].mxu0
      %v2570 = vpop.f32.mrb[0].mxu0
      %v2571 = vadd.f32 %v2506, %v2570
      %v2572 = vpop.f32.mrb[0].mxu0
      %2573 = vmatprep.mubr.bf16.mxu0 0
      %2574 = vmatmul.mubr.bf16.gmra.mrb[0].mxu0 %v2125
      %v2575 = vpop.f32.mrb[0].mxu0
      %v2576 = vadd.f32 %v2511, %v2575
      %v2577 = vpop.f32.mrb[0].mxu0
      %v2578 = vpop.f32.mrb[0].mxu0
      %v2579 = vadd.f32 %v2514, %v2578
      %v2580 = vpop.f32.mrb[0].mxu0
      %2581 = vdwg.mxu0
      %v2582 = vmax.f32 %v1768, %v2552
      %v2583 = vmax.f32 %v1771, %v2555
      %v2584 = vmax.f32 %v1776, %v2560
      %v2585 = vmax.f32 %v1779, %v2563
      %v2586 = vmax.f32 %v1784, %v2568
      %v2587 = vmax.f32 %v1787, %v2571
      %v2588 = vmax.f32 %v1792, %v2576
      %v2589 = vmax.f32 %v1795, %v2579
      %s2590 = scalar_lea.vmem %s201, 832
      %v2591 = vld [vmem:[%s2590] sm:$0xff]
      %v2592 = vld [vmem:[%s2590 + $0x8] sm:$0xff]
      %v2593 = vld [vmem:[%s2590 + $0x10] sm:$0xff]
      %v2594 = vld [vmem:[%s2590 + $0x18] sm:$0xff]
      %v2595 = vld [vmem:[%s2590 + $0x20] sm:$0xff]
      %v2596 = vld [vmem:[%s2590 + $0x28] sm:$0xff]
      %v2597 = vld [vmem:[%s2590 + $0x30] sm:$0xf]
      %v2598 = vld [vmem:[%s2590 + $0x34] sm:$0xff]
      %v2599 = vld [vmem:[%s2590 + $0x3c] sm:$0xff]
      %v2600 = vld [vmem:[%s2590 + $0x44] sm:$0xff]
      %v2601 = vld [vmem:[%s2590 + $0x4c] sm:$0xff]
      %v2602 = vld [vmem:[%s2590 + $0x54] sm:$0xff]
      %v2603 = vld [vmem:[%s2590 + $0x5c] sm:$0xff]
      %v2604 = vld [vmem:[%s2590 + $0x64] sm:$0xf]
      %v2605 = vld [vmem:[%s2590 + $0x68] sm:$0xff]
      %v2606 = vld [vmem:[%s2590 + $0x70] sm:$0xff]
      %v2607 = vld [vmem:[%s2590 + $0x78] sm:$0xff]
      %v2608 = vld [vmem:[%s2590 + $0x80] sm:$0xff]
      %v2609 = vld [vmem:[%s2590 + $0x88] sm:$0xff]
      %v2610 = vld [vmem:[%s2590 + $0x90] sm:$0xff]
      %v2611 = vld [vmem:[%s2590 + $0x98] sm:$0xf]
      %v2612 = vld [vmem:[%s2590 + $0x9c] sm:$0xff]
      %v2613 = vld [vmem:[%s2590 + $0xa4] sm:$0xff]
      %v2614 = vld [vmem:[%s2590 + $0xac] sm:$0xff]
      %v2615 = vld [vmem:[%s2590 + $0xb4] sm:$0xff]
      %v2616 = vld [vmem:[%s2590 + $0xbc] sm:$0xff]
      %v2617 = vld [vmem:[%s2590 + $0xc4] sm:$0xff]
      %v2618 = vld [vmem:[%s2590 + $0xcc] sm:$0xf]
      %v2619 = vld [vmem:[%s2590 + $0xd0] sm:$0xff]
      %v2620 = vld [vmem:[%s2590 + $0xd8] sm:$0xff]
      %v2621 = vld [vmem:[%s2590 + $0xe0] sm:$0xff]
      %v2622 = vld [vmem:[%s2590 + $0xe8] sm:$0xff]
      %v2623 = vld [vmem:[%s2590 + $0xf0] sm:$0xff]
      %v2624 = vld [vmem:[%s2590 + $0xf8] sm:$0xff]
      %v2625 = vld [vmem:[%s2590 + $0x100] sm:$0xf]
      %v2626 = vld [vmem:[%s2590 + $0x104] sm:$0xff]
      %v2627 = vld [vmem:[%s2590 + $0x10c] sm:$0xff]
      %v2628 = vld [vmem:[%s2590 + $0x114] sm:$0xff]
      %v2629 = vld [vmem:[%s2590 + $0x11c] sm:$0xff]
      %v2630 = vld [vmem:[%s2590 + $0x124] sm:$0xff]
      %v2631 = vld [vmem:[%s2590 + $0x12c] sm:$0xff]
      %v2632 = vld [vmem:[%s2590 + $0x134] sm:$0xf]
      %v2633 = vld [vmem:[%s2590 + $0x138] sm:$0xff]
      %v2634 = vld [vmem:[%s2590 + $0x140] sm:$0xff]
      %v2635 = vld [vmem:[%s2590 + $0x148] sm:$0xff]
      %v2636 = vld [vmem:[%s2590 + $0x150] sm:$0xff]
      %v2637 = vld [vmem:[%s2590 + $0x158] sm:$0xff]
      %v2638 = vld [vmem:[%s2590 + $0x160] sm:$0xff]
      %v2639 = vld [vmem:[%s2590 + $0x168] sm:$0xf]
      %v2640 = vld [vmem:[%s2590 + $0x16c] sm:$0xff]
      %v2641 = vld [vmem:[%s2590 + $0x174] sm:$0xff]
      %v2642 = vld [vmem:[%s2590 + $0x17c] sm:$0xff]
      %v2643 = vld [vmem:[%s2590 + $0x184] sm:$0xff]
      %v2644 = vld [vmem:[%s2590 + $0x18c] sm:$0xff]
      %v2645 = vld [vmem:[%s2590 + $0x194] sm:$0xff]
      %v2646 = vld [vmem:[%s2590 + $0x19c] sm:$0xf]
      %v2703 = vunpack.c.l.b16 %v2591
      %v2704 = vunpack.c.h.b16 %v2591
      %v2705 = vunpack.c.l.b16 %v2592
      %v2706 = vunpack.c.h.b16 %v2592
      %v2707 = vunpack.c.l.b16 %v2593
      %v2708 = vunpack.c.h.b16 %v2593
      %v2709 = vunpack.c.l.b16 %v2594
      %v2710 = vunpack.c.h.b16 %v2594
      %v2711 = vunpack.c.l.b16 %v2595
      %v2712 = vunpack.c.h.b16 %v2595
      %v2713 = vunpack.c.l.b16 %v2596
      %v2714 = vunpack.c.h.b16 %v2596
      %v2715 = vunpack.c.l.b16 %v2597
      %v2716 = vunpack.c.l.b16 %v2598
      %v2717 = vunpack.c.h.b16 %v2598
      %v2718 = vunpack.c.l.b16 %v2599
      %v2719 = vunpack.c.h.b16 %v2599
      %v2720 = vunpack.c.l.b16 %v2600
      %v2721 = vunpack.c.h.b16 %v2600
      %v2722 = vunpack.c.l.b16 %v2601
      %v2723 = vunpack.c.h.b16 %v2601
      %v2724 = vunpack.c.l.b16 %v2602
      %v2725 = vunpack.c.h.b16 %v2602
      %v2726 = vunpack.c.l.b16 %v2603
      %v2727 = vunpack.c.h.b16 %v2603
      %v2728 = vunpack.c.l.b16 %v2604
      %v2729 = vunpack.c.l.b16 %v2605
      %v2730 = vunpack.c.h.b16 %v2605
      %v2731 = vunpack.c.l.b16 %v2606
      %v2732 = vunpack.c.h.b16 %v2606
      %v2733 = vunpack.c.l.b16 %v2607
      %v2734 = vunpack.c.h.b16 %v2607
      %v2735 = vunpack.c.l.b16 %v2608
      %v2736 = vunpack.c.h.b16 %v2608
      %v2737 = vunpack.c.l.b16 %v2609
      %v2738 = vunpack.c.h.b16 %v2609
      %v2739 = vunpack.c.l.b16 %v2610
      %v2740 = vunpack.c.h.b16 %v2610
      %v2741 = vunpack.c.l.b16 %v2611
      %v2742 = vunpack.c.l.b16 %v2612
      %v2743 = vunpack.c.h.b16 %v2612
      %v2744 = vunpack.c.l.b16 %v2613
      %v2745 = vunpack.c.h.b16 %v2613
      %v2746 = vunpack.c.l.b16 %v2614
      %v2747 = vunpack.c.h.b16 %v2614
      %v2748 = vunpack.c.l.b16 %v2615
      %v2749 = vunpack.c.h.b16 %v2615
      %v2750 = vunpack.c.l.b16 %v2616
      %v2751 = vunpack.c.h.b16 %v2616
      %v2752 = vunpack.c.l.b16 %v2617
      %v2753 = vunpack.c.h.b16 %v2617
      %v2754 = vunpack.c.l.b16 %v2618
      %v2755 = vunpack.c.l.b16 %v2619
      %v2756 = vunpack.c.h.b16 %v2619
      %v2757 = vunpack.c.l.b16 %v2620
      %v2758 = vunpack.c.h.b16 %v2620
      %v2759 = vunpack.c.l.b16 %v2621
      %v2760 = vunpack.c.h.b16 %v2621
      %v2761 = vunpack.c.l.b16 %v2622
      %v2762 = vunpack.c.h.b16 %v2622
      %v2763 = vunpack.c.l.b16 %v2623
      %v2764 = vunpack.c.h.b16 %v2623
      %v2765 = vunpack.c.l.b16 %v2624
      %v2766 = vunpack.c.h.b16 %v2624
      %v2767 = vunpack.c.l.b16 %v2625
      %v2768 = vunpack.c.l.b16 %v2626
      %v2769 = vunpack.c.h.b16 %v2626
      %v2770 = vunpack.c.l.b16 %v2627
      %v2771 = vunpack.c.h.b16 %v2627
      %v2772 = vunpack.c.l.b16 %v2628
      %v2773 = vunpack.c.h.b16 %v2628
      %v2774 = vunpack.c.l.b16 %v2629
      %v2775 = vunpack.c.h.b16 %v2629
      %v2776 = vunpack.c.l.b16 %v2630
      %v2777 = vunpack.c.h.b16 %v2630
      %v2778 = vunpack.c.l.b16 %v2631
      %v2779 = vunpack.c.h.b16 %v2631
      %v2780 = vunpack.c.l.b16 %v2632
      %v2781 = vunpack.c.l.b16 %v2633
      %v2782 = vunpack.c.h.b16 %v2633
      %v2783 = vunpack.c.l.b16 %v2634
      %v2784 = vunpack.c.h.b16 %v2634
      %v2785 = vunpack.c.l.b16 %v2635
      %v2786 = vunpack.c.h.b16 %v2635
      %v2787 = vunpack.c.l.b16 %v2636
      %v2788 = vunpack.c.h.b16 %v2636
      %v2789 = vunpack.c.l.b16 %v2637
      %v2790 = vunpack.c.h.b16 %v2637
      %v2791 = vunpack.c.l.b16 %v2638
      %v2792 = vunpack.c.h.b16 %v2638
      %v2793 = vunpack.c.l.b16 %v2639
      %v2794 = vunpack.c.l.b16 %v2640
      %v2795 = vunpack.c.h.b16 %v2640
      %v2796 = vunpack.c.l.b16 %v2641
      %v2797 = vunpack.c.h.b16 %v2641
      %v2798 = vunpack.c.l.b16 %v2642
      %v2799 = vunpack.c.h.b16 %v2642
      %v2800 = vunpack.c.l.b16 %v2643
      %v2801 = vunpack.c.h.b16 %v2643
      %v2802 = vunpack.c.l.b16 %v2644
      %v2803 = vunpack.c.h.b16 %v2644
      %v2804 = vunpack.c.l.b16 %v2645
      %v2805 = vunpack.c.h.b16 %v2645
      %v2806 = vunpack.c.l.b16 %v2646
      %v2807 = vpack.c.b16 %v2716, %v2703
      %v2808 = vpack.c.b16 %v2717, %v2704
      %v2809 = vpack.c.b16 %v2718, %v2705
      %v2810 = vpack.c.b16 %v2719, %v2706
      %v2811 = vpack.c.b16 %v2720, %v2707
      %v2812 = vpack.c.b16 %v2721, %v2708
      %v2813 = vpack.c.b16 %v2722, %v2709
      %v2814 = vpack.c.b16 %v2723, %v2710
      %v2815 = vpack.c.b16 %v2724, %v2711
      %v2816 = vpack.c.b16 %v2725, %v2712
      %v2817 = vpack.c.b16 %v2726, %v2713
      %v2818 = vpack.c.b16 %v2727, %v2714
      %v2819 = vpack.c.b16 %v2728, %v2715
      %v2820 = vpack.c.b16 %v2742, %v2729
      %v2821 = vpack.c.b16 %v2743, %v2730
      %v2822 = vpack.c.b16 %v2744, %v2731
      %v2823 = vpack.c.b16 %v2745, %v2732
      %v2824 = vpack.c.b16 %v2746, %v2733
      %v2825 = vpack.c.b16 %v2747, %v2734
      %v2826 = vpack.c.b16 %v2748, %v2735
      %v2827 = vpack.c.b16 %v2749, %v2736
      %v2828 = vpack.c.b16 %v2750, %v2737
      %v2829 = vpack.c.b16 %v2751, %v2738
      %v2830 = vpack.c.b16 %v2752, %v2739
      %v2831 = vpack.c.b16 %v2753, %v2740
      %v2832 = vpack.c.b16 %v2754, %v2741
      %v2833 = vpack.c.b16 %v2768, %v2755
      %v2834 = vpack.c.b16 %v2769, %v2756
      %v2835 = vpack.c.b16 %v2770, %v2757
      %v2836 = vpack.c.b16 %v2771, %v2758
      %v2837 = vpack.c.b16 %v2772, %v2759
      %v2838 = vpack.c.b16 %v2773, %v2760
      %v2839 = vpack.c.b16 %v2774, %v2761
      %v2840 = vpack.c.b16 %v2775, %v2762
      %v2841 = vpack.c.b16 %v2776, %v2763
      %v2842 = vpack.c.b16 %v2777, %v2764
      %v2843 = vpack.c.b16 %v2778, %v2765
      %v2844 = vpack.c.b16 %v2779, %v2766
      %v2845 = vpack.c.b16 %v2780, %v2767
      %v2846 = vpack.c.b16 %v2794, %v2781
      %v2847 = vpack.c.b16 %v2795, %v2782
      %v2848 = vpack.c.b16 %v2796, %v2783
      %v2849 = vpack.c.b16 %v2797, %v2784
      %v2850 = vpack.c.b16 %v2798, %v2785
      %v2851 = vpack.c.b16 %v2799, %v2786
      %v2852 = vpack.c.b16 %v2800, %v2787
      %v2853 = vpack.c.b16 %v2801, %v2788
      %v2854 = vpack.c.b16 %v2802, %v2789
      %v2855 = vpack.c.b16 %v2803, %v2790
      %v2856 = vpack.c.b16 %v2804, %v2791
      %v2857 = vpack.c.b16 %v2805, %v2792
      %v2858 = vpack.c.b16 %v2806, %v2793
      %v2908 = vsel %vm1330, %v2819, 0
      %v2911 = vsel %vm1330, %v2832, 0
      %v2914 = vsel %vm1330, %v2845, 0
      %v2917 = vsel %vm1330, %v2858, 0
      %2919 = vmatprep.subr.bf16.mxu0 0
      %2920 = vmatpush1.bf16.msra.mxu0 %v1130
      %2921 = vmatprep.subr.bf16.mxu0 0
      %2922 = vmatpush1.bf16.msra.mxu0 %v1131
      %2923 = vmatprep.subr.bf16.mxu0 0
      %2924 = vmatpush1.bf16.msra.mxu0 %v1132
      %2925 = vmatprep.subr.bf16.mxu0 0
      %2926 = vmatpush1.bf16.msra.mxu0 %v1133
      %2927 = vmatprep.subr.bf16.mxu0 0
      %2928 = vmatpush1.bf16.msra.mxu0 %v1134
      %2929 = vmatprep.subr.bf16.mxu0 0
      %2930 = vmatpush1.bf16.msra.mxu0 %v1135
      %2931 = vmatprep.subr.bf16.mxu0 0
      %2932 = vmatpush1.bf16.msra.mxu0 %v1136
      %2933 = vmatprep.subr.bf16.mxu0 0
      %2934 = vmatpush1.bf16.msra.mxu0 %v1137
      %2935 = vmatprep.subr.bf16.mxu0 0
      %2936 = vmatpush1.bf16.msra.mxu0 %v1138
      %2937 = vmatprep.subr.bf16.mxu0 0
      %2938 = vmatpush1.bf16.msra.mxu0 %v1139
      %2939 = vmatprep.subr.bf16.mxu0 0
      %2940 = vmatpush1.bf16.msra.mxu0 %v1140
      %2941 = vmatprep.subr.bf16.mxu0 0
      %2942 = vmatpush1.bf16.msra.mxu0 %v1141
      %2943 = vmatprep.subr.bf16.mxu0 0
      %2944 = vmatpush1.bf16.msra.mxu0 %v1142
      %2945 = vmatprep.subr.bf16.mxu0 0
      %2946 = vmatpush1.bf16.msra.mxu0 %v1143
      %2947 = vmatprep.subr.bf16.mxu0 0
      %2948 = vmatpush1.bf16.msra.mxu0 %v1144
      %2949 = vmatprep.subr.bf16.mxu0 0
      %2950 = vmatpush1.bf16.msra.mxu0 %v1145
      %2951 = vmatprep.mubr.bf16.mxu0 %v2808
      %2952 = vmatmul.mubr.bf16.gmra.mrb[0].mxu0 %v2807
      %v2953 = vpop.f32.mrb[0].mxu0
      %v2954 = vadd.f32 0.0, %v2953
      %v2955 = vpop.f32.mrb[0].mxu0
      %v2956 = vpop.f32.mrb[0].mxu0
      %v2957 = vadd.f32 0.0, %v2956
      %v2958 = vpop.f32.mrb[0].mxu0
      %2959 = vmatprep.mubr.bf16.mxu0 %v2821
      %2960 = vmatmul.mubr.bf16.gmra.mrb[0].mxu0 %v2820
      %v2961 = vpop.f32.mrb[0].mxu0
      %v2962 = vadd.f32 0.0, %v2961
      %v2963 = vpop.f32.mrb[0].mxu0
      %v2964 = vpop.f32.mrb[0].mxu0
      %v2965 = vadd.f32 0.0, %v2964
      %v2966 = vpop.f32.mrb[0].mxu0
      %2967 = vmatprep.mubr.bf16.mxu0 %v2834
      %2968 = vmatmul.mubr.bf16.gmra.mrb[0].mxu0 %v2833
      %v2969 = vpop.f32.mrb[0].mxu0
      %v2970 = vadd.f32 0.0, %v2969
      %v2971 = vpop.f32.mrb[0].mxu0
      %v2972 = vpop.f32.mrb[0].mxu0
      %v2973 = vadd.f32 0.0, %v2972
      %v2974 = vpop.f32.mrb[0].mxu0
      %2975 = vmatprep.mubr.bf16.mxu0 %v2847
      %2976 = vmatmul.mubr.bf16.gmra.mrb[0].mxu0 %v2846
      %v2977 = vpop.f32.mrb[0].mxu0
      %v2978 = vadd.f32 0.0, %v2977
      %v2979 = vpop.f32.mrb[0].mxu0
      %v2980 = vpop.f32.mrb[0].mxu0
      %v2981 = vadd.f32 0.0, %v2980
      %v2982 = vpop.f32.mrb[0].mxu0
      %2983 = vdwg.mxu0
      %2984 = vmatprep.subr.bf16.mxu0 0
      %2985 = vmatpush1.bf16.msra.mxu0 %v1146
      %2986 = vmatprep.subr.bf16.mxu0 0
      %2987 = vmatpush1.bf16.msra.mxu0 %v1147
      %2988 = vmatprep.subr.bf16.mxu0 0
      %2989 = vmatpush1.bf16.msra.mxu0 %v1148
      %2990 = vmatprep.subr.bf16.mxu0 0
      %2991 = vmatpush1.bf16.msra.mxu0 %v1149
      %2992 = vmatprep.subr.bf16.mxu0 0
      %2993 = vmatpush1.bf16.msra.mxu0 %v1150
      %2994 = vmatprep.subr.bf16.mxu0 0
      %2995 = vmatpush1.bf16.msra.mxu0 %v1151
      %2996 = vmatprep.subr.bf16.mxu0 0
      %2997 = vmatpush1.bf16.msra.mxu0 %v1152
      %2998 = vmatprep.subr.bf16.mxu0 0
      %2999 = vmatpush1.bf16.msra.mxu0 %v1153
      %3000 = vmatprep.subr.bf16.mxu0 0
      %3001 = vmatpush1.bf16.msra.mxu0 %v1154
      %3002 = vmatprep.subr.bf16.mxu0 0
      %3003 = vmatpush1.bf16.msra.mxu0 %v1155
      %3004 = vmatprep.subr.bf16.mxu0 0
      %3005 = vmatpush1.bf16.msra.mxu0 %v1156
      %3006 = vmatprep.subr.bf16.mxu0 0
      %3007 = vmatpush1.bf16.msra.mxu0 %v1157
      %3008 = vmatprep.subr.bf16.mxu0 0
      %3009 = vmatpush1.bf16.msra.mxu0 %v1158
      %3010 = vmatprep.subr.bf16.mxu0 0
      %3011 = vmatpush1.bf16.msra.mxu0 %v1159
      %3012 = vmatprep.subr.bf16.mxu0 0
      %3013 = vmatpush1.bf16.msra.mxu0 %v1160
      %3014 = vmatprep.subr.bf16.mxu0 0
      %3015 = vmatpush1.bf16.msra.mxu0 %v1161
      %3016 = vmatprep.mubr.bf16.mxu0 %v2810
      %3017 = vmatmul.mubr.bf16.gmra.mrb[0].mxu0 %v2809
      %v3018 = vpop.f32.mrb[0].mxu0
      %v3019 = vadd.f32 %v2954, %v3018
      %v3020 = vpop.f32.mrb[0].mxu0
      %v3021 = vpop.f32.mrb[0].mxu0
      %v3022 = vadd.f32 %v2957, %v3021
      %v3023 = vpop.f32.mrb[0].mxu0
      %3024 = vmatprep.mubr.bf16.mxu0 %v2823
      %3025 = vmatmul.mubr.bf16.gmra.mrb[0].mxu0 %v2822
      %v3026 = vpop.f32.mrb[0].mxu0
      %v3027 = vadd.f32 %v2962, %v3026
      %v3028 = vpop.f32.mrb[0].mxu0
      %v3029 = vpop.f32.mrb[0].mxu0
      %v3030 = vadd.f32 %v2965, %v3029
      %v3031 = vpop.f32.mrb[0].mxu0
      %3032 = vmatprep.mubr.bf16.mxu0 %v2836
      %3033 = vmatmul.mubr.bf16.gmra.mrb[0].mxu0 %v2835
      %v3034 = vpop.f32.mrb[0].mxu0
      %v3035 = vadd.f32 %v2970, %v3034
      %v3036 = vpop.f32.mrb[0].mxu0
      %v3037 = vpop.f32.mrb[0].mxu0
      %v3038 = vadd.f32 %v2973, %v3037
      %v3039 = vpop.f32.mrb[0].mxu0
      %3040 = vmatprep.mubr.bf16.mxu0 %v2849
      %3041 = vmatmul.mubr.bf16.gmra.mrb[0].mxu0 %v2848
      %v3042 = vpop.f32.mrb[0].mxu0
      %v3043 = vadd.f32 %v2978, %v3042
      %v3044 = vpop.f32.mrb[0].mxu0
      %v3045 = vpop.f32.mrb[0].mxu0
      %v3046 = vadd.f32 %v2981, %v3045
      %v3047 = vpop.f32.mrb[0].mxu0
      %3048 = vdwg.mxu0
      %3049 = vmatprep.subr.bf16.mxu0 0
      %3050 = vmatpush1.bf16.msra.mxu0 %v1162
      %3051 = vmatprep.subr.bf16.mxu0 0
      %3052 = vmatpush1.bf16.msra.mxu0 %v1163
      %3053 = vmatprep.subr.bf16.mxu0 0
      %3054 = vmatpush1.bf16.msra.mxu0 %v1164
      %3055 = vmatprep.subr.bf16.mxu0 0
      %3056 = vmatpush1.bf16.msra.mxu0 %v1165
      %3057 = vmatprep.subr.bf16.mxu0 0
      %3058 = vmatpush1.bf16.msra.mxu0 %v1166
      %3059 = vmatprep.subr.bf16.mxu0 0
      %3060 = vmatpush1.bf16.msra.mxu0 %v1167
      %3061 = vmatprep.subr.bf16.mxu0 0
      %3062 = vmatpush1.bf16.msra.mxu0 %v1168
      %3063 = vmatprep.subr.bf16.mxu0 0
      %3064 = vmatpush1.bf16.msra.mxu0 %v1169
      %3065 = vmatprep.subr.bf16.mxu0 0
      %3066 = vmatpush1.bf16.msra.mxu0 %v1170
      %3067 = vmatprep.subr.bf16.mxu0 0
      %3068 = vmatpush1.bf16.msra.mxu0 %v1171
      %3069 = vmatprep.subr.bf16.mxu0 0
      %3070 = vmatpush1.bf16.msra.mxu0 %v1172
      %3071 = vmatprep.subr.bf16.mxu0 0
      %3072 = vmatpush1.bf16.msra.mxu0 %v1173
      %3073 = vmatprep.subr.bf16.mxu0 0
      %3074 = vmatpush1.bf16.msra.mxu0 %v1174
      %3075 = vmatprep.subr.bf16.mxu0 0
      %3076 = vmatpush1.bf16.msra.mxu0 %v1175
      %3077 = vmatprep.subr.bf16.mxu0 0
      %3078 = vmatpush1.bf16.msra.mxu0 %v1176
      %3079 = vmatprep.subr.bf16.mxu0 0
      %3080 = vmatpush1.bf16.msra.mxu0 %v1177
      %3081 = vmatprep.mubr.bf16.mxu0 %v2812
      %3082 = vmatmul.mubr.bf16.gmra.mrb[0].mxu0 %v2811
      %v3083 = vpop.f32.mrb[0].mxu0
      %v3084 = vadd.f32 %v3019, %v3083
      %v3085 = vpop.f32.mrb[0].mxu0
      %v3086 = vpop.f32.mrb[0].mxu0
      %v3087 = vadd.f32 %v3022, %v3086
      %v3088 = vpop.f32.mrb[0].mxu0
      %3089 = vmatprep.mubr.bf16.mxu0 %v2825
      %3090 = vmatmul.mubr.bf16.gmra.mrb[0].mxu0 %v2824
      %v3091 = vpop.f32.mrb[0].mxu0
      %v3092 = vadd.f32 %v3027, %v3091
      %v3093 = vpop.f32.mrb[0].mxu0
      %v3094 = vpop.f32.mrb[0].mxu0
      %v3095 = vadd.f32 %v3030, %v3094
      %v3096 = vpop.f32.mrb[0].mxu0
      %3097 = vmatprep.mubr.bf16.mxu0 %v2838
      %3098 = vmatmul.mubr.bf16.gmra.mrb[0].mxu0 %v2837
      %v3099 = vpop.f32.mrb[0].mxu0
      %v3100 = vadd.f32 %v3035, %v3099
      %v3101 = vpop.f32.mrb[0].mxu0
      %v3102 = vpop.f32.mrb[0].mxu0
      %v3103 = vadd.f32 %v3038, %v3102
      %v3104 = vpop.f32.mrb[0].mxu0
      %3105 = vmatprep.mubr.bf16.mxu0 %v2851
      %3106 = vmatmul.mubr.bf16.gmra.mrb[0].mxu0 %v2850
      %v3107 = vpop.f32.mrb[0].mxu0
      %v3108 = vadd.f32 %v3043, %v3107
      %v3109 = vpop.f32.mrb[0].mxu0
      %v3110 = vpop.f32.mrb[0].mxu0
      %v3111 = vadd.f32 %v3046, %v3110
      %v3112 = vpop.f32.mrb[0].mxu0
      %3113 = vdwg.mxu0
      %3114 = vmatprep.subr.bf16.mxu0 0
      %3115 = vmatpush1.bf16.msra.mxu0 %v1178
      %3116 = vmatprep.subr.bf16.mxu0 0
      %3117 = vmatpush1.bf16.msra.mxu0 %v1179
      %3118 = vmatprep.subr.bf16.mxu0 0
      %3119 = vmatpush1.bf16.msra.mxu0 %v1180
      %3120 = vmatprep.subr.bf16.mxu0 0
      %3121 = vmatpush1.bf16.msra.mxu0 %v1181
      %3122 = vmatprep.subr.bf16.mxu0 0
      %3123 = vmatpush1.bf16.msra.mxu0 %v1182
      %3124 = vmatprep.subr.bf16.mxu0 0
      %3125 = vmatpush1.bf16.msra.mxu0 %v1183
      %3126 = vmatprep.subr.bf16.mxu0 0
      %3127 = vmatpush1.bf16.msra.mxu0 %v1184
      %3128 = vmatprep.subr.bf16.mxu0 0
      %3129 = vmatpush1.bf16.msra.mxu0 %v1185
      %3130 = vmatprep.subr.bf16.mxu0 0
      %3131 = vmatpush1.bf16.msra.mxu0 %v1186
      %3132 = vmatprep.subr.bf16.mxu0 0
      %3133 = vmatpush1.bf16.msra.mxu0 %v1187
      %3134 = vmatprep.subr.bf16.mxu0 0
      %3135 = vmatpush1.bf16.msra.mxu0 %v1188
      %3136 = vmatprep.subr.bf16.mxu0 0
      %3137 = vmatpush1.bf16.msra.mxu0 %v1189
      %3138 = vmatprep.subr.bf16.mxu0 0
      %3139 = vmatpush1.bf16.msra.mxu0 %v1190
      %3140 = vmatprep.subr.bf16.mxu0 0
      %3141 = vmatpush1.bf16.msra.mxu0 %v1191
      %3142 = vmatprep.subr.bf16.mxu0 0
      %3143 = vmatpush1.bf16.msra.mxu0 %v1192
      %3144 = vmatprep.subr.bf16.mxu0 0
      %3145 = vmatpush1.bf16.msra.mxu0 %v1193
      %3146 = vmatprep.mubr.bf16.mxu0 %v2814
      %3147 = vmatmul.mubr.bf16.gmra.mrb[0].mxu0 %v2813
      %v3148 = vpop.f32.mrb[0].mxu0
      %v3149 = vadd.f32 %v3084, %v3148
      %v3150 = vpop.f32.mrb[0].mxu0
      %v3151 = vpop.f32.mrb[0].mxu0
      %v3152 = vadd.f32 %v3087, %v3151
      %v3153 = vpop.f32.mrb[0].mxu0
      %3154 = vmatprep.mubr.bf16.mxu0 %v2827
      %3155 = vmatmul.mubr.bf16.gmra.mrb[0].mxu0 %v2826
      %v3156 = vpop.f32.mrb[0].mxu0
      %v3157 = vadd.f32 %v3092, %v3156
      %v3158 = vpop.f32.mrb[0].mxu0
      %v3159 = vpop.f32.mrb[0].mxu0
      %v3160 = vadd.f32 %v3095, %v3159
      %v3161 = vpop.f32.mrb[0].mxu0
      %3162 = vmatprep.mubr.bf16.mxu0 %v2840
      %3163 = vmatmul.mubr.bf16.gmra.mrb[0].mxu0 %v2839
      %v3164 = vpop.f32.mrb[0].mxu0
      %v3165 = vadd.f32 %v3100, %v3164
      %v3166 = vpop.f32.mrb[0].mxu0
      %v3167 = vpop.f32.mrb[0].mxu0
      %v3168 = vadd.f32 %v3103, %v3167
      %v3169 = vpop.f32.mrb[0].mxu0
      %3170 = vmatprep.mubr.bf16.mxu0 %v2853
      %3171 = vmatmul.mubr.bf16.gmra.mrb[0].mxu0 %v2852
      %v3172 = vpop.f32.mrb[0].mxu0
      %v3173 = vadd.f32 %v3108, %v3172
      %v3174 = vpop.f32.mrb[0].mxu0
      %v3175 = vpop.f32.mrb[0].mxu0
      %v3176 = vadd.f32 %v3111, %v3175
      %v3177 = vpop.f32.mrb[0].mxu0
      %3178 = vdwg.mxu0
      %3179 = vmatprep.subr.bf16.mxu0 0
      %3180 = vmatpush1.bf16.msra.mxu0 %v1194
      %3181 = vmatprep.subr.bf16.mxu0 0
      %3182 = vmatpush1.bf16.msra.mxu0 %v1195
      %3183 = vmatprep.subr.bf16.mxu0 0
      %3184 = vmatpush1.bf16.msra.mxu0 %v1196
      %3185 = vmatprep.subr.bf16.mxu0 0
      %3186 = vmatpush1.bf16.msra.mxu0 %v1197
      %3187 = vmatprep.subr.bf16.mxu0 0
      %3188 = vmatpush1.bf16.msra.mxu0 %v1198
      %3189 = vmatprep.subr.bf16.mxu0 0
      %3190 = vmatpush1.bf16.msra.mxu0 %v1199
      %3191 = vmatprep.subr.bf16.mxu0 0
      %3192 = vmatpush1.bf16.msra.mxu0 %v1200
      %3193 = vmatprep.subr.bf16.mxu0 0
      %3194 = vmatpush1.bf16.msra.mxu0 %v1201
      %3195 = vmatprep.subr.bf16.mxu0 0
      %3196 = vmatpush1.bf16.msra.mxu0 %v1202
      %3197 = vmatprep.subr.bf16.mxu0 0
      %3198 = vmatpush1.bf16.msra.mxu0 %v1203
      %3199 = vmatprep.subr.bf16.mxu0 0
      %3200 = vmatpush1.bf16.msra.mxu0 %v1204
      %3201 = vmatprep.subr.bf16.mxu0 0
      %3202 = vmatpush1.bf16.msra.mxu0 %v1205
      %3203 = vmatprep.subr.bf16.mxu0 0
      %3204 = vmatpush1.bf16.msra.mxu0 %v1206
      %3205 = vmatprep.subr.bf16.mxu0 0
      %3206 = vmatpush1.bf16.msra.mxu0 %v1207
      %3207 = vmatprep.subr.bf16.mxu0 0
      %3208 = vmatpush1.bf16.msra.mxu0 %v1208
      %3209 = vmatprep.subr.bf16.mxu0 0
      %3210 = vmatpush1.bf16.msra.mxu0 %v1209
      %3211 = vmatprep.mubr.bf16.mxu0 %v2816
      %3212 = vmatmul.mubr.bf16.gmra.mrb[0].mxu0 %v2815
      %v3213 = vpop.f32.mrb[0].mxu0
      %v3214 = vadd.f32 %v3149, %v3213
      %v3215 = vpop.f32.mrb[0].mxu0
      %v3216 = vpop.f32.mrb[0].mxu0
      %v3217 = vadd.f32 %v3152, %v3216
      %v3218 = vpop.f32.mrb[0].mxu0
      %3219 = vmatprep.mubr.bf16.mxu0 %v2829
      %3220 = vmatmul.mubr.bf16.gmra.mrb[0].mxu0 %v2828
      %v3221 = vpop.f32.mrb[0].mxu0
      %v3222 = vadd.f32 %v3157, %v3221
      %v3223 = vpop.f32.mrb[0].mxu0
      %v3224 = vpop.f32.mrb[0].mxu0
      %v3225 = vadd.f32 %v3160, %v3224
      %v3226 = vpop.f32.mrb[0].mxu0
      %3227 = vmatprep.mubr.bf16.mxu0 %v2842
      %3228 = vmatmul.mubr.bf16.gmra.mrb[0].mxu0 %v2841
      %v3229 = vpop.f32.mrb[0].mxu0
      %v3230 = vadd.f32 %v3165, %v3229
      %v3231 = vpop.f32.mrb[0].mxu0
      %v3232 = vpop.f32.mrb[0].mxu0
      %v3233 = vadd.f32 %v3168, %v3232
      %v3234 = vpop.f32.mrb[0].mxu0
      %3235 = vmatprep.mubr.bf16.mxu0 %v2855
      %3236 = vmatmul.mubr.bf16.gmra.mrb[0].mxu0 %v2854
      %v3237 = vpop.f32.mrb[0].mxu0
      %v3238 = vadd.f32 %v3173, %v3237
      %v3239 = vpop.f32.mrb[0].mxu0
      %v3240 = vpop.f32.mrb[0].mxu0
      %v3241 = vadd.f32 %v3176, %v3240
      %v3242 = vpop.f32.mrb[0].mxu0
      %3243 = vdwg.mxu0
      %3244 = vmatprep.subr.bf16.mxu0 0
      %3245 = vmatpush1.bf16.msra.mxu0 %v1210
      %3246 = vmatprep.subr.bf16.mxu0 0
      %3247 = vmatpush1.bf16.msra.mxu0 %v1211
      %3248 = vmatprep.subr.bf16.mxu0 0
      %3249 = vmatpush1.bf16.msra.mxu0 %v1212
      %3250 = vmatprep.subr.bf16.mxu0 0
      %3251 = vmatpush1.bf16.msra.mxu0 %v1213
      %3252 = vmatprep.subr.bf16.mxu0 0
      %3253 = vmatpush1.bf16.msra.mxu0 %v1214
      %3254 = vmatprep.subr.bf16.mxu0 0
      %3255 = vmatpush1.bf16.msra.mxu0 %v1215
      %3256 = vmatprep.subr.bf16.mxu0 0
      %3257 = vmatpush1.bf16.msra.mxu0 %v1216
      %3258 = vmatprep.subr.bf16.mxu0 0
      %3259 = vmatpush1.bf16.msra.mxu0 %v1217
      %3260 = vmatprep.subr.bf16.mxu0 0
      %3261 = vmatpush1.bf16.msra.mxu0 %v1218
      %3262 = vmatprep.subr.bf16.mxu0 0
      %3263 = vmatpush1.bf16.msra.mxu0 %v1219
      %3264 = vmatprep.subr.bf16.mxu0 0
      %3265 = vmatpush1.bf16.msra.mxu0 %v1220
      %3266 = vmatprep.subr.bf16.mxu0 0
      %3267 = vmatpush1.bf16.msra.mxu0 %v1221
      %3268 = vmatprep.subr.bf16.mxu0 0
      %3269 = vmatpush1.bf16.msra.mxu0 %v1222
      %3270 = vmatprep.subr.bf16.mxu0 0
      %3271 = vmatpush1.bf16.msra.mxu0 %v1223
      %3272 = vmatprep.subr.bf16.mxu0 0
      %3273 = vmatpush1.bf16.msra.mxu0 %v1224
      %3274 = vmatprep.subr.bf16.mxu0 0
      %3275 = vmatpush1.bf16.msra.mxu0 %v1225
      %3276 = vmatprep.mubr.bf16.mxu0 %v2818
      %3277 = vmatmul.mubr.bf16.gmra.mrb[0].mxu0 %v2817
      %v3278 = vpop.f32.mrb[0].mxu0
      %v3279 = vadd.f32 %v3214, %v3278
      %v3280 = vpop.f32.mrb[0].mxu0
      %v3281 = vpop.f32.mrb[0].mxu0
      %v3282 = vadd.f32 %v3217, %v3281
      %v3283 = vpop.f32.mrb[0].mxu0
      %3284 = vmatprep.mubr.bf16.mxu0 %v2831
      %3285 = vmatmul.mubr.bf16.gmra.mrb[0].mxu0 %v2830
      %v3286 = vpop.f32.mrb[0].mxu0
      %v3287 = vadd.f32 %v3222, %v3286
      %v3288 = vpop.f32.mrb[0].mxu0
      %v3289 = vpop.f32.mrb[0].mxu0
      %v3290 = vadd.f32 %v3225, %v3289
      %v3291 = vpop.f32.mrb[0].mxu0
      %3292 = vmatprep.mubr.bf16.mxu0 %v2844
      %3293 = vmatmul.mubr.bf16.gmra.mrb[0].mxu0 %v2843
      %v3294 = vpop.f32.mrb[0].mxu0
      %v3295 = vadd.f32 %v3230, %v3294
      %v3296 = vpop.f32.mrb[0].mxu0
      %v3297 = vpop.f32.mrb[0].mxu0
      %v3298 = vadd.f32 %v3233, %v3297
      %v3299 = vpop.f32.mrb[0].mxu0
      %3300 = vmatprep.mubr.bf16.mxu0 %v2857
      %3301 = vmatmul.mubr.bf16.gmra.mrb[0].mxu0 %v2856
      %v3302 = vpop.f32.mrb[0].mxu0
      %v3303 = vadd.f32 %v3238, %v3302
      %v3304 = vpop.f32.mrb[0].mxu0
      %v3305 = vpop.f32.mrb[0].mxu0
      %v3306 = vadd.f32 %v3241, %v3305
      %v3307 = vpop.f32.mrb[0].mxu0
      %3308 = vdwg.mxu0
      %3309 = vmatprep.subr.bf16.mxu0 0
      %3310 = vmatpush1.bf16.msra.mxu0 %v1226
      %3311 = vmatprep.subr.bf16.mxu0 0
      %3312 = vmatpush1.bf16.msra.mxu0 %v1227
      %3313 = vmatprep.subr.bf16.mxu0 0
      %3314 = vmatpush1.bf16.msra.mxu0 %v1228
      %3315 = vmatprep.subr.bf16.mxu0 0
      %3316 = vmatpush1.bf16.msra.mxu0 %v1229
      %3317 = vmatprep.subr.bf16.mxu0 0
      %3318 = vmatpush1.bf16.msra.mxu0 0
      %3319 = vmatprep.subr.bf16.mxu0 0
      %3320 = vmatpush1.bf16.msra.mxu0 0
      %3321 = vmatprep.subr.bf16.mxu0 0
      %3322 = vmatpush1.bf16.msra.mxu0 0
      %3323 = vmatprep.subr.bf16.mxu0 0
      %3324 = vmatpush1.bf16.msra.mxu0 0
      %3325 = vmatprep.subr.bf16.mxu0 0
      %3326 = vmatpush1.bf16.msra.mxu0 0
      %3327 = vmatprep.subr.bf16.mxu0 0
      %3328 = vmatpush1.bf16.msra.mxu0 0
      %3329 = vmatprep.subr.bf16.mxu0 0
      %3330 = vmatpush1.bf16.msra.mxu0 0
      %3331 = vmatprep.subr.bf16.mxu0 0
      %3332 = vmatpush1.bf16.msra.mxu0 0
      %3333 = vmatprep.subr.bf16.mxu0 0
      %3334 = vmatpush1.bf16.msra.mxu0 0
      %3335 = vmatprep.subr.bf16.mxu0 0
      %3336 = vmatpush1.bf16.msra.mxu0 0
      %3337 = vmatprep.subr.bf16.mxu0 0
      %3338 = vmatpush1.bf16.msra.mxu0 0
      %3339 = vmatprep.subr.bf16.mxu0 0
      %3340 = vmatpush1.bf16.msra.mxu0 0
      %3341 = vmatprep.mubr.bf16.mxu0 0
      %3342 = vmatmul.mubr.bf16.gmra.mrb[0].mxu0 %v2908
      %v3343 = vpop.f32.mrb[0].mxu0
      %v3344 = vadd.f32 %v3279, %v3343
      %v3345 = vpop.f32.mrb[0].mxu0
      %v3346 = vpop.f32.mrb[0].mxu0
      %v3347 = vadd.f32 %v3282, %v3346
      %v3348 = vpop.f32.mrb[0].mxu0
      %3349 = vmatprep.mubr.bf16.mxu0 0
      %3350 = vmatmul.mubr.bf16.gmra.mrb[0].mxu0 %v2911
      %v3351 = vpop.f32.mrb[0].mxu0
      %v3352 = vadd.f32 %v3287, %v3351
      %v3353 = vpop.f32.mrb[0].mxu0
      %v3354 = vpop.f32.mrb[0].mxu0
      %v3355 = vadd.f32 %v3290, %v3354
      %v3356 = vpop.f32.mrb[0].mxu0
      %3357 = vmatprep.mubr.bf16.mxu0 0
      %3358 = vmatmul.mubr.bf16.gmra.mrb[0].mxu0 %v2914
      %v3359 = vpop.f32.mrb[0].mxu0
      %v3360 = vadd.f32 %v3295, %v3359
      %v3361 = vpop.f32.mrb[0].mxu0
      %v3362 = vpop.f32.mrb[0].mxu0
      %v3363 = vadd.f32 %v3298, %v3362
      %v3364 = vpop.f32.mrb[0].mxu0
      %3365 = vmatprep.mubr.bf16.mxu0 0
      %3366 = vmatmul.mubr.bf16.gmra.mrb[0].mxu0 %v2917
      %v3367 = vpop.f32.mrb[0].mxu0
      %v3368 = vadd.f32 %v3303, %v3367
      %v3369 = vpop.f32.mrb[0].mxu0
      %v3370 = vpop.f32.mrb[0].mxu0
      %v3371 = vadd.f32 %v3306, %v3370
      %v3372 = vpop.f32.mrb[0].mxu0
      %3373 = vdwg.mxu0
      %v3374 = vmax.f32 %v2582, %v3344
      %v3375 = vmax.f32 %v2583, %v3347
      %v3376 = vmax.f32 %v2584, %v3352
      %v3377 = vmax.f32 %v2585, %v3355
      %v3378 = vmax.f32 %v2586, %v3360
      %v3379 = vmax.f32 %v2587, %v3363
      %v3380 = vmax.f32 %v2588, %v3368
      %v3381 = vmax.f32 %v2589, %v3371
      %s3382 = scalar_lea.vmem %s201, 1248
      %v3383 = vld [vmem:[%s3382] sm:$0xff]
      %v3384 = vld [vmem:[%s3382 + $0x8] sm:$0xff]
      %v3385 = vld [vmem:[%s3382 + $0x10] sm:$0xff]
      %v3386 = vld [vmem:[%s3382 + $0x18] sm:$0xff]
      %v3387 = vld [vmem:[%s3382 + $0x20] sm:$0xff]
      %v3388 = vld [vmem:[%s3382 + $0x28] sm:$0xff]
      %v3389 = vld [vmem:[%s3382 + $0x30] sm:$0xf]
      %v3390 = vld [vmem:[%s3382 + $0x34] sm:$0xff]
      %v3391 = vld [vmem:[%s3382 + $0x3c] sm:$0xff]
      %v3392 = vld [vmem:[%s3382 + $0x44] sm:$0xff]
      %v3393 = vld [vmem:[%s3382 + $0x4c] sm:$0xff]
      %v3394 = vld [vmem:[%s3382 + $0x54] sm:$0xff]
      %v3395 = vld [vmem:[%s3382 + $0x5c] sm:$0xff]
      %v3396 = vld [vmem:[%s3382 + $0x64] sm:$0xf]
      %v3397 = vld [vmem:[%s3382 + $0x68] sm:$0xff]
      %v3398 = vld [vmem:[%s3382 + $0x70] sm:$0xff]
      %v3399 = vld [vmem:[%s3382 + $0x78] sm:$0xff]
      %v3400 = vld [vmem:[%s3382 + $0x80] sm:$0xff]
      %v3401 = vld [vmem:[%s3382 + $0x88] sm:$0xff]
      %v3402 = vld [vmem:[%s3382 + $0x90] sm:$0xff]
      %v3403 = vld [vmem:[%s3382 + $0x98] sm:$0xf]
      %v3404 = vld [vmem:[%s3382 + $0x9c] sm:$0xff]
      %v3405 = vld [vmem:[%s3382 + $0xa4] sm:$0xff]
      %v3406 = vld [vmem:[%s3382 + $0xac] sm:$0xff]
      %v3407 = vld [vmem:[%s3382 + $0xb4] sm:$0xff]
      %v3408 = vld [vmem:[%s3382 + $0xbc] sm:$0xff]
      %v3409 = vld [vmem:[%s3382 + $0xc4] sm:$0xff]
      %v3410 = vld [vmem:[%s3382 + $0xcc] sm:$0xf]
      %v3411 = vld [vmem:[%s3382 + $0xd0] sm:$0xff]
      %v3412 = vld [vmem:[%s3382 + $0xd8] sm:$0xff]
      %v3413 = vld [vmem:[%s3382 + $0xe0] sm:$0xff]
      %v3414 = vld [vmem:[%s3382 + $0xe8] sm:$0xff]
      %v3415 = vld [vmem:[%s3382 + $0xf0] sm:$0xff]
      %v3416 = vld [vmem:[%s3382 + $0xf8] sm:$0xff]
      %v3417 = vld [vmem:[%s3382 + $0x100] sm:$0xf]
      %v3418 = vld [vmem:[%s3382 + $0x104] sm:$0xff]
      %v3419 = vld [vmem:[%s3382 + $0x10c] sm:$0xff]
      %v3420 = vld [vmem:[%s3382 + $0x114] sm:$0xff]
      %v3421 = vld [vmem:[%s3382 + $0x11c] sm:$0xff]
      %v3422 = vld [vmem:[%s3382 + $0x124] sm:$0xff]
      %v3423 = vld [vmem:[%s3382 + $0x12c] sm:$0xff]
      %v3424 = vld [vmem:[%s3382 + $0x134] sm:$0xf]
      %v3425 = vld [vmem:[%s3382 + $0x138] sm:$0xff]
      %v3426 = vld [vmem:[%s3382 + $0x140] sm:$0xff]
      %v3427 = vld [vmem:[%s3382 + $0x148] sm:$0xff]
      %v3428 = vld [vmem:[%s3382 + $0x150] sm:$0xff]
      %v3429 = vld [vmem:[%s3382 + $0x158] sm:$0xff]
      %v3430 = vld [vmem:[%s3382 + $0x160] sm:$0xff]
      %v3431 = vld [vmem:[%s3382 + $0x168] sm:$0xf]
      %v3432 = vld [vmem:[%s3382 + $0x16c] sm:$0xff]
      %v3433 = vld [vmem:[%s3382 + $0x174] sm:$0xff]
      %v3434 = vld [vmem:[%s3382 + $0x17c] sm:$0xff]
      %v3435 = vld [vmem:[%s3382 + $0x184] sm:$0xff]
      %v3436 = vld [vmem:[%s3382 + $0x18c] sm:$0xff]
      %v3437 = vld [vmem:[%s3382 + $0x194] sm:$0xff]
      %v3438 = vld [vmem:[%s3382 + $0x19c] sm:$0xf]
      %v3495 = vunpack.c.l.b16 %v3383
      %v3496 = vunpack.c.h.b16 %v3383
      %v3497 = vunpack.c.l.b16 %v3384
      %v3498 = vunpack.c.h.b16 %v3384
      %v3499 = vunpack.c.l.b16 %v3385
      %v3500 = vunpack.c.h.b16 %v3385
      %v3501 = vunpack.c.l.b16 %v3386
      %v3502 = vunpack.c.h.b16 %v3386
      %v3503 = vunpack.c.l.b16 %v3387
      %v3504 = vunpack.c.h.b16 %v3387
      %v3505 = vunpack.c.l.b16 %v3388
      %v3506 = vunpack.c.h.b16 %v3388
      %v3507 = vunpack.c.l.b16 %v3389
      %v3508 = vunpack.c.l.b16 %v3390
      %v3509 = vunpack.c.h.b16 %v3390
      %v3510 = vunpack.c.l.b16 %v3391
      %v3511 = vunpack.c.h.b16 %v3391
      %v3512 = vunpack.c.l.b16 %v3392
      %v3513 = vunpack.c.h.b16 %v3392
      %v3514 = vunpack.c.l.b16 %v3393
      %v3515 = vunpack.c.h.b16 %v3393
      %v3516 = vunpack.c.l.b16 %v3394
      %v3517 = vunpack.c.h.b16 %v3394
      %v3518 = vunpack.c.l.b16 %v3395
      %v3519 = vunpack.c.h.b16 %v3395
      %v3520 = vunpack.c.l.b16 %v3396
      %v3521 = vunpack.c.l.b16 %v3397
      %v3522 = vunpack.c.h.b16 %v3397
      %v3523 = vunpack.c.l.b16 %v3398
      %v3524 = vunpack.c.h.b16 %v3398
      %v3525 = vunpack.c.l.b16 %v3399
      %v3526 = vunpack.c.h.b16 %v3399
      %v3527 = vunpack.c.l.b16 %v3400
      %v3528 = vunpack.c.h.b16 %v3400
      %v3529 = vunpack.c.l.b16 %v3401
      %v3530 = vunpack.c.h.b16 %v3401
      %v3531 = vunpack.c.l.b16 %v3402
      %v3532 = vunpack.c.h.b16 %v3402
      %v3533 = vunpack.c.l.b16 %v3403
      %v3534 = vunpack.c.l.b16 %v3404
      %v3535 = vunpack.c.h.b16 %v3404
      %v3536 = vunpack.c.l.b16 %v3405
      %v3537 = vunpack.c.h.b16 %v3405
      %v3538 = vunpack.c.l.b16 %v3406
      %v3539 = vunpack.c.h.b16 %v3406
      %v3540 = vunpack.c.l.b16 %v3407
      %v3541 = vunpack.c.h.b16 %v3407
      %v3542 = vunpack.c.l.b16 %v3408
      %v3543 = vunpack.c.h.b16 %v3408
      %v3544 = vunpack.c.l.b16 %v3409
      %v3545 = vunpack.c.h.b16 %v3409
      %v3546 = vunpack.c.l.b16 %v3410
      %v3547 = vunpack.c.l.b16 %v3411
      %v3548 = vunpack.c.h.b16 %v3411
      %v3549 = vunpack.c.l.b16 %v3412
      %v3550 = vunpack.c.h.b16 %v3412
      %v3551 = vunpack.c.l.b16 %v3413
      %v3552 = vunpack.c.h.b16 %v3413
      %v3553 = vunpack.c.l.b16 %v3414
      %v3554 = vunpack.c.h.b16 %v3414
      %v3555 = vunpack.c.l.b16 %v3415
      %v3556 = vunpack.c.h.b16 %v3415
      %v3557 = vunpack.c.l.b16 %v3416
      %v3558 = vunpack.c.h.b16 %v3416
      %v3559 = vunpack.c.l.b16 %v3417
      %v3560 = vunpack.c.l.b16 %v3418
      %v3561 = vunpack.c.h.b16 %v3418
      %v3562 = vunpack.c.l.b16 %v3419
      %v3563 = vunpack.c.h.b16 %v3419
      %v3564 = vunpack.c.l.b16 %v3420
      %v3565 = vunpack.c.h.b16 %v3420
      %v3566 = vunpack.c.l.b16 %v3421
      %v3567 = vunpack.c.h.b16 %v3421
      %v3568 = vunpack.c.l.b16 %v3422
      %v3569 = vunpack.c.h.b16 %v3422
      %v3570 = vunpack.c.l.b16 %v3423
      %v3571 = vunpack.c.h.b16 %v3423
      %v3572 = vunpack.c.l.b16 %v3424
      %v3573 = vunpack.c.l.b16 %v3425
      %v3574 = vunpack.c.h.b16 %v3425
      %v3575 = vunpack.c.l.b16 %v3426
      %v3576 = vunpack.c.h.b16 %v3426
      %v3577 = vunpack.c.l.b16 %v3427
      %v3578 = vunpack.c.h.b16 %v3427
      %v3579 = vunpack.c.l.b16 %v3428
      %v3580 = vunpack.c.h.b16 %v3428
      %v3581 = vunpack.c.l.b16 %v3429
      %v3582 = vunpack.c.h.b16 %v3429
      %v3583 = vunpack.c.l.b16 %v3430
      %v3584 = vunpack.c.h.b16 %v3430
      %v3585 = vunpack.c.l.b16 %v3431
      %v3586 = vunpack.c.l.b16 %v3432
      %v3587 = vunpack.c.h.b16 %v3432
      %v3588 = vunpack.c.l.b16 %v3433
      %v3589 = vunpack.c.h.b16 %v3433
      %v3590 = vunpack.c.l.b16 %v3434
      %v3591 = vunpack.c.h.b16 %v3434
      %v3592 = vunpack.c.l.b16 %v3435
      %v3593 = vunpack.c.h.b16 %v3435
      %v3594 = vunpack.c.l.b16 %v3436
      %v3595 = vunpack.c.h.b16 %v3436
      %v3596 = vunpack.c.l.b16 %v3437
      %v3597 = vunpack.c.h.b16 %v3437
      %v3598 = vunpack.c.l.b16 %v3438
      %v3599 = vpack.c.b16 %v3508, %v3495
      %v3600 = vpack.c.b16 %v3509, %v3496
      %v3601 = vpack.c.b16 %v3510, %v3497
      %v3602 = vpack.c.b16 %v3511, %v3498
      %v3603 = vpack.c.b16 %v3512, %v3499
      %v3604 = vpack.c.b16 %v3513, %v3500
      %v3605 = vpack.c.b16 %v3514, %v3501
      %v3606 = vpack.c.b16 %v3515, %v3502
      %v3607 = vpack.c.b16 %v3516, %v3503
      %v3608 = vpack.c.b16 %v3517, %v3504
      %v3609 = vpack.c.b16 %v3518, %v3505
      %v3610 = vpack.c.b16 %v3519, %v3506
      %v3611 = vpack.c.b16 %v3520, %v3507
      %v3612 = vpack.c.b16 %v3534, %v3521
      %v3613 = vpack.c.b16 %v3535, %v3522
      %v3614 = vpack.c.b16 %v3536, %v3523
      %v3615 = vpack.c.b16 %v3537, %v3524
      %v3616 = vpack.c.b16 %v3538, %v3525
      %v3617 = vpack.c.b16 %v3539, %v3526
      %v3618 = vpack.c.b16 %v3540, %v3527
      %v3619 = vpack.c.b16 %v3541, %v3528
      %v3620 = vpack.c.b16 %v3542, %v3529
      %v3621 = vpack.c.b16 %v3543, %v3530
      %v3622 = vpack.c.b16 %v3544, %v3531
      %v3623 = vpack.c.b16 %v3545, %v3532
      %v3624 = vpack.c.b16 %v3546, %v3533
      %v3625 = vpack.c.b16 %v3560, %v3547
      %v3626 = vpack.c.b16 %v3561, %v3548
      %v3627 = vpack.c.b16 %v3562, %v3549
      %v3628 = vpack.c.b16 %v3563, %v3550
      %v3629 = vpack.c.b16 %v3564, %v3551
      %v3630 = vpack.c.b16 %v3565, %v3552
      %v3631 = vpack.c.b16 %v3566, %v3553
      %v3632 = vpack.c.b16 %v3567, %v3554
      %v3633 = vpack.c.b16 %v3568, %v3555
      %v3634 = vpack.c.b16 %v3569, %v3556
      %v3635 = vpack.c.b16 %v3570, %v3557
      %v3636 = vpack.c.b16 %v3571, %v3558
      %v3637 = vpack.c.b16 %v3572, %v3559
      %v3638 = vpack.c.b16 %v3586, %v3573
      %v3639 = vpack.c.b16 %v3587, %v3574
      %v3640 = vpack.c.b16 %v3588, %v3575
      %v3641 = vpack.c.b16 %v3589, %v3576
      %v3642 = vpack.c.b16 %v3590, %v3577
      %v3643 = vpack.c.b16 %v3591, %v3578
      %v3644 = vpack.c.b16 %v3592, %v3579
      %v3645 = vpack.c.b16 %v3593, %v3580
      %v3646 = vpack.c.b16 %v3594, %v3581
      %v3647 = vpack.c.b16 %v3595, %v3582
      %v3648 = vpack.c.b16 %v3596, %v3583
      %v3649 = vpack.c.b16 %v3597, %v3584
      %v3650 = vpack.c.b16 %v3598, %v3585
      %v3700 = vsel %vm1330, %v3611, 0
      %v3703 = vsel %vm1330, %v3624, 0
      %v3706 = vsel %vm1330, %v3637, 0
      %v3709 = vsel %vm1330, %v3650, 0
      %3711 = vmatprep.subr.bf16.mxu0 0
      %3712 = vmatpush1.bf16.msra.mxu0 %v1130
      %3713 = vmatprep.subr.bf16.mxu0 0
      %3714 = vmatpush1.bf16.msra.mxu0 %v1131
      %3715 = vmatprep.subr.bf16.mxu0 0
      %3716 = vmatpush1.bf16.msra.mxu0 %v1132
      %3717 = vmatprep.subr.bf16.mxu0 0
      %3718 = vmatpush1.bf16.msra.mxu0 %v1133
      %3719 = vmatprep.subr.bf16.mxu0 0
      %3720 = vmatpush1.bf16.msra.mxu0 %v1134
      %3721 = vmatprep.subr.bf16.mxu0 0
      %3722 = vmatpush1.bf16.msra.mxu0 %v1135
      %3723 = vmatprep.subr.bf16.mxu0 0
      %3724 = vmatpush1.bf16.msra.mxu0 %v1136
      %3725 = vmatprep.subr.bf16.mxu0 0
      %3726 = vmatpush1.bf16.msra.mxu0 %v1137
      %3727 = vmatprep.subr.bf16.mxu0 0
      %3728 = vmatpush1.bf16.msra.mxu0 %v1138
      %3729 = vmatprep.subr.bf16.mxu0 0
      %3730 = vmatpush1.bf16.msra.mxu0 %v1139
      %3731 = vmatprep.subr.bf16.mxu0 0
      %3732 = vmatpush1.bf16.msra.mxu0 %v1140
      %3733 = vmatprep.subr.bf16.mxu0 0
      %3734 = vmatpush1.bf16.msra.mxu0 %v1141
      %3735 = vmatprep.subr.bf16.mxu0 0
      %3736 = vmatpush1.bf16.msra.mxu0 %v1142
      %3737 = vmatprep.subr.bf16.mxu0 0
      %3738 = vmatpush1.bf16.msra.mxu0 %v1143
      %3739 = vmatprep.subr.bf16.mxu0 0
      %3740 = vmatpush1.bf16.msra.mxu0 %v1144
      %3741 = vmatprep.subr.bf16.mxu0 0
      %3742 = vmatpush1.bf16.msra.mxu0 %v1145
      %3743 = vmatprep.mubr.bf16.mxu0 %v3600
      %3744 = vmatmul.mubr.bf16.gmra.mrb[0].mxu0 %v3599
      %v3745 = vpop.f32.mrb[0].mxu0
      %v3746 = vadd.f32 0.0, %v3745
      %v3747 = vpop.f32.mrb[0].mxu0
      %v3748 = vpop.f32.mrb[0].mxu0
      %v3749 = vadd.f32 0.0, %v3748
      %v3750 = vpop.f32.mrb[0].mxu0
      %3751 = vmatprep.mubr.bf16.mxu0 %v3613
      %3752 = vmatmul.mubr.bf16.gmra.mrb[0].mxu0 %v3612
      %v3753 = vpop.f32.mrb[0].mxu0
      %v3754 = vadd.f32 0.0, %v3753
      %v3755 = vpop.f32.mrb[0].mxu0
      %v3756 = vpop.f32.mrb[0].mxu0
      %v3757 = vadd.f32 0.0, %v3756
      %v3758 = vpop.f32.mrb[0].mxu0
      %3759 = vmatprep.mubr.bf16.mxu0 %v3626
      %3760 = vmatmul.mubr.bf16.gmra.mrb[0].mxu0 %v3625
      %v3761 = vpop.f32.mrb[0].mxu0
      %v3762 = vadd.f32 0.0, %v3761
      %v3763 = vpop.f32.mrb[0].mxu0
      %v3764 = vpop.f32.mrb[0].mxu0
      %v3765 = vadd.f32 0.0, %v3764
      %v3766 = vpop.f32.mrb[0].mxu0
      %3767 = vmatprep.mubr.bf16.mxu0 %v3639
      %3768 = vmatmul.mubr.bf16.gmra.mrb[0].mxu0 %v3638
      %v3769 = vpop.f32.mrb[0].mxu0
      %v3770 = vadd.f32 0.0, %v3769
      %v3771 = vpop.f32.mrb[0].mxu0
      %v3772 = vpop.f32.mrb[0].mxu0
      %v3773 = vadd.f32 0.0, %v3772
      %v3774 = vpop.f32.mrb[0].mxu0
      %3775 = vdwg.mxu0
      %3776 = vmatprep.subr.bf16.mxu0 0
      %3777 = vmatpush1.bf16.msra.mxu0 %v1146
      %3778 = vmatprep.subr.bf16.mxu0 0
      %3779 = vmatpush1.bf16.msra.mxu0 %v1147
      %3780 = vmatprep.subr.bf16.mxu0 0
      %3781 = vmatpush1.bf16.msra.mxu0 %v1148
      %3782 = vmatprep.subr.bf16.mxu0 0
      %3783 = vmatpush1.bf16.msra.mxu0 %v1149
      %3784 = vmatprep.subr.bf16.mxu0 0
      %3785 = vmatpush1.bf16.msra.mxu0 %v1150
      %3786 = vmatprep.subr.bf16.mxu0 0
      %3787 = vmatpush1.bf16.msra.mxu0 %v1151
      %3788 = vmatprep.subr.bf16.mxu0 0
      %3789 = vmatpush1.bf16.msra.mxu0 %v1152
      %3790 = vmatprep.subr.bf16.mxu0 0
      %3791 = vmatpush1.bf16.msra.mxu0 %v1153
      %3792 = vmatprep.subr.bf16.mxu0 0
      %3793 = vmatpush1.bf16.msra.mxu0 %v1154
      %3794 = vmatprep.subr.bf16.mxu0 0
      %3795 = vmatpush1.bf16.msra.mxu0 %v1155
      %3796 = vmatprep.subr.bf16.mxu0 0
      %3797 = vmatpush1.bf16.msra.mxu0 %v1156
      %3798 = vmatprep.subr.bf16.mxu0 0
      %3799 = vmatpush1.bf16.msra.mxu0 %v1157
      %3800 = vmatprep.subr.bf16.mxu0 0
      %3801 = vmatpush1.bf16.msra.mxu0 %v1158
      %3802 = vmatprep.subr.bf16.mxu0 0
      %3803 = vmatpush1.bf16.msra.mxu0 %v1159
      %3804 = vmatprep.subr.bf16.mxu0 0
      %3805 = vmatpush1.bf16.msra.mxu0 %v1160
      %3806 = vmatprep.subr.bf16.mxu0 0
      %3807 = vmatpush1.bf16.msra.mxu0 %v1161
      %3808 = vmatprep.mubr.bf16.mxu0 %v3602
      %3809 = vmatmul.mubr.bf16.gmra.mrb[0].mxu0 %v3601
      %v3810 = vpop.f32.mrb[0].mxu0
      %v3811 = vadd.f32 %v3746, %v3810
      %v3812 = vpop.f32.mrb[0].mxu0
      %v3813 = vpop.f32.mrb[0].mxu0
      %v3814 = vadd.f32 %v3749, %v3813
      %v3815 = vpop.f32.mrb[0].mxu0
      %3816 = vmatprep.mubr.bf16.mxu0 %v3615
      %3817 = vmatmul.mubr.bf16.gmra.mrb[0].mxu0 %v3614
      %v3818 = vpop.f32.mrb[0].mxu0
      %v3819 = vadd.f32 %v3754, %v3818
      %v3820 = vpop.f32.mrb[0].mxu0
      %v3821 = vpop.f32.mrb[0].mxu0
      %v3822 = vadd.f32 %v3757, %v3821
      %v3823 = vpop.f32.mrb[0].mxu0
      %3824 = vmatprep.mubr.bf16.mxu0 %v3628
      %3825 = vmatmul.mubr.bf16.gmra.mrb[0].mxu0 %v3627
      %v3826 = vpop.f32.mrb[0].mxu0
      %v3827 = vadd.f32 %v3762, %v3826
      %v3828 = vpop.f32.mrb[0].mxu0
      %v3829 = vpop.f32.mrb[0].mxu0
      %v3830 = vadd.f32 %v3765, %v3829
      %v3831 = vpop.f32.mrb[0].mxu0
      %3832 = vmatprep.mubr.bf16.mxu0 %v3641
      %3833 = vmatmul.mubr.bf16.gmra.mrb[0].mxu0 %v3640
      %v3834 = vpop.f32.mrb[0].mxu0
      %v3835 = vadd.f32 %v3770, %v3834
      %v3836 = vpop.f32.mrb[0].mxu0
      %v3837 = vpop.f32.mrb[0].mxu0
      %v3838 = vadd.f32 %v3773, %v3837
      %v3839 = vpop.f32.mrb[0].mxu0
      %3840 = vdwg.mxu0
      %3841 = vmatprep.subr.bf16.mxu0 0
      %3842 = vmatpush1.bf16.msra.mxu0 %v1162
      %3843 = vmatprep.subr.bf16.mxu0 0
      %3844 = vmatpush1.bf16.msra.mxu0 %v1163
      %3845 = vmatprep.subr.bf16.mxu0 0
      %3846 = vmatpush1.bf16.msra.mxu0 %v1164
      %3847 = vmatprep.subr.bf16.mxu0 0
      %3848 = vmatpush1.bf16.msra.mxu0 %v1165
      %3849 = vmatprep.subr.bf16.mxu0 0
      %3850 = vmatpush1.bf16.msra.mxu0 %v1166
      %3851 = vmatprep.subr.bf16.mxu0 0
      %3852 = vmatpush1.bf16.msra.mxu0 %v1167
      %3853 = vmatprep.subr.bf16.mxu0 0
      %3854 = vmatpush1.bf16.msra.mxu0 %v1168
      %3855 = vmatprep.subr.bf16.mxu0 0
      %3856 = vmatpush1.bf16.msra.mxu0 %v1169
      %3857 = vmatprep.subr.bf16.mxu0 0
      %3858 = vmatpush1.bf16.msra.mxu0 %v1170
      %3859 = vmatprep.subr.bf16.mxu0 0
      %3860 = vmatpush1.bf16.msra.mxu0 %v1171
      %3861 = vmatprep.subr.bf16.mxu0 0
      %3862 = vmatpush1.bf16.msra.mxu0 %v1172
      %3863 = vmatprep.subr.bf16.mxu0 0
      %3864 = vmatpush1.bf16.msra.mxu0 %v1173
      %3865 = vmatprep.subr.bf16.mxu0 0
      %3866 = vmatpush1.bf16.msra.mxu0 %v1174
      %3867 = vmatprep.subr.bf16.mxu0 0
      %3868 = vmatpush1.bf16.msra.mxu0 %v1175
      %3869 = vmatprep.subr.bf16.mxu0 0
      %3870 = vmatpush1.bf16.msra.mxu0 %v1176
      %3871 = vmatprep.subr.bf16.mxu0 0
      %3872 = vmatpush1.bf16.msra.mxu0 %v1177
      %3873 = vmatprep.mubr.bf16.mxu0 %v3604
      %3874 = vmatmul.mubr.bf16.gmra.mrb[0].mxu0 %v3603
      %v3875 = vpop.f32.mrb[0].mxu0
      %v3876 = vadd.f32 %v3811, %v3875
      %v3877 = vpop.f32.mrb[0].mxu0
      %v3878 = vpop.f32.mrb[0].mxu0
      %v3879 = vadd.f32 %v3814, %v3878
      %v3880 = vpop.f32.mrb[0].mxu0
      %3881 = vmatprep.mubr.bf16.mxu0 %v3617
      %3882 = vmatmul.mubr.bf16.gmra.mrb[0].mxu0 %v3616
      %v3883 = vpop.f32.mrb[0].mxu0
      %v3884 = vadd.f32 %v3819, %v3883
      %v3885 = vpop.f32.mrb[0].mxu0
      %v3886 = vpop.f32.mrb[0].mxu0
      %v3887 = vadd.f32 %v3822, %v3886
      %v3888 = vpop.f32.mrb[0].mxu0
      %3889 = vmatprep.mubr.bf16.mxu0 %v3630
      %3890 = vmatmul.mubr.bf16.gmra.mrb[0].mxu0 %v3629
      %v3891 = vpop.f32.mrb[0].mxu0
      %v3892 = vadd.f32 %v3827, %v3891
      %v3893 = vpop.f32.mrb[0].mxu0
      %v3894 = vpop.f32.mrb[0].mxu0
      %v3895 = vadd.f32 %v3830, %v3894
      %v3896 = vpop.f32.mrb[0].mxu0
      %3897 = vmatprep.mubr.bf16.mxu0 %v3643
      %3898 = vmatmul.mubr.bf16.gmra.mrb[0].mxu0 %v3642
      %v3899 = vpop.f32.mrb[0].mxu0
      %v3900 = vadd.f32 %v3835, %v3899
      %v3901 = vpop.f32.mrb[0].mxu0
      %v3902 = vpop.f32.mrb[0].mxu0
      %v3903 = vadd.f32 %v3838, %v3902
      %v3904 = vpop.f32.mrb[0].mxu0
      %3905 = vdwg.mxu0
      %3906 = vmatprep.subr.bf16.mxu0 0
      %3907 = vmatpush1.bf16.msra.mxu0 %v1178
      %3908 = vmatprep.subr.bf16.mxu0 0
      %3909 = vmatpush1.bf16.msra.mxu0 %v1179
      %3910 = vmatprep.subr.bf16.mxu0 0
      %3911 = vmatpush1.bf16.msra.mxu0 %v1180
      %3912 = vmatprep.subr.bf16.mxu0 0
      %3913 = vmatpush1.bf16.msra.mxu0 %v1181
      %3914 = vmatprep.subr.bf16.mxu0 0
      %3915 = vmatpush1.bf16.msra.mxu0 %v1182
      %3916 = vmatprep.subr.bf16.mxu0 0
      %3917 = vmatpush1.bf16.msra.mxu0 %v1183
      %3918 = vmatprep.subr.bf16.mxu0 0
      %3919 = vmatpush1.bf16.msra.mxu0 %v1184
      %3920 = vmatprep.subr.bf16.mxu0 0
      %3921 = vmatpush1.bf16.msra.mxu0 %v1185
      %3922 = vmatprep.subr.bf16.mxu0 0
      %3923 = vmatpush1.bf16.msra.mxu0 %v1186
      %3924 = vmatprep.subr.bf16.mxu0 0
      %3925 = vmatpush1.bf16.msra.mxu0 %v1187
      %3926 = vmatprep.subr.bf16.mxu0 0
      %3927 = vmatpush1.bf16.msra.mxu0 %v1188
      %3928 = vmatprep.subr.bf16.mxu0 0
      %3929 = vmatpush1.bf16.msra.mxu0 %v1189
      %3930 = vmatprep.subr.bf16.mxu0 0
      %3931 = vmatpush1.bf16.msra.mxu0 %v1190
      %3932 = vmatprep.subr.bf16.mxu0 0
      %3933 = vmatpush1.bf16.msra.mxu0 %v1191
      %3934 = vmatprep.subr.bf16.mxu0 0
      %3935 = vmatpush1.bf16.msra.mxu0 %v1192
      %3936 = vmatprep.subr.bf16.mxu0 0
      %3937 = vmatpush1.bf16.msra.mxu0 %v1193
      %3938 = vmatprep.mubr.bf16.mxu0 %v3606
      %3939 = vmatmul.mubr.bf16.gmra.mrb[0].mxu0 %v3605
      %v3940 = vpop.f32.mrb[0].mxu0
      %v3941 = vadd.f32 %v3876, %v3940
      %v3942 = vpop.f32.mrb[0].mxu0
      %v3943 = vpop.f32.mrb[0].mxu0
      %v3944 = vadd.f32 %v3879, %v3943
      %v3945 = vpop.f32.mrb[0].mxu0
      %3946 = vmatprep.mubr.bf16.mxu0 %v3619
      %3947 = vmatmul.mubr.bf16.gmra.mrb[0].mxu0 %v3618
      %v3948 = vpop.f32.mrb[0].mxu0
      %v3949 = vadd.f32 %v3884, %v3948
      %v3950 = vpop.f32.mrb[0].mxu0
      %v3951 = vpop.f32.mrb[0].mxu0
      %v3952 = vadd.f32 %v3887, %v3951
      %v3953 = vpop.f32.mrb[0].mxu0
      %3954 = vmatprep.mubr.bf16.mxu0 %v3632
      %3955 = vmatmul.mubr.bf16.gmra.mrb[0].mxu0 %v3631
      %v3956 = vpop.f32.mrb[0].mxu0
      %v3957 = vadd.f32 %v3892, %v3956
      %v3958 = vpop.f32.mrb[0].mxu0
      %v3959 = vpop.f32.mrb[0].mxu0
      %v3960 = vadd.f32 %v3895, %v3959
      %v3961 = vpop.f32.mrb[0].mxu0
      %3962 = vmatprep.mubr.bf16.mxu0 %v3645
      %3963 = vmatmul.mubr.bf16.gmra.mrb[0].mxu0 %v3644
      %v3964 = vpop.f32.mrb[0].mxu0
      %v3965 = vadd.f32 %v3900, %v3964
      %v3966 = vpop.f32.mrb[0].mxu0
      %v3967 = vpop.f32.mrb[0].mxu0
      %v3968 = vadd.f32 %v3903, %v3967
      %v3969 = vpop.f32.mrb[0].mxu0
      %3970 = vdwg.mxu0
      %3971 = vmatprep.subr.bf16.mxu0 0
      %3972 = vmatpush1.bf16.msra.mxu0 %v1194
      %3973 = vmatprep.subr.bf16.mxu0 0
      %3974 = vmatpush1.bf16.msra.mxu0 %v1195
      %3975 = vmatprep.subr.bf16.mxu0 0
      %3976 = vmatpush1.bf16.msra.mxu0 %v1196
      %3977 = vmatprep.subr.bf16.mxu0 0
      %3978 = vmatpush1.bf16.msra.mxu0 %v1197
      %3979 = vmatprep.subr.bf16.mxu0 0
      %3980 = vmatpush1.bf16.msra.mxu0 %v1198
      %3981 = vmatprep.subr.bf16.mxu0 0
      %3982 = vmatpush1.bf16.msra.mxu0 %v1199
      %3983 = vmatprep.subr.bf16.mxu0 0
      %3984 = vmatpush1.bf16.msra.mxu0 %v1200
      %3985 = vmatprep.subr.bf16.mxu0 0
      %3986 = vmatpush1.bf16.msra.mxu0 %v1201
      %3987 = vmatprep.subr.bf16.mxu0 0
      %3988 = vmatpush1.bf16.msra.mxu0 %v1202
      %3989 = vmatprep.subr.bf16.mxu0 0
      %3990 = vmatpush1.bf16.msra.mxu0 %v1203
      %3991 = vmatprep.subr.bf16.mxu0 0
      %3992 = vmatpush1.bf16.msra.mxu0 %v1204
      %3993 = vmatprep.subr.bf16.mxu0 0
      %3994 = vmatpush1.bf16.msra.mxu0 %v1205
      %3995 = vmatprep.subr.bf16.mxu0 0
      %3996 = vmatpush1.bf16.msra.mxu0 %v1206
      %3997 = vmatprep.subr.bf16.mxu0 0
      %3998 = vmatpush1.bf16.msra.mxu0 %v1207
      %3999 = vmatprep.subr.bf16.mxu0 0
      %4000 = vmatpush1.bf16.msra.mxu0 %v1208
      %4001 = vmatprep.subr.bf16.mxu0 0
      %4002 = vmatpush1.bf16.msra.mxu0 %v1209
      %4003 = vmatprep.mubr.bf16.mxu0 %v3608
      %4004 = vmatmul.mubr.bf16.gmra.mrb[0].mxu0 %v3607
      %v4005 = vpop.f32.mrb[0].mxu0
      %v4006 = vadd.f32 %v3941, %v4005
      %v4007 = vpop.f32.mrb[0].mxu0
      %v4008 = vpop.f32.mrb[0].mxu0
      %v4009 = vadd.f32 %v3944, %v4008
      %v4010 = vpop.f32.mrb[0].mxu0
      %4011 = vmatprep.mubr.bf16.mxu0 %v3621
      %4012 = vmatmul.mubr.bf16.gmra.mrb[0].mxu0 %v3620
      %v4013 = vpop.f32.mrb[0].mxu0
      %v4014 = vadd.f32 %v3949, %v4013
      %v4015 = vpop.f32.mrb[0].mxu0
      %v4016 = vpop.f32.mrb[0].mxu0
      %v4017 = vadd.f32 %v3952, %v4016
      %v4018 = vpop.f32.mrb[0].mxu0
      %4019 = vmatprep.mubr.bf16.mxu0 %v3634
      %4020 = vmatmul.mubr.bf16.gmra.mrb[0].mxu0 %v3633
      %v4021 = vpop.f32.mrb[0].mxu0
      %v4022 = vadd.f32 %v3957, %v4021
      %v4023 = vpop.f32.mrb[0].mxu0
      %v4024 = vpop.f32.mrb[0].mxu0
      %v4025 = vadd.f32 %v3960, %v4024
      %v4026 = vpop.f32.mrb[0].mxu0
      %4027 = vmatprep.mubr.bf16.mxu0 %v3647
      %4028 = vmatmul.mubr.bf16.gmra.mrb[0].mxu0 %v3646
      %v4029 = vpop.f32.mrb[0].mxu0
      %v4030 = vadd.f32 %v3965, %v4029
      %v4031 = vpop.f32.mrb[0].mxu0
      %v4032 = vpop.f32.mrb[0].mxu0
      %v4033 = vadd.f32 %v3968, %v4032
      %v4034 = vpop.f32.mrb[0].mxu0
      %4035 = vdwg.mxu0
      %4036 = vmatprep.subr.bf16.mxu0 0
      %4037 = vmatpush1.bf16.msra.mxu0 %v1210
      %4038 = vmatprep.subr.bf16.mxu0 0
      %4039 = vmatpush1.bf16.msra.mxu0 %v1211
      %4040 = vmatprep.subr.bf16.mxu0 0
      %4041 = vmatpush1.bf16.msra.mxu0 %v1212
      %4042 = vmatprep.subr.bf16.mxu0 0
      %4043 = vmatpush1.bf16.msra.mxu0 %v1213
      %4044 = vmatprep.subr.bf16.mxu0 0
      %4045 = vmatpush1.bf16.msra.mxu0 %v1214
      %4046 = vmatprep.subr.bf16.mxu0 0
      %4047 = vmatpush1.bf16.msra.mxu0 %v1215
      %4048 = vmatprep.subr.bf16.mxu0 0
      %4049 = vmatpush1.bf16.msra.mxu0 %v1216
      %4050 = vmatprep.subr.bf16.mxu0 0
      %4051 = vmatpush1.bf16.msra.mxu0 %v1217
      %4052 = vmatprep.subr.bf16.mxu0 0
      %4053 = vmatpush1.bf16.msra.mxu0 %v1218
      %4054 = vmatprep.subr.bf16.mxu0 0
      %4055 = vmatpush1.bf16.msra.mxu0 %v1219
      %4056 = vmatprep.subr.bf16.mxu0 0
      %4057 = vmatpush1.bf16.msra.mxu0 %v1220
      %4058 = vmatprep.subr.bf16.mxu0 0
      %4059 = vmatpush1.bf16.msra.mxu0 %v1221
      %4060 = vmatprep.subr.bf16.mxu0 0
      %4061 = vmatpush1.bf16.msra.mxu0 %v1222
      %4062 = vmatprep.subr.bf16.mxu0 0
      %4063 = vmatpush1.bf16.msra.mxu0 %v1223
      %4064 = vmatprep.subr.bf16.mxu0 0
      %4065 = vmatpush1.bf16.msra.mxu0 %v1224
      %4066 = vmatprep.subr.bf16.mxu0 0
      %4067 = vmatpush1.bf16.msra.mxu0 %v1225
      %4068 = vmatprep.mubr.bf16.mxu0 %v3610
      %4069 = vmatmul.mubr.bf16.gmra.mrb[0].mxu0 %v3609
      %v4070 = vpop.f32.mrb[0].mxu0
      %v4071 = vadd.f32 %v4006, %v4070
      %v4072 = vpop.f32.mrb[0].mxu0
      %v4073 = vpop.f32.mrb[0].mxu0
      %v4074 = vadd.f32 %v4009, %v4073
      %v4075 = vpop.f32.mrb[0].mxu0
      %4076 = vmatprep.mubr.bf16.mxu0 %v3623
      %4077 = vmatmul.mubr.bf16.gmra.mrb[0].mxu0 %v3622
      %v4078 = vpop.f32.mrb[0].mxu0
      %v4079 = vadd.f32 %v4014, %v4078
      %v4080 = vpop.f32.mrb[0].mxu0
      %v4081 = vpop.f32.mrb[0].mxu0
      %v4082 = vadd.f32 %v4017, %v4081
      %v4083 = vpop.f32.mrb[0].mxu0
      %4084 = vmatprep.mubr.bf16.mxu0 %v3636
      %4085 = vmatmul.mubr.bf16.gmra.mrb[0].mxu0 %v3635
      %v4086 = vpop.f32.mrb[0].mxu0
      %v4087 = vadd.f32 %v4022, %v4086
      %v4088 = vpop.f32.mrb[0].mxu0
      %v4089 = vpop.f32.mrb[0].mxu0
      %v4090 = vadd.f32 %v4025, %v4089
      %v4091 = vpop.f32.mrb[0].mxu0
      %4092 = vmatprep.mubr.bf16.mxu0 %v3649
      %4093 = vmatmul.mubr.bf16.gmra.mrb[0].mxu0 %v3648
      %v4094 = vpop.f32.mrb[0].mxu0
      %v4095 = vadd.f32 %v4030, %v4094
      %v4096 = vpop.f32.mrb[0].mxu0
      %v4097 = vpop.f32.mrb[0].mxu0
      %v4098 = vadd.f32 %v4033, %v4097
      %v4099 = vpop.f32.mrb[0].mxu0
      %4100 = vdwg.mxu0
      %4101 = vmatprep.subr.bf16.mxu0 0
      %4102 = vmatpush1.bf16.msra.mxu0 %v1226
      %4103 = vmatprep.subr.bf16.mxu0 0
      %4104 = vmatpush1.bf16.msra.mxu0 %v1227
      %4105 = vmatprep.subr.bf16.mxu0 0
      %4106 = vmatpush1.bf16.msra.mxu0 %v1228
      %4107 = vmatprep.subr.bf16.mxu0 0
      %4108 = vmatpush1.bf16.msra.mxu0 %v1229
      %4109 = vmatprep.subr.bf16.mxu0 0
      %4110 = vmatpush1.bf16.msra.mxu0 0
      %4111 = vmatprep.subr.bf16.mxu0 0
      %4112 = vmatpush1.bf16.msra.mxu0 0
      %4113 = vmatprep.subr.bf16.mxu0 0
      %4114 = vmatpush1.bf16.msra.mxu0 0
      %4115 = vmatprep.subr.bf16.mxu0 0
      %4116 = vmatpush1.bf16.msra.mxu0 0
      %4117 = vmatprep.subr.bf16.mxu0 0
      %4118 = vmatpush1.bf16.msra.mxu0 0
      %4119 = vmatprep.subr.bf16.mxu0 0
      %4120 = vmatpush1.bf16.msra.mxu0 0
      %4121 = vmatprep.subr.bf16.mxu0 0
      %4122 = vmatpush1.bf16.msra.mxu0 0
      %4123 = vmatprep.subr.bf16.mxu0 0
      %4124 = vmatpush1.bf16.msra.mxu0 0
      %4125 = vmatprep.subr.bf16.mxu0 0
      %4126 = vmatpush1.bf16.msra.mxu0 0
      %4127 = vmatprep.subr.bf16.mxu0 0
      %4128 = vmatpush1.bf16.msra.mxu0 0
      %4129 = vmatprep.subr.bf16.mxu0 0
      %4130 = vmatpush1.bf16.msra.mxu0 0
      %4131 = vmatprep.subr.bf16.mxu0 0
      %4132 = vmatpush1.bf16.msra.mxu0 0
      %4133 = vmatprep.mubr.bf16.mxu0 0
      %4134 = vmatmul.mubr.bf16.gmra.mrb[0].mxu0 %v3700
      %v4135 = vpop.f32.mrb[0].mxu0
      %v4136 = vadd.f32 %v4071, %v4135
      %v4137 = vpop.f32.mrb[0].mxu0
      %v4138 = vpop.f32.mrb[0].mxu0
      %v4139 = vadd.f32 %v4074, %v4138
      %v4140 = vpop.f32.mrb[0].mxu0
      %4141 = vmatprep.mubr.bf16.mxu0 0
      %4142 = vmatmul.mubr.bf16.gmra.mrb[0].mxu0 %v3703
      %v4143 = vpop.f32.mrb[0].mxu0
      %v4144 = vadd.f32 %v4079, %v4143
      %v4145 = vpop.f32.mrb[0].mxu0
      %v4146 = vpop.f32.mrb[0].mxu0
      %v4147 = vadd.f32 %v4082, %v4146
      %v4148 = vpop.f32.mrb[0].mxu0
      %4149 = vmatprep.mubr.bf16.mxu0 0
      %4150 = vmatmul.mubr.bf16.gmra.mrb[0].mxu0 %v3706
      %v4151 = vpop.f32.mrb[0].mxu0
      %v4152 = vadd.f32 %v4087, %v4151
      %v4153 = vpop.f32.mrb[0].mxu0
      %v4154 = vpop.f32.mrb[0].mxu0
      %v4155 = vadd.f32 %v4090, %v4154
      %v4156 = vpop.f32.mrb[0].mxu0
      %4157 = vmatprep.mubr.bf16.mxu0 0
      %4158 = vmatmul.mubr.bf16.gmra.mrb[0].mxu0 %v3709
      %v4159 = vpop.f32.mrb[0].mxu0
      %v4160 = vadd.f32 %v4095, %v4159
      %v4161 = vpop.f32.mrb[0].mxu0
      %v4162 = vpop.f32.mrb[0].mxu0
      %v4163 = vadd.f32 %v4098, %v4162
      %v4164 = vpop.f32.mrb[0].mxu0
      %4165 = vdwg.mxu0
      %v4166 = vmax.f32 %v3374, %v4136
      %v4167 = vmax.f32 %v3375, %v4139
      %v4168 = vmax.f32 %v3376, %v4144
      %v4169 = vmax.f32 %v3377, %v4147
      %v4170 = vmax.f32 %v3378, %v4152
      %v4171 = vmax.f32 %v3379, %v4155
      %v4172 = vmax.f32 %v3380, %v4160
      %v4173 = vmax.f32 %v3381, %v4163
      %v4174 = vld [vmem:[%s2] sm:$0x1]
      %v4176 = vlaneseq
      %v4177 = vshrl.u32 %v4176, 7
      %v4178 = vsub.s32 0, %v4177
      %v4179 = vrot.slane %v4174, %v4178
      %v4181 = vadd.f32 %v4166, %v4179
      %v4182 = vadd.f32 %v4167, %v4179
      %v4183 = vadd.f32 %v4168, %v4179
      %v4184 = vadd.f32 %v4169, %v4179
      %v4185 = vadd.f32 %v4170, %v4179
      %v4186 = vadd.f32 %v4171, %v4179
      %v4187 = vadd.f32 %v4172, %v4179
      %v4188 = vadd.f32 %v4173, %v4179
      %v4189 = vmax.f32 %v4181, 0.0
      %v4190 = vmax.f32 %v4182, 0.0
      %v4191 = vmax.f32 %v4183, 0.0
      %v4192 = vmax.f32 %v4184, 0.0
      %v4193 = vmax.f32 %v4185, 0.0
      %v4194 = vmax.f32 %v4186, 0.0
      %v4195 = vmax.f32 %v4187, 0.0
      %v4196 = vmax.f32 %v4188, 0.0
      %4197 = vst [vmem:[%s211] sm:$0xff] %v4189
      %4198 = vst [vmem:[%s211 + $0x8] sm:$0xff] %v4190
      %4199 = vst [vmem:[%s211 + $0x10] sm:$0xff] %v4191
      %4200 = vst [vmem:[%s211 + $0x18] sm:$0xff] %v4192
      %4201 = vst [vmem:[%s211 + $0x20] sm:$0xff] %v4193
      %4202 = vst [vmem:[%s211 + $0x28] sm:$0xff] %v4194
      %4203 = vst [vmem:[%s211 + $0x30] sm:$0xff] %v4195
      %4204 = vst [vmem:[%s211 + $0x38] sm:$0xff] %v4196
      %s4205 = smul.u32 8, %s19
      %p4206 = scmp.lt.s32.totalorder %s18, 1
      %s4207 = scalar_select %p4206, %s18, 1
      %p4208 = scmp.lt.s32.totalorder %s4205, 7
      %s4209 = scalar_select %p4208, %s4205, 7
      %s4210 = smul.addr %s4207, 8
      %s4211 = sadd.s32 %s4209, %s4210
      %s4212 = smul.addr %s4211, 8
      %s4213 = scalar_lea.vmem %s3, %s4212
      // Predicated region
      $region33: #{modified_forward.6} parent=31 // pred_check
        %p4214 = pneg %p116
      $region34: #{modified_forward.6} parent=31 // pred_check_branch
        %4216 = sbr.rel (%p4214) target = $region36
      $region35: #{modified_forward.6} parent=31 // pred_region
        %s4217 = smul.u32 8, %s19
      $region36: #{modified_forward.6} parent=31 // pred_fallthru
        _
    $region32: #{modified_forward.6} parent=5 // pred_fallthru
      _
    %p4218 = scmp.le.s32.totalorder 2, %s9
    // Predicated region
    $region37: #{modified_forward.6} parent=5 // pred_check
      %p4219 = pneg %p4218
    $region38: #{modified_forward.6} parent=5 // pred_check_branch
      %4221 = sbr.rel (%p4219) target = $region40
    $region39: #{modified_forward.6} parent=5 // pred_region
      %s4222 = ssub.s32 %s9, 2
      // Predicated region
      $region41: #{modified_forward.6} parent=39 // pred_check
        %p4223 = pneg %p122
      $region42: #{modified_forward.6} parent=39 // pred_check_branch
        %4225 = sbr.rel (%p4223) target = $region44
      $region43: #{modified_forward.6} parent=39 // pred_region
        %s4226 = smul.u32 8, %s21
        %p4227 = scmp.lt.s32.totalorder %s20, 1
        %s4228 = scalar_select %p4227, %s20, 1
        %p4229 = scmp.lt.s32.totalorder %s4226, 7
        %s4230 = scalar_select %p4229, %s4226, 7
        %s4231 = smul.addr %s4228, 8
        %s4232 = sadd.s32 %s4230, %s4231
        %s4233 = smul.addr %s4232, 8
        %s4234 = scalar_lea.vmem %s3, %s4233
      $region44: #{modified_forward.6} parent=39 // pred_fallthru
        _
    $region40: #{modified_forward.6} parent=5 // pred_fallthru
      _
  $region6: #{modified_forward.6} parent=0 // loop_footer
    %s13 = sadd.s32 1, %s9
  $region7: #{modified_forward.6} parent=0 // loop_footer_branch
    %8 = sbr.rel target = $region3
  $region8: #{modified_forward.6} parent=0 // loop_exit
    _

// kernel: modified_forward.7
$region0: #{modified_forward.7}
  #allocation0 [shape = 'u32[]', space=smem, size = 0x4, offset = 0x4, fixed_abs, tag = 'smem constant byte address 0x4 - core index']
  #allocation1 [shape = 'u32[144,128]{1,0:T(1,128)}', space=vmem, size = 0x12000, scoped, tag = 'internal scratch']
  #allocation2 [shape = 'f32[2,128]{1,0:T(2,128)}', space=vmem, size = 0x400, scoped, tag = 'scratch operand']
  %s0 = inlined_call_operand.vmem [shape: bf16[2,8192], index: 0, kind: input, shape index: {}]
  %s1 = inlined_call_operand.vmem [shape: bf16[8192,128], index: 1, kind: input, shape index: {}]
  %s2 = inlined_call_operand.vmem [shape: f32[1,128], index: 2, kind: input, shape index: {}]
  %s3 = inlined_call_operand.vmem [shape: bf16[128,120], index: 3, kind: input, shape index: {}]
  %s4 = inlined_call_operand.vmem [shape: f32[1,120], index: 4, kind: input, shape index: {}]
  %s5 = inlined_call_operand.vmem [shape: bf16[120,84], index: 5, kind: input, shape index: {}]
  %s6 = inlined_call_operand.vmem [shape: f32[1,84], index: 6, kind: input, shape index: {}]
  %s7 = inlined_call_operand.vmem [shape: bf16[84,10], index: 7, kind: input, shape index: {}]
  %s8 = inlined_call_operand.vmem [shape: f32[1,10], index: 8, kind: input, shape index: {}]
  %s9 = inlined_call_operand.hbm [shape: f32[2,10], index: 9, kind: output, shape index: {}]
  %s10 = sld [smem:[#allocation0]]
  $region77: #{modified_forward.7} parent=0
    _
  %s12 = ssub.s32 1, %s10
  %s13 = scalar_select 0, %s12, %s10
  $region1: #{modified_forward.7} parent=0
    #allocation3 [shape = 'u8[1024]{0}', space=vmem, size = 0x400, scoped, tag = 'output window, operand 0, single buffered']
    #allocation4 [shape = 's32[2]{0}', space=sflag, size = 0x8, scoped, tag = 'scoped memory for modified_forward.7']
    %14 = vsyncpa [#allocation4], 0
    loop: start=0, step=1, limit=6
    $region2: #{modified_forward.7} parent=1 // loop_pre_header
      _
    $region3: #{modified_forward.7} parent=1 // loop_header
      %s16 = sphi 0, %s20
      %p17 = scmp.ge.s32.totalorder %s16, 6
      %s26 = sphi 0, %s28
      %s29 = sphi 0, %s26
      %s30 = sphi 0, %s29
      %s46 = sphi 0, %s30
      %s52 = sphi 0, %s54
      %s55 = sphi 0, %s52
      %s56 = sphi 0, %s55
      %s72 = sphi 0, %s56
      %s76 = sphi 0, %s76
      %s78 = sphi 0, %s76
      %s79 = sphi 0, %s78
      %s93 = sphi 0, %s79
      %s97 = sphi 0, %s97
      %s99 = sphi 0, %s97
      %s100 = sphi 0, %s99
      %s114 = sphi 0, %s100
      %s118 = sphi 0, %s118
      %s120 = sphi 0, %s118
      %s121 = sphi 0, %s120
      %s135 = sphi 0, %s121
      %s139 = sphi 0, %s139
      %s141 = sphi 0, %s139
      %s142 = sphi 0, %s141
      %s156 = sphi 0, %s142
      %s160 = sphi 0, %s160
      %s162 = sphi 0, %s160
      %s163 = sphi 0, %s162
      %s177 = sphi 0, %s163
      %s181 = sphi 0, %s181
      %s183 = sphi 0, %s181
      %s184 = sphi 0, %s183
      %s198 = sphi 0, %s184
      %s202 = sphi 0, %s202
      %s204 = sphi 0, %s202
      %s205 = sphi 0, %s204
      %s219 = sphi 0, %s205
      %s223 = sphi 0, %s223
      %s225 = sphi 0, %s223
      %s226 = sphi 0, %s225
      %s240 = sphi 0, %s226
    $region4: #{modified_forward.7} parent=1 // loop_header_branch
      %19 = sbr.rel (%p17) target = $region8
    $region5: #{modified_forward.7} parent=1 // loop_body
      %s21 = ssub.s32 %s16, 1
      %s22 = ssub.s32 %s16, 2
      %s23 = sadd.s32 %s16, 1
      %s24 = ssub.s32 %s16, %s23
      %p25 = scmp.eq.s32.totalorder %s24, 0
      %s27 = sadd.s32 %s26, 1
      %s28 = scalar_select %p25, %s26, %s27
      %p31 = pneg %p25
      %p32 = scmp.eq.s32.totalorder %s16, 3
      %p33 = por %p31, %p32
      %p34 = scmp.ne.s32.totalorder %s26, %s29
      %p35 = scmp.eq.s32.totalorder %s16, 0
      %p36 = por %p34, %p35
      %p37 = scmp.ne.s32.totalorder %s26, %s29
      %p38 = scmp.eq.s32.totalorder %s21, 3
      %p39 = por %p37, %p38
      %p40 = scmp.ne.s32.totalorder %s29, %s30
      %p41 = scmp.eq.s32.totalorder %s21, 0
      %p42 = por %p40, %p41
      %p43 = scmp.ne.s32.totalorder %s29, %s30
      %p44 = scmp.eq.s32.totalorder %s22, 3
      %p45 = por %p43, %p44
      %p47 = scmp.ne.s32.totalorder %s30, %s46
      %p48 = scmp.eq.s32.totalorder %s22, 0
      %p49 = por %p47, %p48
      %s50 = ssub.s32 %s16, %s23
      %p51 = scmp.eq.s32.totalorder %s50, 0
      %s53 = sadd.s32 %s52, 1
      %s54 = scalar_select %p51, %s52, %s53
      %p57 = pneg %p51
      %p58 = scmp.eq.s32.totalorder %s16, 3
      %p59 = por %p57, %p58
      %p60 = scmp.ne.s32.totalorder %s52, %s55
      %p61 = scmp.eq.s32.totalorder %s16, 0
      %p62 = por %p60, %p61
      %p63 = scmp.ne.s32.totalorder %s52, %s55
      %p64 = scmp.eq.s32.totalorder %s21, 3
      %p65 = por %p63, %p64
      %p66 = scmp.ne.s32.totalorder %s55, %s56
      %p67 = scmp.eq.s32.totalorder %s21, 0
      %p68 = por %p66, %p67
      %p69 = scmp.ne.s32.totalorder %s55, %s56
      %p70 = scmp.eq.s32.totalorder %s22, 3
      %p71 = por %p69, %p70
      %p73 = scmp.ne.s32.totalorder %s56, %s72
      %p74 = scmp.eq.s32.totalorder %s22, 0
      %p75 = por %p73, %p74
      %s77 = sadd.s32 %s76, 1
      %p80 = scmp.eq.s32.totalorder %s16, 3
      %p81 = scmp.ne.s32.totalorder %s76, %s78
      %p82 = scmp.eq.s32.totalorder %s16, 0
      %p83 = por %p81, %p82
      %p84 = scmp.ne.s32.totalorder %s76, %s78
      %p85 = scmp.eq.s32.totalorder %s21, 3
      %p86 = por %p84, %p85
      %p87 = scmp.ne.s32.totalorder %s78, %s79
      %p88 = scmp.eq.s32.totalorder %s21, 0
      %p89 = por %p87, %p88
      %p90 = scmp.ne.s32.totalorder %s78, %s79
      %p91 = scmp.eq.s32.totalorder %s22, 3
      %p92 = por %p90, %p91
      %p94 = scmp.ne.s32.totalorder %s79, %s93
      %p95 = scmp.eq.s32.totalorder %s22, 0
      %p96 = por %p94, %p95
      %s98 = sadd.s32 %s97, 1
      %p101 = scmp.eq.s32.totalorder %s16, 3
      %p102 = scmp.ne.s32.totalorder %s97, %s99
      %p103 = scmp.eq.s32.totalorder %s16, 0
      %p104 = por %p102, %p103
      %p105 = scmp.ne.s32.totalorder %s97, %s99
      %p106 = scmp.eq.s32.totalorder %s21, 3
      %p107 = por %p105, %p106
      %p108 = scmp.ne.s32.totalorder %s99, %s100
      %p109 = scmp.eq.s32.totalorder %s21, 0
      %p110 = por %p108, %p109
      %p111 = scmp.ne.s32.totalorder %s99, %s100
      %p112 = scmp.eq.s32.totalorder %s22, 3
      %p113 = por %p111, %p112
      %p115 = scmp.ne.s32.totalorder %s100, %s114
      %p116 = scmp.eq.s32.totalorder %s22, 0
      %p117 = por %p115, %p116
      %s119 = sadd.s32 %s118, 1
      %p122 = scmp.eq.s32.totalorder %s16, 3
      %p123 = scmp.ne.s32.totalorder %s118, %s120
      %p124 = scmp.eq.s32.totalorder %s16, 0
      %p125 = por %p123, %p124
      %p126 = scmp.ne.s32.totalorder %s118, %s120
      %p127 = scmp.eq.s32.totalorder %s21, 3
      %p128 = por %p126, %p127
      %p129 = scmp.ne.s32.totalorder %s120, %s121
      %p130 = scmp.eq.s32.totalorder %s21, 0
      %p131 = por %p129, %p130
      %p132 = scmp.ne.s32.totalorder %s120, %s121
      %p133 = scmp.eq.s32.totalorder %s22, 3
      %p134 = por %p132, %p133
      %p136 = scmp.ne.s32.totalorder %s121, %s135
      %p137 = scmp.eq.s32.totalorder %s22, 0
      %p138 = por %p136, %p137
      %s140 = sadd.s32 %s139, 1
      %p143 = scmp.eq.s32.totalorder %s16, 3
      %p144 = scmp.ne.s32.totalorder %s139, %s141
      %p145 = scmp.eq.s32.totalorder %s16, 0
      %p146 = por %p144, %p145
      %p147 = scmp.ne.s32.totalorder %s139, %s141
      %p148 = scmp.eq.s32.totalorder %s21, 3
      %p149 = por %p147, %p148
      %p150 = scmp.ne.s32.totalorder %s141, %s142
      %p151 = scmp.eq.s32.totalorder %s21, 0
      %p152 = por %p150, %p151
      %p153 = scmp.ne.s32.totalorder %s141, %s142
      %p154 = scmp.eq.s32.totalorder %s22, 3
      %p155 = por %p153, %p154
      %p157 = scmp.ne.s32.totalorder %s142, %s156
      %p158 = scmp.eq.s32.totalorder %s22, 0
      %p159 = por %p157, %p158
      %s161 = sadd.s32 %s160, 1
      %p164 = scmp.eq.s32.totalorder %s16, 3
      %p165 = scmp.ne.s32.totalorder %s160, %s162
      %p166 = scmp.eq.s32.totalorder %s16, 0
      %p167 = por %p165, %p166
      %p168 = scmp.ne.s32.totalorder %s160, %s162
      %p169 = scmp.eq.s32.totalorder %s21, 3
      %p170 = por %p168, %p169
      %p171 = scmp.ne.s32.totalorder %s162, %s163
      %p172 = scmp.eq.s32.totalorder %s21, 0
      %p173 = por %p171, %p172
      %p174 = scmp.ne.s32.totalorder %s162, %s163
      %p175 = scmp.eq.s32.totalorder %s22, 3
      %p176 = por %p174, %p175
      %p178 = scmp.ne.s32.totalorder %s163, %s177
      %p179 = scmp.eq.s32.totalorder %s22, 0
      %p180 = por %p178, %p179
      %s182 = sadd.s32 %s181, 1
      %p185 = scmp.eq.s32.totalorder %s16, 3
      %p186 = scmp.ne.s32.totalorder %s181, %s183
      %p187 = scmp.eq.s32.totalorder %s16, 0
      %p188 = por %p186, %p187
      %p189 = scmp.ne.s32.totalorder %s181, %s183
      %p190 = scmp.eq.s32.totalorder %s21, 3
      %p191 = por %p189, %p190
      %p192 = scmp.ne.s32.totalorder %s183, %s184
      %p193 = scmp.eq.s32.totalorder %s21, 0
      %p194 = por %p192, %p193
      %p195 = scmp.ne.s32.totalorder %s183, %s184
      %p196 = scmp.eq.s32.totalorder %s22, 3
      %p197 = por %p195, %p196
      %p199 = scmp.ne.s32.totalorder %s184, %s198
      %p200 = scmp.eq.s32.totalorder %s22, 0
      %p201 = por %p199, %p200
      %s203 = sadd.s32 %s202, 1
      %p206 = scmp.eq.s32.totalorder %s16, 3
      %p207 = scmp.ne.s32.totalorder %s202, %s204
      %p208 = scmp.eq.s32.totalorder %s16, 0
      %p209 = por %p207, %p208
      %p210 = scmp.ne.s32.totalorder %s202, %s204
      %p211 = scmp.eq.s32.totalorder %s21, 3
      %p212 = por %p210, %p211
      %p213 = scmp.ne.s32.totalorder %s204, %s205
      %p214 = scmp.eq.s32.totalorder %s21, 0
      %p215 = por %p213, %p214
      %p216 = scmp.ne.s32.totalorder %s204, %s205
      %p217 = scmp.eq.s32.totalorder %s22, 3
      %p218 = por %p216, %p217
      %p220 = scmp.ne.s32.totalorder %s205, %s219
      %p221 = scmp.eq.s32.totalorder %s22, 0
      %p222 = por %p220, %p221
      %s224 = sadd.s32 %s223, 1
      %p227 = scmp.eq.s32.totalorder %s16, 3
      %p228 = scmp.ne.s32.totalorder %s223, %s225
      %p229 = scmp.eq.s32.totalorder %s16, 0
      %p230 = por %p228, %p229
      %p231 = scmp.ne.s32.totalorder %s223, %s225
      %p232 = scmp.eq.s32.totalorder %s21, 3
      %p233 = por %p231, %p232
      %p234 = scmp.ne.s32.totalorder %s225, %s226
      %p235 = scmp.eq.s32.totalorder %s21, 0
      %p236 = por %p234, %p235
      %p237 = scmp.ne.s32.totalorder %s225, %s226
      %p238 = scmp.eq.s32.totalorder %s22, 3
      %p239 = por %p237, %p238
      %p241 = scmp.ne.s32.totalorder %s226, %s240
      %p242 = scmp.eq.s32.totalorder %s22, 0
      %p243 = por %p241, %p242
      %p244 = scmp.le.s32.totalorder 1, %s16
      %p245 = scmp.lt.s32.totalorder %s16, 5
      %p246 = pnand %p244, %p245
      %p247 = pneg %p246
      // Predicated region
      $region9: #{modified_forward.7} parent=5 // pred_check
        _
      $region10: #{modified_forward.7} parent=5 // pred_check_branch
        %249 = sbr.rel (%p246) target = $region12
      $region11: #{modified_forward.7} parent=5 // pred_region
        %s250 = ssub.s32 %s16, 1
        // Predicated region
        $region13: #{modified_forward.7} parent=11 // pred_check
          %p251 = pneg %p89
        $region14: #{modified_forward.7} parent=11 // pred_check_branch
          %253 = sbr.rel (%p251) target = $region16
        $region15: #{modified_forward.7} parent=11 // pred_region
          _
        $region16: #{modified_forward.7} parent=11 // pred_fallthru
          _
        // Predicated region
        $region17: #{modified_forward.7} parent=11 // pred_check
          %p254 = pneg %p110
        $region18: #{modified_forward.7} parent=11 // pred_check_branch
          %256 = sbr.rel (%p254) target = $region20
        $region19: #{modified_forward.7} parent=11 // pred_region
          _
        $region20: #{modified_forward.7} parent=11 // pred_fallthru
          _
        // Predicated region
        $region21: #{modified_forward.7} parent=11 // pred_check
          %p257 = pneg %p131
        $region22: #{modified_forward.7} parent=11 // pred_check_branch
          %259 = sbr.rel (%p257) target = $region24
        $region23: #{modified_forward.7} parent=11 // pred_region
          _
        $region24: #{modified_forward.7} parent=11 // pred_fallthru
          _
        // Predicated region
        $region25: #{modified_forward.7} parent=11 // pred_check
          %p260 = pneg %p152
        $region26: #{modified_forward.7} parent=11 // pred_check_branch
          %262 = sbr.rel (%p260) target = $region28
        $region27: #{modified_forward.7} parent=11 // pred_region
          _
        $region28: #{modified_forward.7} parent=11 // pred_fallthru
          _
        // Predicated region
        $region29: #{modified_forward.7} parent=11 // pred_check
          %p263 = pneg %p173
        $region30: #{modified_forward.7} parent=11 // pred_check_branch
          %265 = sbr.rel (%p263) target = $region32
        $region31: #{modified_forward.7} parent=11 // pred_region
          _
        $region32: #{modified_forward.7} parent=11 // pred_fallthru
          _
        // Predicated region
        $region33: #{modified_forward.7} parent=11 // pred_check
          %p266 = pneg %p194
        $region34: #{modified_forward.7} parent=11 // pred_check_branch
          %268 = sbr.rel (%p266) target = $region36
        $region35: #{modified_forward.7} parent=11 // pred_region
          _
        $region36: #{modified_forward.7} parent=11 // pred_fallthru
          _
        // Predicated region
        $region37: #{modified_forward.7} parent=11 // pred_check
          %p269 = pneg %p215
        $region38: #{modified_forward.7} parent=11 // pred_check_branch
          %271 = sbr.rel (%p269) target = $region40
        $region39: #{modified_forward.7} parent=11 // pred_region
          _
        $region40: #{modified_forward.7} parent=11 // pred_fallthru
          _
      $region12: #{modified_forward.7} parent=5 // pred_fallthru
        _
      %p272 = scmp.lt.s32.totalorder %s16, 4
      // Predicated region
      $region41: #{modified_forward.7} parent=5 // pred_check
        %p273 = pneg %p272
      $region42: #{modified_forward.7} parent=5 // pred_check_branch
        %275 = sbr.rel (%p273) target = $region44
      $region43: #{modified_forward.7} parent=5 // pred_region
        // Predicated region
        $region45: #{modified_forward.7} parent=43 // pred_check
          %p276 = pneg %p36
        $region46: #{modified_forward.7} parent=43 // pred_check_branch
          %278 = sbr.rel (%p276) target = $region48
        $region47: #{modified_forward.7} parent=43 // pred_region
          %s279 = smul.u32 16, %s16
          %p280 = scmp.lt.s32.totalorder %s279, 63
          %s281 = scalar_select %p280, %s279, 63
          %s282 = scalar_lea.vmem %s0, %s281
          %s283 = smul.u32 16, %s16
        $region48: #{modified_forward.7} parent=43 // pred_fallthru
          _
        // Predicated region
        $region49: #{modified_forward.7} parent=43 // pred_check
          %p284 = pneg %p62
        $region50: #{modified_forward.7} parent=43 // pred_check_branch
          %286 = sbr.rel (%p284) target = $region52
        $region51: #{modified_forward.7} parent=43 // pred_region
          %s287 = smul.u32 256, %s16
          %p288 = scmp.lt.s32.totalorder %s287, 1023
          %s289 = scalar_select %p288, %s287, 1023
          %s290 = smul.addr %s289, 4
          %s291 = scalar_lea.vmem %s1, %s290
          %s292 = smul.u32 256, %s16
        $region52: #{modified_forward.7} parent=43 // pred_fallthru
          _
      $region44: #{modified_forward.7} parent=5 // pred_fallthru
        _
      %p293 = scmp.le.s32.totalorder 1, %s16
      %p294 = scmp.lt.s32.totalorder %s16, 5
      %p295 = pnand %p293, %p294
      %p296 = pneg %p295
      // Predicated region
      $region53: #{modified_forward.7} parent=5 // pred_check
        _
      $region54: #{modified_forward.7} parent=5 // pred_check_branch
        %298 = sbr.rel (%p295) target = $region56
      $region55: #{modified_forward.7} parent=5 // pred_region
        %s299 = ssub.s32 %s16, 1
        %s300 = smul.u32 16, %s21
        %p301 = scmp.lt.s32.totalorder %s300, 63
        %s302 = scalar_select %p301, %s300, 63
        %s303 = scalar_lea.vmem %s0, %s302
        %p304 = pneg %p42
        %p305 = pneg %p39
        %s306 = smul.u32 256, %s21
        %p307 = scmp.lt.s32.totalorder %s306, 1023
        %s308 = scalar_select %p307, %s306, 1023
        %s309 = smul.addr %s308, 4
        %s310 = scalar_lea.vmem %s1, %s309
        %p311 = pneg %p68
        %p312 = pneg %p65
        %p313 = pneg %p89
        %p314 = pneg %p86
        %p315 = pneg %p110
        %p316 = pneg %p107
        %p317 = pneg %p131
        %p318 = pneg %p128
        %p319 = pneg %p152
        %p320 = pneg %p149
        %p321 = pneg %p173
        %p322 = pneg %p170
        %p323 = pneg %p194
        %p324 = pneg %p191
        %p325 = pneg %p215
        %p326 = pneg %p212
        %p327 = pneg %p236
        %p328 = pneg %p233
        %s329 = smul.u32 16, %s21
        %p330 = scmp.lt.s32.totalorder %s329, 63
        %s331 = scalar_select %p330, %s329, 63
        %s332 = scalar_lea.vmem %s0, %s331
        %s333 = smul.u32 16, %s21
        %s334 = smul.u32 256, %s21
        %p335 = scmp.lt.s32.totalorder %s334, 1023
        %s336 = scalar_select %p335, %s334, 1023
        %s337 = smul.addr %s336, 4
        %s338 = scalar_lea.vmem %s1, %s337
        %s339 = smul.u32 256, %s21
        %p341 = scmp.eq.s32.totalorder %s21, 0
        // Predicated region
        $region57: #{modified_forward.7} parent=55 // pred_check
          %p342 = pneg %p341
        $region58: #{modified_forward.7} parent=55 // pred_check_branch
          %344 = sbr.rel (%p342) target = $region60
        $region59: #{modified_forward.7} parent=55 // pred_region
          %345 = vst [vmem:[#allocation2] sm:$0x3] 0.0
        $region60: #{modified_forward.7} parent=55 // pred_fallthru
          _
        %v346 = vld [vmem:[#allocation2] sm:$0x3]
        %v347 = vld [vmem:[%s332] sm:$0xff]
        %v348 = vld [vmem:[%s332 + $0x8] sm:$0xff]
        %v349 = vld [vmem:[%s338] sm:$0xf]
        %v350 = vld [vmem:[%s338 + $0x4] sm:$0xf]
        %v351 = vld [vmem:[%s338 + $0x8] sm:$0xf]
        %v352 = vld [vmem:[%s338 + $0xc] sm:$0xf]
        %v353 = vld [vmem:[%s338 + $0x10] sm:$0xf]
        %v354 = vld [vmem:[%s338 + $0x14] sm:$0xf]
        %v355 = vld [vmem:[%s338 + $0x18] sm:$0xf]
        %v356 = vld [vmem:[%s338 + $0x1c] sm:$0xf]
        %v357 = vld [vmem:[%s338 + $0x20] sm:$0xf]
        %v358 = vld [vmem:[%s338 + $0x24] sm:$0xf]
        %v359 = vld [vmem:[%s338 + $0x28] sm:$0xf]
        %v360 = vld [vmem:[%s338 + $0x2c] sm:$0xf]
        %v361 = vld [vmem:[%s338 + $0x30] sm:$0xf]
        %v362 = vld [vmem:[%s338 + $0x34] sm:$0xf]
        %v363 = vld [vmem:[%s338 + $0x38] sm:$0xf]
        %v364 = vld [vmem:[%s338 + $0x3c] sm:$0xf]
        %v365 = vld [vmem:[%s338 + $0x40] sm:$0xf]
        %v366 = vld [vmem:[%s338 + $0x44] sm:$0xf]
        %v367 = vld [vmem:[%s338 + $0x48] sm:$0xf]
        %v368 = vld [vmem:[%s338 + $0x4c] sm:$0xf]
        %v369 = vld [vmem:[%s338 + $0x50] sm:$0xf]
        %v370 = vld [vmem:[%s338 + $0x54] sm:$0xf]
        %v371 = vld [vmem:[%s338 + $0x58] sm:$0xf]
        %v372 = vld [vmem:[%s338 + $0x5c] sm:$0xf]
        %v373 = vld [vmem:[%s338 + $0x60] sm:$0xf]
        %v374 = vld [vmem:[%s338 + $0x64] sm:$0xf]
        %v375 = vld [vmem:[%s338 + $0x68] sm:$0xf]
        %v376 = vld [vmem:[%s338 + $0x6c] sm:$0xf]
        %v377 = vld [vmem:[%s338 + $0x70] sm:$0xf]
        %v378 = vld [vmem:[%s338 + $0x74] sm:$0xf]
        %v379 = vld [vmem:[%s338 + $0x78] sm:$0xf]
        %v380 = vld [vmem:[%s338 + $0x7c] sm:$0xf]
        %v381 = vld [vmem:[%s338 + $0x80] sm:$0xf]
        %v382 = vld [vmem:[%s338 + $0x84] sm:$0xf]
        %v383 = vld [vmem:[%s338 + $0x88] sm:$0xf]
        %v384 = vld [vmem:[%s338 + $0x8c] sm:$0xf]
        %v385 = vld [vmem:[%s338 + $0x90] sm:$0xf]
        %v386 = vld [vmem:[%s338 + $0x94] sm:$0xf]
        %v387 = vld [vmem:[%s338 + $0x98] sm:$0xf]
        %v388 = vld [vmem:[%s338 + $0x9c] sm:$0xf]
        %v389 = vld [vmem:[%s338 + $0xa0] sm:$0xf]
        %v390 = vld [vmem:[%s338 + $0xa4] sm:$0xf]
        %v391 = vld [vmem:[%s338 + $0xa8] sm:$0xf]
        %v392 = vld [vmem:[%s338 + $0xac] sm:$0xf]
        %v393 = vld [vmem:[%s338 + $0xb0] sm:$0xf]
        %v394 = vld [vmem:[%s338 + $0xb4] sm:$0xf]
        %v395 = vld [vmem:[%s338 + $0xb8] sm:$0xf]
        %v396 = vld [vmem:[%s338 + $0xbc] sm:$0xf]
        %v397 = vld [vmem:[%s338 + $0xc0] sm:$0xf]
        %v398 = vld [vmem:[%s338 + $0xc4] sm:$0xf]
        %v399 = vld [vmem:[%s338 + $0xc8] sm:$0xf]
        %v400 = vld [vmem:[%s338 + $0xcc] sm:$0xf]
        %v401 = vld [vmem:[%s338 + $0xd0] sm:$0xf]
        %v402 = vld [vmem:[%s338 + $0xd4] sm:$0xf]
        %v403 = vld [vmem:[%s338 + $0xd8] sm:$0xf]
        %v404 = vld [vmem:[%s338 + $0xdc] sm:$0xf]
        %v405 = vld [vmem:[%s338 + $0xe0] sm:$0xf]
        %v406 = vld [vmem:[%s338 + $0xe4] sm:$0xf]
        %v407 = vld [vmem:[%s338 + $0xe8] sm:$0xf]
        %v408 = vld [vmem:[%s338 + $0xec] sm:$0xf]
        %v409 = vld [vmem:[%s338 + $0xf0] sm:$0xf]
        %v410 = vld [vmem:[%s338 + $0xf4] sm:$0xf]
        %v411 = vld [vmem:[%s338 + $0xf8] sm:$0xf]
        %v412 = vld [vmem:[%s338 + $0xfc] sm:$0xf]
        %v413 = vld [vmem:[%s338 + $0x100] sm:$0xf]
        %v414 = vld [vmem:[%s338 + $0x104] sm:$0xf]
        %v415 = vld [vmem:[%s338 + $0x108] sm:$0xf]
        %v416 = vld [vmem:[%s338 + $0x10c] sm:$0xf]
        %v417 = vld [vmem:[%s338 + $0x110] sm:$0xf]
        %v418 = vld [vmem:[%s338 + $0x114] sm:$0xf]
        %v419 = vld [vmem:[%s338 + $0x118] sm:$0xf]
        %v420 = vld [vmem:[%s338 + $0x11c] sm:$0xf]
        %v421 = vld [vmem:[%s338 + $0x120] sm:$0xf]
        %v422 = vld [vmem:[%s338 + $0x124] sm:$0xf]
        %v423 = vld [vmem:[%s338 + $0x128] sm:$0xf]
        %v424 = vld [vmem:[%s338 + $0x12c] sm:$0xf]
        %v425 = vld [vmem:[%s338 + $0x130] sm:$0xf]
        %v426 = vld [vmem:[%s338 + $0x134] sm:$0xf]
        %v427 = vld [vmem:[%s338 + $0x138] sm:$0xf]
        %v428 = vld [vmem:[%s338 + $0x13c] sm:$0xf]
        %v429 = vld [vmem:[%s338 + $0x140] sm:$0xf]
        %v430 = vld [vmem:[%s338 + $0x144] sm:$0xf]
        %v431 = vld [vmem:[%s338 + $0x148] sm:$0xf]
        %v432 = vld [vmem:[%s338 + $0x14c] sm:$0xf]
        %v433 = vld [vmem:[%s338 + $0x150] sm:$0xf]
        %v434 = vld [vmem:[%s338 + $0x154] sm:$0xf]
        %v435 = vld [vmem:[%s338 + $0x158] sm:$0xf]
        %v436 = vld [vmem:[%s338 + $0x15c] sm:$0xf]
        %v437 = vld [vmem:[%s338 + $0x160] sm:$0xf]
        %v438 = vld [vmem:[%s338 + $0x164] sm:$0xf]
        %v439 = vld [vmem:[%s338 + $0x168] sm:$0xf]
        %v440 = vld [vmem:[%s338 + $0x16c] sm:$0xf]
        %v441 = vld [vmem:[%s338 + $0x170] sm:$0xf]
        %v442 = vld [vmem:[%s338 + $0x174] sm:$0xf]
        %v443 = vld [vmem:[%s338 + $0x178] sm:$0xf]
        %v444 = vld [vmem:[%s338 + $0x17c] sm:$0xf]
        %v445 = vld [vmem:[%s338 + $0x180] sm:$0xf]
        %v446 = vld [vmem:[%s338 + $0x184] sm:$0xf]
        %v447 = vld [vmem:[%s338 + $0x188] sm:$0xf]
        %v448 = vld [vmem:[%s338 + $0x18c] sm:$0xf]
        %v449 = vld [vmem:[%s338 + $0x190] sm:$0xf]
        %v450 = vld [vmem:[%s338 + $0x194] sm:$0xf]
        %v451 = vld [vmem:[%s338 + $0x198] sm:$0xf]
        %v452 = vld [vmem:[%s338 + $0x19c] sm:$0xf]
        %v453 = vld [vmem:[%s338 + $0x1a0] sm:$0xf]
        %v454 = vld [vmem:[%s338 + $0x1a4] sm:$0xf]
        %v455 = vld [vmem:[%s338 + $0x1a8] sm:$0xf]
        %v456 = vld [vmem:[%s338 + $0x1ac] sm:$0xf]
        %v457 = vld [vmem:[%s338 + $0x1b0] sm:$0xf]
        %v458 = vld [vmem:[%s338 + $0x1b4] sm:$0xf]
        %v459 = vld [vmem:[%s338 + $0x1b8] sm:$0xf]
        %v460 = vld [vmem:[%s338 + $0x1bc] sm:$0xf]
        %v461 = vld [vmem:[%s338 + $0x1c0] sm:$0xf]
        %v462 = vld [vmem:[%s338 + $0x1c4] sm:$0xf]
        %v463 = vld [vmem:[%s338 + $0x1c8] sm:$0xf]
        %v464 = vld [vmem:[%s338 + $0x1cc] sm:$0xf]
        %v465 = vld [vmem:[%s338 + $0x1d0] sm:$0xf]
        %v466 = vld [vmem:[%s338 + $0x1d4] sm:$0xf]
        %v467 = vld [vmem:[%s338 + $0x1d8] sm:$0xf]
        %v468 = vld [vmem:[%s338 + $0x1dc] sm:$0xf]
        %v469 = vld [vmem:[%s338 + $0x1e0] sm:$0xf]
        %v470 = vld [vmem:[%s338 + $0x1e4] sm:$0xf]
        %v471 = vld [vmem:[%s338 + $0x1e8] sm:$0xf]
        %v472 = vld [vmem:[%s338 + $0x1ec] sm:$0xf]
        %v473 = vld [vmem:[%s338 + $0x1f0] sm:$0xf]
        %v474 = vld [vmem:[%s338 + $0x1f4] sm:$0xf]
        %v475 = vld [vmem:[%s338 + $0x1f8] sm:$0xf]
        %v476 = vld [vmem:[%s338 + $0x1fc] sm:$0xf]
        %v477 = vld [vmem:[%s338 + $0x200] sm:$0xf]
        %v478 = vld [vmem:[%s338 + $0x204] sm:$0xf]
        %v479 = vld [vmem:[%s338 + $0x208] sm:$0xf]
        %v480 = vld [vmem:[%s338 + $0x20c] sm:$0xf]
        %v481 = vld [vmem:[%s338 + $0x210] sm:$0xf]
        %v482 = vld [vmem:[%s338 + $0x214] sm:$0xf]
        %v483 = vld [vmem:[%s338 + $0x218] sm:$0xf]
        %v484 = vld [vmem:[%s338 + $0x21c] sm:$0xf]
        %v485 = vld [vmem:[%s338 + $0x220] sm:$0xf]
        %v486 = vld [vmem:[%s338 + $0x224] sm:$0xf]
        %v487 = vld [vmem:[%s338 + $0x228] sm:$0xf]
        %v488 = vld [vmem:[%s338 + $0x22c] sm:$0xf]
        %v489 = vld [vmem:[%s338 + $0x230] sm:$0xf]
        %v490 = vld [vmem:[%s338 + $0x234] sm:$0xf]
        %v491 = vld [vmem:[%s338 + $0x238] sm:$0xf]
        %v492 = vld [vmem:[%s338 + $0x23c] sm:$0xf]
        %v493 = vld [vmem:[%s338 + $0x240] sm:$0xf]
        %v494 = vld [vmem:[%s338 + $0x244] sm:$0xf]
        %v495 = vld [vmem:[%s338 + $0x248] sm:$0xf]
        %v496 = vld [vmem:[%s338 + $0x24c] sm:$0xf]
        %v497 = vld [vmem:[%s338 + $0x250] sm:$0xf]
        %v498 = vld [vmem:[%s338 + $0x254] sm:$0xf]
        %v499 = vld [vmem:[%s338 + $0x258] sm:$0xf]
        %v500 = vld [vmem:[%s338 + $0x25c] sm:$0xf]
        %v501 = vld [vmem:[%s338 + $0x260] sm:$0xf]
        %v502 = vld [vmem:[%s338 + $0x264] sm:$0xf]
        %v503 = vld [vmem:[%s338 + $0x268] sm:$0xf]
        %v504 = vld [vmem:[%s338 + $0x26c] sm:$0xf]
        %v505 = vld [vmem:[%s338 + $0x270] sm:$0xf]
        %v506 = vld [vmem:[%s338 + $0x274] sm:$0xf]
        %v507 = vld [vmem:[%s338 + $0x278] sm:$0xf]
        %v508 = vld [vmem:[%s338 + $0x27c] sm:$0xf]
        %v509 = vld [vmem:[%s338 + $0x280] sm:$0xf]
        %v510 = vld [vmem:[%s338 + $0x284] sm:$0xf]
        %v511 = vld [vmem:[%s338 + $0x288] sm:$0xf]
        %v512 = vld [vmem:[%s338 + $0x28c] sm:$0xf]
        %v513 = vld [vmem:[%s338 + $0x290] sm:$0xf]
        %v514 = vld [vmem:[%s338 + $0x294] sm:$0xf]
        %v515 = vld [vmem:[%s338 + $0x298] sm:$0xf]
        %v516 = vld [vmem:[%s338 + $0x29c] sm:$0xf]
        %v517 = vld [vmem:[%s338 + $0x2a0] sm:$0xf]
        %v518 = vld [vmem:[%s338 + $0x2a4] sm:$0xf]
        %v519 = vld [vmem:[%s338 + $0x2a8] sm:$0xf]
        %v520 = vld [vmem:[%s338 + $0x2ac] sm:$0xf]
        %v521 = vld [vmem:[%s338 + $0x2b0] sm:$0xf]
        %v522 = vld [vmem:[%s338 + $0x2b4] sm:$0xf]
        %v523 = vld [vmem:[%s338 + $0x2b8] sm:$0xf]
        %v524 = vld [vmem:[%s338 + $0x2bc] sm:$0xf]
        %v525 = vld [vmem:[%s338 + $0x2c0] sm:$0xf]
        %v526 = vld [vmem:[%s338 + $0x2c4] sm:$0xf]
        %v527 = vld [vmem:[%s338 + $0x2c8] sm:$0xf]
        %v528 = vld [vmem:[%s338 + $0x2cc] sm:$0xf]
        %v529 = vld [vmem:[%s338 + $0x2d0] sm:$0xf]
        %v530 = vld [vmem:[%s338 + $0x2d4] sm:$0xf]
        %v531 = vld [vmem:[%s338 + $0x2d8] sm:$0xf]
        %v532 = vld [vmem:[%s338 + $0x2dc] sm:$0xf]
        %v533 = vld [vmem:[%s338 + $0x2e0] sm:$0xf]
        %v534 = vld [vmem:[%s338 + $0x2e4] sm:$0xf]
        %v535 = vld [vmem:[%s338 + $0x2e8] sm:$0xf]
        %v536 = vld [vmem:[%s338 + $0x2ec] sm:$0xf]
        %v537 = vld [vmem:[%s338 + $0x2f0] sm:$0xf]
        %v538 = vld [vmem:[%s338 + $0x2f4] sm:$0xf]
        %v539 = vld [vmem:[%s338 + $0x2f8] sm:$0xf]
        %v540 = vld [vmem:[%s338 + $0x2fc] sm:$0xf]
        %v541 = vld [vmem:[%s338 + $0x300] sm:$0xf]
        %v542 = vld [vmem:[%s338 + $0x304] sm:$0xf]
        %v543 = vld [vmem:[%s338 + $0x308] sm:$0xf]
        %v544 = vld [vmem:[%s338 + $0x30c] sm:$0xf]
        %v545 = vld [vmem:[%s338 + $0x310] sm:$0xf]
        %v546 = vld [vmem:[%s338 + $0x314] sm:$0xf]
        %v547 = vld [vmem:[%s338 + $0x318] sm:$0xf]
        %v548 = vld [vmem:[%s338 + $0x31c] sm:$0xf]
        %v549 = vld [vmem:[%s338 + $0x320] sm:$0xf]
        %v550 = vld [vmem:[%s338 + $0x324] sm:$0xf]
        %v551 = vld [vmem:[%s338 + $0x328] sm:$0xf]
        %v552 = vld [vmem:[%s338 + $0x32c] sm:$0xf]
        %v553 = vld [vmem:[%s338 + $0x330] sm:$0xf]
        %v554 = vld [vmem:[%s338 + $0x334] sm:$0xf]
        %v555 = vld [vmem:[%s338 + $0x338] sm:$0xf]
        %v556 = vld [vmem:[%s338 + $0x33c] sm:$0xf]
        %v557 = vld [vmem:[%s338 + $0x340] sm:$0xf]
        %v558 = vld [vmem:[%s338 + $0x344] sm:$0xf]
        %v559 = vld [vmem:[%s338 + $0x348] sm:$0xf]
        %v560 = vld [vmem:[%s338 + $0x34c] sm:$0xf]
        %v561 = vld [vmem:[%s338 + $0x350] sm:$0xf]
        %v562 = vld [vmem:[%s338 + $0x354] sm:$0xf]
        %v563 = vld [vmem:[%s338 + $0x358] sm:$0xf]
        %v564 = vld [vmem:[%s338 + $0x35c] sm:$0xf]
        %v565 = vld [vmem:[%s338 + $0x360] sm:$0xf]
        %v566 = vld [vmem:[%s338 + $0x364] sm:$0xf]
        %v567 = vld [vmem:[%s338 + $0x368] sm:$0xf]
        %v568 = vld [vmem:[%s338 + $0x36c] sm:$0xf]
        %v569 = vld [vmem:[%s338 + $0x370] sm:$0xf]
        %v570 = vld [vmem:[%s338 + $0x374] sm:$0xf]
        %v571 = vld [vmem:[%s338 + $0x378] sm:$0xf]
        %v572 = vld [vmem:[%s338 + $0x37c] sm:$0xf]
        %v573 = vld [vmem:[%s338 + $0x380] sm:$0xf]
        %v574 = vld [vmem:[%s338 + $0x384] sm:$0xf]
        %v575 = vld [vmem:[%s338 + $0x388] sm:$0xf]
        %v576 = vld [vmem:[%s338 + $0x38c] sm:$0xf]
        %v577 = vld [vmem:[%s338 + $0x390] sm:$0xf]
        %v578 = vld [vmem:[%s338 + $0x394] sm:$0xf]
        %v579 = vld [vmem:[%s338 + $0x398] sm:$0xf]
        %v580 = vld [vmem:[%s338 + $0x39c] sm:$0xf]
        %v581 = vld [vmem:[%s338 + $0x3a0] sm:$0xf]
        %v582 = vld [vmem:[%s338 + $0x3a4] sm:$0xf]
        %v583 = vld [vmem:[%s338 + $0x3a8] sm:$0xf]
        %v584 = vld [vmem:[%s338 + $0x3ac] sm:$0xf]
        %v585 = vld [vmem:[%s338 + $0x3b0] sm:$0xf]
        %v586 = vld [vmem:[%s338 + $0x3b4] sm:$0xf]
        %v587 = vld [vmem:[%s338 + $0x3b8] sm:$0xf]
        %v588 = vld [vmem:[%s338 + $0x3bc] sm:$0xf]
        %v589 = vld [vmem:[%s338 + $0x3c0] sm:$0xf]
        %v590 = vld [vmem:[%s338 + $0x3c4] sm:$0xf]
        %v591 = vld [vmem:[%s338 + $0x3c8] sm:$0xf]
        %v592 = vld [vmem:[%s338 + $0x3cc] sm:$0xf]
        %v593 = vld [vmem:[%s338 + $0x3d0] sm:$0xf]
        %v594 = vld [vmem:[%s338 + $0x3d4] sm:$0xf]
        %v595 = vld [vmem:[%s338 + $0x3d8] sm:$0xf]
        %v596 = vld [vmem:[%s338 + $0x3dc] sm:$0xf]
        %v597 = vld [vmem:[%s338 + $0x3e0] sm:$0xf]
        %v598 = vld [vmem:[%s338 + $0x3e4] sm:$0xf]
        %v599 = vld [vmem:[%s338 + $0x3e8] sm:$0xf]
        %v600 = vld [vmem:[%s338 + $0x3ec] sm:$0xf]
        %v601 = vld [vmem:[%s338 + $0x3f0] sm:$0xf]
        %v602 = vld [vmem:[%s338 + $0x3f4] sm:$0xf]
        %v603 = vld [vmem:[%s338 + $0x3f8] sm:$0xf]
        %v604 = vld [vmem:[%s338 + $0x3fc] sm:$0xf]
        %v607 = vcombine.high %v347, %v347
        %v609 = vunpack.c.l.s4 1966171168
        %v610 = vunpack.c.0.s8 %v609
        %v611 = vlaneseq
        %v612 = vshrl.u32 %v611, 7
        %v613 = vsub.s32 %v610, %v612
        %v614 = vrot.slane %v347, %v613
        %v616 = vunpack.c.l.s4 1966171168
        %v617 = vunpack.c.0.s8 %v616
        %v618 = vlaneseq
        %v619 = vshrl.u32 %v618, 7
        %v620 = vsub.s32 %v617, %v619
        %v621 = vrot.slane %v607, %v620
        %v622 = vcombine.high %v614, %v614
        %v623 = vcombine.high %v621, %v621
        %v625 = vunpack.c.l.s4 1966171168
        %v626 = vunpack.c.0.s8 %v625
        %v627 = vlaneseq
        %v628 = vshrl.u32 %v627, 7
        %v629 = vsub.s32 %v626, %v628
        %v630 = vrot.slane %v614, %v629
        %v632 = vunpack.c.l.s4 1966171168
        %v633 = vunpack.c.0.s8 %v632
        %v634 = vlaneseq
        %v635 = vshrl.u32 %v634, 7
        %v636 = vsub.s32 %v633, %v635
        %v637 = vrot.slane %v621, %v636
        %v639 = vunpack.c.l.s4 1966171168
        %v640 = vunpack.c.0.s8 %v639
        %v641 = vlaneseq
        %v642 = vshrl.u32 %v641, 7
        %v643 = vsub.s32 %v640, %v642
        %v644 = vrot.slane %v622, %v643
        %v646 = vunpack.c.l.s4 1966171168
        %v647 = vunpack.c.0.s8 %v646
        %v648 = vlaneseq
        %v649 = vshrl.u32 %v648, 7
        %v650 = vsub.s32 %v647, %v649
        %v651 = vrot.slane %v623, %v650
        %v652 = vcombine.high %v630, %v630
        %v653 = vcombine.high %v637, %v637
        %v654 = vcombine.high %v644, %v644
        %v655 = vcombine.high %v651, %v651
        %v656 = vcombine.high %v348, %v348
        %v658 = vunpack.c.l.s4 1966171168
        %v659 = vunpack.c.0.s8 %v658
        %v660 = vlaneseq
        %v661 = vshrl.u32 %v660, 7
        %v662 = vsub.s32 %v659, %v661
        %v663 = vrot.slane %v348, %v662
        %v665 = vunpack.c.l.s4 1966171168
        %v666 = vunpack.c.0.s8 %v665
        %v667 = vlaneseq
        %v668 = vshrl.u32 %v667, 7
        %v669 = vsub.s32 %v666, %v668
        %v670 = vrot.slane %v656, %v669
        %v671 = vcombine.high %v663, %v663
        %v672 = vcombine.high %v670, %v670
        %v674 = vunpack.c.l.s4 1966171168
        %v675 = vunpack.c.0.s8 %v674
        %v676 = vlaneseq
        %v677 = vshrl.u32 %v676, 7
        %v678 = vsub.s32 %v675, %v677
        %v679 = vrot.slane %v663, %v678
        %v681 = vunpack.c.l.s4 1966171168
        %v682 = vunpack.c.0.s8 %v681
        %v683 = vlaneseq
        %v684 = vshrl.u32 %v683, 7
        %v685 = vsub.s32 %v682, %v684
        %v686 = vrot.slane %v670, %v685
        %v688 = vunpack.c.l.s4 1966171168
        %v689 = vunpack.c.0.s8 %v688
        %v690 = vlaneseq
        %v691 = vshrl.u32 %v690, 7
        %v692 = vsub.s32 %v689, %v691
        %v693 = vrot.slane %v671, %v692
        %v695 = vunpack.c.l.s4 1966171168
        %v696 = vunpack.c.0.s8 %v695
        %v697 = vlaneseq
        %v698 = vshrl.u32 %v697, 7
        %v699 = vsub.s32 %v696, %v698
        %v700 = vrot.slane %v672, %v699
        %v701 = vcombine.high %v679, %v679
        %v702 = vcombine.high %v686, %v686
        %v703 = vcombine.high %v693, %v693
        %v704 = vcombine.high %v700, %v700
        %v977 = vunpack.c.l.b16 %v349
        %v978 = vunpack.c.l.b16 %v350
        %v979 = vunpack.c.l.b16 %v351
        %v980 = vunpack.c.l.b16 %v352
        %v981 = vunpack.c.l.b16 %v353
        %v982 = vunpack.c.l.b16 %v354
        %v983 = vunpack.c.l.b16 %v355
        %v984 = vunpack.c.l.b16 %v356
        %v985 = vunpack.c.l.b16 %v357
        %v986 = vunpack.c.l.b16 %v358
        %v987 = vunpack.c.l.b16 %v359
        %v988 = vunpack.c.l.b16 %v360
        %v989 = vunpack.c.l.b16 %v361
        %v990 = vunpack.c.l.b16 %v362
        %v991 = vunpack.c.l.b16 %v363
        %v992 = vunpack.c.l.b16 %v364
        %v993 = vunpack.c.l.b16 %v365
        %v994 = vunpack.c.l.b16 %v366
        %v995 = vunpack.c.l.b16 %v367
        %v996 = vunpack.c.l.b16 %v368
        %v997 = vunpack.c.l.b16 %v369
        %v998 = vunpack.c.l.b16 %v370
        %v999 = vunpack.c.l.b16 %v371
        %v1000 = vunpack.c.l.b16 %v372
        %v1001 = vunpack.c.l.b16 %v373
        %v1002 = vunpack.c.l.b16 %v374
        %v1003 = vunpack.c.l.b16 %v375
        %v1004 = vunpack.c.l.b16 %v376
        %v1005 = vunpack.c.l.b16 %v377
        %v1006 = vunpack.c.l.b16 %v378
        %v1007 = vunpack.c.l.b16 %v379
        %v1008 = vunpack.c.l.b16 %v380
        %v1009 = vunpack.c.l.b16 %v381
        %v1010 = vunpack.c.l.b16 %v382
        %v1011 = vunpack.c.l.b16 %v383
        %v1012 = vunpack.c.l.b16 %v384
        %v1013 = vunpack.c.l.b16 %v385
        %v1014 = vunpack.c.l.b16 %v386
        %v1015 = vunpack.c.l.b16 %v387
        %v1016 = vunpack.c.l.b16 %v388
        %v1017 = vunpack.c.l.b16 %v389
        %v1018 = vunpack.c.l.b16 %v390
        %v1019 = vunpack.c.l.b16 %v391
        %v1020 = vunpack.c.l.b16 %v392
        %v1021 = vunpack.c.l.b16 %v393
        %v1022 = vunpack.c.l.b16 %v394
        %v1023 = vunpack.c.l.b16 %v395
        %v1024 = vunpack.c.l.b16 %v396
        %v1025 = vunpack.c.l.b16 %v397
        %v1026 = vunpack.c.l.b16 %v398
        %v1027 = vunpack.c.l.b16 %v399
        %v1028 = vunpack.c.l.b16 %v400
        %v1029 = vunpack.c.l.b16 %v401
        %v1030 = vunpack.c.l.b16 %v402
        %v1031 = vunpack.c.l.b16 %v403
        %v1032 = vunpack.c.l.b16 %v404
        %v1033 = vunpack.c.l.b16 %v405
        %v1034 = vunpack.c.l.b16 %v406
        %v1035 = vunpack.c.l.b16 %v407
        %v1036 = vunpack.c.l.b16 %v408
        %v1037 = vunpack.c.l.b16 %v409
        %v1038 = vunpack.c.l.b16 %v410
        %v1039 = vunpack.c.l.b16 %v411
        %v1040 = vunpack.c.l.b16 %v412
        %v1041 = vunpack.c.l.b16 %v413
        %v1042 = vunpack.c.l.b16 %v414
        %v1043 = vunpack.c.l.b16 %v415
        %v1044 = vunpack.c.l.b16 %v416
        %v1045 = vunpack.c.l.b16 %v417
        %v1046 = vunpack.c.l.b16 %v418
        %v1047 = vunpack.c.l.b16 %v419
        %v1048 = vunpack.c.l.b16 %v420
        %v1049 = vunpack.c.l.b16 %v421
        %v1050 = vunpack.c.l.b16 %v422
        %v1051 = vunpack.c.l.b16 %v423
        %v1052 = vunpack.c.l.b16 %v424
        %v1053 = vunpack.c.l.b16 %v425
        %v1054 = vunpack.c.l.b16 %v426
        %v1055 = vunpack.c.l.b16 %v427
        %v1056 = vunpack.c.l.b16 %v428
        %v1057 = vunpack.c.l.b16 %v429
        %v1058 = vunpack.c.l.b16 %v430
        %v1059 = vunpack.c.l.b16 %v431
        %v1060 = vunpack.c.l.b16 %v432
        %v1061 = vunpack.c.l.b16 %v433
        %v1062 = vunpack.c.l.b16 %v434
        %v1063 = vunpack.c.l.b16 %v435
        %v1064 = vunpack.c.l.b16 %v436
        %v1065 = vunpack.c.l.b16 %v437
        %v1066 = vunpack.c.l.b16 %v438
        %v1067 = vunpack.c.l.b16 %v439
        %v1068 = vunpack.c.l.b16 %v440
        %v1069 = vunpack.c.l.b16 %v441
        %v1070 = vunpack.c.l.b16 %v442
        %v1071 = vunpack.c.l.b16 %v443
        %v1072 = vunpack.c.l.b16 %v444
        %v1073 = vunpack.c.l.b16 %v445
        %v1074 = vunpack.c.l.b16 %v446
        %v1075 = vunpack.c.l.b16 %v447
        %v1076 = vunpack.c.l.b16 %v448
        %v1077 = vunpack.c.l.b16 %v449
        %v1078 = vunpack.c.l.b16 %v450
        %v1079 = vunpack.c.l.b16 %v451
        %v1080 = vunpack.c.l.b16 %v452
        %v1081 = vunpack.c.l.b16 %v453
        %v1082 = vunpack.c.l.b16 %v454
        %v1083 = vunpack.c.l.b16 %v455
        %v1084 = vunpack.c.l.b16 %v456
        %v1085 = vunpack.c.l.b16 %v457
        %v1086 = vunpack.c.l.b16 %v458
        %v1087 = vunpack.c.l.b16 %v459
        %v1088 = vunpack.c.l.b16 %v460
        %v1089 = vunpack.c.l.b16 %v461
        %v1090 = vunpack.c.l.b16 %v462
        %v1091 = vunpack.c.l.b16 %v463
        %v1092 = vunpack.c.l.b16 %v464
        %v1093 = vunpack.c.l.b16 %v465
        %v1094 = vunpack.c.l.b16 %v466
        %v1095 = vunpack.c.l.b16 %v467
        %v1096 = vunpack.c.l.b16 %v468
        %v1097 = vunpack.c.l.b16 %v469
        %v1098 = vunpack.c.l.b16 %v470
        %v1099 = vunpack.c.l.b16 %v471
        %v1100 = vunpack.c.l.b16 %v472
        %v1101 = vunpack.c.l.b16 %v473
        %v1102 = vunpack.c.l.b16 %v474
        %v1103 = vunpack.c.l.b16 %v475
        %v1104 = vunpack.c.l.b16 %v476
        %v1105 = vunpack.c.l.b16 %v477
        %v1106 = vunpack.c.l.b16 %v478
        %v1107 = vunpack.c.l.b16 %v479
        %v1108 = vunpack.c.l.b16 %v480
        %v1109 = vunpack.c.l.b16 %v481
        %v1110 = vunpack.c.l.b16 %v482
        %v1111 = vunpack.c.l.b16 %v483
        %v1112 = vunpack.c.l.b16 %v484
        %v1113 = vunpack.c.l.b16 %v485
        %v1114 = vunpack.c.l.b16 %v486
        %v1115 = vunpack.c.l.b16 %v487
        %v1116 = vunpack.c.l.b16 %v488
        %v1117 = vunpack.c.l.b16 %v489
        %v1118 = vunpack.c.l.b16 %v490
        %v1119 = vunpack.c.l.b16 %v491
        %v1120 = vunpack.c.l.b16 %v492
        %v1121 = vunpack.c.l.b16 %v493
        %v1122 = vunpack.c.l.b16 %v494
        %v1123 = vunpack.c.l.b16 %v495
        %v1124 = vunpack.c.l.b16 %v496
        %v1125 = vunpack.c.l.b16 %v497
        %v1126 = vunpack.c.l.b16 %v498
        %v1127 = vunpack.c.l.b16 %v499
        %v1128 = vunpack.c.l.b16 %v500
        %v1129 = vunpack.c.l.b16 %v501
        %v1130 = vunpack.c.l.b16 %v502
        %v1131 = vunpack.c.l.b16 %v503
        %v1132 = vunpack.c.l.b16 %v504
        %v1133 = vunpack.c.l.b16 %v505
        %v1134 = vunpack.c.l.b16 %v506
        %v1135 = vunpack.c.l.b16 %v507
        %v1136 = vunpack.c.l.b16 %v508
        %v1137 = vunpack.c.l.b16 %v509
        %v1138 = vunpack.c.l.b16 %v510
        %v1139 = vunpack.c.l.b16 %v511
        %v1140 = vunpack.c.l.b16 %v512
        %v1141 = vunpack.c.l.b16 %v513
        %v1142 = vunpack.c.l.b16 %v514
        %v1143 = vunpack.c.l.b16 %v515
        %v1144 = vunpack.c.l.b16 %v516
        %v1145 = vunpack.c.l.b16 %v517
        %v1146 = vunpack.c.l.b16 %v518
        %v1147 = vunpack.c.l.b16 %v519
        %v1148 = vunpack.c.l.b16 %v520
        %v1149 = vunpack.c.l.b16 %v521
        %v1150 = vunpack.c.l.b16 %v522
        %v1151 = vunpack.c.l.b16 %v523
        %v1152 = vunpack.c.l.b16 %v524
        %v1153 = vunpack.c.l.b16 %v525
        %v1154 = vunpack.c.l.b16 %v526
        %v1155 = vunpack.c.l.b16 %v527
        %v1156 = vunpack.c.l.b16 %v528
        %v1157 = vunpack.c.l.b16 %v529
        %v1158 = vunpack.c.l.b16 %v530
        %v1159 = vunpack.c.l.b16 %v531
        %v1160 = vunpack.c.l.b16 %v532
        %v1161 = vunpack.c.l.b16 %v533
        %v1162 = vunpack.c.l.b16 %v534
        %v1163 = vunpack.c.l.b16 %v535
        %v1164 = vunpack.c.l.b16 %v536
        %v1165 = vunpack.c.l.b16 %v537
        %v1166 = vunpack.c.l.b16 %v538
        %v1167 = vunpack.c.l.b16 %v539
        %v1168 = vunpack.c.l.b16 %v540
        %v1169 = vunpack.c.l.b16 %v541
        %v1170 = vunpack.c.l.b16 %v542
        %v1171 = vunpack.c.l.b16 %v543
        %v1172 = vunpack.c.l.b16 %v544
        %v1173 = vunpack.c.l.b16 %v545
        %v1174 = vunpack.c.l.b16 %v546
        %v1175 = vunpack.c.l.b16 %v547
        %v1176 = vunpack.c.l.b16 %v548
        %v1177 = vunpack.c.l.b16 %v549
        %v1178 = vunpack.c.l.b16 %v550
        %v1179 = vunpack.c.l.b16 %v551
        %v1180 = vunpack.c.l.b16 %v552
        %v1181 = vunpack.c.l.b16 %v553
        %v1182 = vunpack.c.l.b16 %v554
        %v1183 = vunpack.c.l.b16 %v555
        %v1184 = vunpack.c.l.b16 %v556
        %v1185 = vunpack.c.l.b16 %v557
        %v1186 = vunpack.c.l.b16 %v558
        %v1187 = vunpack.c.l.b16 %v559
        %v1188 = vunpack.c.l.b16 %v560
        %v1189 = vunpack.c.l.b16 %v561
        %v1190 = vunpack.c.l.b16 %v562
        %v1191 = vunpack.c.l.b16 %v563
        %v1192 = vunpack.c.l.b16 %v564
        %v1193 = vunpack.c.l.b16 %v565
        %v1194 = vunpack.c.l.b16 %v566
        %v1195 = vunpack.c.l.b16 %v567
        %v1196 = vunpack.c.l.b16 %v568
        %v1197 = vunpack.c.l.b16 %v569
        %v1198 = vunpack.c.l.b16 %v570
        %v1199 = vunpack.c.l.b16 %v571
        %v1200 = vunpack.c.l.b16 %v572
        %v1201 = vunpack.c.l.b16 %v573
        %v1202 = vunpack.c.l.b16 %v574
        %v1203 = vunpack.c.l.b16 %v575
        %v1204 = vunpack.c.l.b16 %v576
        %v1205 = vunpack.c.l.b16 %v577
        %v1206 = vunpack.c.l.b16 %v578
        %v1207 = vunpack.c.l.b16 %v579
        %v1208 = vunpack.c.l.b16 %v580
        %v1209 = vunpack.c.l.b16 %v581
        %v1210 = vunpack.c.l.b16 %v582
        %v1211 = vunpack.c.l.b16 %v583
        %v1212 = vunpack.c.l.b16 %v584
        %v1213 = vunpack.c.l.b16 %v585
        %v1214 = vunpack.c.l.b16 %v586
        %v1215 = vunpack.c.l.b16 %v587
        %v1216 = vunpack.c.l.b16 %v588
        %v1217 = vunpack.c.l.b16 %v589
        %v1218 = vunpack.c.l.b16 %v590
        %v1219 = vunpack.c.l.b16 %v591
        %v1220 = vunpack.c.l.b16 %v592
        %v1221 = vunpack.c.l.b16 %v593
        %v1222 = vunpack.c.l.b16 %v594
        %v1223 = vunpack.c.l.b16 %v595
        %v1224 = vunpack.c.l.b16 %v596
        %v1225 = vunpack.c.l.b16 %v597
        %v1226 = vunpack.c.l.b16 %v598
        %v1227 = vunpack.c.l.b16 %v599
        %v1228 = vunpack.c.l.b16 %v600
        %v1229 = vunpack.c.l.b16 %v601
        %v1230 = vunpack.c.l.b16 %v602
        %v1231 = vunpack.c.l.b16 %v603
        %v1232 = vunpack.c.l.b16 %v604
        %v1233 = vpack.c.b16 %v978, %v977
        %v1234 = vpack.c.b16 %v980, %v979
        %v1235 = vpack.c.b16 %v982, %v981
        %v1236 = vpack.c.b16 %v984, %v983
        %v1237 = vpack.c.b16 %v986, %v985
        %v1238 = vpack.c.b16 %v988, %v987
        %v1239 = vpack.c.b16 %v990, %v989
        %v1240 = vpack.c.b16 %v992, %v991
        %v1241 = vpack.c.b16 %v994, %v993
        %v1242 = vpack.c.b16 %v996, %v995
        %v1243 = vpack.c.b16 %v998, %v997
        %v1244 = vpack.c.b16 %v1000, %v999
        %v1245 = vpack.c.b16 %v1002, %v1001
        %v1246 = vpack.c.b16 %v1004, %v1003
        %v1247 = vpack.c.b16 %v1006, %v1005
        %v1248 = vpack.c.b16 %v1008, %v1007
        %v1249 = vpack.c.b16 %v1010, %v1009
        %v1250 = vpack.c.b16 %v1012, %v1011
        %v1251 = vpack.c.b16 %v1014, %v1013
        %v1252 = vpack.c.b16 %v1016, %v1015
        %v1253 = vpack.c.b16 %v1018, %v1017
        %v1254 = vpack.c.b16 %v1020, %v1019
        %v1255 = vpack.c.b16 %v1022, %v1021
        %v1256 = vpack.c.b16 %v1024, %v1023
        %v1257 = vpack.c.b16 %v1026, %v1025
        %v1258 = vpack.c.b16 %v1028, %v1027
        %v1259 = vpack.c.b16 %v1030, %v1029
        %v1260 = vpack.c.b16 %v1032, %v1031
        %v1261 = vpack.c.b16 %v1034, %v1033
        %v1262 = vpack.c.b16 %v1036, %v1035
        %v1263 = vpack.c.b16 %v1038, %v1037
        %v1264 = vpack.c.b16 %v1040, %v1039
        %v1265 = vpack.c.b16 %v1042, %v1041
        %v1266 = vpack.c.b16 %v1044, %v1043
        %v1267 = vpack.c.b16 %v1046, %v1045
        %v1268 = vpack.c.b16 %v1048, %v1047
        %v1269 = vpack.c.b16 %v1050, %v1049
        %v1270 = vpack.c.b16 %v1052, %v1051
        %v1271 = vpack.c.b16 %v1054, %v1053
        %v1272 = vpack.c.b16 %v1056, %v1055
        %v1273 = vpack.c.b16 %v1058, %v1057
        %v1274 = vpack.c.b16 %v1060, %v1059
        %v1275 = vpack.c.b16 %v1062, %v1061
        %v1276 = vpack.c.b16 %v1064, %v1063
        %v1277 = vpack.c.b16 %v1066, %v1065
        %v1278 = vpack.c.b16 %v1068, %v1067
        %v1279 = vpack.c.b16 %v1070, %v1069
        %v1280 = vpack.c.b16 %v1072, %v1071
        %v1281 = vpack.c.b16 %v1074, %v1073
        %v1282 = vpack.c.b16 %v1076, %v1075
        %v1283 = vpack.c.b16 %v1078, %v1077
        %v1284 = vpack.c.b16 %v1080, %v1079
        %v1285 = vpack.c.b16 %v1082, %v1081
        %v1286 = vpack.c.b16 %v1084, %v1083
        %v1287 = vpack.c.b16 %v1086, %v1085
        %v1288 = vpack.c.b16 %v1088, %v1087
        %v1289 = vpack.c.b16 %v1090, %v1089
        %v1290 = vpack.c.b16 %v1092, %v1091
        %v1291 = vpack.c.b16 %v1094, %v1093
        %v1292 = vpack.c.b16 %v1096, %v1095
        %v1293 = vpack.c.b16 %v1098, %v1097
        %v1294 = vpack.c.b16 %v1100, %v1099
        %v1295 = vpack.c.b16 %v1102, %v1101
        %v1296 = vpack.c.b16 %v1104, %v1103
        %v1297 = vpack.c.b16 %v1106, %v1105
        %v1298 = vpack.c.b16 %v1108, %v1107
        %v1299 = vpack.c.b16 %v1110, %v1109
        %v1300 = vpack.c.b16 %v1112, %v1111
        %v1301 = vpack.c.b16 %v1114, %v1113
        %v1302 = vpack.c.b16 %v1116, %v1115
        %v1303 = vpack.c.b16 %v1118, %v1117
        %v1304 = vpack.c.b16 %v1120, %v1119
        %v1305 = vpack.c.b16 %v1122, %v1121
        %v1306 = vpack.c.b16 %v1124, %v1123
        %v1307 = vpack.c.b16 %v1126, %v1125
        %v1308 = vpack.c.b16 %v1128, %v1127
        %v1309 = vpack.c.b16 %v1130, %v1129
        %v1310 = vpack.c.b16 %v1132, %v1131
        %v1311 = vpack.c.b16 %v1134, %v1133
        %v1312 = vpack.c.b16 %v1136, %v1135
        %v1313 = vpack.c.b16 %v1138, %v1137
        %v1314 = vpack.c.b16 %v1140, %v1139
        %v1315 = vpack.c.b16 %v1142, %v1141
        %v1316 = vpack.c.b16 %v1144, %v1143
        %v1317 = vpack.c.b16 %v1146, %v1145
        %v1318 = vpack.c.b16 %v1148, %v1147
        %v1319 = vpack.c.b16 %v1150, %v1149
        %v1320 = vpack.c.b16 %v1152, %v1151
        %v1321 = vpack.c.b16 %v1154, %v1153
        %v1322 = vpack.c.b16 %v1156, %v1155
        %v1323 = vpack.c.b16 %v1158, %v1157
        %v1324 = vpack.c.b16 %v1160, %v1159
        %v1325 = vpack.c.b16 %v1162, %v1161
        %v1326 = vpack.c.b16 %v1164, %v1163
        %v1327 = vpack.c.b16 %v1166, %v1165
        %v1328 = vpack.c.b16 %v1168, %v1167
        %v1329 = vpack.c.b16 %v1170, %v1169
        %v1330 = vpack.c.b16 %v1172, %v1171
        %v1331 = vpack.c.b16 %v1174, %v1173
        %v1332 = vpack.c.b16 %v1176, %v1175
        %v1333 = vpack.c.b16 %v1178, %v1177
        %v1334 = vpack.c.b16 %v1180, %v1179
        %v1335 = vpack.c.b16 %v1182, %v1181
        %v1336 = vpack.c.b16 %v1184, %v1183
        %v1337 = vpack.c.b16 %v1186, %v1185
        %v1338 = vpack.c.b16 %v1188, %v1187
        %v1339 = vpack.c.b16 %v1190, %v1189
        %v1340 = vpack.c.b16 %v1192, %v1191
        %v1341 = vpack.c.b16 %v1194, %v1193
        %v1342 = vpack.c.b16 %v1196, %v1195
        %v1343 = vpack.c.b16 %v1198, %v1197
        %v1344 = vpack.c.b16 %v1200, %v1199
        %v1345 = vpack.c.b16 %v1202, %v1201
        %v1346 = vpack.c.b16 %v1204, %v1203
        %v1347 = vpack.c.b16 %v1206, %v1205
        %v1348 = vpack.c.b16 %v1208, %v1207
        %v1349 = vpack.c.b16 %v1210, %v1209
        %v1350 = vpack.c.b16 %v1212, %v1211
        %v1351 = vpack.c.b16 %v1214, %v1213
        %v1352 = vpack.c.b16 %v1216, %v1215
        %v1353 = vpack.c.b16 %v1218, %v1217
        %v1354 = vpack.c.b16 %v1220, %v1219
        %v1355 = vpack.c.b16 %v1222, %v1221
        %v1356 = vpack.c.b16 %v1224, %v1223
        %v1357 = vpack.c.b16 %v1226, %v1225
        %v1358 = vpack.c.b16 %v1228, %v1227
        %v1359 = vpack.c.b16 %v1230, %v1229
        %v1360 = vpack.c.b16 %v1232, %v1231
        %1489 = vmatprep.subr.bf16.mxu0 0
        %1490 = vmatpush1.bf16.msra.mxu0 %v1233
        %1491 = vmatprep.subr.bf16.mxu0 0
        %1492 = vmatpush1.bf16.msra.mxu0 %v1234
        %1493 = vmatprep.subr.bf16.mxu0 0
        %1494 = vmatpush1.bf16.msra.mxu0 %v1235
        %1495 = vmatprep.subr.bf16.mxu0 0
        %1496 = vmatpush1.bf16.msra.mxu0 %v1236
        %1497 = vmatprep.subr.bf16.mxu0 0
        %1498 = vmatpush1.bf16.msra.mxu0 %v1237
        %1499 = vmatprep.subr.bf16.mxu0 0
        %1500 = vmatpush1.bf16.msra.mxu0 %v1238
        %1501 = vmatprep.subr.bf16.mxu0 0
        %1502 = vmatpush1.bf16.msra.mxu0 %v1239
        %1503 = vmatprep.subr.bf16.mxu0 0
        %1504 = vmatpush1.bf16.msra.mxu0 %v1240
        %1505 = vmatprep.subr.bf16.mxu0 0
        %1506 = vmatpush1.bf16.msra.mxu0 %v1241
        %1507 = vmatprep.subr.bf16.mxu0 0
        %1508 = vmatpush1.bf16.msra.mxu0 %v1242
        %1509 = vmatprep.subr.bf16.mxu0 0
        %1510 = vmatpush1.bf16.msra.mxu0 %v1243
        %1511 = vmatprep.subr.bf16.mxu0 0
        %1512 = vmatpush1.bf16.msra.mxu0 %v1244
        %1513 = vmatprep.subr.bf16.mxu0 0
        %1514 = vmatpush1.bf16.msra.mxu0 %v1245
        %1515 = vmatprep.subr.bf16.mxu0 0
        %1516 = vmatpush1.bf16.msra.mxu0 %v1246
        %1517 = vmatprep.subr.bf16.mxu0 0
        %1518 = vmatpush1.bf16.msra.mxu0 %v1247
        %1519 = vmatprep.subr.bf16.mxu0 0
        %1520 = vmatpush1.bf16.msra.mxu0 %v1248
        %1521 = vmatprep.mubr.bf16.mxu0 %v644
        %1522 = vmatmul.mubr.bf16.gmra.mrb[0].mxu0 %v630
        %v1523 = vpop.f32.mrb[0].mxu0
        %v1524 = vadd.f32 0.0, %v1523
        %v1525 = vpop.f32.mrb[0].mxu0
        %v1526 = vpop.f32.mrb[0].mxu0
        %v1527 = vpop.f32.mrb[0].mxu0
        %1528 = vdwg.mxu0
        %1529 = vmatprep.subr.bf16.mxu0 0
        %1530 = vmatpush1.bf16.msra.mxu0 %v1249
        %1531 = vmatprep.subr.bf16.mxu0 0
        %1532 = vmatpush1.bf16.msra.mxu0 %v1250
        %1533 = vmatprep.subr.bf16.mxu0 0
        %1534 = vmatpush1.bf16.msra.mxu0 %v1251
        %1535 = vmatprep.subr.bf16.mxu0 0
        %1536 = vmatpush1.bf16.msra.mxu0 %v1252
        %1537 = vmatprep.subr.bf16.mxu0 0
        %1538 = vmatpush1.bf16.msra.mxu0 %v1253
        %1539 = vmatprep.subr.bf16.mxu0 0
        %1540 = vmatpush1.bf16.msra.mxu0 %v1254
        %1541 = vmatprep.subr.bf16.mxu0 0
        %1542 = vmatpush1.bf16.msra.mxu0 %v1255
        %1543 = vmatprep.subr.bf16.mxu0 0
        %1544 = vmatpush1.bf16.msra.mxu0 %v1256
        %1545 = vmatprep.subr.bf16.mxu0 0
        %1546 = vmatpush1.bf16.msra.mxu0 %v1257
        %1547 = vmatprep.subr.bf16.mxu0 0
        %1548 = vmatpush1.bf16.msra.mxu0 %v1258
        %1549 = vmatprep.subr.bf16.mxu0 0
        %1550 = vmatpush1.bf16.msra.mxu0 %v1259
        %1551 = vmatprep.subr.bf16.mxu0 0
        %1552 = vmatpush1.bf16.msra.mxu0 %v1260
        %1553 = vmatprep.subr.bf16.mxu0 0
        %1554 = vmatpush1.bf16.msra.mxu0 %v1261
        %1555 = vmatprep.subr.bf16.mxu0 0
        %1556 = vmatpush1.bf16.msra.mxu0 %v1262
        %1557 = vmatprep.subr.bf16.mxu0 0
        %1558 = vmatpush1.bf16.msra.mxu0 %v1263
        %1559 = vmatprep.subr.bf16.mxu0 0
        %1560 = vmatpush1.bf16.msra.mxu0 %v1264
        %1561 = vmatprep.mubr.bf16.mxu0 %v654
        %1562 = vmatmul.mubr.bf16.gmra.mrb[0].mxu0 %v652
        %v1563 = vpop.f32.mrb[0].mxu0
        %v1564 = vadd.f32 %v1524, %v1563
        %v1565 = vpop.f32.mrb[0].mxu0
        %v1566 = vpop.f32.mrb[0].mxu0
        %v1567 = vpop.f32.mrb[0].mxu0
        %1568 = vdwg.mxu0
        %1569 = vmatprep.subr.bf16.mxu0 0
        %1570 = vmatpush1.bf16.msra.mxu0 %v1265
        %1571 = vmatprep.subr.bf16.mxu0 0
        %1572 = vmatpush1.bf16.msra.mxu0 %v1266
        %1573 = vmatprep.subr.bf16.mxu0 0
        %1574 = vmatpush1.bf16.msra.mxu0 %v1267
        %1575 = vmatprep.subr.bf16.mxu0 0
        %1576 = vmatpush1.bf16.msra.mxu0 %v1268
        %1577 = vmatprep.subr.bf16.mxu0 0
        %1578 = vmatpush1.bf16.msra.mxu0 %v1269
        %1579 = vmatprep.subr.bf16.mxu0 0
        %1580 = vmatpush1.bf16.msra.mxu0 %v1270
        %1581 = vmatprep.subr.bf16.mxu0 0
        %1582 = vmatpush1.bf16.msra.mxu0 %v1271
        %1583 = vmatprep.subr.bf16.mxu0 0
        %1584 = vmatpush1.bf16.msra.mxu0 %v1272
        %1585 = vmatprep.subr.bf16.mxu0 0
        %1586 = vmatpush1.bf16.msra.mxu0 %v1273
        %1587 = vmatprep.subr.bf16.mxu0 0
        %1588 = vmatpush1.bf16.msra.mxu0 %v1274
        %1589 = vmatprep.subr.bf16.mxu0 0
        %1590 = vmatpush1.bf16.msra.mxu0 %v1275
        %1591 = vmatprep.subr.bf16.mxu0 0
        %1592 = vmatpush1.bf16.msra.mxu0 %v1276
        %1593 = vmatprep.subr.bf16.mxu0 0
        %1594 = vmatpush1.bf16.msra.mxu0 %v1277
        %1595 = vmatprep.subr.bf16.mxu0 0
        %1596 = vmatpush1.bf16.msra.mxu0 %v1278
        %1597 = vmatprep.subr.bf16.mxu0 0
        %1598 = vmatpush1.bf16.msra.mxu0 %v1279
        %1599 = vmatprep.subr.bf16.mxu0 0
        %1600 = vmatpush1.bf16.msra.mxu0 %v1280
        %1601 = vmatprep.mubr.bf16.mxu0 %v651
        %1602 = vmatmul.mubr.bf16.gmra.mrb[0].mxu0 %v637
        %v1603 = vpop.f32.mrb[0].mxu0
        %v1604 = vadd.f32 %v1564, %v1603
        %v1605 = vpop.f32.mrb[0].mxu0
        %v1606 = vpop.f32.mrb[0].mxu0
        %v1607 = vpop.f32.mrb[0].mxu0
        %1608 = vdwg.mxu0
        %1609 = vmatprep.subr.bf16.mxu0 0
        %1610 = vmatpush1.bf16.msra.mxu0 %v1281
        %1611 = vmatprep.subr.bf16.mxu0 0
        %1612 = vmatpush1.bf16.msra.mxu0 %v1282
        %1613 = vmatprep.subr.bf16.mxu0 0
        %1614 = vmatpush1.bf16.msra.mxu0 %v1283
        %1615 = vmatprep.subr.bf16.mxu0 0
        %1616 = vmatpush1.bf16.msra.mxu0 %v1284
        %1617 = vmatprep.subr.bf16.mxu0 0
        %1618 = vmatpush1.bf16.msra.mxu0 %v1285
        %1619 = vmatprep.subr.bf16.mxu0 0
        %1620 = vmatpush1.bf16.msra.mxu0 %v1286
        %1621 = vmatprep.subr.bf16.mxu0 0
        %1622 = vmatpush1.bf16.msra.mxu0 %v1287
        %1623 = vmatprep.subr.bf16.mxu0 0
        %1624 = vmatpush1.bf16.msra.mxu0 %v1288
        %1625 = vmatprep.subr.bf16.mxu0 0
        %1626 = vmatpush1.bf16.msra.mxu0 %v1289
        %1627 = vmatprep.subr.bf16.mxu0 0
        %1628 = vmatpush1.bf16.msra.mxu0 %v1290
        %1629 = vmatprep.subr.bf16.mxu0 0
        %1630 = vmatpush1.bf16.msra.mxu0 %v1291
        %1631 = vmatprep.subr.bf16.mxu0 0
        %1632 = vmatpush1.bf16.msra.mxu0 %v1292
        %1633 = vmatprep.subr.bf16.mxu0 0
        %1634 = vmatpush1.bf16.msra.mxu0 %v1293
        %1635 = vmatprep.subr.bf16.mxu0 0
        %1636 = vmatpush1.bf16.msra.mxu0 %v1294
        %1637 = vmatprep.subr.bf16.mxu0 0
        %1638 = vmatpush1.bf16.msra.mxu0 %v1295
        %1639 = vmatprep.subr.bf16.mxu0 0
        %1640 = vmatpush1.bf16.msra.mxu0 %v1296
        %1641 = vmatprep.mubr.bf16.mxu0 %v655
        %1642 = vmatmul.mubr.bf16.gmra.mrb[0].mxu0 %v653
        %v1643 = vpop.f32.mrb[0].mxu0
        %v1644 = vadd.f32 %v1604, %v1643
        %v1645 = vpop.f32.mrb[0].mxu0
        %v1646 = vpop.f32.mrb[0].mxu0
        %v1647 = vpop.f32.mrb[0].mxu0
        %1648 = vdwg.mxu0
        %1649 = vmatprep.subr.bf16.mxu0 0
        %1650 = vmatpush1.bf16.msra.mxu0 %v1297
        %1651 = vmatprep.subr.bf16.mxu0 0
        %1652 = vmatpush1.bf16.msra.mxu0 %v1298
        %1653 = vmatprep.subr.bf16.mxu0 0
        %1654 = vmatpush1.bf16.msra.mxu0 %v1299
        %1655 = vmatprep.subr.bf16.mxu0 0
        %1656 = vmatpush1.bf16.msra.mxu0 %v1300
        %1657 = vmatprep.subr.bf16.mxu0 0
        %1658 = vmatpush1.bf16.msra.mxu0 %v1301
        %1659 = vmatprep.subr.bf16.mxu0 0
        %1660 = vmatpush1.bf16.msra.mxu0 %v1302
        %1661 = vmatprep.subr.bf16.mxu0 0
        %1662 = vmatpush1.bf16.msra.mxu0 %v1303
        %1663 = vmatprep.subr.bf16.mxu0 0
        %1664 = vmatpush1.bf16.msra.mxu0 %v1304
        %1665 = vmatprep.subr.bf16.mxu0 0
        %1666 = vmatpush1.bf16.msra.mxu0 %v1305
        %1667 = vmatprep.subr.bf16.mxu0 0
        %1668 = vmatpush1.bf16.msra.mxu0 %v1306
        %1669 = vmatprep.subr.bf16.mxu0 0
        %1670 = vmatpush1.bf16.msra.mxu0 %v1307
        %1671 = vmatprep.subr.bf16.mxu0 0
        %1672 = vmatpush1.bf16.msra.mxu0 %v1308
        %1673 = vmatprep.subr.bf16.mxu0 0
        %1674 = vmatpush1.bf16.msra.mxu0 %v1309
        %1675 = vmatprep.subr.bf16.mxu0 0
        %1676 = vmatpush1.bf16.msra.mxu0 %v1310
        %1677 = vmatprep.subr.bf16.mxu0 0
        %1678 = vmatpush1.bf16.msra.mxu0 %v1311
        %1679 = vmatprep.subr.bf16.mxu0 0
        %1680 = vmatpush1.bf16.msra.mxu0 %v1312
        %1681 = vmatprep.mubr.bf16.mxu0 %v693
        %1682 = vmatmul.mubr.bf16.gmra.mrb[0].mxu0 %v679
        %v1683 = vpop.f32.mrb[0].mxu0
        %v1684 = vadd.f32 %v1644, %v1683
        %v1685 = vpop.f32.mrb[0].mxu0
        %v1686 = vpop.f32.mrb[0].mxu0
        %v1687 = vpop.f32.mrb[0].mxu0
        %1688 = vdwg.mxu0
        %1689 = vmatprep.subr.bf16.mxu0 0
        %1690 = vmatpush1.bf16.msra.mxu0 %v1313
        %1691 = vmatprep.subr.bf16.mxu0 0
        %1692 = vmatpush1.bf16.msra.mxu0 %v1314
        %1693 = vmatprep.subr.bf16.mxu0 0
        %1694 = vmatpush1.bf16.msra.mxu0 %v1315
        %1695 = vmatprep.subr.bf16.mxu0 0
        %1696 = vmatpush1.bf16.msra.mxu0 %v1316
        %1697 = vmatprep.subr.bf16.mxu0 0
        %1698 = vmatpush1.bf16.msra.mxu0 %v1317
        %1699 = vmatprep.subr.bf16.mxu0 0
        %1700 = vmatpush1.bf16.msra.mxu0 %v1318
        %1701 = vmatprep.subr.bf16.mxu0 0
        %1702 = vmatpush1.bf16.msra.mxu0 %v1319
        %1703 = vmatprep.subr.bf16.mxu0 0
        %1704 = vmatpush1.bf16.msra.mxu0 %v1320
        %1705 = vmatprep.subr.bf16.mxu0 0
        %1706 = vmatpush1.bf16.msra.mxu0 %v1321
        %1707 = vmatprep.subr.bf16.mxu0 0
        %1708 = vmatpush1.bf16.msra.mxu0 %v1322
        %1709 = vmatprep.subr.bf16.mxu0 0
        %1710 = vmatpush1.bf16.msra.mxu0 %v1323
        %1711 = vmatprep.subr.bf16.mxu0 0
        %1712 = vmatpush1.bf16.msra.mxu0 %v1324
        %1713 = vmatprep.subr.bf16.mxu0 0
        %1714 = vmatpush1.bf16.msra.mxu0 %v1325
        %1715 = vmatprep.subr.bf16.mxu0 0
        %1716 = vmatpush1.bf16.msra.mxu0 %v1326
        %1717 = vmatprep.subr.bf16.mxu0 0
        %1718 = vmatpush1.bf16.msra.mxu0 %v1327
        %1719 = vmatprep.subr.bf16.mxu0 0
        %1720 = vmatpush1.bf16.msra.mxu0 %v1328
        %1721 = vmatprep.mubr.bf16.mxu0 %v703
        %1722 = vmatmul.mubr.bf16.gmra.mrb[0].mxu0 %v701
        %v1723 = vpop.f32.mrb[0].mxu0
        %v1724 = vadd.f32 %v1684, %v1723
        %v1725 = vpop.f32.mrb[0].mxu0
        %v1726 = vpop.f32.mrb[0].mxu0
        %v1727 = vpop.f32.mrb[0].mxu0
        %1728 = vdwg.mxu0
        %1729 = vmatprep.subr.bf16.mxu0 0
        %1730 = vmatpush1.bf16.msra.mxu0 %v1329
        %1731 = vmatprep.subr.bf16.mxu0 0
        %1732 = vmatpush1.bf16.msra.mxu0 %v1330
        %1733 = vmatprep.subr.bf16.mxu0 0
        %1734 = vmatpush1.bf16.msra.mxu0 %v1331
        %1735 = vmatprep.subr.bf16.mxu0 0
        %1736 = vmatpush1.bf16.msra.mxu0 %v1332
        %1737 = vmatprep.subr.bf16.mxu0 0
        %1738 = vmatpush1.bf16.msra.mxu0 %v1333
        %1739 = vmatprep.subr.bf16.mxu0 0
        %1740 = vmatpush1.bf16.msra.mxu0 %v1334
        %1741 = vmatprep.subr.bf16.mxu0 0
        %1742 = vmatpush1.bf16.msra.mxu0 %v1335
        %1743 = vmatprep.subr.bf16.mxu0 0
        %1744 = vmatpush1.bf16.msra.mxu0 %v1336
        %1745 = vmatprep.subr.bf16.mxu0 0
        %1746 = vmatpush1.bf16.msra.mxu0 %v1337
        %1747 = vmatprep.subr.bf16.mxu0 0
        %1748 = vmatpush1.bf16.msra.mxu0 %v1338
        %1749 = vmatprep.subr.bf16.mxu0 0
        %1750 = vmatpush1.bf16.msra.mxu0 %v1339
        %1751 = vmatprep.subr.bf16.mxu0 0
        %1752 = vmatpush1.bf16.msra.mxu0 %v1340
        %1753 = vmatprep.subr.bf16.mxu0 0
        %1754 = vmatpush1.bf16.msra.mxu0 %v1341
        %1755 = vmatprep.subr.bf16.mxu0 0
        %1756 = vmatpush1.bf16.msra.mxu0 %v1342
        %1757 = vmatprep.subr.bf16.mxu0 0
        %1758 = vmatpush1.bf16.msra.mxu0 %v1343
        %1759 = vmatprep.subr.bf16.mxu0 0
        %1760 = vmatpush1.bf16.msra.mxu0 %v1344
        %1761 = vmatprep.mubr.bf16.mxu0 %v700
        %1762 = vmatmul.mubr.bf16.gmra.mrb[0].mxu0 %v686
        %v1763 = vpop.f32.mrb[0].mxu0
        %v1764 = vadd.f32 %v1724, %v1763
        %v1765 = vpop.f32.mrb[0].mxu0
        %v1766 = vpop.f32.mrb[0].mxu0
        %v1767 = vpop.f32.mrb[0].mxu0
        %1768 = vdwg.mxu0
        %1769 = vmatprep.subr.bf16.mxu0 0
        %1770 = vmatpush1.bf16.msra.mxu0 %v1345
        %1771 = vmatprep.subr.bf16.mxu0 0
        %1772 = vmatpush1.bf16.msra.mxu0 %v1346
        %1773 = vmatprep.subr.bf16.mxu0 0
        %1774 = vmatpush1.bf16.msra.mxu0 %v1347
        %1775 = vmatprep.subr.bf16.mxu0 0
        %1776 = vmatpush1.bf16.msra.mxu0 %v1348
        %1777 = vmatprep.subr.bf16.mxu0 0
        %1778 = vmatpush1.bf16.msra.mxu0 %v1349
        %1779 = vmatprep.subr.bf16.mxu0 0
        %1780 = vmatpush1.bf16.msra.mxu0 %v1350
        %1781 = vmatprep.subr.bf16.mxu0 0
        %1782 = vmatpush1.bf16.msra.mxu0 %v1351
        %1783 = vmatprep.subr.bf16.mxu0 0
        %1784 = vmatpush1.bf16.msra.mxu0 %v1352
        %1785 = vmatprep.subr.bf16.mxu0 0
        %1786 = vmatpush1.bf16.msra.mxu0 %v1353
        %1787 = vmatprep.subr.bf16.mxu0 0
        %1788 = vmatpush1.bf16.msra.mxu0 %v1354
        %1789 = vmatprep.subr.bf16.mxu0 0
        %1790 = vmatpush1.bf16.msra.mxu0 %v1355
        %1791 = vmatprep.subr.bf16.mxu0 0
        %1792 = vmatpush1.bf16.msra.mxu0 %v1356
        %1793 = vmatprep.subr.bf16.mxu0 0
        %1794 = vmatpush1.bf16.msra.mxu0 %v1357
        %1795 = vmatprep.subr.bf16.mxu0 0
        %1796 = vmatpush1.bf16.msra.mxu0 %v1358
        %1797 = vmatprep.subr.bf16.mxu0 0
        %1798 = vmatpush1.bf16.msra.mxu0 %v1359
        %1799 = vmatprep.subr.bf16.mxu0 0
        %1800 = vmatpush1.bf16.msra.mxu0 %v1360
        %1801 = vmatprep.mubr.bf16.mxu0 %v704
        %1802 = vmatmul.mubr.bf16.gmra.mrb[0].mxu0 %v702
        %v1803 = vpop.f32.mrb[0].mxu0
        %v1804 = vadd.f32 %v1764, %v1803
        %v1805 = vpop.f32.mrb[0].mxu0
        %v1806 = vpop.f32.mrb[0].mxu0
        %v1807 = vpop.f32.mrb[0].mxu0
        %1808 = vdwg.mxu0
        %v1809 = vadd.f32 %v346, %v1804
        %1810 = vst [vmem:[#allocation2] sm:$0x3] %v1809
        %p1811 = scmp.eq.s32.totalorder %s21, 3
        // Predicated region
        $region61: #{modified_forward.7} parent=55 // pred_check
          %p1812 = pneg %p1811
        $region62: #{modified_forward.7} parent=55 // pred_check_branch
          %1814 = sbr.rel (%p1812) target = $region64
        $region63: #{modified_forward.7} parent=55 // pred_region
          %v1815 = vld [vmem:[#allocation2] sm:$0x3]
          %v1816 = vld [vmem:[%s2] sm:$0x1]
          %v1818 = vlaneseq
          %v1819 = vshrl.u32 %v1818, 7
          %v1820 = vsub.s32 0, %v1819
          %v1821 = vrot.slane %v1816, %v1820
          %v1823 = vadd.f32 %v1815, %v1821
          %v1824 = vmax.f32 %v1823, 0.0
          %v1825 = vpack.c.bf16 %v1824, %v1824
          %v1826 = vld [vmem:[%s3] sm:$0xf]
          %v1827 = vld [vmem:[%s3 + $0x4] sm:$0xf]
          %v1828 = vld [vmem:[%s3 + $0x8] sm:$0xf]
          %v1829 = vld [vmem:[%s3 + $0xc] sm:$0xf]
          %v1830 = vld [vmem:[%s3 + $0x10] sm:$0xf]
          %v1831 = vld [vmem:[%s3 + $0x14] sm:$0xf]
          %v1832 = vld [vmem:[%s3 + $0x18] sm:$0xf]
          %v1833 = vld [vmem:[%s3 + $0x1c] sm:$0xf]
          %v1834 = vld [vmem:[%s3 + $0x20] sm:$0xf]
          %v1835 = vld [vmem:[%s3 + $0x24] sm:$0xf]
          %v1836 = vld [vmem:[%s3 + $0x28] sm:$0xf]
          %v1837 = vld [vmem:[%s3 + $0x2c] sm:$0xf]
          %v1838 = vld [vmem:[%s3 + $0x30] sm:$0xf]
          %v1839 = vld [vmem:[%s3 + $0x34] sm:$0xf]
          %v1840 = vld [vmem:[%s3 + $0x38] sm:$0xf]
          %v1841 = vld [vmem:[%s3 + $0x3c] sm:$0xf]
          %v1842 = vld [vmem:[%s4] sm:$0x1]
          %v1844 = vlaneseq
          %v1845 = vshrl.u32 %v1844, 7
          %v1846 = vsub.s32 0, %v1845
          %v1847 = vrot.slane %v1842, %v1846
          %v1865 = vunpack.c.l.b16 %v1826
          %v1866 = vunpack.c.l.b16 %v1827
          %v1867 = vunpack.c.l.b16 %v1828
          %v1868 = vunpack.c.l.b16 %v1829
          %v1869 = vunpack.c.l.b16 %v1830
          %v1870 = vunpack.c.l.b16 %v1831
          %v1871 = vunpack.c.l.b16 %v1832
          %v1872 = vunpack.c.l.b16 %v1833
          %v1873 = vunpack.c.l.b16 %v1834
          %v1874 = vunpack.c.l.b16 %v1835
          %v1875 = vunpack.c.l.b16 %v1836
          %v1876 = vunpack.c.l.b16 %v1837
          %v1877 = vunpack.c.l.b16 %v1838
          %v1878 = vunpack.c.l.b16 %v1839
          %v1879 = vunpack.c.l.b16 %v1840
          %v1880 = vunpack.c.l.b16 %v1841
          %v1881 = vpack.c.b16 %v1866, %v1865
          %v1882 = vpack.c.b16 %v1868, %v1867
          %v1883 = vpack.c.b16 %v1870, %v1869
          %v1884 = vpack.c.b16 %v1872, %v1871
          %v1885 = vpack.c.b16 %v1874, %v1873
          %v1886 = vpack.c.b16 %v1876, %v1875
          %v1887 = vpack.c.b16 %v1878, %v1877
          %v1888 = vpack.c.b16 %v1880, %v1879
          %1897 = vmatprep.subr.bf16.mxu0 0
          %1898 = vmatpush1.bf16.msra.mxu0 %v1881
          %1899 = vmatprep.subr.bf16.mxu0 0
          %1900 = vmatpush1.bf16.msra.mxu0 %v1882
          %1901 = vmatprep.subr.bf16.mxu0 0
          %1902 = vmatpush1.bf16.msra.mxu0 %v1883
          %1903 = vmatprep.subr.bf16.mxu0 0
          %1904 = vmatpush1.bf16.msra.mxu0 %v1884
          %1905 = vmatprep.subr.bf16.mxu0 0
          %1906 = vmatpush1.bf16.msra.mxu0 %v1885
          %1907 = vmatprep.subr.bf16.mxu0 0
          %1908 = vmatpush1.bf16.msra.mxu0 %v1886
          %1909 = vmatprep.subr.bf16.mxu0 0
          %1910 = vmatpush1.bf16.msra.mxu0 %v1887
          %1911 = vmatprep.subr.bf16.mxu0 0
          %1912 = vmatpush1.bf16.msra.mxu0 %v1888
          %1913 = vmatprep.subr.bf16.mxu0 0
          %1914 = vmatpush1.bf16.msra.mxu0 0
          %1915 = vmatprep.subr.bf16.mxu0 0
          %1916 = vmatpush1.bf16.msra.mxu0 0
          %1917 = vmatprep.subr.bf16.mxu0 0
          %1918 = vmatpush1.bf16.msra.mxu0 0
          %1919 = vmatprep.subr.bf16.mxu0 0
          %1920 = vmatpush1.bf16.msra.mxu0 0
          %1921 = vmatprep.subr.bf16.mxu0 0
          %1922 = vmatpush1.bf16.msra.mxu0 0
          %1923 = vmatprep.subr.bf16.mxu0 0
          %1924 = vmatpush1.bf16.msra.mxu0 0
          %1925 = vmatprep.subr.bf16.mxu0 0
          %1926 = vmatpush1.bf16.msra.mxu0 0
          %1927 = vmatprep.subr.bf16.mxu0 0
          %1928 = vmatpush1.bf16.msra.mxu0 0
          %1929 = vmatprep.mubr.bf16.mxu0 0
          %1930 = vmatmul.mubr.bf16.gmra.mrb[0].mxu0 %v1825
          %v1931 = vpop.f32.mrb[0].mxu0
          %v1932 = vadd.f32 %v1847, %v1931
          %v1933 = vpop.f32.mrb[0].mxu0
          %v1934 = vpop.f32.mrb[0].mxu0
          %v1935 = vpop.f32.mrb[0].mxu0
          %1936 = vdwg.mxu0
          %v1937 = vmax.f32 %v1932, 0.0
          %v1938 = vpack.c.bf16 %v1937, %v1937
          %v1939 = vld [vmem:[%s5] sm:$0xf]
          %v1940 = vld [vmem:[%s5 + $0x4] sm:$0xf]
          %v1941 = vld [vmem:[%s5 + $0x8] sm:$0xf]
          %v1942 = vld [vmem:[%s5 + $0xc] sm:$0xf]
          %v1943 = vld [vmem:[%s5 + $0x10] sm:$0xf]
          %v1944 = vld [vmem:[%s5 + $0x14] sm:$0xf]
          %v1945 = vld [vmem:[%s5 + $0x18] sm:$0xf]
          %v1946 = vld [vmem:[%s5 + $0x1c] sm:$0xf]
          %v1947 = vld [vmem:[%s5 + $0x20] sm:$0xf]
          %v1948 = vld [vmem:[%s5 + $0x24] sm:$0xf]
          %v1949 = vld [vmem:[%s5 + $0x28] sm:$0xf]
          %v1950 = vld [vmem:[%s5 + $0x2c] sm:$0xf]
          %v1951 = vld [vmem:[%s5 + $0x30] sm:$0xf]
          %v1952 = vld [vmem:[%s5 + $0x34] sm:$0xf]
          %v1953 = vld [vmem:[%s5 + $0x38] sm:$0xf]
          %v1954 = vld [vmem:[%s6] sm:$0x1]
          %v1956 = vlaneseq
          %v1957 = vshrl.u32 %v1956, 7
          %v1958 = vsub.s32 0, %v1957
          %v1959 = vrot.slane %v1954, %v1958
          %v1976 = vunpack.c.l.b16 %v1939
          %v1977 = vunpack.c.l.b16 %v1940
          %v1978 = vunpack.c.l.b16 %v1941
          %v1979 = vunpack.c.l.b16 %v1942
          %v1980 = vunpack.c.l.b16 %v1943
          %v1981 = vunpack.c.l.b16 %v1944
          %v1982 = vunpack.c.l.b16 %v1945
          %v1983 = vunpack.c.l.b16 %v1946
          %v1984 = vunpack.c.l.b16 %v1947
          %v1985 = vunpack.c.l.b16 %v1948
          %v1986 = vunpack.c.l.b16 %v1949
          %v1987 = vunpack.c.l.b16 %v1950
          %v1988 = vunpack.c.l.b16 %v1951
          %v1989 = vunpack.c.l.b16 %v1952
          %v1990 = vunpack.c.l.b16 %v1953
          %v1991 = vpack.c.b16 %v1977, %v1976
          %v1992 = vpack.c.b16 %v1979, %v1978
          %v1993 = vpack.c.b16 %v1981, %v1980
          %v1994 = vpack.c.b16 %v1983, %v1982
          %v1995 = vpack.c.b16 %v1985, %v1984
          %v1996 = vpack.c.b16 %v1987, %v1986
          %v1997 = vpack.c.b16 %v1989, %v1988
          %v1998 = vpack.c.b16 %v1990, %v1990
          %vm2006 = vcmask 982016
          %v2008 = vsel %vm2006, %v1938, 0
          %vm2010 = vcmask 1043456
          %v2012 = vsel %vm2010, %v1998, 0
          %2014 = vmatprep.subr.bf16.mxu0 0
          %2015 = vmatpush1.bf16.msra.mxu0 %v1991
          %2016 = vmatprep.subr.bf16.mxu0 0
          %2017 = vmatpush1.bf16.msra.mxu0 %v1992
          %2018 = vmatprep.subr.bf16.mxu0 0
          %2019 = vmatpush1.bf16.msra.mxu0 %v1993
          %2020 = vmatprep.subr.bf16.mxu0 0
          %2021 = vmatpush1.bf16.msra.mxu0 %v1994
          %2022 = vmatprep.subr.bf16.mxu0 0
          %2023 = vmatpush1.bf16.msra.mxu0 %v1995
          %2024 = vmatprep.subr.bf16.mxu0 0
          %2025 = vmatpush1.bf16.msra.mxu0 %v1996
          %2026 = vmatprep.subr.bf16.mxu0 0
          %2027 = vmatpush1.bf16.msra.mxu0 %v1997
          %2028 = vmatprep.subr.bf16.mxu0 0
          %2029 = vmatpush1.bf16.msra.mxu0 %v2012
          %2030 = vmatprep.subr.bf16.mxu0 0
          %2031 = vmatpush1.bf16.msra.mxu0 0
          %2032 = vmatprep.subr.bf16.mxu0 0
          %2033 = vmatpush1.bf16.msra.mxu0 0
          %2034 = vmatprep.subr.bf16.mxu0 0
          %2035 = vmatpush1.bf16.msra.mxu0 0
          %2036 = vmatprep.subr.bf16.mxu0 0
          %2037 = vmatpush1.bf16.msra.mxu0 0
          %2038 = vmatprep.subr.bf16.mxu0 0
          %2039 = vmatpush1.bf16.msra.mxu0 0
          %2040 = vmatprep.subr.bf16.mxu0 0
          %2041 = vmatpush1.bf16.msra.mxu0 0
          %2042 = vmatprep.subr.bf16.mxu0 0
          %2043 = vmatpush1.bf16.msra.mxu0 0
          %2044 = vmatprep.subr.bf16.mxu0 0
          %2045 = vmatpush1.bf16.msra.mxu0 0
          %2046 = vmatprep.mubr.bf16.mxu0 0
          %2047 = vmatmul.mubr.bf16.gmra.mrb[0].mxu0 %v2008
          %v2048 = vpop.f32.mrb[0].mxu0
          %v2049 = vadd.f32 %v1959, %v2048
          %v2050 = vpop.f32.mrb[0].mxu0
          %v2051 = vpop.f32.mrb[0].mxu0
          %v2052 = vpop.f32.mrb[0].mxu0
          %2053 = vdwg.mxu0
          %v2054 = vmax.f32 %v2049, 0.0
          %v2055 = vpack.c.bf16 %v2054, %v2054
          %v2056 = vld [vmem:[%s7] sm:$0xf]
          %v2057 = vld [vmem:[%s7 + $0x4] sm:$0xf]
          %v2058 = vld [vmem:[%s7 + $0x8] sm:$0xf]
          %v2059 = vld [vmem:[%s7 + $0xc] sm:$0xf]
          %v2060 = vld [vmem:[%s7 + $0x10] sm:$0xf]
          %v2061 = vld [vmem:[%s7 + $0x14] sm:$0xf]
          %v2062 = vld [vmem:[%s7 + $0x18] sm:$0xf]
          %v2063 = vld [vmem:[%s7 + $0x1c] sm:$0xf]
          %v2064 = vld [vmem:[%s7 + $0x20] sm:$0xf]
          %v2065 = vld [vmem:[%s7 + $0x24] sm:$0xf]
          %v2066 = vld [vmem:[%s7 + $0x28] sm:$0x3]
          %v2067 = vld [vmem:[%s8] sm:$0x1]
          %v2069 = vlaneseq
          %v2070 = vshrl.u32 %v2069, 7
          %v2071 = vsub.s32 0, %v2070
          %v2072 = vrot.slane %v2067, %v2071
          %v2085 = vunpack.c.l.b16 %v2056
          %v2086 = vunpack.c.l.b16 %v2057
          %v2087 = vunpack.c.l.b16 %v2058
          %v2088 = vunpack.c.l.b16 %v2059
          %v2089 = vunpack.c.l.b16 %v2060
          %v2090 = vunpack.c.l.b16 %v2061
          %v2091 = vunpack.c.l.b16 %v2062
          %v2092 = vunpack.c.l.b16 %v2063
          %v2093 = vunpack.c.l.b16 %v2064
          %v2094 = vunpack.c.l.b16 %v2065
          %v2095 = vunpack.c.l.b16 %v2066
          %v2096 = vpack.c.b16 %v2086, %v2085
          %v2097 = vpack.c.b16 %v2088, %v2087
          %v2098 = vpack.c.b16 %v2090, %v2089
          %v2099 = vpack.c.b16 %v2092, %v2091
          %v2100 = vpack.c.b16 %v2094, %v2093
          %v2101 = vpack.c.b16 %v2095, %v2095
          %vm2107 = vcmask 687104
          %v2109 = vsel %vm2107, %v2055, 0
          %vm2111 = vcmask 1041408
          %v2113 = vsel %vm2111, %v2101, 0
          %2115 = vmatprep.subr.bf16.mxu0 0
          %2116 = vmatpush1.bf16.msra.mxu0 %v2096
          %2117 = vmatprep.subr.bf16.mxu0 0
          %2118 = vmatpush1.bf16.msra.mxu0 %v2097
          %2119 = vmatprep.subr.bf16.mxu0 0
          %2120 = vmatpush1.bf16.msra.mxu0 %v2098
          %2121 = vmatprep.subr.bf16.mxu0 0
          %2122 = vmatpush1.bf16.msra.mxu0 %v2099
          %2123 = vmatprep.subr.bf16.mxu0 0
          %2124 = vmatpush1.bf16.msra.mxu0 %v2100
          %2125 = vmatprep.subr.bf16.mxu0 0
          %2126 = vmatpush1.bf16.msra.mxu0 %v2113
          %2127 = vmatprep.subr.bf16.mxu0 0
          %2128 = vmatpush1.bf16.msra.mxu0 0
          %2129 = vmatprep.subr.bf16.mxu0 0
          %2130 = vmatpush1.bf16.msra.mxu0 0
          %2131 = vmatprep.subr.bf16.mxu0 0
          %2132 = vmatpush1.bf16.msra.mxu0 0
          %2133 = vmatprep.subr.bf16.mxu0 0
          %2134 = vmatpush1.bf16.msra.mxu0 0
          %2135 = vmatprep.subr.bf16.mxu0 0
          %2136 = vmatpush1.bf16.msra.mxu0 0
          %2137 = vmatprep.subr.bf16.mxu0 0
          %2138 = vmatpush1.bf16.msra.mxu0 0
          %2139 = vmatprep.subr.bf16.mxu0 0
          %2140 = vmatpush1.bf16.msra.mxu0 0
          %2141 = vmatprep.subr.bf16.mxu0 0
          %2142 = vmatpush1.bf16.msra.mxu0 0
          %2143 = vmatprep.subr.bf16.mxu0 0
          %2144 = vmatpush1.bf16.msra.mxu0 0
          %2145 = vmatprep.subr.bf16.mxu0 0
          %2146 = vmatpush1.bf16.msra.mxu0 0
          %2147 = vmatprep.mubr.bf16.mxu0 0
          %2148 = vmatmul.mubr.bf16.gmra.mrb[0].mxu0 %v2109
          %v2149 = vpop.f32.mrb[0].mxu0
          %v2150 = vadd.f32 %v2072, %v2149
          %v2151 = vpop.f32.mrb[0].mxu0
          %v2152 = vpop.f32.mrb[0].mxu0
          %v2153 = vpop.f32.mrb[0].mxu0
          %2154 = vdwg.mxu0
          %vm2155 = vcmask 74752
          %2156 = vst.msk [vmem:[#allocation3] sm:$0x3] %vm2155, %v2150
        $region64: #{modified_forward.7} parent=55 // pred_fallthru
          _
        // Predicated region
        $region65: #{modified_forward.7} parent=55 // pred_check
          %p2157 = pneg %p233
        $region66: #{modified_forward.7} parent=55 // pred_check_branch
          %2159 = sbr.rel (%p2157) target = $region68
        $region67: #{modified_forward.7} parent=55 // pred_region
          %s2161 = ssub.s32 32, 32
          %2162 = vsyncadd [#allocation4], %s2161
          %s2164 = sshll.u32 [#allocation3], 4
          %s2165 = int_to_ptr.vmem [resolvable:$true] %s2164
          %2167 = dma.vmem_to_hbm [thread:$0]  %s2165, 32, %s9, [#allocation4]
        $region68: #{modified_forward.7} parent=55 // pred_fallthru
          _
        // Predicated region
        $region69: #{modified_forward.7} parent=55 // pred_check
          %p2168 = pneg %p233
        $region70: #{modified_forward.7} parent=55 // pred_check_branch
          %2170 = sbr.rel (%p2168) target = $region72
        $region71: #{modified_forward.7} parent=55 // pred_region
          %2171 = dma.done [#allocation4], 32
        $region72: #{modified_forward.7} parent=55 // pred_fallthru
          _
      $region56: #{modified_forward.7} parent=5 // pred_fallthru
        _
      %p2172 = scmp.le.s32.totalorder 2, %s16
      // Predicated region
      $region73: #{modified_forward.7} parent=5 // pred_check
        %p2173 = pneg %p2172
      $region74: #{modified_forward.7} parent=5 // pred_check_branch
        %2175 = sbr.rel (%p2173) target = $region76
      $region75: #{modified_forward.7} parent=5 // pred_region
        %s2176 = ssub.s32 %s16, 2
      $region76: #{modified_forward.7} parent=5 // pred_fallthru
        _
    $region6: #{modified_forward.7} parent=1 // loop_footer
      %s20 = sadd.s32 1, %s16
    $region7: #{modified_forward.7} parent=1 // loop_footer_branch
      %15 = sbr.rel target = $region3
    $region8: #{modified_forward.7} parent=1 // loop_exit
      _
    %2177 = vsyncpa [#allocation4], 1
    %s2178 = scalar_lea.sflag [#allocation4], 1
    %2179 = vsyncpa %s2178, 1

</llo_original>
